<compile_context>
chip_gen: v6e
topology: v6e:2x2x1
jax: 0.10.0
libtpu: 0.0.40
codegen_flags: <defaults>
</compile_context>

<pallas_src>
import functools
import math

import jax
import jax.numpy as jnp
from jax.experimental import pallas as pl
from jax.experimental.pallas import tpu as pltpu


def _round_up(x, m):
    return (x + m - 1) // m * m


def _pick_block_batch(batch):
    """Multiple of 16, as large as 512, <=25% padding waste, >=2 grid steps
    whenever batch >= 32 (so the parallel axis can use both v7x TensorCores)."""
    padded_min = _round_up(batch, 16)
    for tb in (512, 384, 256, 192, 128, 96, 64, 48, 32, 16):
        if tb > padded_min:
            continue
        padded = _round_up(batch, tb)
        waste = padded - batch
        n_steps = padded // tb
        if waste * 4 > padded:          # more than 25% padded rows -> too wasteful
            continue
        if batch >= 32 and n_steps < 2:  # keep >=2 grid steps for megacore sharding
            continue
        return tb
    return 16


# ----------------------------------------------------------------------------
# Pallas kernel: full fused CVAE forward pass (encoder -> sample -> decoder)
# ----------------------------------------------------------------------------
def cvae_forward_kernel(
    # data (per batch tile)
    x_ref, y_ref, eps_ref,
    # encoder (Linear+BN folded), e1 split into x / y parts
    e1wx_ref, e1wy_ref, e1t_ref,
    e2w_ref, e2t_ref,
    # merged mean|logvar head
    mlw_ref, mlb_ref,
    # decoder (Linear+BN folded), d1 split into z / y parts, plus output Linear
    d1wz_ref, d1wy_ref, d1t_ref,
    d2w_ref, d2t_ref,
    d3w_ref, d3b_ref,
    # outputs
    xrec_ref, stats_ref,
    *, latent, stats_pad,
):
    f32 = jnp.float32
    bf16 = jnp.bfloat16

    y = y_ref[...]  # bf16

    # -------- encoder layer 1 (split matmul replaces cat((x, y))) --------
    h = (jnp.dot(x_ref[...], e1wx_ref[...], preferred_element_type=f32)
         + jnp.dot(y, e1wy_ref[...], preferred_element_type=f32)
         + e1t_ref[...])
    h = jnp.maximum(h, 0.0).astype(bf16)            # BN folded, ReLU, Dropout=id

    # -------- encoder layer 2 --------
    h = jnp.dot(h, e2w_ref[...], preferred_element_type=f32) + e2t_ref[...]
    h = jnp.maximum(h, 0.0).astype(bf16)

    # -------- merged mean / logvar head --------
    s = jnp.dot(h, mlw_ref[...], preferred_element_type=f32) + mlb_ref[...]
    mean = s[:, :latent]
    logvar = s[:, latent:]

    # -------- reparameterization (f32): z = eps * exp(0.5*logvar) + mean --------
    z = eps_ref[...] * jnp.exp(0.5 * logvar) + mean

    # -------- decoder layer 1 (split matmul replaces cat((z, y))) --------
    d = (jnp.dot(z.astype(bf16), d1wz_ref[...], preferred_element_type=f32)
         + jnp.dot(y, d1wy_ref[...], preferred_element_type=f32)
         + d1t_ref[...])
    d = jnp.maximum(d, 0.0).astype(bf16)

    # -------- decoder layer 2 + output Linear --------
    d = jnp.dot(d, d2w_ref[...], preferred_element_type=f32) + d2t_ref[...]
    d = jnp.maximum(d, 0.0).astype(bf16)
    xrec_ref[...] = jnp.dot(d, d3w_ref[...], preferred_element_type=f32) + d3b_ref[...]

    # -------- lane-dense packed stats slab: [mean | logvar | z | 0 ...] --------
    tb = s.shape[0]
    pieces = [s, z]                         # s is already [mean | logvar]
    pad = stats_pad - 3 * latent
    if pad > 0:
        pieces.append(jnp.zeros((tb, pad), f32))
    stats_ref[...] = jnp.concatenate(pieces, axis=-1)


# ----------------------------------------------------------------------------
# Wrapper
# ----------------------------------------------------------------------------
def cvae_forward(x, y, eps, kparams, *, block_batch=None):
    """Fused CVAE forward.  `kparams` are the kernel-ready params from prepare_params."""
    batch, n_genes = x.shape
    n_labels = y.shape[1]
    latent = eps.shape[1]

    (e1wx, e1wy, e1t, e2w, e2t, mlw, mlb,
     d1wz, d1wy, d1t, d2w, d2t, d3w, d3b) = kparams

    # No HBM-side concat: x and y go straight to the kernel (both bf16).
    x_b = x.astype(jnp.bfloat16)
    y_b = y.astype(jnp.bfloat16)
    eps = eps.astype(jnp.float32)

    tb = _pick_block_batch(batch) if block_batch is None else block_batch
    padded = _round_up(batch, tb)
    if padded != batch:
        pad = padded - batch
        x_b = jnp.pad(x_b, ((0, pad), (0, 0)))
        y_b = jnp.pad(y_b, ((0, pad), (0, 0)))
        eps = jnp.pad(eps, ((0, pad), (0, 0)))

    grid = (padded // tb,)
    stats_pad = max(128, _round_up(3 * latent, 128))

    def act_spec(width):
        return pl.BlockSpec((tb, width), lambda i: (i, 0))

    params = [e1wx, e1wy, e1t, e2w, e2t, mlw, mlb,
              d1wz, d1wy, d1t, d2w, d2t, d3w, d3b]
    operands = (x_b, y_b, eps, *params)

    out_shapes = (
        jax.ShapeDtypeStruct((padded, n_genes), jnp.float32),      # X_reconstructed
        jax.ShapeDtypeStruct((padded, stats_pad), jnp.float32),    # [mean|logvar|z|0]
    )
    out_specs = (act_spec(n_genes), act_spec(stats_pad))

    # Cost estimate (pure Python ints).
    flops = 2 * padded * (
        n_genes * 800 + n_labels * 800 + 800 * 400 + 400 * (2 * latent)
        + latent * 400 + n_labels * 400 + 400 * 800 + 800 * n_genes)
    bytes_accessed = int(
        sum(int(math.prod(a.shape)) * a.dtype.itemsize for a in operands)
        + sum(int(math.prod(o.shape)) * 4 for o in out_shapes))

    # VMEM budget from actual sizes (resident params + pipelined I/O tiles +
    # in-kernel intermediates + headroom), clamped to ~90% of physical VMEM.
    resident_bytes = sum(int(math.prod(p.shape)) * p.dtype.itemsize for p in params)
    io_tile_bytes = tb * (n_genes * 2 + n_labels * 2 + latent * 4
                          + (n_genes + stats_pad) * 4)
    inter_bytes = tb * (800 + 400 + 2 * latent + 400 + 800) * 4 * 2
    vmem_needed = 2 * resident_bytes + 2 * io_tile_bytes + inter_bytes + (8 << 20)
    try:
        phys_vmem = int(pltpu.get_tpu_info().vmem_capacity_bytes)
    except Exception:
        phys_vmem = 64 * 1024 * 1024        # conservative: valid on all generations
    vmem_limit = int(min(max(vmem_needed, 32 << 20), int(phys_vmem * 0.9)))

    def build_call(single_buffer_weights):
        def resident_spec(shape):
            # Constant index_map => weight stays resident in VMEM across the grid.
            if single_buffer_weights:
                return pl.BlockSpec(shape, lambda i: (0, 0),
                                    pipeline_mode=pl.Buffered(1))
            return pl.BlockSpec(shape, lambda i: (0, 0))

        in_specs = (
            [act_spec(n_genes), act_spec(n_labels), act_spec(latent)]
            + [resident_spec(p.shape) for p in params])

        return pl.pallas_call(
            functools.partial(cvae_forward_kernel, latent=latent,
                              stats_pad=stats_pad),
            out_shape=out_shapes,
            grid=grid,
            in_specs=in_specs,
            out_specs=out_specs,
            compiler_params=pltpu.CompilerParams(
                dimension_semantics=("parallel",),
                vmem_limit_bytes=vmem_limit,
            ),
            cost_estimate=pl.CostEstimate(
                flops=int(flops),
                transcendentals=int(padded * latent),
                bytes_accessed=bytes_accessed,
            ),
        )

    try:
        xrec, stats = build_call(single_buffer_weights=True)(*operands)
        xrec, stats = jax.block_until_ready((xrec, stats))
    except Exception:
        # Fallback if this JAX build rejects Buffered(1): default double-buffering.
        xrec, stats = build_call(single_buffer_weights=False)(*operands)

    xrec = xrec[:batch]
    stats = stats[:batch]
    mean = stats[:, :latent]
    logvar = stats[:, latent:2 * latent]
    z = stats[:, 2 * latent:3 * latent]
    return xrec, mean, logvar, z


# ----------------------------------------------------------------------------
# Parameter construction (mimics PyTorch default inits) + kernel-side preparation
# ----------------------------------------------------------------------------
def _linear(key, fan_in, fan_out):
    k1, k2 = jax.random.split(key)
    bound = 1.0 / float(fan_in) ** 0.5
    w = jax.random.uniform(k1, (fan_in, fan_out), jnp.float32, -bound, bound)
    b = jax.random.uniform(k2, (1, fan_out), jnp.float32, -bound, bound)
    return w, b


def _bn_folded(key, dim):
    """BatchNorm1d in eval mode folded into per-feature scale/shift."""
    k1, k2, k3, k4 = jax.random.split(key, 4)
    gamma = 1.0 + 0.1 * jax.random.normal(k1, (1, dim), jnp.float32)
    beta = 0.1 * jax.random.normal(k2, (1, dim), jnp.float32)
    running_mean = 0.1 * jax.random.normal(k3, (1, dim), jnp.float32)
    running_var = 1.0 + 0.1 * jax.random.uniform(k4, (1, dim), jnp.float32)
    scale = gamma / jnp.sqrt(running_var + 1e-5)
    shift = beta - running_mean * scale
    return scale, shift


def init_params(key, n_genes, n_labels, latent_size):
    keys = jax.random.split(key, 10)
    e1w, e1b = _linear(keys[0], n_genes + n_labels, 800)
    bn1s, bn1t = _bn_folded(keys[1], 800)
    e2w, e2b = _linear(keys[2], 800, 400)
    bn2s, bn2t = _bn_folded(keys[3], 400)
    mw, mb = _linear(keys[4], 400, latent_size)
    lw, lb = _linear(keys[5], 400, latent_size)
    d1w, d1b = _linear(keys[6], latent_size + n_labels, 400)
    bn3s, bn3t = _bn_folded(keys[7], 400)
    d2w, d2b = _linear(keys[8], 400, 800)
    bn4s, bn4t = _bn_folded(keys[9], 800)
    d3w, d3b = _linear(jax.random.fold_in(key, 123), 800, n_genes)
    return (e1w, e1b, bn1s, bn1t, e2w, e2b, bn2s, bn2t,
            mw, mb, lw, lb,
            d1w, d1b, bn3s, bn3t, d2w, d2b, bn4s, bn4t, d3w, d3b)


def prepare_params(raw, n_genes, n_labels, latent_size):
    """Fold BN into the Linear weights, split e1/d1 weights (no concats needed),
    merge mean/logvar heads, cast weights to bf16 (biases stay f32)."""
    (e1w, e1b, bn1s, bn1t, e2w, e2b, bn2s, bn2t,
     mw, mb, lw, lb,
     d1w, d1b, bn3s, bn3t, d2w, d2b, bn4s, bn4t, d3w, d3b) = raw

    def fold(w, b, s, t):
        return (w * s).astype(jnp.bfloat16), (b * s + t).astype(jnp.float32)

    e1w_, e1t_ = fold(e1w, e1b, bn1s, bn1t)
    e1wx, e1wy = e1w_[:n_genes], e1w_[n_genes:]
    e2w_, e2t_ = fold(e2w, e2b, bn2s, bn2t)
    mlw = jnp.concatenate([mw, lw], axis=1).astype(jnp.bfloat16)
    mlb = jnp.concatenate([mb, lb], axis=1).astype(jnp.float32)
    d1w_, d1t_ = fold(d1w, d1b, bn3s, bn3t)
    d1wz, d1wy = d1w_[:latent_size], d1w_[latent_size:]
    d2w_, d2t_ = fold(d2w, d2b, bn4s, bn4t)
    return (e1wx, e1wy, e1t_, e2w_, e2t_, mlw, mlb,
            d1wz, d1wy, d1t_, d2w_, d2t_,
            d3w.astype(jnp.bfloat16), d3b.astype(jnp.float32))


# Plain-JAX reference with identical bf16 mixed-precision semantics (for validation).
def cvae_forward_ref(x, y, eps, kparams):
    (e1wx, e1wy, e1t, e2w, e2t, mlw, mlb,
     d1wz, d1wy, d1t, d2w, d2t, d3w, d3b) = kparams
    f32, bf16 = jnp.float32, jnp.bfloat16
    latent = eps.shape[1]
    xb, yb = x.astype(bf16), y.astype(bf16)
    h = (jnp.dot(xb, e1wx, preferred_element_type=f32)
         + jnp.dot(yb, e1wy, preferred_element_type=f32) + e1t)
    h = jnp.maximum(h, 0.0).astype(bf16)
    h = jnp.dot(h, e2w, preferred_element_type=f32) + e2t
    h = jnp.maximum(h, 0.0).astype(bf16)
    s = jnp.dot(h, mlw, preferred_element_type=f32) + mlb
    mean, logvar = s[:, :latent], s[:, latent:]
    z = eps.astype(f32) * jnp.exp(0.5 * logvar) + mean
    d = (jnp.dot(z.astype(bf16), d1wz, preferred_element_type=f32)
         + jnp.dot(yb, d1wy, preferred_element_type=f32) + d1t)
    d = jnp.maximum(d, 0.0).astype(bf16)
    d = jnp.dot(d, d2w, preferred_element_type=f32) + d2t
    d = jnp.maximum(d, 0.0).astype(bf16)
    xrec = jnp.dot(d, d3w, preferred_element_type=f32) + d3b
    return xrec, mean, logvar, z


if __name__ == "__main__":
    n_genes, n_labels, latent_size, batch = 128, 8, 16, 32

    key = jax.random.PRNGKey(0)
    k_x, k_y, k_eps, k_p = jax.random.split(key, 4)

    x = jax.random.normal(k_x, (batch, n_genes), jnp.float32)
    y = jax.nn.one_hot(
        jax.random.randint(k_y, (batch,), 0, n_labels), n_labels, dtype=jnp.float32)
    eps = jax.random.normal(k_eps, (batch, latent_size), jnp.float32)

    raw_params = init_params(k_p, n_genes, n_labels, latent_size)
    kparams = prepare_params(raw_params, n_genes, n_labels, latent_size)

    # batch=32 -> tb=16, grid=(2,): exercises the batch pipeline, resident
    # (single-buffered) weights and the parallel grid axis.
    outs = cvae_forward(x, y, eps, kparams)
    outs = jax.block_until_ready(outs)

    refs = cvae_forward_ref(x, y, eps, kparams)
    names = ("X_reconstructed", "mean", "logvar", "z")
    for name, o, r in zip(names, outs, refs):
        assert o.shape == r.shape and o.dtype == r.dtype, f"{name}: shape/dtype mismatch"
        assert jnp.allclose(o, r, rtol=1e-2, atol=1e-2), f"{name}: mismatch vs JAX reference"

    print("KERNEL_OK")
</pallas_src>

<mosaic_0001>
module attributes {stable_mosaic.version = 11 : i64} {
  func.func @cvae_forward_kernel(%arg0: i32, %arg1: memref<16x128xbf16, #tpu.memory_space<vmem>>, %arg2: memref<16x8xbf16, #tpu.memory_space<vmem>>, %arg3: memref<16x16xf32, #tpu.memory_space<vmem>>, %arg4: memref<128x800xbf16, #tpu.memory_space<vmem>>, %arg5: memref<8x800xbf16, #tpu.memory_space<vmem>>, %arg6: memref<1x800xf32, #tpu.memory_space<vmem>>, %arg7: memref<800x400xbf16, #tpu.memory_space<vmem>>, %arg8: memref<1x400xf32, #tpu.memory_space<vmem>>, %arg9: memref<400x32xbf16, #tpu.memory_space<vmem>>, %arg10: memref<1x32xf32, #tpu.memory_space<vmem>>, %arg11: memref<16x400xbf16, #tpu.memory_space<vmem>>, %arg12: memref<8x400xbf16, #tpu.memory_space<vmem>>, %arg13: memref<1x400xf32, #tpu.memory_space<vmem>>, %arg14: memref<400x800xbf16, #tpu.memory_space<vmem>>, %arg15: memref<1x800xf32, #tpu.memory_space<vmem>>, %arg16: memref<800x128xbf16, #tpu.memory_space<vmem>>, %arg17: memref<1x128xf32, #tpu.memory_space<vmem>>, %arg18: memref<16x128xf32, #tpu.memory_space<vmem>>, %arg19: memref<16x128xf32, #tpu.memory_space<vmem>>) attributes {dimension_semantics = [#tpu.dimension_semantics<parallel>], iteration_bounds = array<i64: 2>, scalar_prefetch = 0 : i64, scratch_operands = 0 : i64, tpu.core_type = #tpu.core_type<tc>, window_params = [{transform_indices = @transform_0, window_bounds = array<i64: 16, 128>}, {transform_indices = @transform_1, window_bounds = array<i64: 16, 8>}, {transform_indices = @transform_2, window_bounds = array<i64: 16, 16>}, {pipeline_mode = #tpu.pipeline_mode<synchronous>, transform_indices = @transform_3, window_bounds = array<i64: 128, 800>}, {pipeline_mode = #tpu.pipeline_mode<synchronous>, transform_indices = @transform_4, window_bounds = array<i64: 8, 800>}, {pipeline_mode = #tpu.pipeline_mode<synchronous>, transform_indices = @transform_5, window_bounds = array<i64: 1, 800>}, {pipeline_mode = #tpu.pipeline_mode<synchronous>, transform_indices = @transform_6, window_bounds = array<i64: 800, 400>}, {pipeline_mode = #tpu.pipeline_mode<synchronous>, transform_indices = @transform_7, window_bounds = array<i64: 1, 400>}, {pipeline_mode = #tpu.pipeline_mode<synchronous>, transform_indices = @transform_8, window_bounds = array<i64: 400, 32>}, {pipeline_mode = #tpu.pipeline_mode<synchronous>, transform_indices = @transform_9, window_bounds = array<i64: 1, 32>}, {pipeline_mode = #tpu.pipeline_mode<synchronous>, transform_indices = @transform_10, window_bounds = array<i64: 16, 400>}, {pipeline_mode = #tpu.pipeline_mode<synchronous>, transform_indices = @transform_11, window_bounds = array<i64: 8, 400>}, {pipeline_mode = #tpu.pipeline_mode<synchronous>, transform_indices = @transform_12, window_bounds = array<i64: 1, 400>}, {pipeline_mode = #tpu.pipeline_mode<synchronous>, transform_indices = @transform_13, window_bounds = array<i64: 400, 800>}, {pipeline_mode = #tpu.pipeline_mode<synchronous>, transform_indices = @transform_14, window_bounds = array<i64: 1, 800>}, {pipeline_mode = #tpu.pipeline_mode<synchronous>, transform_indices = @transform_15, window_bounds = array<i64: 800, 128>}, {pipeline_mode = #tpu.pipeline_mode<synchronous>, transform_indices = @transform_16, window_bounds = array<i64: 1, 128>}, {transform_indices = @transform_17, window_bounds = array<i64: 16, 128>}, {transform_indices = @transform_18, window_bounds = array<i64: 16, 128>}]} {
    %c0 = arith.constant 0 : index
    %c0_0 = arith.constant 0 : index
    %0 = vector.load %arg2[%c0, %c0_0] : memref<16x8xbf16, #tpu.memory_space<vmem>>, vector<16x8xbf16>
    %c0_1 = arith.constant 0 : index
    %c0_2 = arith.constant 0 : index
    %1 = vector.load %arg1[%c0_1, %c0_2] : memref<16x128xbf16, #tpu.memory_space<vmem>>, vector<16x128xbf16>
    %c0_3 = arith.constant 0 : index
    %c0_4 = arith.constant 0 : index
    %2 = vector.load %arg4[%c0_3, %c0_4] : memref<128x800xbf16, #tpu.memory_space<vmem>>, vector<128x800xbf16>
    %cst = arith.constant dense<0.000000e+00> : vector<16x800xf32>
    %3 = tpu.matmul %1, %2, %cst {dimension_numbers = #tpu.dot_dimension_numbers<[1], [0], [0], [1], [0, 0, 1, 1], [], []>} : vector<16x128xbf16>, vector<128x800xbf16>, vector<16x800xf32> -> vector<16x800xf32>
    %c0_5 = arith.constant 0 : index
    %c0_6 = arith.constant 0 : index
    %4 = vector.load %arg5[%c0_5, %c0_6] : memref<8x800xbf16, #tpu.memory_space<vmem>>, vector<8x800xbf16>
    %cst_7 = arith.constant dense<0.000000e+00> : vector<16x800xf32>
    %5 = tpu.matmul %0, %4, %cst_7 {dimension_numbers = #tpu.dot_dimension_numbers<[1], [0], [0], [1], [0, 0, 1, 1], [], []>} : vector<16x8xbf16>, vector<8x800xbf16>, vector<16x800xf32> -> vector<16x800xf32>
    %6 = arith.addf %3, %5 : vector<16x800xf32>
    %c0_8 = arith.constant 0 : index
    %c0_9 = arith.constant 0 : index
    %7 = vector.load %arg6[%c0_8, %c0_9] : memref<1x800xf32, #tpu.memory_space<vmem>>, vector<1x800xf32>
    %8 = vector.broadcast %7 : vector<1x800xf32> to vector<16x800xf32>
    %9 = arith.addf %6, %8 : vector<16x800xf32>
    %cst_10 = arith.constant 0.000000e+00 : f32
    %10 = vector.broadcast %cst_10 : f32 to vector<16x800xf32>
    %11 = arith.maximumf %9, %10 : vector<16x800xf32>
    %12 = arith.truncf %11 : vector<16x800xf32> to vector<16x800xbf16>
    %c0_11 = arith.constant 0 : index
    %c0_12 = arith.constant 0 : index
    %13 = vector.load %arg7[%c0_11, %c0_12] : memref<800x400xbf16, #tpu.memory_space<vmem>>, vector<800x400xbf16>
    %cst_13 = arith.constant dense<0.000000e+00> : vector<16x400xf32>
    %14 = tpu.matmul %12, %13, %cst_13 {dimension_numbers = #tpu.dot_dimension_numbers<[1], [0], [0], [1], [0, 0, 1, 1], [], []>} : vector<16x800xbf16>, vector<800x400xbf16>, vector<16x400xf32> -> vector<16x400xf32>
    %c0_14 = arith.constant 0 : index
    %c0_15 = arith.constant 0 : index
    %15 = vector.load %arg8[%c0_14, %c0_15] : memref<1x400xf32, #tpu.memory_space<vmem>>, vector<1x400xf32>
    %16 = vector.broadcast %15 : vector<1x400xf32> to vector<16x400xf32>
    %17 = arith.addf %14, %16 : vector<16x400xf32>
    %cst_16 = arith.constant 0.000000e+00 : f32
    %18 = vector.broadcast %cst_16 : f32 to vector<16x400xf32>
    %19 = arith.maximumf %17, %18 : vector<16x400xf32>
    %20 = arith.truncf %19 : vector<16x400xf32> to vector<16x400xbf16>
    %c0_17 = arith.constant 0 : index
    %c0_18 = arith.constant 0 : index
    %21 = vector.load %arg9[%c0_17, %c0_18] : memref<400x32xbf16, #tpu.memory_space<vmem>>, vector<400x32xbf16>
    %cst_19 = arith.constant dense<0.000000e+00> : vector<16x32xf32>
    %22 = tpu.matmul %20, %21, %cst_19 {dimension_numbers = #tpu.dot_dimension_numbers<[1], [0], [0], [1], [0, 0, 1, 1], [], []>} : vector<16x400xbf16>, vector<400x32xbf16>, vector<16x32xf32> -> vector<16x32xf32>
    %c0_20 = arith.constant 0 : index
    %c0_21 = arith.constant 0 : index
    %23 = vector.load %arg10[%c0_20, %c0_21] : memref<1x32xf32, #tpu.memory_space<vmem>>, vector<1x32xf32>
    %24 = vector.broadcast %23 : vector<1x32xf32> to vector<16x32xf32>
    %25 = arith.addf %22, %24 : vector<16x32xf32>
    %26 = vector.extract_strided_slice %25 {offsets = [0, 0], sizes = [16, 16], strides = [1, 1]} : vector<16x32xf32> to vector<16x16xf32>
    %27 = vector.extract_strided_slice %25 {offsets = [0, 16], sizes = [16, 16], strides = [1, 1]} : vector<16x32xf32> to vector<16x16xf32>
    %c0_22 = arith.constant 0 : index
    %c0_23 = arith.constant 0 : index
    %28 = vector.load %arg3[%c0_22, %c0_23] : memref<16x16xf32, #tpu.memory_space<vmem>>, vector<16x16xf32>
    %cst_24 = arith.constant 5.000000e-01 : f32
    %29 = vector.broadcast %cst_24 : f32 to vector<16x16xf32>
    %30 = arith.mulf %29, %27 : vector<16x16xf32>
    %31 = math.exp %30 : vector<16x16xf32>
    %32 = arith.mulf %28, %31 : vector<16x16xf32>
    %33 = arith.addf %32, %26 : vector<16x16xf32>
    %34 = arith.truncf %33 : vector<16x16xf32> to vector<16x16xbf16>
    %c0_25 = arith.constant 0 : index
    %c0_26 = arith.constant 0 : index
    %35 = vector.load %arg11[%c0_25, %c0_26] : memref<16x400xbf16, #tpu.memory_space<vmem>>, vector<16x400xbf16>
    %cst_27 = arith.constant dense<0.000000e+00> : vector<16x400xf32>
    %36 = tpu.matmul %34, %35, %cst_27 {dimension_numbers = #tpu.dot_dimension_numbers<[1], [0], [0], [1], [0, 0, 1, 1], [], []>} : vector<16x16xbf16>, vector<16x400xbf16>, vector<16x400xf32> -> vector<16x400xf32>
    %c0_28 = arith.constant 0 : index
    %c0_29 = arith.constant 0 : index
    %37 = vector.load %arg12[%c0_28, %c0_29] : memref<8x400xbf16, #tpu.memory_space<vmem>>, vector<8x400xbf16>
    %cst_30 = arith.constant dense<0.000000e+00> : vector<16x400xf32>
    %38 = tpu.matmul %0, %37, %cst_30 {dimension_numbers = #tpu.dot_dimension_numbers<[1], [0], [0], [1], [0, 0, 1, 1], [], []>} : vector<16x8xbf16>, vector<8x400xbf16>, vector<16x400xf32> -> vector<16x400xf32>
    %39 = arith.addf %36, %38 : vector<16x400xf32>
    %c0_31 = arith.constant 0 : index
    %c0_32 = arith.constant 0 : index
    %40 = vector.load %arg13[%c0_31, %c0_32] : memref<1x400xf32, #tpu.memory_space<vmem>>, vector<1x400xf32>
    %41 = vector.broadcast %40 : vector<1x400xf32> to vector<16x400xf32>
    %42 = arith.addf %39, %41 : vector<16x400xf32>
    %cst_33 = arith.constant 0.000000e+00 : f32
    %43 = vector.broadcast %cst_33 : f32 to vector<16x400xf32>
    %44 = arith.maximumf %42, %43 : vector<16x400xf32>
    %45 = arith.truncf %44 : vector<16x400xf32> to vector<16x400xbf16>
    %c0_34 = arith.constant 0 : index
    %c0_35 = arith.constant 0 : index
    %46 = vector.load %arg14[%c0_34, %c0_35] : memref<400x800xbf16, #tpu.memory_space<vmem>>, vector<400x800xbf16>
    %cst_36 = arith.constant dense<0.000000e+00> : vector<16x800xf32>
    %47 = tpu.matmul %45, %46, %cst_36 {dimension_numbers = #tpu.dot_dimension_numbers<[1], [0], [0], [1], [0, 0, 1, 1], [], []>} : vector<16x400xbf16>, vector<400x800xbf16>, vector<16x800xf32> -> vector<16x800xf32>
    %c0_37 = arith.constant 0 : index
    %c0_38 = arith.constant 0 : index
    %48 = vector.load %arg15[%c0_37, %c0_38] : memref<1x800xf32, #tpu.memory_space<vmem>>, vector<1x800xf32>
    %49 = vector.broadcast %48 : vector<1x800xf32> to vector<16x800xf32>
    %50 = arith.addf %47, %49 : vector<16x800xf32>
    %cst_39 = arith.constant 0.000000e+00 : f32
    %51 = vector.broadcast %cst_39 : f32 to vector<16x800xf32>
    %52 = arith.maximumf %50, %51 : vector<16x800xf32>
    %53 = arith.truncf %52 : vector<16x800xf32> to vector<16x800xbf16>
    %c0_40 = arith.constant 0 : index
    %c0_41 = arith.constant 0 : index
    %54 = vector.load %arg16[%c0_40, %c0_41] : memref<800x128xbf16, #tpu.memory_space<vmem>>, vector<800x128xbf16>
    %cst_42 = arith.constant dense<0.000000e+00> : vector<16x128xf32>
    %55 = tpu.matmul %53, %54, %cst_42 {dimension_numbers = #tpu.dot_dimension_numbers<[1], [0], [0], [1], [0, 0, 1, 1], [], []>} : vector<16x800xbf16>, vector<800x128xbf16>, vector<16x128xf32> -> vector<16x128xf32>
    %c0_43 = arith.constant 0 : index
    %c0_44 = arith.constant 0 : index
    %56 = vector.load %arg17[%c0_43, %c0_44] : memref<1x128xf32, #tpu.memory_space<vmem>>, vector<1x128xf32>
    %57 = vector.broadcast %56 : vector<1x128xf32> to vector<16x128xf32>
    %58 = arith.addf %55, %57 : vector<16x128xf32>
    %c0_45 = arith.constant 0 : index
    %c0_46 = arith.constant 0 : index
    %59 = vector.load %arg18[%c0_45, %c0_46] : memref<16x128xf32, #tpu.memory_space<vmem>>, vector<16x128xf32>
    tpu.vector_store %arg18[%c0_45, %c0_46], %58 {strides = array<i32>} : memref<16x128xf32, #tpu.memory_space<vmem>>, vector<16x128xf32>,
    %cst_47 = arith.constant 0.000000e+00 : f32
    %60 = vector.broadcast %cst_47 : f32 to vector<16x80xf32>
    %61 = tpu.concatenate %25, %33, %60 in 1 : vector<16x32xf32>, vector<16x16xf32>, vector<16x80xf32> -> vector<16x128xf32>
    %c0_48 = arith.constant 0 : index
    %c0_49 = arith.constant 0 : index
    %62 = vector.load %arg19[%c0_48, %c0_49] : memref<16x128xf32, #tpu.memory_space<vmem>>, vector<16x128xf32>
    tpu.vector_store %arg19[%c0_48, %c0_49], %61 {strides = array<i32>} : memref<16x128xf32, #tpu.memory_space<vmem>>, vector<16x128xf32>,
    return
  }
  func.func @transform_0(%arg0: i32) -> (i32, i32) {
    %c0_i32 = arith.constant 0 : i32
    %c0_i32_0 = arith.constant 0 : i32
    return %arg0, %c0_i32 : i32, i32
  }
  func.func @transform_1(%arg0: i32) -> (i32, i32) {
    %c0_i32 = arith.constant 0 : i32
    %c0_i32_0 = arith.constant 0 : i32
    return %arg0, %c0_i32 : i32, i32
  }
  func.func @transform_2(%arg0: i32) -> (i32, i32) {
    %c0_i32 = arith.constant 0 : i32
    %c0_i32_0 = arith.constant 0 : i32
    return %arg0, %c0_i32 : i32, i32
  }
  func.func @transform_3(%arg0: i32) -> (i32, i32) {
    %c0_i32 = arith.constant 0 : i32
    %c0_i32_0 = arith.constant 0 : i32
    %c0_i32_1 = arith.constant 0 : i32
    return %c0_i32, %c0_i32_0 : i32, i32
  }
  func.func @transform_4(%arg0: i32) -> (i32, i32) {
    %c0_i32 = arith.constant 0 : i32
    %c0_i32_0 = arith.constant 0 : i32
    %c0_i32_1 = arith.constant 0 : i32
    return %c0_i32, %c0_i32_0 : i32, i32
  }
  func.func @transform_5(%arg0: i32) -> (i32, i32) {
    %c0_i32 = arith.constant 0 : i32
    %c0_i32_0 = arith.constant 0 : i32
    %c0_i32_1 = arith.constant 0 : i32
    return %c0_i32, %c0_i32_0 : i32, i32
  }
  func.func @transform_6(%arg0: i32) -> (i32, i32) {
    %c0_i32 = arith.constant 0 : i32
    %c0_i32_0 = arith.constant 0 : i32
    %c0_i32_1 = arith.constant 0 : i32
    return %c0_i32, %c0_i32_0 : i32, i32
  }
  func.func @transform_7(%arg0: i32) -> (i32, i32) {
    %c0_i32 = arith.constant 0 : i32
    %c0_i32_0 = arith.constant 0 : i32
    %c0_i32_1 = arith.constant 0 : i32
    return %c0_i32, %c0_i32_0 : i32, i32
  }
  func.func @transform_8(%arg0: i32) -> (i32, i32) {
    %c0_i32 = arith.constant 0 : i32
    %c0_i32_0 = arith.constant 0 : i32
    %c0_i32_1 = arith.constant 0 : i32
    return %c0_i32, %c0_i32_0 : i32, i32
  }
  func.func @transform_9(%arg0: i32) -> (i32, i32) {
    %c0_i32 = arith.constant 0 : i32
    %c0_i32_0 = arith.constant 0 : i32
    %c0_i32_1 = arith.constant 0 : i32
    return %c0_i32, %c0_i32_0 : i32, i32
  }
  func.func @transform_10(%arg0: i32) -> (i32, i32) {
    %c0_i32 = arith.constant 0 : i32
    %c0_i32_0 = arith.constant 0 : i32
    %c0_i32_1 = arith.constant 0 : i32
    return %c0_i32, %c0_i32_0 : i32, i32
  }
  func.func @transform_11(%arg0: i32) -> (i32, i32) {
    %c0_i32 = arith.constant 0 : i32
    %c0_i32_0 = arith.constant 0 : i32
    %c0_i32_1 = arith.constant 0 : i32
    return %c0_i32, %c0_i32_0 : i32, i32
  }
  func.func @transform_12(%arg0: i32) -> (i32, i32) {
    %c0_i32 = arith.constant 0 : i32
    %c0_i32_0 = arith.constant 0 : i32
    %c0_i32_1 = arith.constant 0 : i32
    return %c0_i32, %c0_i32_0 : i32, i32
  }
  func.func @transform_13(%arg0: i32) -> (i32, i32) {
    %c0_i32 = arith.constant 0 : i32
    %c0_i32_0 = arith.constant 0 : i32
    %c0_i32_1 = arith.constant 0 : i32
    return %c0_i32, %c0_i32_0 : i32, i32
  }
  func.func @transform_14(%arg0: i32) -> (i32, i32) {
    %c0_i32 = arith.constant 0 : i32
    %c0_i32_0 = arith.constant 0 : i32
    %c0_i32_1 = arith.constant 0 : i32
    return %c0_i32, %c0_i32_0 : i32, i32
  }
  func.func @transform_15(%arg0: i32) -> (i32, i32) {
    %c0_i32 = arith.constant 0 : i32
    %c0_i32_0 = arith.constant 0 : i32
    %c0_i32_1 = arith.constant 0 : i32
    return %c0_i32, %c0_i32_0 : i32, i32
  }
  func.func @transform_16(%arg0: i32) -> (i32, i32) {
    %c0_i32 = arith.constant 0 : i32
    %c0_i32_0 = arith.constant 0 : i32
    %c0_i32_1 = arith.constant 0 : i32
    return %c0_i32, %c0_i32_0 : i32, i32
  }
  func.func @transform_17(%arg0: i32) -> (i32, i32) {
    %c0_i32 = arith.constant 0 : i32
    %c0_i32_0 = arith.constant 0 : i32
    return %arg0, %c0_i32 : i32, i32
  }
  func.func @transform_18(%arg0: i32) -> (i32, i32) {
    %c0_i32 = arith.constant 0 : i32
    %c0_i32_0 = arith.constant 0 : i32
    return %arg0, %c0_i32 : i32, i32
  }
}

module attributes {stable_mosaic.version = 11 : i64} {
  func.func @cvae_forward_kernel(%arg0: i32, %arg1: memref<16x128xbf16, #tpu.memory_space<vmem>>, %arg2: memref<16x8xbf16, #tpu.memory_space<vmem>>, %arg3: memref<16x16xf32, #tpu.memory_space<vmem>>, %arg4: memref<128x800xbf16, #tpu.memory_space<vmem>>, %arg5: memref<8x800xbf16, #tpu.memory_space<vmem>>, %arg6: memref<1x800xf32, #tpu.memory_space<vmem>>, %arg7: memref<800x400xbf16, #tpu.memory_space<vmem>>, %arg8: memref<1x400xf32, #tpu.memory_space<vmem>>, %arg9: memref<400x32xbf16, #tpu.memory_space<vmem>>, %arg10: memref<1x32xf32, #tpu.memory_space<vmem>>, %arg11: memref<16x400xbf16, #tpu.memory_space<vmem>>, %arg12: memref<8x400xbf16, #tpu.memory_space<vmem>>, %arg13: memref<1x400xf32, #tpu.memory_space<vmem>>, %arg14: memref<400x800xbf16, #tpu.memory_space<vmem>>, %arg15: memref<1x800xf32, #tpu.memory_space<vmem>>, %arg16: memref<800x128xbf16, #tpu.memory_space<vmem>>, %arg17: memref<1x128xf32, #tpu.memory_space<vmem>>, %arg18: memref<16x128xf32, #tpu.memory_space<vmem>>, %arg19: memref<16x128xf32, #tpu.memory_space<vmem>>) attributes {dimension_semantics = [#tpu.dimension_semantics<parallel>], iteration_bounds = array<i64: 2>, scalar_prefetch = 0 : i64, scratch_operands = 0 : i64, tpu.core_type = #tpu.core_type<tc>, window_params = [{transform_indices = @transform_0, window_bounds = array<i64: 16, 128>}, {transform_indices = @transform_1, window_bounds = array<i64: 16, 8>}, {transform_indices = @transform_2, window_bounds = array<i64: 16, 16>}, {pipeline_mode = #tpu.pipeline_mode<synchronous>, transform_indices = @transform_3, window_bounds = array<i64: 128, 800>}, {pipeline_mode = #tpu.pipeline_mode<synchronous>, transform_indices = @transform_4, window_bounds = array<i64: 8, 800>}, {pipeline_mode = #tpu.pipeline_mode<synchronous>, transform_indices = @transform_5, window_bounds = array<i64: 1, 800>}, {pipeline_mode = #tpu.pipeline_mode<synchronous>, transform_indices = @transform_6, window_bounds = array<i64: 800, 400>}, {pipeline_mode = #tpu.pipeline_mode<synchronous>, transform_indices = @transform_7, window_bounds = array<i64: 1, 400>}, {pipeline_mode = #tpu.pipeline_mode<synchronous>, transform_indices = @transform_8, window_bounds = array<i64: 400, 32>}, {pipeline_mode = #tpu.pipeline_mode<synchronous>, transform_indices = @transform_9, window_bounds = array<i64: 1, 32>}, {pipeline_mode = #tpu.pipeline_mode<synchronous>, transform_indices = @transform_10, window_bounds = array<i64: 16, 400>}, {pipeline_mode = #tpu.pipeline_mode<synchronous>, transform_indices = @transform_11, window_bounds = array<i64: 8, 400>}, {pipeline_mode = #tpu.pipeline_mode<synchronous>, transform_indices = @transform_12, window_bounds = array<i64: 1, 400>}, {pipeline_mode = #tpu.pipeline_mode<synchronous>, transform_indices = @transform_13, window_bounds = array<i64: 400, 800>}, {pipeline_mode = #tpu.pipeline_mode<synchronous>, transform_indices = @transform_14, window_bounds = array<i64: 1, 800>}, {pipeline_mode = #tpu.pipeline_mode<synchronous>, transform_indices = @transform_15, window_bounds = array<i64: 800, 128>}, {pipeline_mode = #tpu.pipeline_mode<synchronous>, transform_indices = @transform_16, window_bounds = array<i64: 1, 128>}, {transform_indices = @transform_17, window_bounds = array<i64: 16, 128>}, {transform_indices = @transform_18, window_bounds = array<i64: 16, 128>}]} {
    %c0 = arith.constant 0 : index
    %c0_0 = arith.constant 0 : index
    %0 = vector.load %arg2[%c0, %c0_0] : memref<16x8xbf16, #tpu.memory_space<vmem>>, vector<16x8xbf16>
    %c0_1 = arith.constant 0 : index
    %c0_2 = arith.constant 0 : index
    %1 = vector.load %arg1[%c0_1, %c0_2] : memref<16x128xbf16, #tpu.memory_space<vmem>>, vector<16x128xbf16>
    %c0_3 = arith.constant 0 : index
    %c0_4 = arith.constant 0 : index
    %2 = vector.load %arg4[%c0_3, %c0_4] : memref<128x800xbf16, #tpu.memory_space<vmem>>, vector<128x800xbf16>
    %cst = arith.constant dense<0.000000e+00> : vector<16x800xf32>
    %3 = tpu.matmul %1, %2, %cst {dimension_numbers = #tpu.dot_dimension_numbers<[1], [0], [0], [1], [0, 0, 1, 1], [], []>} : vector<16x128xbf16>, vector<128x800xbf16>, vector<16x800xf32> -> vector<16x800xf32>
    %c0_5 = arith.constant 0 : index
    %c0_6 = arith.constant 0 : index
    %4 = vector.load %arg5[%c0_5, %c0_6] : memref<8x800xbf16, #tpu.memory_space<vmem>>, vector<8x800xbf16>
    %cst_7 = arith.constant dense<0.000000e+00> : vector<16x800xf32>
    %5 = tpu.matmul %0, %4, %cst_7 {dimension_numbers = #tpu.dot_dimension_numbers<[1], [0], [0], [1], [0, 0, 1, 1], [], []>} : vector<16x8xbf16>, vector<8x800xbf16>, vector<16x800xf32> -> vector<16x800xf32>
    %6 = arith.addf %3, %5 : vector<16x800xf32>
    %c0_8 = arith.constant 0 : index
    %c0_9 = arith.constant 0 : index
    %7 = vector.load %arg6[%c0_8, %c0_9] : memref<1x800xf32, #tpu.memory_space<vmem>>, vector<1x800xf32>
    %8 = vector.broadcast %7 : vector<1x800xf32> to vector<16x800xf32>
    %9 = arith.addf %6, %8 : vector<16x800xf32>
    %cst_10 = arith.constant 0.000000e+00 : f32
    %10 = vector.broadcast %cst_10 : f32 to vector<16x800xf32>
    %11 = arith.maximumf %9, %10 : vector<16x800xf32>
    %12 = arith.truncf %11 : vector<16x800xf32> to vector<16x800xbf16>
    %c0_11 = arith.constant 0 : index
    %c0_12 = arith.constant 0 : index
    %13 = vector.load %arg7[%c0_11, %c0_12] : memref<800x400xbf16, #tpu.memory_space<vmem>>, vector<800x400xbf16>
    %cst_13 = arith.constant dense<0.000000e+00> : vector<16x400xf32>
    %14 = tpu.matmul %12, %13, %cst_13 {dimension_numbers = #tpu.dot_dimension_numbers<[1], [0], [0], [1], [0, 0, 1, 1], [], []>} : vector<16x800xbf16>, vector<800x400xbf16>, vector<16x400xf32> -> vector<16x400xf32>
    %c0_14 = arith.constant 0 : index
    %c0_15 = arith.constant 0 : index
    %15 = vector.load %arg8[%c0_14, %c0_15] : memref<1x400xf32, #tpu.memory_space<vmem>>, vector<1x400xf32>
    %16 = vector.broadcast %15 : vector<1x400xf32> to vector<16x400xf32>
    %17 = arith.addf %14, %16 : vector<16x400xf32>
    %cst_16 = arith.constant 0.000000e+00 : f32
    %18 = vector.broadcast %cst_16 : f32 to vector<16x400xf32>
    %19 = arith.maximumf %17, %18 : vector<16x400xf32>
    %20 = arith.truncf %19 : vector<16x400xf32> to vector<16x400xbf16>
    %c0_17 = arith.constant 0 : index
    %c0_18 = arith.constant 0 : index
    %21 = vector.load %arg9[%c0_17, %c0_18] : memref<400x32xbf16, #tpu.memory_space<vmem>>, vector<400x32xbf16>
    %cst_19 = arith.constant dense<0.000000e+00> : vector<16x32xf32>
    %22 = tpu.matmul %20, %21, %cst_19 {dimension_numbers = #tpu.dot_dimension_numbers<[1], [0], [0], [1], [0, 0, 1, 1], [], []>} : vector<16x400xbf16>, vector<400x32xbf16>, vector<16x32xf32> -> vector<16x32xf32>
    %c0_20 = arith.constant 0 : index
    %c0_21 = arith.constant 0 : index
    %23 = vector.load %arg10[%c0_20, %c0_21] : memref<1x32xf32, #tpu.memory_space<vmem>>, vector<1x32xf32>
    %24 = vector.broadcast %23 : vector<1x32xf32> to vector<16x32xf32>
    %25 = arith.addf %22, %24 : vector<16x32xf32>
    %26 = vector.extract_strided_slice %25 {offsets = [0, 0], sizes = [16, 16], strides = [1, 1]} : vector<16x32xf32> to vector<16x16xf32>
    %27 = vector.extract_strided_slice %25 {offsets = [0, 16], sizes = [16, 16], strides = [1, 1]} : vector<16x32xf32> to vector<16x16xf32>
    %c0_22 = arith.constant 0 : index
    %c0_23 = arith.constant 0 : index
    %28 = vector.load %arg3[%c0_22, %c0_23] : memref<16x16xf32, #tpu.memory_space<vmem>>, vector<16x16xf32>
    %cst_24 = arith.constant 5.000000e-01 : f32
    %29 = vector.broadcast %cst_24 : f32 to vector<16x16xf32>
    %30 = arith.mulf %29, %27 : vector<16x16xf32>
    %31 = math.exp %30 : vector<16x16xf32>
    %32 = arith.mulf %28, %31 : vector<16x16xf32>
    %33 = arith.addf %32, %26 : vector<16x16xf32>
    %34 = arith.truncf %33 : vector<16x16xf32> to vector<16x16xbf16>
    %c0_25 = arith.constant 0 : index
    %c0_26 = arith.constant 0 : index
    %35 = vector.load %arg11[%c0_25, %c0_26] : memref<16x400xbf16, #tpu.memory_space<vmem>>, vector<16x400xbf16>
    %cst_27 = arith.constant dense<0.000000e+00> : vector<16x400xf32>
    %36 = tpu.matmul %34, %35, %cst_27 {dimension_numbers = #tpu.dot_dimension_numbers<[1], [0], [0], [1], [0, 0, 1, 1], [], []>} : vector<16x16xbf16>, vector<16x400xbf16>, vector<16x400xf32> -> vector<16x400xf32>
    %c0_28 = arith.constant 0 : index
    %c0_29 = arith.constant 0 : index
    %37 = vector.load %arg12[%c0_28, %c0_29] : memref<8x400xbf16, #tpu.memory_space<vmem>>, vector<8x400xbf16>
    %cst_30 = arith.constant dense<0.000000e+00> : vector<16x400xf32>
    %38 = tpu.matmul %0, %37, %cst_30 {dimension_numbers = #tpu.dot_dimension_numbers<[1], [0], [0], [1], [0, 0, 1, 1], [], []>} : vector<16x8xbf16>, vector<8x400xbf16>, vector<16x400xf32> -> vector<16x400xf32>
    %39 = arith.addf %36, %38 : vector<16x400xf32>
    %c0_31 = arith.constant 0 : index
    %c0_32 = arith.constant 0 : index
    %40 = vector.load %arg13[%c0_31, %c0_32] : memref<1x400xf32, #tpu.memory_space<vmem>>, vector<1x400xf32>
    %41 = vector.broadcast %40 : vector<1x400xf32> to vector<16x400xf32>
    %42 = arith.addf %39, %41 : vector<16x400xf32>
    %cst_33 = arith.constant 0.000000e+00 : f32
    %43 = vector.broadcast %cst_33 : f32 to vector<16x400xf32>
    %44 = arith.maximumf %42, %43 : vector<16x400xf32>
    %45 = arith.truncf %44 : vector<16x400xf32> to vector<16x400xbf16>
    %c0_34 = arith.constant 0 : index
    %c0_35 = arith.constant 0 : index
    %46 = vector.load %arg14[%c0_34, %c0_35] : memref<400x800xbf16, #tpu.memory_space<vmem>>, vector<400x800xbf16>
    %cst_36 = arith.constant dense<0.000000e+00> : vector<16x800xf32>
    %47 = tpu.matmul %45, %46, %cst_36 {dimension_numbers = #tpu.dot_dimension_numbers<[1], [0], [0], [1], [0, 0, 1, 1], [], []>} : vector<16x400xbf16>, vector<400x800xbf16>, vector<16x800xf32> -> vector<16x800xf32>
    %c0_37 = arith.constant 0 : index
    %c0_38 = arith.constant 0 : index
    %48 = vector.load %arg15[%c0_37, %c0_38] : memref<1x800xf32, #tpu.memory_space<vmem>>, vector<1x800xf32>
    %49 = vector.broadcast %48 : vector<1x800xf32> to vector<16x800xf32>
    %50 = arith.addf %47, %49 : vector<16x800xf32>
    %cst_39 = arith.constant 0.000000e+00 : f32
    %51 = vector.broadcast %cst_39 : f32 to vector<16x800xf32>
    %52 = arith.maximumf %50, %51 : vector<16x800xf32>
    %53 = arith.truncf %52 : vector<16x800xf32> to vector<16x800xbf16>
    %c0_40 = arith.constant 0 : index
    %c0_41 = arith.constant 0 : index
    %54 = vector.load %arg16[%c0_40, %c0_41] : memref<800x128xbf16, #tpu.memory_space<vmem>>, vector<800x128xbf16>
    %cst_42 = arith.constant dense<0.000000e+00> : vector<16x128xf32>
    %55 = tpu.matmul %53, %54, %cst_42 {dimension_numbers = #tpu.dot_dimension_numbers<[1], [0], [0], [1], [0, 0, 1, 1], [], []>} : vector<16x800xbf16>, vector<800x128xbf16>, vector<16x128xf32> -> vector<16x128xf32>
    %c0_43 = arith.constant 0 : index
    %c0_44 = arith.constant 0 : index
    %56 = vector.load %arg17[%c0_43, %c0_44] : memref<1x128xf32, #tpu.memory_space<vmem>>, vector<1x128xf32>
    %57 = vector.broadcast %56 : vector<1x128xf32> to vector<16x128xf32>
    %58 = arith.addf %55, %57 : vector<16x128xf32>
    %c0_45 = arith.constant 0 : index
    %c0_46 = arith.constant 0 : index
    %59 = vector.load %arg18[%c0_45, %c0_46] : memref<16x128xf32, #tpu.memory_space<vmem>>, vector<16x128xf32>
    tpu.vector_store %arg18[%c0_45, %c0_46], %58 {strides = array<i32>} : memref<16x128xf32, #tpu.memory_space<vmem>>, vector<16x128xf32>,
    %cst_47 = arith.constant 0.000000e+00 : f32
    %60 = vector.broadcast %cst_47 : f32 to vector<16x80xf32>
    %61 = tpu.concatenate %25, %33, %60 in 1 : vector<16x32xf32>, vector<16x16xf32>, vector<16x80xf32> -> vector<16x128xf32>
    %c0_48 = arith.constant 0 : index
    %c0_49 = arith.constant 0 : index
    %62 = vector.load %arg19[%c0_48, %c0_49] : memref<16x128xf32, #tpu.memory_space<vmem>>, vector<16x128xf32>
    tpu.vector_store %arg19[%c0_48, %c0_49], %61 {strides = array<i32>} : memref<16x128xf32, #tpu.memory_space<vmem>>, vector<16x128xf32>,
    return
  }
  func.func @transform_0(%arg0: i32) -> (i32, i32) {
    %c0_i32 = arith.constant 0 : i32
    %c0_i32_0 = arith.constant 0 : i32
    return %arg0, %c0_i32 : i32, i32
  }
  func.func @transform_1(%arg0: i32) -> (i32, i32) {
    %c0_i32 = arith.constant 0 : i32
    %c0_i32_0 = arith.constant 0 : i32
    return %arg0, %c0_i32 : i32, i32
  }
  func.func @transform_2(%arg0: i32) -> (i32, i32) {
    %c0_i32 = arith.constant 0 : i32
    %c0_i32_0 = arith.constant 0 : i32
    return %arg0, %c0_i32 : i32, i32
  }
  func.func @transform_3(%arg0: i32) -> (i32, i32) {
    %c0_i32 = arith.constant 0 : i32
    %c0_i32_0 = arith.constant 0 : i32
    %c0_i32_1 = arith.constant 0 : i32
    return %c0_i32, %c0_i32_0 : i32, i32
  }
  func.func @transform_4(%arg0: i32) -> (i32, i32) {
    %c0_i32 = arith.constant 0 : i32
    %c0_i32_0 = arith.constant 0 : i32
    %c0_i32_1 = arith.constant 0 : i32
    return %c0_i32, %c0_i32_0 : i32, i32
  }
  func.func @transform_5(%arg0: i32) -> (i32, i32) {
    %c0_i32 = arith.constant 0 : i32
    %c0_i32_0 = arith.constant 0 : i32
    %c0_i32_1 = arith.constant 0 : i32
    return %c0_i32, %c0_i32_0 : i32, i32
  }
  func.func @transform_6(%arg0: i32) -> (i32, i32) {
    %c0_i32 = arith.constant 0 : i32
    %c0_i32_0 = arith.constant 0 : i32
    %c0_i32_1 = arith.constant 0 : i32
    return %c0_i32, %c0_i32_0 : i32, i32
  }
  func.func @transform_7(%arg0: i32) -> (i32, i32) {
    %c0_i32 = arith.constant 0 : i32
    %c0_i32_0 = arith.constant 0 : i32
    %c0_i32_1 = arith.constant 0 : i32
    return %c0_i32, %c0_i32_0 : i32, i32
  }
  func.func @transform_8(%arg0: i32) -> (i32, i32) {
    %c0_i32 = arith.constant 0 : i32
    %c0_i32_0 = arith.constant 0 : i32
    %c0_i32_1 = arith.constant 0 : i32
    return %c0_i32, %c0_i32_0 : i32, i32
  }
  func.func @transform_9(%arg0: i32) -> (i32, i32) {
    %c0_i32 = arith.constant 0 : i32
    %c0_i32_0 = arith.constant 0 : i32
    %c0_i32_1 = arith.constant 0 : i32
    return %c0_i32, %c0_i32_0 : i32, i32
  }
  func.func @transform_10(%arg0: i32) -> (i32, i32) {
    %c0_i32 = arith.constant 0 : i32
    %c0_i32_0 = arith.constant 0 : i32
    %c0_i32_1 = arith.constant 0 : i32
    return %c0_i32, %c0_i32_0 : i32, i32
  }
  func.func @transform_11(%arg0: i32) -> (i32, i32) {
    %c0_i32 = arith.constant 0 : i32
    %c0_i32_0 = arith.constant 0 : i32
    %c0_i32_1 = arith.constant 0 : i32
    return %c0_i32, %c0_i32_0 : i32, i32
  }
  func.func @transform_12(%arg0: i32) -> (i32, i32) {
    %c0_i32 = arith.constant 0 : i32
    %c0_i32_0 = arith.constant 0 : i32
    %c0_i32_1 = arith.constant 0 : i32
    return %c0_i32, %c0_i32_0 : i32, i32
  }
  func.func @transform_13(%arg0: i32) -> (i32, i32) {
    %c0_i32 = arith.constant 0 : i32
    %c0_i32_0 = arith.constant 0 : i32
    %c0_i32_1 = arith.constant 0 : i32
    return %c0_i32, %c0_i32_0 : i32, i32
  }
  func.func @transform_14(%arg0: i32) -> (i32, i32) {
    %c0_i32 = arith.constant 0 : i32
    %c0_i32_0 = arith.constant 0 : i32
    %c0_i32_1 = arith.constant 0 : i32
    return %c0_i32, %c0_i32_0 : i32, i32
  }
  func.func @transform_15(%arg0: i32) -> (i32, i32) {
    %c0_i32 = arith.constant 0 : i32
    %c0_i32_0 = arith.constant 0 : i32
    %c0_i32_1 = arith.constant 0 : i32
    return %c0_i32, %c0_i32_0 : i32, i32
  }
  func.func @transform_16(%arg0: i32) -> (i32, i32) {
    %c0_i32 = arith.constant 0 : i32
    %c0_i32_0 = arith.constant 0 : i32
    %c0_i32_1 = arith.constant 0 : i32
    return %c0_i32, %c0_i32_0 : i32, i32
  }
  func.func @transform_17(%arg0: i32) -> (i32, i32) {
    %c0_i32 = arith.constant 0 : i32
    %c0_i32_0 = arith.constant 0 : i32
    return %arg0, %c0_i32 : i32, i32
  }
  func.func @transform_18(%arg0: i32) -> (i32, i32) {
    %c0_i32 = arith.constant 0 : i32
    %c0_i32_0 = arith.constant 0 : i32
    return %arg0, %c0_i32 : i32, i32
  }
}

</mosaic_0001>

<llo_original>
// kernel: tpu_custom_call.1
$region0: #{tpu_custom_call.1}
  #allocation0 [shape = 'u32[]', space=smem, size = 0x4, offset = 0x4, fixed_abs, tag = 'smem constant byte address 0x4 - core index']
  #allocation1 [shape = 'u32[144,128]{1,0:T(1,128)}', space=vmem, size = 0x12000, scoped, tag = 'internal scratch']
  %s0 = inlined_call_operand.vmem [shape: bf16[32,128], index: 0, kind: input, shape index: {}]
  %s1 = inlined_call_operand.vmem [shape: bf16[32,8], index: 1, kind: input, shape index: {}]
  %s2 = inlined_call_operand.vmem [shape: f32[32,16], index: 2, kind: input, shape index: {}]
  %s3 = inlined_call_operand.vmem [shape: bf16[128,800], index: 3, kind: input, shape index: {}]
  %s4 = inlined_call_operand.vmem [shape: bf16[8,800], index: 4, kind: input, shape index: {}]
  %s5 = inlined_call_operand.vmem [shape: f32[1,800], index: 5, kind: input, shape index: {}]
  %s6 = inlined_call_operand.vmem [shape: bf16[800,400], index: 6, kind: input, shape index: {}]
  %s7 = inlined_call_operand.vmem [shape: f32[1,400], index: 7, kind: input, shape index: {}]
  %s8 = inlined_call_operand.vmem [shape: bf16[400,32], index: 8, kind: input, shape index: {}]
  %s9 = inlined_call_operand.vmem [shape: f32[1,32], index: 9, kind: input, shape index: {}]
  %s10 = inlined_call_operand.vmem [shape: bf16[16,400], index: 10, kind: input, shape index: {}]
  %s11 = inlined_call_operand.vmem [shape: bf16[8,400], index: 11, kind: input, shape index: {}]
  %s12 = inlined_call_operand.vmem [shape: f32[1,400], index: 12, kind: input, shape index: {}]
  %s13 = inlined_call_operand.vmem [shape: bf16[400,800], index: 13, kind: input, shape index: {}]
  %s14 = inlined_call_operand.vmem [shape: f32[1,800], index: 14, kind: input, shape index: {}]
  %s15 = inlined_call_operand.vmem [shape: bf16[800,128], index: 15, kind: input, shape index: {}]
  %s16 = inlined_call_operand.vmem [shape: f32[1,128], index: 16, kind: input, shape index: {}]
  %s17 = inlined_call_operand.hbm [shape: f32[32,128], index: 17, kind: output, shape index: {0}]
  %s18 = inlined_call_operand.hbm [shape: f32[32,128], index: 18, kind: output, shape index: {1}]
  %19 = xla_tuple %s17, %s18
  %s20 = sld [smem:[#allocation0]]
  $region109: #{tpu_custom_call.1} parent=0
    _
  %s22 = ssub.s32 1, %s20
  %s23 = scalar_select 0, %s22, %s20
  $region1: #{tpu_custom_call.1} parent=0
    #allocation2 [shape = 'u8[16384]{0}', space=vmem, size = 0x4000, scoped, tag = 'output window, operand 0']
    #allocation3 [shape = 's32[2]{0}', space=sflag, size = 0x8, scoped, tag = 'scoped memory for tpu_custom_call.1']
    #allocation4 [shape = 'u8[16384]{0}', space=vmem, size = 0x4000, scoped, tag = 'output window, operand 1']
    #allocation5 [shape = 's32[2]{0}', space=sflag, size = 0x8, scoped, tag = 'scoped memory for tpu_custom_call.1']
    %24 = vsyncpa [#allocation3], 0
    %s25 = scalar_lea.sflag [#allocation3], 1
    %26 = vsyncpa %s25, 0
    %27 = vsyncpa [#allocation5], 0
    %s28 = scalar_lea.sflag [#allocation5], 1
    %29 = vsyncpa %s28, 0
    loop: start=0, step=1, limit=4
    $region2: #{tpu_custom_call.1} parent=1 // loop_pre_header
      _
    $region3: #{tpu_custom_call.1} parent=1 // loop_header
      %s31 = sphi 0, %s35
      %p32 = scmp.ge.s32.totalorder %s31, 4
      %s41 = sphi 0, %s43
      %s44 = sphi 0, %s41
      %s45 = sphi 0, %s44
      %s61 = sphi 0, %s45
      %s67 = sphi 0, %s69
      %s70 = sphi 0, %s67
      %s71 = sphi 0, %s70
      %s87 = sphi 0, %s71
      %s93 = sphi 0, %s95
      %s96 = sphi 0, %s93
      %s97 = sphi 0, %s96
      %s113 = sphi 0, %s97
      %s117 = sphi 0, %s117
      %s119 = sphi 0, %s117
      %s120 = sphi 0, %s119
      %s134 = sphi 0, %s120
      %s138 = sphi 0, %s138
      %s140 = sphi 0, %s138
      %s141 = sphi 0, %s140
      %s155 = sphi 0, %s141
      %s159 = sphi 0, %s159
      %s161 = sphi 0, %s159
      %s162 = sphi 0, %s161
      %s176 = sphi 0, %s162
      %s180 = sphi 0, %s180
      %s182 = sphi 0, %s180
      %s183 = sphi 0, %s182
      %s197 = sphi 0, %s183
      %s201 = sphi 0, %s201
      %s203 = sphi 0, %s201
      %s204 = sphi 0, %s203
      %s218 = sphi 0, %s204
      %s222 = sphi 0, %s222
      %s224 = sphi 0, %s222
      %s225 = sphi 0, %s224
      %s239 = sphi 0, %s225
      %s243 = sphi 0, %s243
      %s245 = sphi 0, %s243
      %s246 = sphi 0, %s245
      %s260 = sphi 0, %s246
      %s264 = sphi 0, %s264
      %s266 = sphi 0, %s264
      %s267 = sphi 0, %s266
      %s281 = sphi 0, %s267
      %s285 = sphi 0, %s285
      %s287 = sphi 0, %s285
      %s288 = sphi 0, %s287
      %s302 = sphi 0, %s288
      %s306 = sphi 0, %s306
      %s308 = sphi 0, %s306
      %s309 = sphi 0, %s308
      %s323 = sphi 0, %s309
      %s327 = sphi 0, %s327
      %s329 = sphi 0, %s327
      %s330 = sphi 0, %s329
      %s344 = sphi 0, %s330
      %s348 = sphi 0, %s348
      %s350 = sphi 0, %s348
      %s351 = sphi 0, %s350
      %s365 = sphi 0, %s351
      %s369 = sphi 0, %s369
      %s371 = sphi 0, %s369
      %s372 = sphi 0, %s371
      %s386 = sphi 0, %s372
      %s390 = sphi 0, %s390
      %s392 = sphi 0, %s390
      %s393 = sphi 0, %s392
      %s407 = sphi 0, %s393
      %s413 = sphi 0, %s415
      %s416 = sphi 0, %s413
      %s417 = sphi 0, %s416
      %s433 = sphi 0, %s417
      %s439 = sphi 0, %s441
      %s442 = sphi 0, %s439
      %s443 = sphi 0, %s442
      %s459 = sphi 0, %s443
    $region4: #{tpu_custom_call.1} parent=1 // loop_header_branch
      %34 = sbr.rel (%p32) target = $region8
    $region5: #{tpu_custom_call.1} parent=1 // loop_body
      %s36 = ssub.s32 %s31, 1
      %s37 = ssub.s32 %s31, 2
      %s38 = sadd.s32 %s31, 1
      %s39 = ssub.s32 %s31, %s38
      %p40 = scmp.eq.s32.totalorder %s39, 0
      %s42 = sadd.s32 %s41, 1
      %s43 = scalar_select %p40, %s41, %s42
      %p46 = pneg %p40
      %p47 = scmp.eq.s32.totalorder %s31, 1
      %p48 = por %p46, %p47
      %p49 = scmp.ne.s32.totalorder %s41, %s44
      %p50 = scmp.eq.s32.totalorder %s31, 0
      %p51 = por %p49, %p50
      %p52 = scmp.ne.s32.totalorder %s41, %s44
      %p53 = scmp.eq.s32.totalorder %s36, 1
      %p54 = por %p52, %p53
      %p55 = scmp.ne.s32.totalorder %s44, %s45
      %p56 = scmp.eq.s32.totalorder %s36, 0
      %p57 = por %p55, %p56
      %p58 = scmp.ne.s32.totalorder %s44, %s45
      %p59 = scmp.eq.s32.totalorder %s37, 1
      %p60 = por %p58, %p59
      %p62 = scmp.ne.s32.totalorder %s45, %s61
      %p63 = scmp.eq.s32.totalorder %s37, 0
      %p64 = por %p62, %p63
      %s65 = ssub.s32 %s31, %s38
      %p66 = scmp.eq.s32.totalorder %s65, 0
      %s68 = sadd.s32 %s67, 1
      %s69 = scalar_select %p66, %s67, %s68
      %p72 = pneg %p66
      %p73 = scmp.eq.s32.totalorder %s31, 1
      %p74 = por %p72, %p73
      %p75 = scmp.ne.s32.totalorder %s67, %s70
      %p76 = scmp.eq.s32.totalorder %s31, 0
      %p77 = por %p75, %p76
      %p78 = scmp.ne.s32.totalorder %s67, %s70
      %p79 = scmp.eq.s32.totalorder %s36, 1
      %p80 = por %p78, %p79
      %p81 = scmp.ne.s32.totalorder %s70, %s71
      %p82 = scmp.eq.s32.totalorder %s36, 0
      %p83 = por %p81, %p82
      %p84 = scmp.ne.s32.totalorder %s70, %s71
      %p85 = scmp.eq.s32.totalorder %s37, 1
      %p86 = por %p84, %p85
      %p88 = scmp.ne.s32.totalorder %s71, %s87
      %p89 = scmp.eq.s32.totalorder %s37, 0
      %p90 = por %p88, %p89
      %s91 = ssub.s32 %s31, %s38
      %p92 = scmp.eq.s32.totalorder %s91, 0
      %s94 = sadd.s32 %s93, 1
      %s95 = scalar_select %p92, %s93, %s94
      %p98 = pneg %p92
      %p99 = scmp.eq.s32.totalorder %s31, 1
      %p100 = por %p98, %p99
      %p101 = scmp.ne.s32.totalorder %s93, %s96
      %p102 = scmp.eq.s32.totalorder %s31, 0
      %p103 = por %p101, %p102
      %p104 = scmp.ne.s32.totalorder %s93, %s96
      %p105 = scmp.eq.s32.totalorder %s36, 1
      %p106 = por %p104, %p105
      %p107 = scmp.ne.s32.totalorder %s96, %s97
      %p108 = scmp.eq.s32.totalorder %s36, 0
      %p109 = por %p107, %p108
      %p110 = scmp.ne.s32.totalorder %s96, %s97
      %p111 = scmp.eq.s32.totalorder %s37, 1
      %p112 = por %p110, %p111
      %p114 = scmp.ne.s32.totalorder %s97, %s113
      %p115 = scmp.eq.s32.totalorder %s37, 0
      %p116 = por %p114, %p115
      %s118 = sadd.s32 %s117, 1
      %p121 = scmp.eq.s32.totalorder %s31, 1
      %p122 = scmp.ne.s32.totalorder %s117, %s119
      %p123 = scmp.eq.s32.totalorder %s31, 0
      %p124 = por %p122, %p123
      %p125 = scmp.ne.s32.totalorder %s117, %s119
      %p126 = scmp.eq.s32.totalorder %s36, 1
      %p127 = por %p125, %p126
      %p128 = scmp.ne.s32.totalorder %s119, %s120
      %p129 = scmp.eq.s32.totalorder %s36, 0
      %p130 = por %p128, %p129
      %p131 = scmp.ne.s32.totalorder %s119, %s120
      %p132 = scmp.eq.s32.totalorder %s37, 1
      %p133 = por %p131, %p132
      %p135 = scmp.ne.s32.totalorder %s120, %s134
      %p136 = scmp.eq.s32.totalorder %s37, 0
      %p137 = por %p135, %p136
      %s139 = sadd.s32 %s138, 1
      %p142 = scmp.eq.s32.totalorder %s31, 1
      %p143 = scmp.ne.s32.totalorder %s138, %s140
      %p144 = scmp.eq.s32.totalorder %s31, 0
      %p145 = por %p143, %p144
      %p146 = scmp.ne.s32.totalorder %s138, %s140
      %p147 = scmp.eq.s32.totalorder %s36, 1
      %p148 = por %p146, %p147
      %p149 = scmp.ne.s32.totalorder %s140, %s141
      %p150 = scmp.eq.s32.totalorder %s36, 0
      %p151 = por %p149, %p150
      %p152 = scmp.ne.s32.totalorder %s140, %s141
      %p153 = scmp.eq.s32.totalorder %s37, 1
      %p154 = por %p152, %p153
      %p156 = scmp.ne.s32.totalorder %s141, %s155
      %p157 = scmp.eq.s32.totalorder %s37, 0
      %p158 = por %p156, %p157
      %s160 = sadd.s32 %s159, 1
      %p163 = scmp.eq.s32.totalorder %s31, 1
      %p164 = scmp.ne.s32.totalorder %s159, %s161
      %p165 = scmp.eq.s32.totalorder %s31, 0
      %p166 = por %p164, %p165
      %p167 = scmp.ne.s32.totalorder %s159, %s161
      %p168 = scmp.eq.s32.totalorder %s36, 1
      %p169 = por %p167, %p168
      %p170 = scmp.ne.s32.totalorder %s161, %s162
      %p171 = scmp.eq.s32.totalorder %s36, 0
      %p172 = por %p170, %p171
      %p173 = scmp.ne.s32.totalorder %s161, %s162
      %p174 = scmp.eq.s32.totalorder %s37, 1
      %p175 = por %p173, %p174
      %p177 = scmp.ne.s32.totalorder %s162, %s176
      %p178 = scmp.eq.s32.totalorder %s37, 0
      %p179 = por %p177, %p178
      %s181 = sadd.s32 %s180, 1
      %p184 = scmp.eq.s32.totalorder %s31, 1
      %p185 = scmp.ne.s32.totalorder %s180, %s182
      %p186 = scmp.eq.s32.totalorder %s31, 0
      %p187 = por %p185, %p186
      %p188 = scmp.ne.s32.totalorder %s180, %s182
      %p189 = scmp.eq.s32.totalorder %s36, 1
      %p190 = por %p188, %p189
      %p191 = scmp.ne.s32.totalorder %s182, %s183
      %p192 = scmp.eq.s32.totalorder %s36, 0
      %p193 = por %p191, %p192
      %p194 = scmp.ne.s32.totalorder %s182, %s183
      %p195 = scmp.eq.s32.totalorder %s37, 1
      %p196 = por %p194, %p195
      %p198 = scmp.ne.s32.totalorder %s183, %s197
      %p199 = scmp.eq.s32.totalorder %s37, 0
      %p200 = por %p198, %p199
      %s202 = sadd.s32 %s201, 1
      %p205 = scmp.eq.s32.totalorder %s31, 1
      %p206 = scmp.ne.s32.totalorder %s201, %s203
      %p207 = scmp.eq.s32.totalorder %s31, 0
      %p208 = por %p206, %p207
      %p209 = scmp.ne.s32.totalorder %s201, %s203
      %p210 = scmp.eq.s32.totalorder %s36, 1
      %p211 = por %p209, %p210
      %p212 = scmp.ne.s32.totalorder %s203, %s204
      %p213 = scmp.eq.s32.totalorder %s36, 0
      %p214 = por %p212, %p213
      %p215 = scmp.ne.s32.totalorder %s203, %s204
      %p216 = scmp.eq.s32.totalorder %s37, 1
      %p217 = por %p215, %p216
      %p219 = scmp.ne.s32.totalorder %s204, %s218
      %p220 = scmp.eq.s32.totalorder %s37, 0
      %p221 = por %p219, %p220
      %s223 = sadd.s32 %s222, 1
      %p226 = scmp.eq.s32.totalorder %s31, 1
      %p227 = scmp.ne.s32.totalorder %s222, %s224
      %p228 = scmp.eq.s32.totalorder %s31, 0
      %p229 = por %p227, %p228
      %p230 = scmp.ne.s32.totalorder %s222, %s224
      %p231 = scmp.eq.s32.totalorder %s36, 1
      %p232 = por %p230, %p231
      %p233 = scmp.ne.s32.totalorder %s224, %s225
      %p234 = scmp.eq.s32.totalorder %s36, 0
      %p235 = por %p233, %p234
      %p236 = scmp.ne.s32.totalorder %s224, %s225
      %p237 = scmp.eq.s32.totalorder %s37, 1
      %p238 = por %p236, %p237
      %p240 = scmp.ne.s32.totalorder %s225, %s239
      %p241 = scmp.eq.s32.totalorder %s37, 0
      %p242 = por %p240, %p241
      %s244 = sadd.s32 %s243, 1
      %p247 = scmp.eq.s32.totalorder %s31, 1
      %p248 = scmp.ne.s32.totalorder %s243, %s245
      %p249 = scmp.eq.s32.totalorder %s31, 0
      %p250 = por %p248, %p249
      %p251 = scmp.ne.s32.totalorder %s243, %s245
      %p252 = scmp.eq.s32.totalorder %s36, 1
      %p253 = por %p251, %p252
      %p254 = scmp.ne.s32.totalorder %s245, %s246
      %p255 = scmp.eq.s32.totalorder %s36, 0
      %p256 = por %p254, %p255
      %p257 = scmp.ne.s32.totalorder %s245, %s246
      %p258 = scmp.eq.s32.totalorder %s37, 1
      %p259 = por %p257, %p258
      %p261 = scmp.ne.s32.totalorder %s246, %s260
      %p262 = scmp.eq.s32.totalorder %s37, 0
      %p263 = por %p261, %p262
      %s265 = sadd.s32 %s264, 1
      %p268 = scmp.eq.s32.totalorder %s31, 1
      %p269 = scmp.ne.s32.totalorder %s264, %s266
      %p270 = scmp.eq.s32.totalorder %s31, 0
      %p271 = por %p269, %p270
      %p272 = scmp.ne.s32.totalorder %s264, %s266
      %p273 = scmp.eq.s32.totalorder %s36, 1
      %p274 = por %p272, %p273
      %p275 = scmp.ne.s32.totalorder %s266, %s267
      %p276 = scmp.eq.s32.totalorder %s36, 0
      %p277 = por %p275, %p276
      %p278 = scmp.ne.s32.totalorder %s266, %s267
      %p279 = scmp.eq.s32.totalorder %s37, 1
      %p280 = por %p278, %p279
      %p282 = scmp.ne.s32.totalorder %s267, %s281
      %p283 = scmp.eq.s32.totalorder %s37, 0
      %p284 = por %p282, %p283
      %s286 = sadd.s32 %s285, 1
      %p289 = scmp.eq.s32.totalorder %s31, 1
      %p290 = scmp.ne.s32.totalorder %s285, %s287
      %p291 = scmp.eq.s32.totalorder %s31, 0
      %p292 = por %p290, %p291
      %p293 = scmp.ne.s32.totalorder %s285, %s287
      %p294 = scmp.eq.s32.totalorder %s36, 1
      %p295 = por %p293, %p294
      %p296 = scmp.ne.s32.totalorder %s287, %s288
      %p297 = scmp.eq.s32.totalorder %s36, 0
      %p298 = por %p296, %p297
      %p299 = scmp.ne.s32.totalorder %s287, %s288
      %p300 = scmp.eq.s32.totalorder %s37, 1
      %p301 = por %p299, %p300
      %p303 = scmp.ne.s32.totalorder %s288, %s302
      %p304 = scmp.eq.s32.totalorder %s37, 0
      %p305 = por %p303, %p304
      %s307 = sadd.s32 %s306, 1
      %p310 = scmp.eq.s32.totalorder %s31, 1
      %p311 = scmp.ne.s32.totalorder %s306, %s308
      %p312 = scmp.eq.s32.totalorder %s31, 0
      %p313 = por %p311, %p312
      %p314 = scmp.ne.s32.totalorder %s306, %s308
      %p315 = scmp.eq.s32.totalorder %s36, 1
      %p316 = por %p314, %p315
      %p317 = scmp.ne.s32.totalorder %s308, %s309
      %p318 = scmp.eq.s32.totalorder %s36, 0
      %p319 = por %p317, %p318
      %p320 = scmp.ne.s32.totalorder %s308, %s309
      %p321 = scmp.eq.s32.totalorder %s37, 1
      %p322 = por %p320, %p321
      %p324 = scmp.ne.s32.totalorder %s309, %s323
      %p325 = scmp.eq.s32.totalorder %s37, 0
      %p326 = por %p324, %p325
      %s328 = sadd.s32 %s327, 1
      %p331 = scmp.eq.s32.totalorder %s31, 1
      %p332 = scmp.ne.s32.totalorder %s327, %s329
      %p333 = scmp.eq.s32.totalorder %s31, 0
      %p334 = por %p332, %p333
      %p335 = scmp.ne.s32.totalorder %s327, %s329
      %p336 = scmp.eq.s32.totalorder %s36, 1
      %p337 = por %p335, %p336
      %p338 = scmp.ne.s32.totalorder %s329, %s330
      %p339 = scmp.eq.s32.totalorder %s36, 0
      %p340 = por %p338, %p339
      %p341 = scmp.ne.s32.totalorder %s329, %s330
      %p342 = scmp.eq.s32.totalorder %s37, 1
      %p343 = por %p341, %p342
      %p345 = scmp.ne.s32.totalorder %s330, %s344
      %p346 = scmp.eq.s32.totalorder %s37, 0
      %p347 = por %p345, %p346
      %s349 = sadd.s32 %s348, 1
      %p352 = scmp.eq.s32.totalorder %s31, 1
      %p353 = scmp.ne.s32.totalorder %s348, %s350
      %p354 = scmp.eq.s32.totalorder %s31, 0
      %p355 = por %p353, %p354
      %p356 = scmp.ne.s32.totalorder %s348, %s350
      %p357 = scmp.eq.s32.totalorder %s36, 1
      %p358 = por %p356, %p357
      %p359 = scmp.ne.s32.totalorder %s350, %s351
      %p360 = scmp.eq.s32.totalorder %s36, 0
      %p361 = por %p359, %p360
      %p362 = scmp.ne.s32.totalorder %s350, %s351
      %p363 = scmp.eq.s32.totalorder %s37, 1
      %p364 = por %p362, %p363
      %p366 = scmp.ne.s32.totalorder %s351, %s365
      %p367 = scmp.eq.s32.totalorder %s37, 0
      %p368 = por %p366, %p367
      %s370 = sadd.s32 %s369, 1
      %p373 = scmp.eq.s32.totalorder %s31, 1
      %p374 = scmp.ne.s32.totalorder %s369, %s371
      %p375 = scmp.eq.s32.totalorder %s31, 0
      %p376 = por %p374, %p375
      %p377 = scmp.ne.s32.totalorder %s369, %s371
      %p378 = scmp.eq.s32.totalorder %s36, 1
      %p379 = por %p377, %p378
      %p380 = scmp.ne.s32.totalorder %s371, %s372
      %p381 = scmp.eq.s32.totalorder %s36, 0
      %p382 = por %p380, %p381
      %p383 = scmp.ne.s32.totalorder %s371, %s372
      %p384 = scmp.eq.s32.totalorder %s37, 1
      %p385 = por %p383, %p384
      %p387 = scmp.ne.s32.totalorder %s372, %s386
      %p388 = scmp.eq.s32.totalorder %s37, 0
      %p389 = por %p387, %p388
      %s391 = sadd.s32 %s390, 1
      %p394 = scmp.eq.s32.totalorder %s31, 1
      %p395 = scmp.ne.s32.totalorder %s390, %s392
      %p396 = scmp.eq.s32.totalorder %s31, 0
      %p397 = por %p395, %p396
      %p398 = scmp.ne.s32.totalorder %s390, %s392
      %p399 = scmp.eq.s32.totalorder %s36, 1
      %p400 = por %p398, %p399
      %p401 = scmp.ne.s32.totalorder %s392, %s393
      %p402 = scmp.eq.s32.totalorder %s36, 0
      %p403 = por %p401, %p402
      %p404 = scmp.ne.s32.totalorder %s392, %s393
      %p405 = scmp.eq.s32.totalorder %s37, 1
      %p406 = por %p404, %p405
      %p408 = scmp.ne.s32.totalorder %s393, %s407
      %p409 = scmp.eq.s32.totalorder %s37, 0
      %p410 = por %p408, %p409
      %s411 = ssub.s32 %s31, %s38
      %p412 = scmp.eq.s32.totalorder %s411, 0
      %s414 = sadd.s32 %s413, 1
      %s415 = scalar_select %p412, %s413, %s414
      %p418 = pneg %p412
      %p419 = scmp.eq.s32.totalorder %s31, 1
      %p420 = por %p418, %p419
      %p421 = scmp.ne.s32.totalorder %s413, %s416
      %p422 = scmp.eq.s32.totalorder %s31, 0
      %p423 = por %p421, %p422
      %p424 = scmp.ne.s32.totalorder %s413, %s416
      %p425 = scmp.eq.s32.totalorder %s36, 1
      %p426 = por %p424, %p425
      %p427 = scmp.ne.s32.totalorder %s416, %s417
      %p428 = scmp.eq.s32.totalorder %s36, 0
      %p429 = por %p427, %p428
      %p430 = scmp.ne.s32.totalorder %s416, %s417
      %p431 = scmp.eq.s32.totalorder %s37, 1
      %p432 = por %p430, %p431
      %p434 = scmp.ne.s32.totalorder %s417, %s433
      %p435 = scmp.eq.s32.totalorder %s37, 0
      %p436 = por %p434, %p435
      %s437 = ssub.s32 %s31, %s38
      %p438 = scmp.eq.s32.totalorder %s437, 0
      %s440 = sadd.s32 %s439, 1
      %s441 = scalar_select %p438, %s439, %s440
      %p444 = pneg %p438
      %p445 = scmp.eq.s32.totalorder %s31, 1
      %p446 = por %p444, %p445
      %p447 = scmp.ne.s32.totalorder %s439, %s442
      %p448 = scmp.eq.s32.totalorder %s31, 0
      %p449 = por %p447, %p448
      %p450 = scmp.ne.s32.totalorder %s439, %s442
      %p451 = scmp.eq.s32.totalorder %s36, 1
      %p452 = por %p450, %p451
      %p453 = scmp.ne.s32.totalorder %s442, %s443
      %p454 = scmp.eq.s32.totalorder %s36, 0
      %p455 = por %p453, %p454
      %p456 = scmp.ne.s32.totalorder %s442, %s443
      %p457 = scmp.eq.s32.totalorder %s37, 1
      %p458 = por %p456, %p457
      %p460 = scmp.ne.s32.totalorder %s443, %s459
      %p461 = scmp.eq.s32.totalorder %s37, 0
      %p462 = por %p460, %p461
      %p463 = scmp.le.s32.totalorder 1, %s31
      %p464 = scmp.lt.s32.totalorder %s31, 3
      %p465 = pnand %p463, %p464
      %p466 = pneg %p465
      // Predicated region
      $region9: #{tpu_custom_call.1} parent=5 // pred_check
        _
      $region10: #{tpu_custom_call.1} parent=5 // pred_check_branch
        %468 = sbr.rel (%p465) target = $region12
      $region11: #{tpu_custom_call.1} parent=5 // pred_region
        %s469 = ssub.s32 %s31, 1
        // Predicated region
        $region13: #{tpu_custom_call.1} parent=11 // pred_check
          %p470 = pneg %p130
        $region14: #{tpu_custom_call.1} parent=11 // pred_check_branch
          %472 = sbr.rel (%p470) target = $region16
        $region15: #{tpu_custom_call.1} parent=11 // pred_region
          _
        $region16: #{tpu_custom_call.1} parent=11 // pred_fallthru
          _
        // Predicated region
        $region17: #{tpu_custom_call.1} parent=11 // pred_check
          %p473 = pneg %p151
        $region18: #{tpu_custom_call.1} parent=11 // pred_check_branch
          %475 = sbr.rel (%p473) target = $region20
        $region19: #{tpu_custom_call.1} parent=11 // pred_region
          _
        $region20: #{tpu_custom_call.1} parent=11 // pred_fallthru
          _
        // Predicated region
        $region21: #{tpu_custom_call.1} parent=11 // pred_check
          %p476 = pneg %p172
        $region22: #{tpu_custom_call.1} parent=11 // pred_check_branch
          %478 = sbr.rel (%p476) target = $region24
        $region23: #{tpu_custom_call.1} parent=11 // pred_region
          _
        $region24: #{tpu_custom_call.1} parent=11 // pred_fallthru
          _
        // Predicated region
        $region25: #{tpu_custom_call.1} parent=11 // pred_check
          %p479 = pneg %p193
        $region26: #{tpu_custom_call.1} parent=11 // pred_check_branch
          %481 = sbr.rel (%p479) target = $region28
        $region27: #{tpu_custom_call.1} parent=11 // pred_region
          _
        $region28: #{tpu_custom_call.1} parent=11 // pred_fallthru
          _
        // Predicated region
        $region29: #{tpu_custom_call.1} parent=11 // pred_check
          %p482 = pneg %p214
        $region30: #{tpu_custom_call.1} parent=11 // pred_check_branch
          %484 = sbr.rel (%p482) target = $region32
        $region31: #{tpu_custom_call.1} parent=11 // pred_region
          _
        $region32: #{tpu_custom_call.1} parent=11 // pred_fallthru
          _
        // Predicated region
        $region33: #{tpu_custom_call.1} parent=11 // pred_check
          %p485 = pneg %p235
        $region34: #{tpu_custom_call.1} parent=11 // pred_check_branch
          %487 = sbr.rel (%p485) target = $region36
        $region35: #{tpu_custom_call.1} parent=11 // pred_region
          _
        $region36: #{tpu_custom_call.1} parent=11 // pred_fallthru
          _
        // Predicated region
        $region37: #{tpu_custom_call.1} parent=11 // pred_check
          %p488 = pneg %p256
        $region38: #{tpu_custom_call.1} parent=11 // pred_check_branch
          %490 = sbr.rel (%p488) target = $region40
        $region39: #{tpu_custom_call.1} parent=11 // pred_region
          _
        $region40: #{tpu_custom_call.1} parent=11 // pred_fallthru
          _
        // Predicated region
        $region41: #{tpu_custom_call.1} parent=11 // pred_check
          %p491 = pneg %p277
        $region42: #{tpu_custom_call.1} parent=11 // pred_check_branch
          %493 = sbr.rel (%p491) target = $region44
        $region43: #{tpu_custom_call.1} parent=11 // pred_region
          _
        $region44: #{tpu_custom_call.1} parent=11 // pred_fallthru
          _
        // Predicated region
        $region45: #{tpu_custom_call.1} parent=11 // pred_check
          %p494 = pneg %p298
        $region46: #{tpu_custom_call.1} parent=11 // pred_check_branch
          %496 = sbr.rel (%p494) target = $region48
        $region47: #{tpu_custom_call.1} parent=11 // pred_region
          _
        $region48: #{tpu_custom_call.1} parent=11 // pred_fallthru
          _
        // Predicated region
        $region49: #{tpu_custom_call.1} parent=11 // pred_check
          %p497 = pneg %p319
        $region50: #{tpu_custom_call.1} parent=11 // pred_check_branch
          %499 = sbr.rel (%p497) target = $region52
        $region51: #{tpu_custom_call.1} parent=11 // pred_region
          _
        $region52: #{tpu_custom_call.1} parent=11 // pred_fallthru
          _
        // Predicated region
        $region53: #{tpu_custom_call.1} parent=11 // pred_check
          %p500 = pneg %p340
        $region54: #{tpu_custom_call.1} parent=11 // pred_check_branch
          %502 = sbr.rel (%p500) target = $region56
        $region55: #{tpu_custom_call.1} parent=11 // pred_region
          _
        $region56: #{tpu_custom_call.1} parent=11 // pred_fallthru
          _
        // Predicated region
        $region57: #{tpu_custom_call.1} parent=11 // pred_check
          %p503 = pneg %p361
        $region58: #{tpu_custom_call.1} parent=11 // pred_check_branch
          %505 = sbr.rel (%p503) target = $region60
        $region59: #{tpu_custom_call.1} parent=11 // pred_region
          _
        $region60: #{tpu_custom_call.1} parent=11 // pred_fallthru
          _
        // Predicated region
        $region61: #{tpu_custom_call.1} parent=11 // pred_check
          %p506 = pneg %p382
        $region62: #{tpu_custom_call.1} parent=11 // pred_check_branch
          %508 = sbr.rel (%p506) target = $region64
        $region63: #{tpu_custom_call.1} parent=11 // pred_region
          _
        $region64: #{tpu_custom_call.1} parent=11 // pred_fallthru
          _
        // Predicated region
        $region65: #{tpu_custom_call.1} parent=11 // pred_check
          %p509 = pneg %p403
        $region66: #{tpu_custom_call.1} parent=11 // pred_check_branch
          %511 = sbr.rel (%p509) target = $region68
        $region67: #{tpu_custom_call.1} parent=11 // pred_region
          _
        $region68: #{tpu_custom_call.1} parent=11 // pred_fallthru
          _
      $region12: #{tpu_custom_call.1} parent=5 // pred_fallthru
        _
      %p512 = scmp.lt.s32.totalorder %s31, 2
      // Predicated region
      $region69: #{tpu_custom_call.1} parent=5 // pred_check
        %p513 = pneg %p512
      $region70: #{tpu_custom_call.1} parent=5 // pred_check_branch
        %515 = sbr.rel (%p513) target = $region72
      $region71: #{tpu_custom_call.1} parent=5 // pred_region
        // Predicated region
        $region73: #{tpu_custom_call.1} parent=71 // pred_check
          %p516 = pneg %p51
        $region74: #{tpu_custom_call.1} parent=71 // pred_check_branch
          %518 = sbr.rel (%p516) target = $region76
        $region75: #{tpu_custom_call.1} parent=71 // pred_region
          %s519 = smul.u32 2, %s31
          %p520 = scmp.lt.s32.totalorder %s519, 3
          %s521 = scalar_select %p520, %s519, 3
          %s522 = smul.addr %s521, 4
          %s523 = scalar_lea.vmem %s0, %s522
          %s524 = smul.u32 2, %s31
        $region76: #{tpu_custom_call.1} parent=71 // pred_fallthru
          _
        // Predicated region
        $region77: #{tpu_custom_call.1} parent=71 // pred_check
          %p525 = pneg %p77
        $region78: #{tpu_custom_call.1} parent=71 // pred_check_branch
          %527 = sbr.rel (%p525) target = $region80
        $region79: #{tpu_custom_call.1} parent=71 // pred_region
          %s528 = smul.u32 2, %s31
          %p529 = scmp.lt.s32.totalorder %s528, 3
          %s530 = scalar_select %p529, %s528, 3
          %s531 = smul.addr %s530, 4
          %s532 = scalar_lea.vmem %s1, %s531
          %s533 = smul.u32 2, %s31
        $region80: #{tpu_custom_call.1} parent=71 // pred_fallthru
          _
        // Predicated region
        $region81: #{tpu_custom_call.1} parent=71 // pred_check
          %p534 = pneg %p103
        $region82: #{tpu_custom_call.1} parent=71 // pred_check_branch
          %536 = sbr.rel (%p534) target = $region84
        $region83: #{tpu_custom_call.1} parent=71 // pred_region
          %s537 = smul.u32 2, %s31
          %p538 = scmp.lt.s32.totalorder %s537, 3
          %s539 = scalar_select %p538, %s537, 3
          %s540 = smul.addr %s539, 8
          %s541 = scalar_lea.vmem %s2, %s540
          %s542 = smul.u32 2, %s31
        $region84: #{tpu_custom_call.1} parent=71 // pred_fallthru
          _
      $region72: #{tpu_custom_call.1} parent=5 // pred_fallthru
        _
      %p543 = scmp.le.s32.totalorder 1, %s31
      %p544 = scmp.lt.s32.totalorder %s31, 3
      %p545 = pnand %p543, %p544
      %p546 = pneg %p545
      // Predicated region
      $region85: #{tpu_custom_call.1} parent=5 // pred_check
        _
      $region86: #{tpu_custom_call.1} parent=5 // pred_check_branch
        %548 = sbr.rel (%p545) target = $region88
      $region87: #{tpu_custom_call.1} parent=5 // pred_region
        %s549 = ssub.s32 %s31, 1
        %s550 = smul.u32 2, %s36
        %p551 = scmp.lt.s32.totalorder %s550, 3
        %s552 = scalar_select %p551, %s550, 3
        %s553 = smul.addr %s552, 4
        %s554 = scalar_lea.vmem %s0, %s553
        %p555 = pneg %p57
        %p556 = pneg %p54
        %s557 = smul.u32 2, %s36
        %p558 = scmp.lt.s32.totalorder %s557, 3
        %s559 = scalar_select %p558, %s557, 3
        %s560 = smul.addr %s559, 4
        %s561 = scalar_lea.vmem %s1, %s560
        %p562 = pneg %p83
        %p563 = pneg %p80
        %s564 = smul.u32 2, %s36
        %p565 = scmp.lt.s32.totalorder %s564, 3
        %s566 = scalar_select %p565, %s564, 3
        %s567 = smul.addr %s566, 8
        %s568 = scalar_lea.vmem %s2, %s567
        %p569 = pneg %p109
        %p570 = pneg %p106
        %p571 = pneg %p130
        %p572 = pneg %p127
        %p573 = pneg %p151
        %p574 = pneg %p148
        %p575 = pneg %p172
        %p576 = pneg %p169
        %p577 = pneg %p193
        %p578 = pneg %p190
        %p579 = pneg %p214
        %p580 = pneg %p211
        %p581 = pneg %p235
        %p582 = pneg %p232
        %p583 = pneg %p256
        %p584 = pneg %p253
        %p585 = pneg %p277
        %p586 = pneg %p274
        %p587 = pneg %p298
        %p588 = pneg %p295
        %p589 = pneg %p319
        %p590 = pneg %p316
        %p591 = pneg %p340
        %p592 = pneg %p337
        %p593 = pneg %p361
        %p594 = pneg %p358
        %p595 = pneg %p382
        %p596 = pneg %p379
        %p597 = pneg %p403
        %p598 = pneg %p400
        %p599 = pneg %p429
        %p600 = pneg %p426
        %s601 = sand.u32 %s416, 1
        %s602 = scalar_lea.sflag [#allocation3], %s601
        %s603 = sand.u32 %s416, 1
        %s604 = smul.addr %s603, 16
        %s605 = scalar_lea.vmem [#allocation2], %s604
        %p606 = pneg %p455
        %p607 = pneg %p452
        %s608 = sand.u32 %s442, 1
        %s609 = scalar_lea.sflag [#allocation5], %s608
        %s610 = sand.u32 %s442, 1
        %s611 = smul.addr %s610, 16
        %s612 = scalar_lea.vmem [#allocation4], %s611
        %s613 = smul.u32 2, %s36
        %p614 = scmp.lt.s32.totalorder %s613, 3
        %s615 = scalar_select %p614, %s613, 3
        %s616 = smul.addr %s615, 4
        %s617 = scalar_lea.vmem %s0, %s616
        %s618 = smul.u32 2, %s36
        %s619 = smul.u32 2, %s36
        %p620 = scmp.lt.s32.totalorder %s619, 3
        %s621 = scalar_select %p620, %s619, 3
        %s622 = smul.addr %s621, 4
        %s623 = scalar_lea.vmem %s1, %s622
        %s624 = smul.u32 2, %s36
        %s625 = smul.u32 2, %s36
        %p626 = scmp.lt.s32.totalorder %s625, 3
        %s627 = scalar_select %p626, %s625, 3
        %s628 = smul.addr %s627, 8
        %s629 = scalar_lea.vmem %s2, %s628
        %s630 = smul.u32 2, %s36
        %s631 = smul.u32 2, %s36
        %s632 = smul.u32 2, %s36
        %v634 = vld [vmem:[%s623] sm:$0xf]
        %v635 = vld [vmem:[%s623 + $0x4] sm:$0xf]
        %v636 = vld [vmem:[%s617] sm:$0xf]
        %v637 = vld [vmem:[%s617 + $0x4] sm:$0xf]
        %v638 = vld [vmem:[%s3] sm:$0xff]
        %v639 = vld [vmem:[%s3 + $0x8] sm:$0xff]
        %v640 = vld [vmem:[%s3 + $0x10] sm:$0xff]
        %v641 = vld [vmem:[%s3 + $0x18] sm:$0xf]
        %v642 = vld [vmem:[%s3 + $0x1c] sm:$0xff]
        %v643 = vld [vmem:[%s3 + $0x24] sm:$0xff]
        %v644 = vld [vmem:[%s3 + $0x2c] sm:$0xff]
        %v645 = vld [vmem:[%s3 + $0x34] sm:$0xf]
        %v646 = vld [vmem:[%s3 + $0x38] sm:$0xff]
        %v647 = vld [vmem:[%s3 + $0x40] sm:$0xff]
        %v648 = vld [vmem:[%s3 + $0x48] sm:$0xff]
        %v649 = vld [vmem:[%s3 + $0x50] sm:$0xf]
        %v650 = vld [vmem:[%s3 + $0x54] sm:$0xff]
        %v651 = vld [vmem:[%s3 + $0x5c] sm:$0xff]
        %v652 = vld [vmem:[%s3 + $0x64] sm:$0xff]
        %v653 = vld [vmem:[%s3 + $0x6c] sm:$0xf]
        %v654 = vld [vmem:[%s3 + $0x70] sm:$0xff]
        %v655 = vld [vmem:[%s3 + $0x78] sm:$0xff]
        %v656 = vld [vmem:[%s3 + $0x80] sm:$0xff]
        %v657 = vld [vmem:[%s3 + $0x88] sm:$0xf]
        %v658 = vld [vmem:[%s3 + $0x8c] sm:$0xff]
        %v659 = vld [vmem:[%s3 + $0x94] sm:$0xff]
        %v660 = vld [vmem:[%s3 + $0x9c] sm:$0xff]
        %v661 = vld [vmem:[%s3 + $0xa4] sm:$0xf]
        %v662 = vld [vmem:[%s3 + $0xa8] sm:$0xff]
        %v663 = vld [vmem:[%s3 + $0xb0] sm:$0xff]
        %v664 = vld [vmem:[%s3 + $0xb8] sm:$0xff]
        %v665 = vld [vmem:[%s3 + $0xc0] sm:$0xf]
        %v666 = vld [vmem:[%s3 + $0xc4] sm:$0xff]
        %v667 = vld [vmem:[%s3 + $0xcc] sm:$0xff]
        %v668 = vld [vmem:[%s3 + $0xd4] sm:$0xff]
        %v669 = vld [vmem:[%s3 + $0xdc] sm:$0xf]
        %v670 = vld [vmem:[%s3 + $0xe0] sm:$0xff]
        %v671 = vld [vmem:[%s3 + $0xe8] sm:$0xff]
        %v672 = vld [vmem:[%s3 + $0xf0] sm:$0xff]
        %v673 = vld [vmem:[%s3 + $0xf8] sm:$0xf]
        %v674 = vld [vmem:[%s3 + $0xfc] sm:$0xff]
        %v675 = vld [vmem:[%s3 + $0x104] sm:$0xff]
        %v676 = vld [vmem:[%s3 + $0x10c] sm:$0xff]
        %v677 = vld [vmem:[%s3 + $0x114] sm:$0xf]
        %v678 = vld [vmem:[%s3 + $0x118] sm:$0xff]
        %v679 = vld [vmem:[%s3 + $0x120] sm:$0xff]
        %v680 = vld [vmem:[%s3 + $0x128] sm:$0xff]
        %v681 = vld [vmem:[%s3 + $0x130] sm:$0xf]
        %v682 = vld [vmem:[%s3 + $0x134] sm:$0xff]
        %v683 = vld [vmem:[%s3 + $0x13c] sm:$0xff]
        %v684 = vld [vmem:[%s3 + $0x144] sm:$0xff]
        %v685 = vld [vmem:[%s3 + $0x14c] sm:$0xf]
        %v686 = vld [vmem:[%s3 + $0x150] sm:$0xff]
        %v687 = vld [vmem:[%s3 + $0x158] sm:$0xff]
        %v688 = vld [vmem:[%s3 + $0x160] sm:$0xff]
        %v689 = vld [vmem:[%s3 + $0x168] sm:$0xf]
        %v690 = vld [vmem:[%s3 + $0x16c] sm:$0xff]
        %v691 = vld [vmem:[%s3 + $0x174] sm:$0xff]
        %v692 = vld [vmem:[%s3 + $0x17c] sm:$0xff]
        %v693 = vld [vmem:[%s3 + $0x184] sm:$0xf]
        %v694 = vld [vmem:[%s3 + $0x188] sm:$0xff]
        %v695 = vld [vmem:[%s3 + $0x190] sm:$0xff]
        %v696 = vld [vmem:[%s3 + $0x198] sm:$0xff]
        %v697 = vld [vmem:[%s3 + $0x1a0] sm:$0xf]
        %v698 = vld [vmem:[%s3 + $0x1a4] sm:$0xff]
        %v699 = vld [vmem:[%s3 + $0x1ac] sm:$0xff]
        %v700 = vld [vmem:[%s3 + $0x1b4] sm:$0xff]
        %v701 = vld [vmem:[%s3 + $0x1bc] sm:$0xf]
        %v702 = vld [vmem:[%s4] sm:$0xff]
        %v703 = vld [vmem:[%s4 + $0x8] sm:$0xff]
        %v704 = vld [vmem:[%s4 + $0x10] sm:$0xff]
        %v705 = vld [vmem:[%s4 + $0x18] sm:$0xf]
        %v708 = vunpack.c.l.b16 %v634
        %v709 = vunpack.c.l.b16 %v635
        %v710 = vpack.c.b16 %v709, %v708
        %v715 = vunpack.c.l.b16 %v702
        %v716 = vunpack.c.h.b16 %v702
        %v717 = vunpack.c.l.b16 %v703
        %v718 = vunpack.c.h.b16 %v703
        %v719 = vunpack.c.l.b16 %v704
        %v720 = vunpack.c.h.b16 %v704
        %v721 = vunpack.c.l.b16 %v705
        %v722 = vpack.c.b16 %v715, %v715
        %v723 = vpack.c.b16 %v716, %v716
        %v724 = vpack.c.b16 %v717, %v717
        %v725 = vpack.c.b16 %v718, %v718
        %v726 = vpack.c.b16 %v719, %v719
        %v727 = vpack.c.b16 %v720, %v720
        %v728 = vpack.c.b16 %v721, %v721
        %vm729 = vcmask 64512
        %v731 = vsel %vm729, %v710, 0
        %vm733 = vcmask 1043456
        %v735 = vsel %vm733, %v722, 0
        %v738 = vsel %vm733, %v723, 0
        %v741 = vsel %vm733, %v724, 0
        %v744 = vsel %vm733, %v725, 0
        %v747 = vsel %vm733, %v726, 0
        %v750 = vsel %vm733, %v727, 0
        %v753 = vsel %vm733, %v728, 0
        %755 = vmatprep.subr.bf16.mxu0 0
        %756 = vmatpush1.bf16.msra.mxu0 0
        %757 = vmatprep.subr.bf16.mxu0 0
        %758 = vmatpush1.bf16.msra.mxu0 0
        %759 = vmatprep.subr.bf16.mxu0 0
        %760 = vmatpush1.bf16.msra.mxu0 0
        %761 = vmatprep.subr.bf16.mxu0 0
        %762 = vmatpush1.bf16.msra.mxu0 0
        %763 = vmatprep.subr.bf16.mxu0 0
        %764 = vmatpush1.bf16.msra.mxu0 0
        %765 = vmatprep.subr.bf16.mxu0 0
        %766 = vmatpush1.bf16.msra.mxu0 0
        %767 = vmatprep.subr.bf16.mxu0 0
        %768 = vmatpush1.bf16.msra.mxu0 0
        %769 = vmatprep.subr.bf16.mxu0 %v738
        %770 = vmatpush1.bf16.msra.mxu0 %v735
        %771 = vmatprep.subr.bf16.mxu0 0
        %772 = vmatpush2.bf16.msra.mxu0 0
        %773 = vmatprep.subr.bf16.mxu0 0
        %774 = vmatpush2.bf16.msra.mxu0 0
        %775 = vmatprep.subr.bf16.mxu0 0
        %776 = vmatpush2.bf16.msra.mxu0 0
        %777 = vmatprep.subr.bf16.mxu0 0
        %778 = vmatpush2.bf16.msra.mxu0 0
        %779 = vmatprep.subr.bf16.mxu0 0
        %780 = vmatpush2.bf16.msra.mxu0 0
        %781 = vmatprep.subr.bf16.mxu0 0
        %782 = vmatpush2.bf16.msra.mxu0 0
        %783 = vmatprep.subr.bf16.mxu0 0
        %784 = vmatpush2.bf16.msra.mxu0 0
        %785 = vmatprep.subr.bf16.mxu0 0
        %786 = vmatpush2.bf16.msra.mxu0 0
        %787 = vmatprep.mubr.bf16.mxu0 0
        %788 = vmatmul.mubr.bf16.gmra.mxu0 %v731
        %v789 = vpop.f32.mrf.mxu0
        %v790 = vadd.f32 0.0, %v789
        %v791 = vpop.f32.mrf.mxu0
        %v792 = vadd.f32 0.0, %v791
        %v793 = vpop.f32.mrf.mxu0
        %v794 = vadd.f32 0.0, %v793
        %v795 = vpop.f32.mrf.mxu0
        %v796 = vadd.f32 0.0, %v795
        %797 = vdwg.mxu0
        %798 = vmatprep.subr.bf16.mxu0 0
        %799 = vmatpush1.bf16.msra.mxu0 0
        %800 = vmatprep.subr.bf16.mxu0 0
        %801 = vmatpush1.bf16.msra.mxu0 0
        %802 = vmatprep.subr.bf16.mxu0 0
        %803 = vmatpush1.bf16.msra.mxu0 0
        %804 = vmatprep.subr.bf16.mxu0 0
        %805 = vmatpush1.bf16.msra.mxu0 0
        %806 = vmatprep.subr.bf16.mxu0 0
        %807 = vmatpush1.bf16.msra.mxu0 0
        %808 = vmatprep.subr.bf16.mxu0 0
        %809 = vmatpush1.bf16.msra.mxu0 0
        %810 = vmatprep.subr.bf16.mxu0 0
        %811 = vmatpush1.bf16.msra.mxu0 0
        %812 = vmatprep.subr.bf16.mxu0 %v744
        %813 = vmatpush1.bf16.msra.mxu0 %v741
        %814 = vmatprep.subr.bf16.mxu0 0
        %815 = vmatpush2.bf16.msra.mxu0 0
        %816 = vmatprep.subr.bf16.mxu0 0
        %817 = vmatpush2.bf16.msra.mxu0 0
        %818 = vmatprep.subr.bf16.mxu0 0
        %819 = vmatpush2.bf16.msra.mxu0 0
        %820 = vmatprep.subr.bf16.mxu0 0
        %821 = vmatpush2.bf16.msra.mxu0 0
        %822 = vmatprep.subr.bf16.mxu0 0
        %823 = vmatpush2.bf16.msra.mxu0 0
        %824 = vmatprep.subr.bf16.mxu0 0
        %825 = vmatpush2.bf16.msra.mxu0 0
        %826 = vmatprep.subr.bf16.mxu0 0
        %827 = vmatpush2.bf16.msra.mxu0 0
        %828 = vmatprep.subr.bf16.mxu0 0
        %829 = vmatpush2.bf16.msra.mxu0 0
        %830 = vmatprep.mubr.bf16.mxu0 0
        %831 = vmatmul.mubr.bf16.gmra.mxu0 %v731
        %v832 = vpop.f32.mrf.mxu0
        %v833 = vadd.f32 0.0, %v832
        %v834 = vpop.f32.mrf.mxu0
        %v835 = vadd.f32 0.0, %v834
        %v836 = vpop.f32.mrf.mxu0
        %v837 = vadd.f32 0.0, %v836
        %v838 = vpop.f32.mrf.mxu0
        %v839 = vadd.f32 0.0, %v838
        %840 = vdwg.mxu0
        %841 = vmatprep.subr.bf16.mxu0 0
        %842 = vmatpush1.bf16.msra.mxu0 0
        %843 = vmatprep.subr.bf16.mxu0 0
        %844 = vmatpush1.bf16.msra.mxu0 0
        %845 = vmatprep.subr.bf16.mxu0 0
        %846 = vmatpush1.bf16.msra.mxu0 0
        %847 = vmatprep.subr.bf16.mxu0 0
        %848 = vmatpush1.bf16.msra.mxu0 0
        %849 = vmatprep.subr.bf16.mxu0 0
        %850 = vmatpush1.bf16.msra.mxu0 0
        %851 = vmatprep.subr.bf16.mxu0 0
        %852 = vmatpush1.bf16.msra.mxu0 0
        %853 = vmatprep.subr.bf16.mxu0 0
        %854 = vmatpush1.bf16.msra.mxu0 0
        %855 = vmatprep.subr.bf16.mxu0 %v750
        %856 = vmatpush1.bf16.msra.mxu0 %v747
        %857 = vmatprep.subr.bf16.mxu0 0
        %858 = vmatpush2.bf16.msra.mxu0 0
        %859 = vmatprep.subr.bf16.mxu0 0
        %860 = vmatpush2.bf16.msra.mxu0 0
        %861 = vmatprep.subr.bf16.mxu0 0
        %862 = vmatpush2.bf16.msra.mxu0 0
        %863 = vmatprep.subr.bf16.mxu0 0
        %864 = vmatpush2.bf16.msra.mxu0 0
        %865 = vmatprep.subr.bf16.mxu0 0
        %866 = vmatpush2.bf16.msra.mxu0 0
        %867 = vmatprep.subr.bf16.mxu0 0
        %868 = vmatpush2.bf16.msra.mxu0 0
        %869 = vmatprep.subr.bf16.mxu0 0
        %870 = vmatpush2.bf16.msra.mxu0 0
        %871 = vmatprep.subr.bf16.mxu0 0
        %872 = vmatpush2.bf16.msra.mxu0 0
        %873 = vmatprep.mubr.bf16.mxu0 0
        %874 = vmatmul.mubr.bf16.gmra.mxu0 %v731
        %v875 = vpop.f32.mrf.mxu0
        %v876 = vadd.f32 0.0, %v875
        %v877 = vpop.f32.mrf.mxu0
        %v878 = vadd.f32 0.0, %v877
        %v879 = vpop.f32.mrf.mxu0
        %v880 = vadd.f32 0.0, %v879
        %v881 = vpop.f32.mrf.mxu0
        %v882 = vadd.f32 0.0, %v881
        %883 = vdwg.mxu0
        %884 = vmatprep.subr.bf16.mxu0 0
        %885 = vmatpush1.bf16.msra.mxu0 0
        %886 = vmatprep.subr.bf16.mxu0 0
        %887 = vmatpush1.bf16.msra.mxu0 0
        %888 = vmatprep.subr.bf16.mxu0 0
        %889 = vmatpush1.bf16.msra.mxu0 0
        %890 = vmatprep.subr.bf16.mxu0 0
        %891 = vmatpush1.bf16.msra.mxu0 0
        %892 = vmatprep.subr.bf16.mxu0 0
        %893 = vmatpush1.bf16.msra.mxu0 0
        %894 = vmatprep.subr.bf16.mxu0 0
        %895 = vmatpush1.bf16.msra.mxu0 0
        %896 = vmatprep.subr.bf16.mxu0 0
        %897 = vmatpush1.bf16.msra.mxu0 0
        %898 = vmatprep.subr.bf16.mxu0 0
        %899 = vmatpush1.bf16.msra.mxu0 %v753
        %900 = vmatprep.subr.bf16.mxu0 0
        %901 = vmatpush2.bf16.msra.mxu0 0
        %902 = vmatprep.subr.bf16.mxu0 0
        %903 = vmatpush2.bf16.msra.mxu0 0
        %904 = vmatprep.subr.bf16.mxu0 0
        %905 = vmatpush2.bf16.msra.mxu0 0
        %906 = vmatprep.subr.bf16.mxu0 0
        %907 = vmatpush2.bf16.msra.mxu0 0
        %908 = vmatprep.subr.bf16.mxu0 0
        %909 = vmatpush2.bf16.msra.mxu0 0
        %910 = vmatprep.subr.bf16.mxu0 0
        %911 = vmatpush2.bf16.msra.mxu0 0
        %912 = vmatprep.subr.bf16.mxu0 0
        %913 = vmatpush2.bf16.msra.mxu0 0
        %914 = vmatprep.subr.bf16.mxu0 0
        %915 = vmatpush2.bf16.msra.mxu0 0
        %916 = vmatprep.mubr.bf16.mxu0 0
        %917 = vmatmul.mubr.bf16.gmra.mxu0 %v731
        %v918 = vpop.f32.mrf.mxu0
        %v919 = vadd.f32 0.0, %v918
        %v920 = vpop.f32.mrf.mxu0
        %v921 = vpop.f32.mrf.mxu0
        %v922 = vadd.f32 0.0, %v921
        %v923 = vpop.f32.mrf.mxu0
        %924 = vdwg.mxu0
        %v927 = vunpack.c.l.b16 %v636
        %v928 = vunpack.c.l.b16 %v637
        %v929 = vpack.c.b16 %v928, %v927
        %v995 = vunpack.c.l.b16 %v638
        %v996 = vunpack.c.h.b16 %v638
        %v997 = vunpack.c.l.b16 %v639
        %v998 = vunpack.c.h.b16 %v639
        %v999 = vunpack.c.l.b16 %v640
        %v1000 = vunpack.c.h.b16 %v640
        %v1001 = vunpack.c.l.b16 %v641
        %v1002 = vunpack.c.l.b16 %v642
        %v1003 = vunpack.c.h.b16 %v642
        %v1004 = vunpack.c.l.b16 %v643
        %v1005 = vunpack.c.h.b16 %v643
        %v1006 = vunpack.c.l.b16 %v644
        %v1007 = vunpack.c.h.b16 %v644
        %v1008 = vunpack.c.l.b16 %v645
        %v1009 = vunpack.c.l.b16 %v646
        %v1010 = vunpack.c.h.b16 %v646
        %v1011 = vunpack.c.l.b16 %v647
        %v1012 = vunpack.c.h.b16 %v647
        %v1013 = vunpack.c.l.b16 %v648
        %v1014 = vunpack.c.h.b16 %v648
        %v1015 = vunpack.c.l.b16 %v649
        %v1016 = vunpack.c.l.b16 %v650
        %v1017 = vunpack.c.h.b16 %v650
        %v1018 = vunpack.c.l.b16 %v651
        %v1019 = vunpack.c.h.b16 %v651
        %v1020 = vunpack.c.l.b16 %v652
        %v1021 = vunpack.c.h.b16 %v652
        %v1022 = vunpack.c.l.b16 %v653
        %v1023 = vunpack.c.l.b16 %v654
        %v1024 = vunpack.c.h.b16 %v654
        %v1025 = vunpack.c.l.b16 %v655
        %v1026 = vunpack.c.h.b16 %v655
        %v1027 = vunpack.c.l.b16 %v656
        %v1028 = vunpack.c.h.b16 %v656
        %v1029 = vunpack.c.l.b16 %v657
        %v1030 = vunpack.c.l.b16 %v658
        %v1031 = vunpack.c.h.b16 %v658
        %v1032 = vunpack.c.l.b16 %v659
        %v1033 = vunpack.c.h.b16 %v659
        %v1034 = vunpack.c.l.b16 %v660
        %v1035 = vunpack.c.h.b16 %v660
        %v1036 = vunpack.c.l.b16 %v661
        %v1037 = vunpack.c.l.b16 %v662
        %v1038 = vunpack.c.h.b16 %v662
        %v1039 = vunpack.c.l.b16 %v663
        %v1040 = vunpack.c.h.b16 %v663
        %v1041 = vunpack.c.l.b16 %v664
        %v1042 = vunpack.c.h.b16 %v664
        %v1043 = vunpack.c.l.b16 %v665
        %v1044 = vunpack.c.l.b16 %v666
        %v1045 = vunpack.c.h.b16 %v666
        %v1046 = vunpack.c.l.b16 %v667
        %v1047 = vunpack.c.h.b16 %v667
        %v1048 = vunpack.c.l.b16 %v668
        %v1049 = vunpack.c.h.b16 %v668
        %v1050 = vunpack.c.l.b16 %v669
        %v1051 = vunpack.c.l.b16 %v670
        %v1052 = vunpack.c.h.b16 %v670
        %v1053 = vunpack.c.l.b16 %v671
        %v1054 = vunpack.c.h.b16 %v671
        %v1055 = vunpack.c.l.b16 %v672
        %v1056 = vunpack.c.h.b16 %v672
        %v1057 = vunpack.c.l.b16 %v673
        %v1058 = vunpack.c.l.b16 %v674
        %v1059 = vunpack.c.h.b16 %v674
        %v1060 = vunpack.c.l.b16 %v675
        %v1061 = vunpack.c.h.b16 %v675
        %v1062 = vunpack.c.l.b16 %v676
        %v1063 = vunpack.c.h.b16 %v676
        %v1064 = vunpack.c.l.b16 %v677
        %v1065 = vunpack.c.l.b16 %v678
        %v1066 = vunpack.c.h.b16 %v678
        %v1067 = vunpack.c.l.b16 %v679
        %v1068 = vunpack.c.h.b16 %v679
        %v1069 = vunpack.c.l.b16 %v680
        %v1070 = vunpack.c.h.b16 %v680
        %v1071 = vunpack.c.l.b16 %v681
        %v1072 = vunpack.c.l.b16 %v682
        %v1073 = vunpack.c.h.b16 %v682
        %v1074 = vunpack.c.l.b16 %v683
        %v1075 = vunpack.c.h.b16 %v683
        %v1076 = vunpack.c.l.b16 %v684
        %v1077 = vunpack.c.h.b16 %v684
        %v1078 = vunpack.c.l.b16 %v685
        %v1079 = vunpack.c.l.b16 %v686
        %v1080 = vunpack.c.h.b16 %v686
        %v1081 = vunpack.c.l.b16 %v687
        %v1082 = vunpack.c.h.b16 %v687
        %v1083 = vunpack.c.l.b16 %v688
        %v1084 = vunpack.c.h.b16 %v688
        %v1085 = vunpack.c.l.b16 %v689
        %v1086 = vunpack.c.l.b16 %v690
        %v1087 = vunpack.c.h.b16 %v690
        %v1088 = vunpack.c.l.b16 %v691
        %v1089 = vunpack.c.h.b16 %v691
        %v1090 = vunpack.c.l.b16 %v692
        %v1091 = vunpack.c.h.b16 %v692
        %v1092 = vunpack.c.l.b16 %v693
        %v1093 = vunpack.c.l.b16 %v694
        %v1094 = vunpack.c.h.b16 %v694
        %v1095 = vunpack.c.l.b16 %v695
        %v1096 = vunpack.c.h.b16 %v695
        %v1097 = vunpack.c.l.b16 %v696
        %v1098 = vunpack.c.h.b16 %v696
        %v1099 = vunpack.c.l.b16 %v697
        %v1100 = vunpack.c.l.b16 %v698
        %v1101 = vunpack.c.h.b16 %v698
        %v1102 = vunpack.c.l.b16 %v699
        %v1103 = vunpack.c.h.b16 %v699
        %v1104 = vunpack.c.l.b16 %v700
        %v1105 = vunpack.c.h.b16 %v700
        %v1106 = vunpack.c.l.b16 %v701
        %v1107 = vpack.c.b16 %v1002, %v995
        %v1108 = vpack.c.b16 %v1003, %v996
        %v1109 = vpack.c.b16 %v1004, %v997
        %v1110 = vpack.c.b16 %v1005, %v998
        %v1111 = vpack.c.b16 %v1006, %v999
        %v1112 = vpack.c.b16 %v1007, %v1000
        %v1113 = vpack.c.b16 %v1008, %v1001
        %v1114 = vpack.c.b16 %v1016, %v1009
        %v1115 = vpack.c.b16 %v1017, %v1010
        %v1116 = vpack.c.b16 %v1018, %v1011
        %v1117 = vpack.c.b16 %v1019, %v1012
        %v1118 = vpack.c.b16 %v1020, %v1013
        %v1119 = vpack.c.b16 %v1021, %v1014
        %v1120 = vpack.c.b16 %v1022, %v1015
        %v1121 = vpack.c.b16 %v1030, %v1023
        %v1122 = vpack.c.b16 %v1031, %v1024
        %v1123 = vpack.c.b16 %v1032, %v1025
        %v1124 = vpack.c.b16 %v1033, %v1026
        %v1125 = vpack.c.b16 %v1034, %v1027
        %v1126 = vpack.c.b16 %v1035, %v1028
        %v1127 = vpack.c.b16 %v1036, %v1029
        %v1128 = vpack.c.b16 %v1044, %v1037
        %v1129 = vpack.c.b16 %v1045, %v1038
        %v1130 = vpack.c.b16 %v1046, %v1039
        %v1131 = vpack.c.b16 %v1047, %v1040
        %v1132 = vpack.c.b16 %v1048, %v1041
        %v1133 = vpack.c.b16 %v1049, %v1042
        %v1134 = vpack.c.b16 %v1050, %v1043
        %v1135 = vpack.c.b16 %v1058, %v1051
        %v1136 = vpack.c.b16 %v1059, %v1052
        %v1137 = vpack.c.b16 %v1060, %v1053
        %v1138 = vpack.c.b16 %v1061, %v1054
        %v1139 = vpack.c.b16 %v1062, %v1055
        %v1140 = vpack.c.b16 %v1063, %v1056
        %v1141 = vpack.c.b16 %v1064, %v1057
        %v1142 = vpack.c.b16 %v1072, %v1065
        %v1143 = vpack.c.b16 %v1073, %v1066
        %v1144 = vpack.c.b16 %v1074, %v1067
        %v1145 = vpack.c.b16 %v1075, %v1068
        %v1146 = vpack.c.b16 %v1076, %v1069
        %v1147 = vpack.c.b16 %v1077, %v1070
        %v1148 = vpack.c.b16 %v1078, %v1071
        %v1149 = vpack.c.b16 %v1086, %v1079
        %v1150 = vpack.c.b16 %v1087, %v1080
        %v1151 = vpack.c.b16 %v1088, %v1081
        %v1152 = vpack.c.b16 %v1089, %v1082
        %v1153 = vpack.c.b16 %v1090, %v1083
        %v1154 = vpack.c.b16 %v1091, %v1084
        %v1155 = vpack.c.b16 %v1092, %v1085
        %v1156 = vpack.c.b16 %v1100, %v1093
        %v1157 = vpack.c.b16 %v1101, %v1094
        %v1158 = vpack.c.b16 %v1102, %v1095
        %v1159 = vpack.c.b16 %v1103, %v1096
        %v1160 = vpack.c.b16 %v1104, %v1097
        %v1161 = vpack.c.b16 %v1105, %v1098
        %v1162 = vpack.c.b16 %v1106, %v1099
        %1219 = vmatprep.subr.bf16.mxu0 %v1157
        %1220 = vmatpush1.bf16.msra.mxu0 %v1156
        %1221 = vmatprep.subr.bf16.mxu0 %v1150
        %1222 = vmatpush1.bf16.msra.mxu0 %v1149
        %1223 = vmatprep.subr.bf16.mxu0 %v1143
        %1224 = vmatpush1.bf16.msra.mxu0 %v1142
        %1225 = vmatprep.subr.bf16.mxu0 %v1136
        %1226 = vmatpush1.bf16.msra.mxu0 %v1135
        %1227 = vmatprep.subr.bf16.mxu0 %v1129
        %1228 = vmatpush1.bf16.msra.mxu0 %v1128
        %1229 = vmatprep.subr.bf16.mxu0 %v1122
        %1230 = vmatpush1.bf16.msra.mxu0 %v1121
        %1231 = vmatprep.subr.bf16.mxu0 %v1115
        %1232 = vmatpush1.bf16.msra.mxu0 %v1114
        %1233 = vmatprep.subr.bf16.mxu0 %v1108
        %1234 = vmatpush1.bf16.msra.mxu0 %v1107
        %1235 = vmatprep.subr.bf16.mxu0 0
        %1236 = vmatpush2.bf16.msra.mxu0 0
        %1237 = vmatprep.subr.bf16.mxu0 0
        %1238 = vmatpush2.bf16.msra.mxu0 0
        %1239 = vmatprep.subr.bf16.mxu0 0
        %1240 = vmatpush2.bf16.msra.mxu0 0
        %1241 = vmatprep.subr.bf16.mxu0 0
        %1242 = vmatpush2.bf16.msra.mxu0 0
        %1243 = vmatprep.subr.bf16.mxu0 0
        %1244 = vmatpush2.bf16.msra.mxu0 0
        %1245 = vmatprep.subr.bf16.mxu0 0
        %1246 = vmatpush2.bf16.msra.mxu0 0
        %1247 = vmatprep.subr.bf16.mxu0 0
        %1248 = vmatpush2.bf16.msra.mxu0 0
        %1249 = vmatprep.subr.bf16.mxu0 0
        %1250 = vmatpush2.bf16.msra.mxu0 0
        %1251 = vmatprep.mubr.bf16.mxu0 0
        %1252 = vmatmul.mubr.bf16.gmra.mxu0 %v929
        %v1253 = vpop.f32.mrf.mxu0
        %v1254 = vadd.f32 %v790, %v1253
        %v1255 = vpop.f32.mrf.mxu0
        %v1256 = vadd.f32 %v792, %v1255
        %v1257 = vpop.f32.mrf.mxu0
        %v1258 = vadd.f32 %v794, %v1257
        %v1259 = vpop.f32.mrf.mxu0
        %v1260 = vadd.f32 %v796, %v1259
        %1261 = vdwg.mxu0
        %1262 = vmatprep.subr.bf16.mxu0 %v1159
        %1263 = vmatpush1.bf16.msra.mxu0 %v1158
        %1264 = vmatprep.subr.bf16.mxu0 %v1152
        %1265 = vmatpush1.bf16.msra.mxu0 %v1151
        %1266 = vmatprep.subr.bf16.mxu0 %v1145
        %1267 = vmatpush1.bf16.msra.mxu0 %v1144
        %1268 = vmatprep.subr.bf16.mxu0 %v1138
        %1269 = vmatpush1.bf16.msra.mxu0 %v1137
        %1270 = vmatprep.subr.bf16.mxu0 %v1131
        %1271 = vmatpush1.bf16.msra.mxu0 %v1130
        %1272 = vmatprep.subr.bf16.mxu0 %v1124
        %1273 = vmatpush1.bf16.msra.mxu0 %v1123
        %1274 = vmatprep.subr.bf16.mxu0 %v1117
        %1275 = vmatpush1.bf16.msra.mxu0 %v1116
        %1276 = vmatprep.subr.bf16.mxu0 %v1110
        %1277 = vmatpush1.bf16.msra.mxu0 %v1109
        %1278 = vmatprep.subr.bf16.mxu0 0
        %1279 = vmatpush2.bf16.msra.mxu0 0
        %1280 = vmatprep.subr.bf16.mxu0 0
        %1281 = vmatpush2.bf16.msra.mxu0 0
        %1282 = vmatprep.subr.bf16.mxu0 0
        %1283 = vmatpush2.bf16.msra.mxu0 0
        %1284 = vmatprep.subr.bf16.mxu0 0
        %1285 = vmatpush2.bf16.msra.mxu0 0
        %1286 = vmatprep.subr.bf16.mxu0 0
        %1287 = vmatpush2.bf16.msra.mxu0 0
        %1288 = vmatprep.subr.bf16.mxu0 0
        %1289 = vmatpush2.bf16.msra.mxu0 0
        %1290 = vmatprep.subr.bf16.mxu0 0
        %1291 = vmatpush2.bf16.msra.mxu0 0
        %1292 = vmatprep.subr.bf16.mxu0 0
        %1293 = vmatpush2.bf16.msra.mxu0 0
        %1294 = vmatprep.mubr.bf16.mxu0 0
        %1295 = vmatmul.mubr.bf16.gmra.mxu0 %v929
        %v1296 = vpop.f32.mrf.mxu0
        %v1297 = vadd.f32 %v833, %v1296
        %v1298 = vpop.f32.mrf.mxu0
        %v1299 = vadd.f32 %v835, %v1298
        %v1300 = vpop.f32.mrf.mxu0
        %v1301 = vadd.f32 %v837, %v1300
        %v1302 = vpop.f32.mrf.mxu0
        %v1303 = vadd.f32 %v839, %v1302
        %1304 = vdwg.mxu0
        %1305 = vmatprep.subr.bf16.mxu0 %v1161
        %1306 = vmatpush1.bf16.msra.mxu0 %v1160
        %1307 = vmatprep.subr.bf16.mxu0 %v1154
        %1308 = vmatpush1.bf16.msra.mxu0 %v1153
        %1309 = vmatprep.subr.bf16.mxu0 %v1147
        %1310 = vmatpush1.bf16.msra.mxu0 %v1146
        %1311 = vmatprep.subr.bf16.mxu0 %v1140
        %1312 = vmatpush1.bf16.msra.mxu0 %v1139
        %1313 = vmatprep.subr.bf16.mxu0 %v1133
        %1314 = vmatpush1.bf16.msra.mxu0 %v1132
        %1315 = vmatprep.subr.bf16.mxu0 %v1126
        %1316 = vmatpush1.bf16.msra.mxu0 %v1125
        %1317 = vmatprep.subr.bf16.mxu0 %v1119
        %1318 = vmatpush1.bf16.msra.mxu0 %v1118
        %1319 = vmatprep.subr.bf16.mxu0 %v1112
        %1320 = vmatpush1.bf16.msra.mxu0 %v1111
        %1321 = vmatprep.subr.bf16.mxu0 0
        %1322 = vmatpush2.bf16.msra.mxu0 0
        %1323 = vmatprep.subr.bf16.mxu0 0
        %1324 = vmatpush2.bf16.msra.mxu0 0
        %1325 = vmatprep.subr.bf16.mxu0 0
        %1326 = vmatpush2.bf16.msra.mxu0 0
        %1327 = vmatprep.subr.bf16.mxu0 0
        %1328 = vmatpush2.bf16.msra.mxu0 0
        %1329 = vmatprep.subr.bf16.mxu0 0
        %1330 = vmatpush2.bf16.msra.mxu0 0
        %1331 = vmatprep.subr.bf16.mxu0 0
        %1332 = vmatpush2.bf16.msra.mxu0 0
        %1333 = vmatprep.subr.bf16.mxu0 0
        %1334 = vmatpush2.bf16.msra.mxu0 0
        %1335 = vmatprep.subr.bf16.mxu0 0
        %1336 = vmatpush2.bf16.msra.mxu0 0
        %1337 = vmatprep.mubr.bf16.mxu0 0
        %1338 = vmatmul.mubr.bf16.gmra.mxu0 %v929
        %v1339 = vpop.f32.mrf.mxu0
        %v1340 = vadd.f32 %v876, %v1339
        %v1341 = vpop.f32.mrf.mxu0
        %v1342 = vadd.f32 %v878, %v1341
        %v1343 = vpop.f32.mrf.mxu0
        %v1344 = vadd.f32 %v880, %v1343
        %v1345 = vpop.f32.mrf.mxu0
        %v1346 = vadd.f32 %v882, %v1345
        %1347 = vdwg.mxu0
        %1348 = vmatprep.subr.bf16.mxu0 0
        %1349 = vmatpush1.bf16.msra.mxu0 %v1162
        %1350 = vmatprep.subr.bf16.mxu0 0
        %1351 = vmatpush1.bf16.msra.mxu0 %v1155
        %1352 = vmatprep.subr.bf16.mxu0 0
        %1353 = vmatpush1.bf16.msra.mxu0 %v1148
        %1354 = vmatprep.subr.bf16.mxu0 0
        %1355 = vmatpush1.bf16.msra.mxu0 %v1141
        %1356 = vmatprep.subr.bf16.mxu0 0
        %1357 = vmatpush1.bf16.msra.mxu0 %v1134
        %1358 = vmatprep.subr.bf16.mxu0 0
        %1359 = vmatpush1.bf16.msra.mxu0 %v1127
        %1360 = vmatprep.subr.bf16.mxu0 0
        %1361 = vmatpush1.bf16.msra.mxu0 %v1120
        %1362 = vmatprep.subr.bf16.mxu0 0
        %1363 = vmatpush1.bf16.msra.mxu0 %v1113
        %1364 = vmatprep.subr.bf16.mxu0 0
        %1365 = vmatpush2.bf16.msra.mxu0 0
        %1366 = vmatprep.subr.bf16.mxu0 0
        %1367 = vmatpush2.bf16.msra.mxu0 0
        %1368 = vmatprep.subr.bf16.mxu0 0
        %1369 = vmatpush2.bf16.msra.mxu0 0
        %1370 = vmatprep.subr.bf16.mxu0 0
        %1371 = vmatpush2.bf16.msra.mxu0 0
        %1372 = vmatprep.subr.bf16.mxu0 0
        %1373 = vmatpush2.bf16.msra.mxu0 0
        %1374 = vmatprep.subr.bf16.mxu0 0
        %1375 = vmatpush2.bf16.msra.mxu0 0
        %1376 = vmatprep.subr.bf16.mxu0 0
        %1377 = vmatpush2.bf16.msra.mxu0 0
        %1378 = vmatprep.subr.bf16.mxu0 0
        %1379 = vmatpush2.bf16.msra.mxu0 0
        %1380 = vmatprep.mubr.bf16.mxu0 0
        %1381 = vmatmul.mubr.bf16.gmra.mxu0 %v929
        %v1382 = vpop.f32.mrf.mxu0
        %v1383 = vadd.f32 %v919, %v1382
        %v1384 = vpop.f32.mrf.mxu0
        %v1385 = vpop.f32.mrf.mxu0
        %v1386 = vadd.f32 %v922, %v1385
        %v1387 = vpop.f32.mrf.mxu0
        %1388 = vdwg.mxu0
        %v1389 = vld [vmem:[%s5] sm:$0x7f]
        %v1391 = vlaneseq
        %v1392 = vshrl.u32 %v1391, 7
        %v1393 = vsub.s32 0, %v1392
        %v1394 = vrot.slane %v1389, %v1393
        %v1395 = vlaneseq
        %v1396 = vshrl.u32 %v1395, 7
        %v1397 = vsub.s32 1, %v1396
        %v1398 = vrot.slane %v1389, %v1397
        %v1399 = vlaneseq
        %v1400 = vshrl.u32 %v1399, 7
        %v1401 = vsub.s32 2, %v1400
        %v1402 = vrot.slane %v1389, %v1401
        %v1403 = vlaneseq
        %v1404 = vshrl.u32 %v1403, 7
        %v1405 = vsub.s32 3, %v1404
        %v1406 = vrot.slane %v1389, %v1405
        %v1407 = vlaneseq
        %v1408 = vshrl.u32 %v1407, 7
        %v1409 = vsub.s32 4, %v1408
        %v1410 = vrot.slane %v1389, %v1409
        %v1411 = vlaneseq
        %v1412 = vshrl.u32 %v1411, 7
        %v1413 = vsub.s32 5, %v1412
        %v1414 = vrot.slane %v1389, %v1413
        %v1415 = vlaneseq
        %v1416 = vshrl.u32 %v1415, 7
        %v1417 = vsub.s32 6, %v1416
        %v1418 = vrot.slane %v1389, %v1417
        %v1426 = vadd.f32 %v1254, %v1394
        %v1427 = vadd.f32 %v1256, %v1398
        %v1428 = vadd.f32 %v1297, %v1402
        %v1429 = vadd.f32 %v1299, %v1406
        %v1430 = vadd.f32 %v1340, %v1410
        %v1431 = vadd.f32 %v1342, %v1414
        %v1432 = vadd.f32 %v1383, %v1418
        %v1433 = vadd.f32 %v1258, %v1394
        %v1434 = vadd.f32 %v1260, %v1398
        %v1435 = vadd.f32 %v1301, %v1402
        %v1436 = vadd.f32 %v1303, %v1406
        %v1437 = vadd.f32 %v1344, %v1410
        %v1438 = vadd.f32 %v1346, %v1414
        %v1439 = vadd.f32 %v1386, %v1418
        %v1440 = vmax.f32 %v1426, 0.0
        %v1441 = vmax.f32 %v1427, 0.0
        %v1442 = vmax.f32 %v1428, 0.0
        %v1443 = vmax.f32 %v1429, 0.0
        %v1444 = vmax.f32 %v1430, 0.0
        %v1445 = vmax.f32 %v1431, 0.0
        %v1446 = vmax.f32 %v1432, 0.0
        %v1447 = vmax.f32 %v1433, 0.0
        %v1448 = vmax.f32 %v1434, 0.0
        %v1449 = vmax.f32 %v1435, 0.0
        %v1450 = vmax.f32 %v1436, 0.0
        %v1451 = vmax.f32 %v1437, 0.0
        %v1452 = vmax.f32 %v1438, 0.0
        %v1453 = vmax.f32 %v1439, 0.0
        %v1454 = vpack.c.bf16 %v1447, %v1440
        %v1455 = vpack.c.bf16 %v1448, %v1441
        %v1456 = vpack.c.bf16 %v1449, %v1442
        %v1457 = vpack.c.bf16 %v1450, %v1443
        %v1458 = vpack.c.bf16 %v1451, %v1444
        %v1459 = vpack.c.bf16 %v1452, %v1445
        %v1460 = vpack.c.bf16 %v1453, %v1446
        %v1461 = vld [vmem:[%s6] sm:$0xff]
        %v1462 = vld [vmem:[%s6 + $0x8] sm:$0xff]
        %v1463 = vld [vmem:[%s6 + $0x10] sm:$0xff]
        %v1464 = vld [vmem:[%s6 + $0x18] sm:$0xff]
        %v1465 = vld [vmem:[%s6 + $0x20] sm:$0xff]
        %v1466 = vld [vmem:[%s6 + $0x28] sm:$0xff]
        %v1467 = vld [vmem:[%s6 + $0x30] sm:$0xff]
        %v1468 = vld [vmem:[%s6 + $0x38] sm:$0xff]
        %v1469 = vld [vmem:[%s6 + $0x40] sm:$0xff]
        %v1470 = vld [vmem:[%s6 + $0x48] sm:$0xff]
        %v1471 = vld [vmem:[%s6 + $0x50] sm:$0xff]
        %v1472 = vld [vmem:[%s6 + $0x58] sm:$0xff]
        %v1473 = vld [vmem:[%s6 + $0x60] sm:$0xff]
        %v1474 = vld [vmem:[%s6 + $0x68] sm:$0xff]
        %v1475 = vld [vmem:[%s6 + $0x70] sm:$0xff]
        %v1476 = vld [vmem:[%s6 + $0x78] sm:$0xff]
        %v1477 = vld [vmem:[%s6 + $0x80] sm:$0xff]
        %v1478 = vld [vmem:[%s6 + $0x88] sm:$0xff]
        %v1479 = vld [vmem:[%s6 + $0x90] sm:$0xff]
        %v1480 = vld [vmem:[%s6 + $0x98] sm:$0xff]
        %v1481 = vld [vmem:[%s6 + $0xa0] sm:$0xff]
        %v1482 = vld [vmem:[%s6 + $0xa8] sm:$0xff]
        %v1483 = vld [vmem:[%s6 + $0xb0] sm:$0xff]
        %v1484 = vld [vmem:[%s6 + $0xb8] sm:$0xff]
        %v1485 = vld [vmem:[%s6 + $0xc0] sm:$0xff]
        %v1486 = vld [vmem:[%s6 + $0xc8] sm:$0xff]
        %v1487 = vld [vmem:[%s6 + $0xd0] sm:$0xff]
        %v1488 = vld [vmem:[%s6 + $0xd8] sm:$0xff]
        %v1489 = vld [vmem:[%s6 + $0xe0] sm:$0xff]
        %v1490 = vld [vmem:[%s6 + $0xe8] sm:$0xff]
        %v1491 = vld [vmem:[%s6 + $0xf0] sm:$0xff]
        %v1492 = vld [vmem:[%s6 + $0xf8] sm:$0xff]
        %v1493 = vld [vmem:[%s6 + $0x100] sm:$0xff]
        %v1494 = vld [vmem:[%s6 + $0x108] sm:$0xff]
        %v1495 = vld [vmem:[%s6 + $0x110] sm:$0xff]
        %v1496 = vld [vmem:[%s6 + $0x118] sm:$0xff]
        %v1497 = vld [vmem:[%s6 + $0x120] sm:$0xff]
        %v1498 = vld [vmem:[%s6 + $0x128] sm:$0xff]
        %v1499 = vld [vmem:[%s6 + $0x130] sm:$0xff]
        %v1500 = vld [vmem:[%s6 + $0x138] sm:$0xff]
        %v1501 = vld [vmem:[%s6 + $0x140] sm:$0xff]
        %v1502 = vld [vmem:[%s6 + $0x148] sm:$0xff]
        %v1503 = vld [vmem:[%s6 + $0x150] sm:$0xff]
        %v1504 = vld [vmem:[%s6 + $0x158] sm:$0xff]
        %v1505 = vld [vmem:[%s6 + $0x160] sm:$0xff]
        %v1506 = vld [vmem:[%s6 + $0x168] sm:$0xff]
        %v1507 = vld [vmem:[%s6 + $0x170] sm:$0xff]
        %v1508 = vld [vmem:[%s6 + $0x178] sm:$0xff]
        %v1509 = vld [vmem:[%s6 + $0x180] sm:$0xff]
        %v1510 = vld [vmem:[%s6 + $0x188] sm:$0xff]
        %v1511 = vld [vmem:[%s6 + $0x190] sm:$0xff]
        %v1512 = vld [vmem:[%s6 + $0x198] sm:$0xff]
        %v1513 = vld [vmem:[%s6 + $0x1a0] sm:$0xff]
        %v1514 = vld [vmem:[%s6 + $0x1a8] sm:$0xff]
        %v1515 = vld [vmem:[%s6 + $0x1b0] sm:$0xff]
        %v1516 = vld [vmem:[%s6 + $0x1b8] sm:$0xff]
        %v1517 = vld [vmem:[%s6 + $0x1c0] sm:$0xff]
        %v1518 = vld [vmem:[%s6 + $0x1c8] sm:$0xff]
        %v1519 = vld [vmem:[%s6 + $0x1d0] sm:$0xff]
        %v1520 = vld [vmem:[%s6 + $0x1d8] sm:$0xff]
        %v1521 = vld [vmem:[%s6 + $0x1e0] sm:$0xff]
        %v1522 = vld [vmem:[%s6 + $0x1e8] sm:$0xff]
        %v1523 = vld [vmem:[%s6 + $0x1f0] sm:$0xff]
        %v1524 = vld [vmem:[%s6 + $0x1f8] sm:$0xff]
        %v1525 = vld [vmem:[%s6 + $0x200] sm:$0xff]
        %v1526 = vld [vmem:[%s6 + $0x208] sm:$0xff]
        %v1527 = vld [vmem:[%s6 + $0x210] sm:$0xff]
        %v1528 = vld [vmem:[%s6 + $0x218] sm:$0xff]
        %v1529 = vld [vmem:[%s6 + $0x220] sm:$0xff]
        %v1530 = vld [vmem:[%s6 + $0x228] sm:$0xff]
        %v1531 = vld [vmem:[%s6 + $0x230] sm:$0xff]
        %v1532 = vld [vmem:[%s6 + $0x238] sm:$0xff]
        %v1533 = vld [vmem:[%s6 + $0x240] sm:$0xff]
        %v1534 = vld [vmem:[%s6 + $0x248] sm:$0xff]
        %v1535 = vld [vmem:[%s6 + $0x250] sm:$0xff]
        %v1536 = vld [vmem:[%s6 + $0x258] sm:$0xff]
        %v1537 = vld [vmem:[%s6 + $0x260] sm:$0xff]
        %v1538 = vld [vmem:[%s6 + $0x268] sm:$0xff]
        %v1539 = vld [vmem:[%s6 + $0x270] sm:$0xff]
        %v1540 = vld [vmem:[%s6 + $0x278] sm:$0xff]
        %v1541 = vld [vmem:[%s6 + $0x280] sm:$0xff]
        %v1542 = vld [vmem:[%s6 + $0x288] sm:$0xff]
        %v1543 = vld [vmem:[%s6 + $0x290] sm:$0xff]
        %v1544 = vld [vmem:[%s6 + $0x298] sm:$0xff]
        %v1545 = vld [vmem:[%s6 + $0x2a0] sm:$0xff]
        %v1546 = vld [vmem:[%s6 + $0x2a8] sm:$0xff]
        %v1547 = vld [vmem:[%s6 + $0x2b0] sm:$0xff]
        %v1548 = vld [vmem:[%s6 + $0x2b8] sm:$0xff]
        %v1549 = vld [vmem:[%s6 + $0x2c0] sm:$0xff]
        %v1550 = vld [vmem:[%s6 + $0x2c8] sm:$0xff]
        %v1551 = vld [vmem:[%s6 + $0x2d0] sm:$0xff]
        %v1552 = vld [vmem:[%s6 + $0x2d8] sm:$0xff]
        %v1553 = vld [vmem:[%s6 + $0x2e0] sm:$0xff]
        %v1554 = vld [vmem:[%s6 + $0x2e8] sm:$0xff]
        %v1555 = vld [vmem:[%s6 + $0x2f0] sm:$0xff]
        %v1556 = vld [vmem:[%s6 + $0x2f8] sm:$0xff]
        %v1557 = vld [vmem:[%s6 + $0x300] sm:$0xff]
        %v1558 = vld [vmem:[%s6 + $0x308] sm:$0xff]
        %v1559 = vld [vmem:[%s6 + $0x310] sm:$0xff]
        %v1560 = vld [vmem:[%s6 + $0x318] sm:$0xff]
        %v1561 = vld [vmem:[%s6 + $0x320] sm:$0xff]
        %v1562 = vld [vmem:[%s6 + $0x328] sm:$0xff]
        %v1563 = vld [vmem:[%s6 + $0x330] sm:$0xff]
        %v1564 = vld [vmem:[%s6 + $0x338] sm:$0xff]
        %v1565 = vld [vmem:[%s6 + $0x340] sm:$0xff]
        %v1566 = vld [vmem:[%s6 + $0x348] sm:$0xff]
        %v1567 = vld [vmem:[%s6 + $0x350] sm:$0xff]
        %v1568 = vld [vmem:[%s6 + $0x358] sm:$0xff]
        %v1569 = vld [vmem:[%s6 + $0x360] sm:$0xff]
        %v1570 = vld [vmem:[%s6 + $0x368] sm:$0xff]
        %v1571 = vld [vmem:[%s6 + $0x370] sm:$0xff]
        %v1572 = vld [vmem:[%s6 + $0x378] sm:$0xff]
        %v1573 = vld [vmem:[%s6 + $0x380] sm:$0xff]
        %v1574 = vld [vmem:[%s6 + $0x388] sm:$0xff]
        %v1575 = vld [vmem:[%s6 + $0x390] sm:$0xff]
        %v1576 = vld [vmem:[%s6 + $0x398] sm:$0xff]
        %v1577 = vld [vmem:[%s6 + $0x3a0] sm:$0xff]
        %v1578 = vld [vmem:[%s6 + $0x3a8] sm:$0xff]
        %v1579 = vld [vmem:[%s6 + $0x3b0] sm:$0xff]
        %v1580 = vld [vmem:[%s6 + $0x3b8] sm:$0xff]
        %v1581 = vld [vmem:[%s6 + $0x3c0] sm:$0xff]
        %v1582 = vld [vmem:[%s6 + $0x3c8] sm:$0xff]
        %v1583 = vld [vmem:[%s6 + $0x3d0] sm:$0xff]
        %v1584 = vld [vmem:[%s6 + $0x3d8] sm:$0xff]
        %v1585 = vld [vmem:[%s6 + $0x3e0] sm:$0xff]
        %v1586 = vld [vmem:[%s6 + $0x3e8] sm:$0xff]
        %v1587 = vld [vmem:[%s6 + $0x3f0] sm:$0xff]
        %v1588 = vld [vmem:[%s6 + $0x3f8] sm:$0xff]
        %v1589 = vld [vmem:[%s6 + $0x400] sm:$0xff]
        %v1590 = vld [vmem:[%s6 + $0x408] sm:$0xff]
        %v1591 = vld [vmem:[%s6 + $0x410] sm:$0xff]
        %v1592 = vld [vmem:[%s6 + $0x418] sm:$0xff]
        %v1593 = vld [vmem:[%s6 + $0x420] sm:$0xff]
        %v1594 = vld [vmem:[%s6 + $0x428] sm:$0xff]
        %v1595 = vld [vmem:[%s6 + $0x430] sm:$0xff]
        %v1596 = vld [vmem:[%s6 + $0x438] sm:$0xff]
        %v1597 = vld [vmem:[%s6 + $0x440] sm:$0xff]
        %v1598 = vld [vmem:[%s6 + $0x448] sm:$0xff]
        %v1599 = vld [vmem:[%s6 + $0x450] sm:$0xff]
        %v1600 = vld [vmem:[%s6 + $0x458] sm:$0xff]
        %v1601 = vld [vmem:[%s6 + $0x460] sm:$0xff]
        %v1602 = vld [vmem:[%s6 + $0x468] sm:$0xff]
        %v1603 = vld [vmem:[%s6 + $0x470] sm:$0xff]
        %v1604 = vld [vmem:[%s6 + $0x478] sm:$0xff]
        %v1605 = vld [vmem:[%s6 + $0x480] sm:$0xff]
        %v1606 = vld [vmem:[%s6 + $0x488] sm:$0xff]
        %v1607 = vld [vmem:[%s6 + $0x490] sm:$0xff]
        %v1608 = vld [vmem:[%s6 + $0x498] sm:$0xff]
        %v1609 = vld [vmem:[%s6 + $0x4a0] sm:$0xff]
        %v1610 = vld [vmem:[%s6 + $0x4a8] sm:$0xff]
        %v1611 = vld [vmem:[%s6 + $0x4b0] sm:$0xff]
        %v1612 = vld [vmem:[%s6 + $0x4b8] sm:$0xff]
        %v1613 = vld [vmem:[%s6 + $0x4c0] sm:$0xff]
        %v1614 = vld [vmem:[%s6 + $0x4c8] sm:$0xff]
        %v1615 = vld [vmem:[%s6 + $0x4d0] sm:$0xff]
        %v1616 = vld [vmem:[%s6 + $0x4d8] sm:$0xff]
        %v1617 = vld [vmem:[%s6 + $0x4e0] sm:$0xff]
        %v1618 = vld [vmem:[%s6 + $0x4e8] sm:$0xff]
        %v1619 = vld [vmem:[%s6 + $0x4f0] sm:$0xff]
        %v1620 = vld [vmem:[%s6 + $0x4f8] sm:$0xff]
        %v1621 = vld [vmem:[%s6 + $0x500] sm:$0xff]
        %v1622 = vld [vmem:[%s6 + $0x508] sm:$0xff]
        %v1623 = vld [vmem:[%s6 + $0x510] sm:$0xff]
        %v1624 = vld [vmem:[%s6 + $0x518] sm:$0xff]
        %v1625 = vld [vmem:[%s6 + $0x520] sm:$0xff]
        %v1626 = vld [vmem:[%s6 + $0x528] sm:$0xff]
        %v1627 = vld [vmem:[%s6 + $0x530] sm:$0xff]
        %v1628 = vld [vmem:[%s6 + $0x538] sm:$0xff]
        %v1629 = vld [vmem:[%s6 + $0x540] sm:$0xff]
        %v1630 = vld [vmem:[%s6 + $0x548] sm:$0xff]
        %v1631 = vld [vmem:[%s6 + $0x550] sm:$0xff]
        %v1632 = vld [vmem:[%s6 + $0x558] sm:$0xff]
        %v1633 = vld [vmem:[%s6 + $0x560] sm:$0xff]
        %v1634 = vld [vmem:[%s6 + $0x568] sm:$0xff]
        %v1635 = vld [vmem:[%s6 + $0x570] sm:$0xff]
        %v1636 = vld [vmem:[%s6 + $0x578] sm:$0xff]
        %v1637 = vld [vmem:[%s6 + $0x580] sm:$0xff]
        %v1638 = vld [vmem:[%s6 + $0x588] sm:$0xff]
        %v1639 = vld [vmem:[%s6 + $0x590] sm:$0xff]
        %v1640 = vld [vmem:[%s6 + $0x598] sm:$0xff]
        %v1641 = vld [vmem:[%s6 + $0x5a0] sm:$0xff]
        %v1642 = vld [vmem:[%s6 + $0x5a8] sm:$0xff]
        %v1643 = vld [vmem:[%s6 + $0x5b0] sm:$0xff]
        %v1644 = vld [vmem:[%s6 + $0x5b8] sm:$0xff]
        %v1645 = vld [vmem:[%s6 + $0x5c0] sm:$0xff]
        %v1646 = vld [vmem:[%s6 + $0x5c8] sm:$0xff]
        %v1647 = vld [vmem:[%s6 + $0x5d0] sm:$0xff]
        %v1648 = vld [vmem:[%s6 + $0x5d8] sm:$0xff]
        %v1649 = vld [vmem:[%s6 + $0x5e0] sm:$0xff]
        %v1650 = vld [vmem:[%s6 + $0x5e8] sm:$0xff]
        %v1651 = vld [vmem:[%s6 + $0x5f0] sm:$0xff]
        %v1652 = vld [vmem:[%s6 + $0x5f8] sm:$0xff]
        %v1653 = vld [vmem:[%s6 + $0x600] sm:$0xff]
        %v1654 = vld [vmem:[%s6 + $0x608] sm:$0xff]
        %v1655 = vld [vmem:[%s6 + $0x610] sm:$0xff]
        %v1656 = vld [vmem:[%s6 + $0x618] sm:$0xff]
        %v1657 = vld [vmem:[%s6 + $0x620] sm:$0xff]
        %v1658 = vld [vmem:[%s6 + $0x628] sm:$0xff]
        %v1659 = vld [vmem:[%s6 + $0x630] sm:$0xff]
        %v1660 = vld [vmem:[%s6 + $0x638] sm:$0xff]
        %v1661 = vld [vmem:[%s7] sm:$0xf]
        %v1663 = vlaneseq
        %v1664 = vshrl.u32 %v1663, 7
        %v1665 = vsub.s32 0, %v1664
        %v1666 = vrot.slane %v1661, %v1665
        %v1667 = vlaneseq
        %v1668 = vshrl.u32 %v1667, 7
        %v1669 = vsub.s32 1, %v1668
        %v1670 = vrot.slane %v1661, %v1669
        %v1671 = vlaneseq
        %v1672 = vshrl.u32 %v1671, 7
        %v1673 = vsub.s32 2, %v1672
        %v1674 = vrot.slane %v1661, %v1673
        %v1675 = vlaneseq
        %v1676 = vshrl.u32 %v1675, 7
        %v1677 = vsub.s32 3, %v1676
        %v1678 = vrot.slane %v1661, %v1677
        %v1883 = vunpack.c.l.b16 %v1461
        %v1884 = vunpack.c.h.b16 %v1461
        %v1885 = vunpack.c.l.b16 %v1462
        %v1886 = vunpack.c.h.b16 %v1462
        %v1887 = vunpack.c.l.b16 %v1463
        %v1888 = vunpack.c.h.b16 %v1463
        %v1889 = vunpack.c.l.b16 %v1464
        %v1890 = vunpack.c.h.b16 %v1464
        %v1891 = vunpack.c.l.b16 %v1465
        %v1892 = vunpack.c.h.b16 %v1465
        %v1893 = vunpack.c.l.b16 %v1466
        %v1894 = vunpack.c.h.b16 %v1466
        %v1895 = vunpack.c.l.b16 %v1467
        %v1896 = vunpack.c.h.b16 %v1467
        %v1897 = vunpack.c.l.b16 %v1468
        %v1898 = vunpack.c.h.b16 %v1468
        %v1899 = vunpack.c.l.b16 %v1469
        %v1900 = vunpack.c.h.b16 %v1469
        %v1901 = vunpack.c.l.b16 %v1470
        %v1902 = vunpack.c.h.b16 %v1470
        %v1903 = vunpack.c.l.b16 %v1471
        %v1904 = vunpack.c.h.b16 %v1471
        %v1905 = vunpack.c.l.b16 %v1472
        %v1906 = vunpack.c.h.b16 %v1472
        %v1907 = vunpack.c.l.b16 %v1473
        %v1908 = vunpack.c.h.b16 %v1473
        %v1909 = vunpack.c.l.b16 %v1474
        %v1910 = vunpack.c.h.b16 %v1474
        %v1911 = vunpack.c.l.b16 %v1475
        %v1912 = vunpack.c.h.b16 %v1475
        %v1913 = vunpack.c.l.b16 %v1476
        %v1914 = vunpack.c.h.b16 %v1476
        %v1915 = vunpack.c.l.b16 %v1477
        %v1916 = vunpack.c.h.b16 %v1477
        %v1917 = vunpack.c.l.b16 %v1478
        %v1918 = vunpack.c.h.b16 %v1478
        %v1919 = vunpack.c.l.b16 %v1479
        %v1920 = vunpack.c.h.b16 %v1479
        %v1921 = vunpack.c.l.b16 %v1480
        %v1922 = vunpack.c.h.b16 %v1480
        %v1923 = vunpack.c.l.b16 %v1481
        %v1924 = vunpack.c.h.b16 %v1481
        %v1925 = vunpack.c.l.b16 %v1482
        %v1926 = vunpack.c.h.b16 %v1482
        %v1927 = vunpack.c.l.b16 %v1483
        %v1928 = vunpack.c.h.b16 %v1483
        %v1929 = vunpack.c.l.b16 %v1484
        %v1930 = vunpack.c.h.b16 %v1484
        %v1931 = vunpack.c.l.b16 %v1485
        %v1932 = vunpack.c.h.b16 %v1485
        %v1933 = vunpack.c.l.b16 %v1486
        %v1934 = vunpack.c.h.b16 %v1486
        %v1935 = vunpack.c.l.b16 %v1487
        %v1936 = vunpack.c.h.b16 %v1487
        %v1937 = vunpack.c.l.b16 %v1488
        %v1938 = vunpack.c.h.b16 %v1488
        %v1939 = vunpack.c.l.b16 %v1489
        %v1940 = vunpack.c.h.b16 %v1489
        %v1941 = vunpack.c.l.b16 %v1490
        %v1942 = vunpack.c.h.b16 %v1490
        %v1943 = vunpack.c.l.b16 %v1491
        %v1944 = vunpack.c.h.b16 %v1491
        %v1945 = vunpack.c.l.b16 %v1492
        %v1946 = vunpack.c.h.b16 %v1492
        %v1947 = vunpack.c.l.b16 %v1493
        %v1948 = vunpack.c.h.b16 %v1493
        %v1949 = vunpack.c.l.b16 %v1494
        %v1950 = vunpack.c.h.b16 %v1494
        %v1951 = vunpack.c.l.b16 %v1495
        %v1952 = vunpack.c.h.b16 %v1495
        %v1953 = vunpack.c.l.b16 %v1496
        %v1954 = vunpack.c.h.b16 %v1496
        %v1955 = vunpack.c.l.b16 %v1497
        %v1956 = vunpack.c.h.b16 %v1497
        %v1957 = vunpack.c.l.b16 %v1498
        %v1958 = vunpack.c.h.b16 %v1498
        %v1959 = vunpack.c.l.b16 %v1499
        %v1960 = vunpack.c.h.b16 %v1499
        %v1961 = vunpack.c.l.b16 %v1500
        %v1962 = vunpack.c.h.b16 %v1500
        %v1963 = vunpack.c.l.b16 %v1501
        %v1964 = vunpack.c.h.b16 %v1501
        %v1965 = vunpack.c.l.b16 %v1502
        %v1966 = vunpack.c.h.b16 %v1502
        %v1967 = vunpack.c.l.b16 %v1503
        %v1968 = vunpack.c.h.b16 %v1503
        %v1969 = vunpack.c.l.b16 %v1504
        %v1970 = vunpack.c.h.b16 %v1504
        %v1971 = vunpack.c.l.b16 %v1505
        %v1972 = vunpack.c.h.b16 %v1505
        %v1973 = vunpack.c.l.b16 %v1506
        %v1974 = vunpack.c.h.b16 %v1506
        %v1975 = vunpack.c.l.b16 %v1507
        %v1976 = vunpack.c.h.b16 %v1507
        %v1977 = vunpack.c.l.b16 %v1508
        %v1978 = vunpack.c.h.b16 %v1508
        %v1979 = vunpack.c.l.b16 %v1509
        %v1980 = vunpack.c.h.b16 %v1509
        %v1981 = vunpack.c.l.b16 %v1510
        %v1982 = vunpack.c.h.b16 %v1510
        %v1983 = vunpack.c.l.b16 %v1511
        %v1984 = vunpack.c.h.b16 %v1511
        %v1985 = vunpack.c.l.b16 %v1512
        %v1986 = vunpack.c.h.b16 %v1512
        %v1987 = vunpack.c.l.b16 %v1513
        %v1988 = vunpack.c.h.b16 %v1513
        %v1989 = vunpack.c.l.b16 %v1514
        %v1990 = vunpack.c.h.b16 %v1514
        %v1991 = vunpack.c.l.b16 %v1515
        %v1992 = vunpack.c.h.b16 %v1515
        %v1993 = vunpack.c.l.b16 %v1516
        %v1994 = vunpack.c.h.b16 %v1516
        %v1995 = vunpack.c.l.b16 %v1517
        %v1996 = vunpack.c.h.b16 %v1517
        %v1997 = vunpack.c.l.b16 %v1518
        %v1998 = vunpack.c.h.b16 %v1518
        %v1999 = vunpack.c.l.b16 %v1519
        %v2000 = vunpack.c.h.b16 %v1519
        %v2001 = vunpack.c.l.b16 %v1520
        %v2002 = vunpack.c.h.b16 %v1520
        %v2003 = vunpack.c.l.b16 %v1521
        %v2004 = vunpack.c.h.b16 %v1521
        %v2005 = vunpack.c.l.b16 %v1522
        %v2006 = vunpack.c.h.b16 %v1522
        %v2007 = vunpack.c.l.b16 %v1523
        %v2008 = vunpack.c.h.b16 %v1523
        %v2009 = vunpack.c.l.b16 %v1524
        %v2010 = vunpack.c.h.b16 %v1524
        %v2011 = vunpack.c.l.b16 %v1525
        %v2012 = vunpack.c.h.b16 %v1525
        %v2013 = vunpack.c.l.b16 %v1526
        %v2014 = vunpack.c.h.b16 %v1526
        %v2015 = vunpack.c.l.b16 %v1527
        %v2016 = vunpack.c.h.b16 %v1527
        %v2017 = vunpack.c.l.b16 %v1528
        %v2018 = vunpack.c.h.b16 %v1528
        %v2019 = vunpack.c.l.b16 %v1529
        %v2020 = vunpack.c.h.b16 %v1529
        %v2021 = vunpack.c.l.b16 %v1530
        %v2022 = vunpack.c.h.b16 %v1530
        %v2023 = vunpack.c.l.b16 %v1531
        %v2024 = vunpack.c.h.b16 %v1531
        %v2025 = vunpack.c.l.b16 %v1532
        %v2026 = vunpack.c.h.b16 %v1532
        %v2027 = vunpack.c.l.b16 %v1533
        %v2028 = vunpack.c.h.b16 %v1533
        %v2029 = vunpack.c.l.b16 %v1534
        %v2030 = vunpack.c.h.b16 %v1534
        %v2031 = vunpack.c.l.b16 %v1535
        %v2032 = vunpack.c.h.b16 %v1535
        %v2033 = vunpack.c.l.b16 %v1536
        %v2034 = vunpack.c.h.b16 %v1536
        %v2035 = vunpack.c.l.b16 %v1537
        %v2036 = vunpack.c.h.b16 %v1537
        %v2037 = vunpack.c.l.b16 %v1538
        %v2038 = vunpack.c.h.b16 %v1538
        %v2039 = vunpack.c.l.b16 %v1539
        %v2040 = vunpack.c.h.b16 %v1539
        %v2041 = vunpack.c.l.b16 %v1540
        %v2042 = vunpack.c.h.b16 %v1540
        %v2043 = vunpack.c.l.b16 %v1541
        %v2044 = vunpack.c.h.b16 %v1541
        %v2045 = vunpack.c.l.b16 %v1542
        %v2046 = vunpack.c.h.b16 %v1542
        %v2047 = vunpack.c.l.b16 %v1543
        %v2048 = vunpack.c.h.b16 %v1543
        %v2049 = vunpack.c.l.b16 %v1544
        %v2050 = vunpack.c.h.b16 %v1544
        %v2051 = vunpack.c.l.b16 %v1545
        %v2052 = vunpack.c.h.b16 %v1545
        %v2053 = vunpack.c.l.b16 %v1546
        %v2054 = vunpack.c.h.b16 %v1546
        %v2055 = vunpack.c.l.b16 %v1547
        %v2056 = vunpack.c.h.b16 %v1547
        %v2057 = vunpack.c.l.b16 %v1548
        %v2058 = vunpack.c.h.b16 %v1548
        %v2059 = vunpack.c.l.b16 %v1549
        %v2060 = vunpack.c.h.b16 %v1549
        %v2061 = vunpack.c.l.b16 %v1550
        %v2062 = vunpack.c.h.b16 %v1550
        %v2063 = vunpack.c.l.b16 %v1551
        %v2064 = vunpack.c.h.b16 %v1551
        %v2065 = vunpack.c.l.b16 %v1552
        %v2066 = vunpack.c.h.b16 %v1552
        %v2067 = vunpack.c.l.b16 %v1553
        %v2068 = vunpack.c.h.b16 %v1553
        %v2069 = vunpack.c.l.b16 %v1554
        %v2070 = vunpack.c.h.b16 %v1554
        %v2071 = vunpack.c.l.b16 %v1555
        %v2072 = vunpack.c.h.b16 %v1555
        %v2073 = vunpack.c.l.b16 %v1556
        %v2074 = vunpack.c.h.b16 %v1556
        %v2075 = vunpack.c.l.b16 %v1557
        %v2076 = vunpack.c.h.b16 %v1557
        %v2077 = vunpack.c.l.b16 %v1558
        %v2078 = vunpack.c.h.b16 %v1558
        %v2079 = vunpack.c.l.b16 %v1559
        %v2080 = vunpack.c.h.b16 %v1559
        %v2081 = vunpack.c.l.b16 %v1560
        %v2082 = vunpack.c.h.b16 %v1560
        %v2083 = vunpack.c.l.b16 %v1561
        %v2084 = vunpack.c.h.b16 %v1561
        %v2085 = vunpack.c.l.b16 %v1562
        %v2086 = vunpack.c.h.b16 %v1562
        %v2087 = vunpack.c.l.b16 %v1563
        %v2088 = vunpack.c.h.b16 %v1563
        %v2089 = vunpack.c.l.b16 %v1564
        %v2090 = vunpack.c.h.b16 %v1564
        %v2091 = vunpack.c.l.b16 %v1565
        %v2092 = vunpack.c.h.b16 %v1565
        %v2093 = vunpack.c.l.b16 %v1566
        %v2094 = vunpack.c.h.b16 %v1566
        %v2095 = vunpack.c.l.b16 %v1567
        %v2096 = vunpack.c.h.b16 %v1567
        %v2097 = vunpack.c.l.b16 %v1568
        %v2098 = vunpack.c.h.b16 %v1568
        %v2099 = vunpack.c.l.b16 %v1569
        %v2100 = vunpack.c.h.b16 %v1569
        %v2101 = vunpack.c.l.b16 %v1570
        %v2102 = vunpack.c.h.b16 %v1570
        %v2103 = vunpack.c.l.b16 %v1571
        %v2104 = vunpack.c.h.b16 %v1571
        %v2105 = vunpack.c.l.b16 %v1572
        %v2106 = vunpack.c.h.b16 %v1572
        %v2107 = vunpack.c.l.b16 %v1573
        %v2108 = vunpack.c.h.b16 %v1573
        %v2109 = vunpack.c.l.b16 %v1574
        %v2110 = vunpack.c.h.b16 %v1574
        %v2111 = vunpack.c.l.b16 %v1575
        %v2112 = vunpack.c.h.b16 %v1575
        %v2113 = vunpack.c.l.b16 %v1576
        %v2114 = vunpack.c.h.b16 %v1576
        %v2115 = vunpack.c.l.b16 %v1577
        %v2116 = vunpack.c.h.b16 %v1577
        %v2117 = vunpack.c.l.b16 %v1578
        %v2118 = vunpack.c.h.b16 %v1578
        %v2119 = vunpack.c.l.b16 %v1579
        %v2120 = vunpack.c.h.b16 %v1579
        %v2121 = vunpack.c.l.b16 %v1580
        %v2122 = vunpack.c.h.b16 %v1580
        %v2123 = vunpack.c.l.b16 %v1581
        %v2124 = vunpack.c.h.b16 %v1581
        %v2125 = vunpack.c.l.b16 %v1582
        %v2126 = vunpack.c.h.b16 %v1582
        %v2127 = vunpack.c.l.b16 %v1583
        %v2128 = vunpack.c.h.b16 %v1583
        %v2129 = vunpack.c.l.b16 %v1584
        %v2130 = vunpack.c.h.b16 %v1584
        %v2131 = vunpack.c.l.b16 %v1585
        %v2132 = vunpack.c.h.b16 %v1585
        %v2133 = vunpack.c.l.b16 %v1586
        %v2134 = vunpack.c.h.b16 %v1586
        %v2135 = vunpack.c.l.b16 %v1587
        %v2136 = vunpack.c.h.b16 %v1587
        %v2137 = vunpack.c.l.b16 %v1588
        %v2138 = vunpack.c.h.b16 %v1588
        %v2139 = vunpack.c.l.b16 %v1589
        %v2140 = vunpack.c.h.b16 %v1589
        %v2141 = vunpack.c.l.b16 %v1590
        %v2142 = vunpack.c.h.b16 %v1590
        %v2143 = vunpack.c.l.b16 %v1591
        %v2144 = vunpack.c.h.b16 %v1591
        %v2145 = vunpack.c.l.b16 %v1592
        %v2146 = vunpack.c.h.b16 %v1592
        %v2147 = vunpack.c.l.b16 %v1593
        %v2148 = vunpack.c.h.b16 %v1593
        %v2149 = vunpack.c.l.b16 %v1594
        %v2150 = vunpack.c.h.b16 %v1594
        %v2151 = vunpack.c.l.b16 %v1595
        %v2152 = vunpack.c.h.b16 %v1595
        %v2153 = vunpack.c.l.b16 %v1596
        %v2154 = vunpack.c.h.b16 %v1596
        %v2155 = vunpack.c.l.b16 %v1597
        %v2156 = vunpack.c.h.b16 %v1597
        %v2157 = vunpack.c.l.b16 %v1598
        %v2158 = vunpack.c.h.b16 %v1598
        %v2159 = vunpack.c.l.b16 %v1599
        %v2160 = vunpack.c.h.b16 %v1599
        %v2161 = vunpack.c.l.b16 %v1600
        %v2162 = vunpack.c.h.b16 %v1600
        %v2163 = vunpack.c.l.b16 %v1601
        %v2164 = vunpack.c.h.b16 %v1601
        %v2165 = vunpack.c.l.b16 %v1602
        %v2166 = vunpack.c.h.b16 %v1602
        %v2167 = vunpack.c.l.b16 %v1603
        %v2168 = vunpack.c.h.b16 %v1603
        %v2169 = vunpack.c.l.b16 %v1604
        %v2170 = vunpack.c.h.b16 %v1604
        %v2171 = vunpack.c.l.b16 %v1605
        %v2172 = vunpack.c.h.b16 %v1605
        %v2173 = vunpack.c.l.b16 %v1606
        %v2174 = vunpack.c.h.b16 %v1606
        %v2175 = vunpack.c.l.b16 %v1607
        %v2176 = vunpack.c.h.b16 %v1607
        %v2177 = vunpack.c.l.b16 %v1608
        %v2178 = vunpack.c.h.b16 %v1608
        %v2179 = vunpack.c.l.b16 %v1609
        %v2180 = vunpack.c.h.b16 %v1609
        %v2181 = vunpack.c.l.b16 %v1610
        %v2182 = vunpack.c.h.b16 %v1610
        %v2183 = vunpack.c.l.b16 %v1611
        %v2184 = vunpack.c.h.b16 %v1611
        %v2185 = vunpack.c.l.b16 %v1612
        %v2186 = vunpack.c.h.b16 %v1612
        %v2187 = vunpack.c.l.b16 %v1613
        %v2188 = vunpack.c.h.b16 %v1613
        %v2189 = vunpack.c.l.b16 %v1614
        %v2190 = vunpack.c.h.b16 %v1614
        %v2191 = vunpack.c.l.b16 %v1615
        %v2192 = vunpack.c.h.b16 %v1615
        %v2193 = vunpack.c.l.b16 %v1616
        %v2194 = vunpack.c.h.b16 %v1616
        %v2195 = vunpack.c.l.b16 %v1617
        %v2196 = vunpack.c.h.b16 %v1617
        %v2197 = vunpack.c.l.b16 %v1618
        %v2198 = vunpack.c.h.b16 %v1618
        %v2199 = vunpack.c.l.b16 %v1619
        %v2200 = vunpack.c.h.b16 %v1619
        %v2201 = vunpack.c.l.b16 %v1620
        %v2202 = vunpack.c.h.b16 %v1620
        %v2203 = vunpack.c.l.b16 %v1621
        %v2204 = vunpack.c.h.b16 %v1621
        %v2205 = vunpack.c.l.b16 %v1622
        %v2206 = vunpack.c.h.b16 %v1622
        %v2207 = vunpack.c.l.b16 %v1623
        %v2208 = vunpack.c.h.b16 %v1623
        %v2209 = vunpack.c.l.b16 %v1624
        %v2210 = vunpack.c.h.b16 %v1624
        %v2211 = vunpack.c.l.b16 %v1625
        %v2212 = vunpack.c.h.b16 %v1625
        %v2213 = vunpack.c.l.b16 %v1626
        %v2214 = vunpack.c.h.b16 %v1626
        %v2215 = vunpack.c.l.b16 %v1627
        %v2216 = vunpack.c.h.b16 %v1627
        %v2217 = vunpack.c.l.b16 %v1628
        %v2218 = vunpack.c.h.b16 %v1628
        %v2219 = vunpack.c.l.b16 %v1629
        %v2220 = vunpack.c.h.b16 %v1629
        %v2221 = vunpack.c.l.b16 %v1630
        %v2222 = vunpack.c.h.b16 %v1630
        %v2223 = vunpack.c.l.b16 %v1631
        %v2224 = vunpack.c.h.b16 %v1631
        %v2225 = vunpack.c.l.b16 %v1632
        %v2226 = vunpack.c.h.b16 %v1632
        %v2227 = vunpack.c.l.b16 %v1633
        %v2228 = vunpack.c.h.b16 %v1633
        %v2229 = vunpack.c.l.b16 %v1634
        %v2230 = vunpack.c.h.b16 %v1634
        %v2231 = vunpack.c.l.b16 %v1635
        %v2232 = vunpack.c.h.b16 %v1635
        %v2233 = vunpack.c.l.b16 %v1636
        %v2234 = vunpack.c.h.b16 %v1636
        %v2235 = vunpack.c.l.b16 %v1637
        %v2236 = vunpack.c.h.b16 %v1637
        %v2237 = vunpack.c.l.b16 %v1638
        %v2238 = vunpack.c.h.b16 %v1638
        %v2239 = vunpack.c.l.b16 %v1639
        %v2240 = vunpack.c.h.b16 %v1639
        %v2241 = vunpack.c.l.b16 %v1640
        %v2242 = vunpack.c.h.b16 %v1640
        %v2243 = vunpack.c.l.b16 %v1641
        %v2244 = vunpack.c.h.b16 %v1641
        %v2245 = vunpack.c.l.b16 %v1642
        %v2246 = vunpack.c.h.b16 %v1642
        %v2247 = vunpack.c.l.b16 %v1643
        %v2248 = vunpack.c.h.b16 %v1643
        %v2249 = vunpack.c.l.b16 %v1644
        %v2250 = vunpack.c.h.b16 %v1644
        %v2251 = vunpack.c.l.b16 %v1645
        %v2252 = vunpack.c.h.b16 %v1645
        %v2253 = vunpack.c.l.b16 %v1646
        %v2254 = vunpack.c.h.b16 %v1646
        %v2255 = vunpack.c.l.b16 %v1647
        %v2256 = vunpack.c.h.b16 %v1647
        %v2257 = vunpack.c.l.b16 %v1648
        %v2258 = vunpack.c.h.b16 %v1648
        %v2259 = vunpack.c.l.b16 %v1649
        %v2260 = vunpack.c.h.b16 %v1649
        %v2261 = vunpack.c.l.b16 %v1650
        %v2262 = vunpack.c.h.b16 %v1650
        %v2263 = vunpack.c.l.b16 %v1651
        %v2264 = vunpack.c.h.b16 %v1651
        %v2265 = vunpack.c.l.b16 %v1652
        %v2266 = vunpack.c.h.b16 %v1652
        %v2267 = vunpack.c.l.b16 %v1653
        %v2268 = vunpack.c.h.b16 %v1653
        %v2269 = vunpack.c.l.b16 %v1654
        %v2270 = vunpack.c.h.b16 %v1654
        %v2271 = vunpack.c.l.b16 %v1655
        %v2272 = vunpack.c.h.b16 %v1655
        %v2273 = vunpack.c.l.b16 %v1656
        %v2274 = vunpack.c.h.b16 %v1656
        %v2275 = vunpack.c.l.b16 %v1657
        %v2276 = vunpack.c.h.b16 %v1657
        %v2277 = vunpack.c.l.b16 %v1658
        %v2278 = vunpack.c.h.b16 %v1658
        %v2279 = vunpack.c.l.b16 %v1659
        %v2280 = vunpack.c.h.b16 %v1659
        %v2281 = vunpack.c.l.b16 %v1660
        %v2282 = vunpack.c.h.b16 %v1660
        %v2283 = vpack.c.b16 %v1887, %v1883
        %v2284 = vpack.c.b16 %v1888, %v1884
        %v2285 = vpack.c.b16 %v1889, %v1885
        %v2286 = vpack.c.b16 %v1890, %v1886
        %v2287 = vpack.c.b16 %v1895, %v1891
        %v2288 = vpack.c.b16 %v1896, %v1892
        %v2289 = vpack.c.b16 %v1897, %v1893
        %v2290 = vpack.c.b16 %v1898, %v1894
        %v2291 = vpack.c.b16 %v1903, %v1899
        %v2292 = vpack.c.b16 %v1904, %v1900
        %v2293 = vpack.c.b16 %v1905, %v1901
        %v2294 = vpack.c.b16 %v1906, %v1902
        %v2295 = vpack.c.b16 %v1911, %v1907
        %v2296 = vpack.c.b16 %v1912, %v1908
        %v2297 = vpack.c.b16 %v1913, %v1909
        %v2298 = vpack.c.b16 %v1914, %v1910
        %v2299 = vpack.c.b16 %v1919, %v1915
        %v2300 = vpack.c.b16 %v1920, %v1916
        %v2301 = vpack.c.b16 %v1921, %v1917
        %v2302 = vpack.c.b16 %v1922, %v1918
        %v2303 = vpack.c.b16 %v1927, %v1923
        %v2304 = vpack.c.b16 %v1928, %v1924
        %v2305 = vpack.c.b16 %v1929, %v1925
        %v2306 = vpack.c.b16 %v1930, %v1926
        %v2307 = vpack.c.b16 %v1935, %v1931
        %v2308 = vpack.c.b16 %v1936, %v1932
        %v2309 = vpack.c.b16 %v1937, %v1933
        %v2310 = vpack.c.b16 %v1938, %v1934
        %v2311 = vpack.c.b16 %v1943, %v1939
        %v2312 = vpack.c.b16 %v1944, %v1940
        %v2313 = vpack.c.b16 %v1945, %v1941
        %v2314 = vpack.c.b16 %v1946, %v1942
        %v2315 = vpack.c.b16 %v1951, %v1947
        %v2316 = vpack.c.b16 %v1952, %v1948
        %v2317 = vpack.c.b16 %v1953, %v1949
        %v2318 = vpack.c.b16 %v1954, %v1950
        %v2319 = vpack.c.b16 %v1959, %v1955
        %v2320 = vpack.c.b16 %v1960, %v1956
        %v2321 = vpack.c.b16 %v1961, %v1957
        %v2322 = vpack.c.b16 %v1962, %v1958
        %v2323 = vpack.c.b16 %v1967, %v1963
        %v2324 = vpack.c.b16 %v1968, %v1964
        %v2325 = vpack.c.b16 %v1969, %v1965
        %v2326 = vpack.c.b16 %v1970, %v1966
        %v2327 = vpack.c.b16 %v1975, %v1971
        %v2328 = vpack.c.b16 %v1976, %v1972
        %v2329 = vpack.c.b16 %v1977, %v1973
        %v2330 = vpack.c.b16 %v1978, %v1974
        %v2331 = vpack.c.b16 %v1983, %v1979
        %v2332 = vpack.c.b16 %v1984, %v1980
        %v2333 = vpack.c.b16 %v1985, %v1981
        %v2334 = vpack.c.b16 %v1986, %v1982
        %v2335 = vpack.c.b16 %v1991, %v1987
        %v2336 = vpack.c.b16 %v1992, %v1988
        %v2337 = vpack.c.b16 %v1993, %v1989
        %v2338 = vpack.c.b16 %v1994, %v1990
        %v2339 = vpack.c.b16 %v1999, %v1995
        %v2340 = vpack.c.b16 %v2000, %v1996
        %v2341 = vpack.c.b16 %v2001, %v1997
        %v2342 = vpack.c.b16 %v2002, %v1998
        %v2343 = vpack.c.b16 %v2007, %v2003
        %v2344 = vpack.c.b16 %v2008, %v2004
        %v2345 = vpack.c.b16 %v2009, %v2005
        %v2346 = vpack.c.b16 %v2010, %v2006
        %v2347 = vpack.c.b16 %v2015, %v2011
        %v2348 = vpack.c.b16 %v2016, %v2012
        %v2349 = vpack.c.b16 %v2017, %v2013
        %v2350 = vpack.c.b16 %v2018, %v2014
        %v2351 = vpack.c.b16 %v2023, %v2019
        %v2352 = vpack.c.b16 %v2024, %v2020
        %v2353 = vpack.c.b16 %v2025, %v2021
        %v2354 = vpack.c.b16 %v2026, %v2022
        %v2355 = vpack.c.b16 %v2031, %v2027
        %v2356 = vpack.c.b16 %v2032, %v2028
        %v2357 = vpack.c.b16 %v2033, %v2029
        %v2358 = vpack.c.b16 %v2034, %v2030
        %v2359 = vpack.c.b16 %v2039, %v2035
        %v2360 = vpack.c.b16 %v2040, %v2036
        %v2361 = vpack.c.b16 %v2041, %v2037
        %v2362 = vpack.c.b16 %v2042, %v2038
        %v2363 = vpack.c.b16 %v2047, %v2043
        %v2364 = vpack.c.b16 %v2048, %v2044
        %v2365 = vpack.c.b16 %v2049, %v2045
        %v2366 = vpack.c.b16 %v2050, %v2046
        %v2367 = vpack.c.b16 %v2055, %v2051
        %v2368 = vpack.c.b16 %v2056, %v2052
        %v2369 = vpack.c.b16 %v2057, %v2053
        %v2370 = vpack.c.b16 %v2058, %v2054
        %v2371 = vpack.c.b16 %v2063, %v2059
        %v2372 = vpack.c.b16 %v2064, %v2060
        %v2373 = vpack.c.b16 %v2065, %v2061
        %v2374 = vpack.c.b16 %v2066, %v2062
        %v2375 = vpack.c.b16 %v2071, %v2067
        %v2376 = vpack.c.b16 %v2072, %v2068
        %v2377 = vpack.c.b16 %v2073, %v2069
        %v2378 = vpack.c.b16 %v2074, %v2070
        %v2379 = vpack.c.b16 %v2079, %v2075
        %v2380 = vpack.c.b16 %v2080, %v2076
        %v2381 = vpack.c.b16 %v2081, %v2077
        %v2382 = vpack.c.b16 %v2082, %v2078
        %v2383 = vpack.c.b16 %v2087, %v2083
        %v2384 = vpack.c.b16 %v2088, %v2084
        %v2385 = vpack.c.b16 %v2089, %v2085
        %v2386 = vpack.c.b16 %v2090, %v2086
        %v2387 = vpack.c.b16 %v2095, %v2091
        %v2388 = vpack.c.b16 %v2096, %v2092
        %v2389 = vpack.c.b16 %v2097, %v2093
        %v2390 = vpack.c.b16 %v2098, %v2094
        %v2391 = vpack.c.b16 %v2103, %v2099
        %v2392 = vpack.c.b16 %v2104, %v2100
        %v2393 = vpack.c.b16 %v2105, %v2101
        %v2394 = vpack.c.b16 %v2106, %v2102
        %v2395 = vpack.c.b16 %v2111, %v2107
        %v2396 = vpack.c.b16 %v2112, %v2108
        %v2397 = vpack.c.b16 %v2113, %v2109
        %v2398 = vpack.c.b16 %v2114, %v2110
        %v2399 = vpack.c.b16 %v2119, %v2115
        %v2400 = vpack.c.b16 %v2120, %v2116
        %v2401 = vpack.c.b16 %v2121, %v2117
        %v2402 = vpack.c.b16 %v2122, %v2118
        %v2403 = vpack.c.b16 %v2127, %v2123
        %v2404 = vpack.c.b16 %v2128, %v2124
        %v2405 = vpack.c.b16 %v2129, %v2125
        %v2406 = vpack.c.b16 %v2130, %v2126
        %v2407 = vpack.c.b16 %v2135, %v2131
        %v2408 = vpack.c.b16 %v2136, %v2132
        %v2409 = vpack.c.b16 %v2137, %v2133
        %v2410 = vpack.c.b16 %v2138, %v2134
        %v2411 = vpack.c.b16 %v2143, %v2139
        %v2412 = vpack.c.b16 %v2144, %v2140
        %v2413 = vpack.c.b16 %v2145, %v2141
        %v2414 = vpack.c.b16 %v2146, %v2142
        %v2415 = vpack.c.b16 %v2151, %v2147
        %v2416 = vpack.c.b16 %v2152, %v2148
        %v2417 = vpack.c.b16 %v2153, %v2149
        %v2418 = vpack.c.b16 %v2154, %v2150
        %v2419 = vpack.c.b16 %v2159, %v2155
        %v2420 = vpack.c.b16 %v2160, %v2156
        %v2421 = vpack.c.b16 %v2161, %v2157
        %v2422 = vpack.c.b16 %v2162, %v2158
        %v2423 = vpack.c.b16 %v2167, %v2163
        %v2424 = vpack.c.b16 %v2168, %v2164
        %v2425 = vpack.c.b16 %v2169, %v2165
        %v2426 = vpack.c.b16 %v2170, %v2166
        %v2427 = vpack.c.b16 %v2175, %v2171
        %v2428 = vpack.c.b16 %v2176, %v2172
        %v2429 = vpack.c.b16 %v2177, %v2173
        %v2430 = vpack.c.b16 %v2178, %v2174
        %v2431 = vpack.c.b16 %v2183, %v2179
        %v2432 = vpack.c.b16 %v2184, %v2180
        %v2433 = vpack.c.b16 %v2185, %v2181
        %v2434 = vpack.c.b16 %v2186, %v2182
        %v2435 = vpack.c.b16 %v2191, %v2187
        %v2436 = vpack.c.b16 %v2192, %v2188
        %v2437 = vpack.c.b16 %v2193, %v2189
        %v2438 = vpack.c.b16 %v2194, %v2190
        %v2439 = vpack.c.b16 %v2199, %v2195
        %v2440 = vpack.c.b16 %v2200, %v2196
        %v2441 = vpack.c.b16 %v2201, %v2197
        %v2442 = vpack.c.b16 %v2202, %v2198
        %v2443 = vpack.c.b16 %v2207, %v2203
        %v2444 = vpack.c.b16 %v2208, %v2204
        %v2445 = vpack.c.b16 %v2209, %v2205
        %v2446 = vpack.c.b16 %v2210, %v2206
        %v2447 = vpack.c.b16 %v2215, %v2211
        %v2448 = vpack.c.b16 %v2216, %v2212
        %v2449 = vpack.c.b16 %v2217, %v2213
        %v2450 = vpack.c.b16 %v2218, %v2214
        %v2451 = vpack.c.b16 %v2223, %v2219
        %v2452 = vpack.c.b16 %v2224, %v2220
        %v2453 = vpack.c.b16 %v2225, %v2221
        %v2454 = vpack.c.b16 %v2226, %v2222
        %v2455 = vpack.c.b16 %v2231, %v2227
        %v2456 = vpack.c.b16 %v2232, %v2228
        %v2457 = vpack.c.b16 %v2233, %v2229
        %v2458 = vpack.c.b16 %v2234, %v2230
        %v2459 = vpack.c.b16 %v2239, %v2235
        %v2460 = vpack.c.b16 %v2240, %v2236
        %v2461 = vpack.c.b16 %v2241, %v2237
        %v2462 = vpack.c.b16 %v2242, %v2238
        %v2463 = vpack.c.b16 %v2247, %v2243
        %v2464 = vpack.c.b16 %v2248, %v2244
        %v2465 = vpack.c.b16 %v2249, %v2245
        %v2466 = vpack.c.b16 %v2250, %v2246
        %v2467 = vpack.c.b16 %v2255, %v2251
        %v2468 = vpack.c.b16 %v2256, %v2252
        %v2469 = vpack.c.b16 %v2257, %v2253
        %v2470 = vpack.c.b16 %v2258, %v2254
        %v2471 = vpack.c.b16 %v2263, %v2259
        %v2472 = vpack.c.b16 %v2264, %v2260
        %v2473 = vpack.c.b16 %v2265, %v2261
        %v2474 = vpack.c.b16 %v2266, %v2262
        %v2475 = vpack.c.b16 %v2271, %v2267
        %v2476 = vpack.c.b16 %v2272, %v2268
        %v2477 = vpack.c.b16 %v2273, %v2269
        %v2478 = vpack.c.b16 %v2274, %v2270
        %v2479 = vpack.c.b16 %v2279, %v2275
        %v2480 = vpack.c.b16 %v2280, %v2276
        %v2481 = vpack.c.b16 %v2281, %v2277
        %v2482 = vpack.c.b16 %v2282, %v2278
        %vm2683 = vcmask 261120
        %v2685 = vsel %vm2683, %v1460, 0
        %2687 = vmatprep.subr.bf16.mxu0 %v2312
        %2688 = vmatpush1.bf16.msra.mxu0 %v2311
        %2689 = vmatprep.subr.bf16.mxu0 %v2308
        %2690 = vmatpush1.bf16.msra.mxu0 %v2307
        %2691 = vmatprep.subr.bf16.mxu0 %v2304
        %2692 = vmatpush1.bf16.msra.mxu0 %v2303
        %2693 = vmatprep.subr.bf16.mxu0 %v2300
        %2694 = vmatpush1.bf16.msra.mxu0 %v2299
        %2695 = vmatprep.subr.bf16.mxu0 %v2296
        %2696 = vmatpush1.bf16.msra.mxu0 %v2295
        %2697 = vmatprep.subr.bf16.mxu0 %v2292
        %2698 = vmatpush1.bf16.msra.mxu0 %v2291
        %2699 = vmatprep.subr.bf16.mxu0 %v2288
        %2700 = vmatpush1.bf16.msra.mxu0 %v2287
        %2701 = vmatprep.subr.bf16.mxu0 %v2284
        %2702 = vmatpush1.bf16.msra.mxu0 %v2283
        %2703 = vmatprep.subr.bf16.mxu0 %v2344
        %2704 = vmatpush2.bf16.msra.mxu0 %v2343
        %2705 = vmatprep.subr.bf16.mxu0 %v2340
        %2706 = vmatpush2.bf16.msra.mxu0 %v2339
        %2707 = vmatprep.subr.bf16.mxu0 %v2336
        %2708 = vmatpush2.bf16.msra.mxu0 %v2335
        %2709 = vmatprep.subr.bf16.mxu0 %v2332
        %2710 = vmatpush2.bf16.msra.mxu0 %v2331
        %2711 = vmatprep.subr.bf16.mxu0 %v2328
        %2712 = vmatpush2.bf16.msra.mxu0 %v2327
        %2713 = vmatprep.subr.bf16.mxu0 %v2324
        %2714 = vmatpush2.bf16.msra.mxu0 %v2323
        %2715 = vmatprep.subr.bf16.mxu0 %v2320
        %2716 = vmatpush2.bf16.msra.mxu0 %v2319
        %2717 = vmatprep.subr.bf16.mxu0 %v2316
        %2718 = vmatpush2.bf16.msra.mxu0 %v2315
        %2719 = vmatprep.mubr.bf16.mxu0 %v1455
        %2720 = vmatmul.mubr.bf16.gmra.mxu0 %v1454
        %v2721 = vpop.f32.mrf.mxu0
        %v2722 = vadd.f32 %v1666, %v2721
        %v2723 = vpop.f32.mrf.mxu0
        %v2724 = vadd.f32 %v1670, %v2723
        %v2725 = vpop.f32.mrf.mxu0
        %v2726 = vadd.f32 %v1666, %v2725
        %v2727 = vpop.f32.mrf.mxu0
        %v2728 = vadd.f32 %v1670, %v2727
        %2729 = vdwg.mxu0
        %2730 = vmatprep.subr.bf16.mxu0 %v2376
        %2731 = vmatpush1.bf16.msra.mxu0 %v2375
        %2732 = vmatprep.subr.bf16.mxu0 %v2372
        %2733 = vmatpush1.bf16.msra.mxu0 %v2371
        %2734 = vmatprep.subr.bf16.mxu0 %v2368
        %2735 = vmatpush1.bf16.msra.mxu0 %v2367
        %2736 = vmatprep.subr.bf16.mxu0 %v2364
        %2737 = vmatpush1.bf16.msra.mxu0 %v2363
        %2738 = vmatprep.subr.bf16.mxu0 %v2360
        %2739 = vmatpush1.bf16.msra.mxu0 %v2359
        %2740 = vmatprep.subr.bf16.mxu0 %v2356
        %2741 = vmatpush1.bf16.msra.mxu0 %v2355
        %2742 = vmatprep.subr.bf16.mxu0 %v2352
        %2743 = vmatpush1.bf16.msra.mxu0 %v2351
        %2744 = vmatprep.subr.bf16.mxu0 %v2348
        %2745 = vmatpush1.bf16.msra.mxu0 %v2347
        %2746 = vmatprep.subr.bf16.mxu0 %v2408
        %2747 = vmatpush2.bf16.msra.mxu0 %v2407
        %2748 = vmatprep.subr.bf16.mxu0 %v2404
        %2749 = vmatpush2.bf16.msra.mxu0 %v2403
        %2750 = vmatprep.subr.bf16.mxu0 %v2400
        %2751 = vmatpush2.bf16.msra.mxu0 %v2399
        %2752 = vmatprep.subr.bf16.mxu0 %v2396
        %2753 = vmatpush2.bf16.msra.mxu0 %v2395
        %2754 = vmatprep.subr.bf16.mxu0 %v2392
        %2755 = vmatpush2.bf16.msra.mxu0 %v2391
        %2756 = vmatprep.subr.bf16.mxu0 %v2388
        %2757 = vmatpush2.bf16.msra.mxu0 %v2387
        %2758 = vmatprep.subr.bf16.mxu0 %v2384
        %2759 = vmatpush2.bf16.msra.mxu0 %v2383
        %2760 = vmatprep.subr.bf16.mxu0 %v2380
        %2761 = vmatpush2.bf16.msra.mxu0 %v2379
        %2762 = vmatprep.mubr.bf16.mxu0 %v1457
        %2763 = vmatmul.mubr.bf16.gmra.mxu0 %v1456
        %v2764 = vpop.f32.mrf.mxu0
        %v2765 = vadd.f32 %v2722, %v2764
        %v2766 = vpop.f32.mrf.mxu0
        %v2767 = vadd.f32 %v2724, %v2766
        %v2768 = vpop.f32.mrf.mxu0
        %v2769 = vadd.f32 %v2726, %v2768
        %v2770 = vpop.f32.mrf.mxu0
        %v2771 = vadd.f32 %v2728, %v2770
        %2772 = vdwg.mxu0
        %2773 = vmatprep.subr.bf16.mxu0 %v2440
        %2774 = vmatpush1.bf16.msra.mxu0 %v2439
        %2775 = vmatprep.subr.bf16.mxu0 %v2436
        %2776 = vmatpush1.bf16.msra.mxu0 %v2435
        %2777 = vmatprep.subr.bf16.mxu0 %v2432
        %2778 = vmatpush1.bf16.msra.mxu0 %v2431
        %2779 = vmatprep.subr.bf16.mxu0 %v2428
        %2780 = vmatpush1.bf16.msra.mxu0 %v2427
        %2781 = vmatprep.subr.bf16.mxu0 %v2424
        %2782 = vmatpush1.bf16.msra.mxu0 %v2423
        %2783 = vmatprep.subr.bf16.mxu0 %v2420
        %2784 = vmatpush1.bf16.msra.mxu0 %v2419
        %2785 = vmatprep.subr.bf16.mxu0 %v2416
        %2786 = vmatpush1.bf16.msra.mxu0 %v2415
        %2787 = vmatprep.subr.bf16.mxu0 %v2412
        %2788 = vmatpush1.bf16.msra.mxu0 %v2411
        %2789 = vmatprep.subr.bf16.mxu0 %v2472
        %2790 = vmatpush2.bf16.msra.mxu0 %v2471
        %2791 = vmatprep.subr.bf16.mxu0 %v2468
        %2792 = vmatpush2.bf16.msra.mxu0 %v2467
        %2793 = vmatprep.subr.bf16.mxu0 %v2464
        %2794 = vmatpush2.bf16.msra.mxu0 %v2463
        %2795 = vmatprep.subr.bf16.mxu0 %v2460
        %2796 = vmatpush2.bf16.msra.mxu0 %v2459
        %2797 = vmatprep.subr.bf16.mxu0 %v2456
        %2798 = vmatpush2.bf16.msra.mxu0 %v2455
        %2799 = vmatprep.subr.bf16.mxu0 %v2452
        %2800 = vmatpush2.bf16.msra.mxu0 %v2451
        %2801 = vmatprep.subr.bf16.mxu0 %v2448
        %2802 = vmatpush2.bf16.msra.mxu0 %v2447
        %2803 = vmatprep.subr.bf16.mxu0 %v2444
        %2804 = vmatpush2.bf16.msra.mxu0 %v2443
        %2805 = vmatprep.mubr.bf16.mxu0 %v1459
        %2806 = vmatmul.mubr.bf16.gmra.mxu0 %v1458
        %v2807 = vpop.f32.mrf.mxu0
        %v2808 = vadd.f32 %v2765, %v2807
        %v2809 = vpop.f32.mrf.mxu0
        %v2810 = vadd.f32 %v2767, %v2809
        %v2811 = vpop.f32.mrf.mxu0
        %v2812 = vadd.f32 %v2769, %v2811
        %v2813 = vpop.f32.mrf.mxu0
        %v2814 = vadd.f32 %v2771, %v2813
        %2815 = vdwg.mxu0
        %2816 = vmatprep.subr.bf16.mxu0 0
        %2817 = vmatpush1.bf16.msra.mxu0 0
        %2818 = vmatprep.subr.bf16.mxu0 0
        %2819 = vmatpush1.bf16.msra.mxu0 0
        %2820 = vmatprep.subr.bf16.mxu0 0
        %2821 = vmatpush1.bf16.msra.mxu0 0
        %2822 = vmatprep.subr.bf16.mxu0 0
        %2823 = vmatpush1.bf16.msra.mxu0 0
        %2824 = vmatprep.subr.bf16.mxu0 0
        %2825 = vmatpush1.bf16.msra.mxu0 0
        %2826 = vmatprep.subr.bf16.mxu0 0
        %2827 = vmatpush1.bf16.msra.mxu0 0
        %2828 = vmatprep.subr.bf16.mxu0 %v2480
        %2829 = vmatpush1.bf16.msra.mxu0 %v2479
        %2830 = vmatprep.subr.bf16.mxu0 %v2476
        %2831 = vmatpush1.bf16.msra.mxu0 %v2475
        %2832 = vmatprep.subr.bf16.mxu0 0
        %2833 = vmatpush2.bf16.msra.mxu0 0
        %2834 = vmatprep.subr.bf16.mxu0 0
        %2835 = vmatpush2.bf16.msra.mxu0 0
        %2836 = vmatprep.subr.bf16.mxu0 0
        %2837 = vmatpush2.bf16.msra.mxu0 0
        %2838 = vmatprep.subr.bf16.mxu0 0
        %2839 = vmatpush2.bf16.msra.mxu0 0
        %2840 = vmatprep.subr.bf16.mxu0 0
        %2841 = vmatpush2.bf16.msra.mxu0 0
        %2842 = vmatprep.subr.bf16.mxu0 0
        %2843 = vmatpush2.bf16.msra.mxu0 0
        %2844 = vmatprep.subr.bf16.mxu0 0
        %2845 = vmatpush2.bf16.msra.mxu0 0
        %2846 = vmatprep.subr.bf16.mxu0 0
        %2847 = vmatpush2.bf16.msra.mxu0 0
        %2848 = vmatprep.mubr.bf16.mxu0 0
        %2849 = vmatmul.mubr.bf16.gmra.mxu0 %v2685
        %v2850 = vpop.f32.mrf.mxu0
        %v2851 = vadd.f32 %v2808, %v2850
        %v2852 = vpop.f32.mrf.mxu0
        %v2853 = vadd.f32 %v2810, %v2852
        %v2854 = vpop.f32.mrf.mxu0
        %v2855 = vadd.f32 %v2812, %v2854
        %v2856 = vpop.f32.mrf.mxu0
        %v2857 = vadd.f32 %v2814, %v2856
        %2858 = vdwg.mxu0
        %2859 = vmatprep.subr.bf16.mxu0 %v2314
        %2860 = vmatpush1.bf16.msra.mxu0 %v2313
        %2861 = vmatprep.subr.bf16.mxu0 %v2310
        %2862 = vmatpush1.bf16.msra.mxu0 %v2309
        %2863 = vmatprep.subr.bf16.mxu0 %v2306
        %2864 = vmatpush1.bf16.msra.mxu0 %v2305
        %2865 = vmatprep.subr.bf16.mxu0 %v2302
        %2866 = vmatpush1.bf16.msra.mxu0 %v2301
        %2867 = vmatprep.subr.bf16.mxu0 %v2298
        %2868 = vmatpush1.bf16.msra.mxu0 %v2297
        %2869 = vmatprep.subr.bf16.mxu0 %v2294
        %2870 = vmatpush1.bf16.msra.mxu0 %v2293
        %2871 = vmatprep.subr.bf16.mxu0 %v2290
        %2872 = vmatpush1.bf16.msra.mxu0 %v2289
        %2873 = vmatprep.subr.bf16.mxu0 %v2286
        %2874 = vmatpush1.bf16.msra.mxu0 %v2285
        %2875 = vmatprep.subr.bf16.mxu0 %v2346
        %2876 = vmatpush2.bf16.msra.mxu0 %v2345
        %2877 = vmatprep.subr.bf16.mxu0 %v2342
        %2878 = vmatpush2.bf16.msra.mxu0 %v2341
        %2879 = vmatprep.subr.bf16.mxu0 %v2338
        %2880 = vmatpush2.bf16.msra.mxu0 %v2337
        %2881 = vmatprep.subr.bf16.mxu0 %v2334
        %2882 = vmatpush2.bf16.msra.mxu0 %v2333
        %2883 = vmatprep.subr.bf16.mxu0 %v2330
        %2884 = vmatpush2.bf16.msra.mxu0 %v2329
        %2885 = vmatprep.subr.bf16.mxu0 %v2326
        %2886 = vmatpush2.bf16.msra.mxu0 %v2325
        %2887 = vmatprep.subr.bf16.mxu0 %v2322
        %2888 = vmatpush2.bf16.msra.mxu0 %v2321
        %2889 = vmatprep.subr.bf16.mxu0 %v2318
        %2890 = vmatpush2.bf16.msra.mxu0 %v2317
        %2891 = vmatprep.mubr.bf16.mxu0 %v1455
        %2892 = vmatmul.mubr.bf16.gmra.mxu0 %v1454
        %v2893 = vpop.f32.mrf.mxu0
        %v2894 = vadd.f32 %v1674, %v2893
        %v2895 = vpop.f32.mrf.mxu0
        %v2896 = vadd.f32 %v1678, %v2895
        %v2897 = vpop.f32.mrf.mxu0
        %v2898 = vadd.f32 %v1674, %v2897
        %v2899 = vpop.f32.mrf.mxu0
        %v2900 = vadd.f32 %v1678, %v2899
        %2901 = vdwg.mxu0
        %2902 = vmatprep.subr.bf16.mxu0 %v2378
        %2903 = vmatpush1.bf16.msra.mxu0 %v2377
        %2904 = vmatprep.subr.bf16.mxu0 %v2374
        %2905 = vmatpush1.bf16.msra.mxu0 %v2373
        %2906 = vmatprep.subr.bf16.mxu0 %v2370
        %2907 = vmatpush1.bf16.msra.mxu0 %v2369
        %2908 = vmatprep.subr.bf16.mxu0 %v2366
        %2909 = vmatpush1.bf16.msra.mxu0 %v2365
        %2910 = vmatprep.subr.bf16.mxu0 %v2362
        %2911 = vmatpush1.bf16.msra.mxu0 %v2361
        %2912 = vmatprep.subr.bf16.mxu0 %v2358
        %2913 = vmatpush1.bf16.msra.mxu0 %v2357
        %2914 = vmatprep.subr.bf16.mxu0 %v2354
        %2915 = vmatpush1.bf16.msra.mxu0 %v2353
        %2916 = vmatprep.subr.bf16.mxu0 %v2350
        %2917 = vmatpush1.bf16.msra.mxu0 %v2349
        %2918 = vmatprep.subr.bf16.mxu0 %v2410
        %2919 = vmatpush2.bf16.msra.mxu0 %v2409
        %2920 = vmatprep.subr.bf16.mxu0 %v2406
        %2921 = vmatpush2.bf16.msra.mxu0 %v2405
        %2922 = vmatprep.subr.bf16.mxu0 %v2402
        %2923 = vmatpush2.bf16.msra.mxu0 %v2401
        %2924 = vmatprep.subr.bf16.mxu0 %v2398
        %2925 = vmatpush2.bf16.msra.mxu0 %v2397
        %2926 = vmatprep.subr.bf16.mxu0 %v2394
        %2927 = vmatpush2.bf16.msra.mxu0 %v2393
        %2928 = vmatprep.subr.bf16.mxu0 %v2390
        %2929 = vmatpush2.bf16.msra.mxu0 %v2389
        %2930 = vmatprep.subr.bf16.mxu0 %v2386
        %2931 = vmatpush2.bf16.msra.mxu0 %v2385
        %2932 = vmatprep.subr.bf16.mxu0 %v2382
        %2933 = vmatpush2.bf16.msra.mxu0 %v2381
        %2934 = vmatprep.mubr.bf16.mxu0 %v1457
        %2935 = vmatmul.mubr.bf16.gmra.mxu0 %v1456
        %v2936 = vpop.f32.mrf.mxu0
        %v2937 = vadd.f32 %v2894, %v2936
        %v2938 = vpop.f32.mrf.mxu0
        %v2939 = vadd.f32 %v2896, %v2938
        %v2940 = vpop.f32.mrf.mxu0
        %v2941 = vadd.f32 %v2898, %v2940
        %v2942 = vpop.f32.mrf.mxu0
        %v2943 = vadd.f32 %v2900, %v2942
        %2944 = vdwg.mxu0
        %2945 = vmatprep.subr.bf16.mxu0 %v2442
        %2946 = vmatpush1.bf16.msra.mxu0 %v2441
        %2947 = vmatprep.subr.bf16.mxu0 %v2438
        %2948 = vmatpush1.bf16.msra.mxu0 %v2437
        %2949 = vmatprep.subr.bf16.mxu0 %v2434
        %2950 = vmatpush1.bf16.msra.mxu0 %v2433
        %2951 = vmatprep.subr.bf16.mxu0 %v2430
        %2952 = vmatpush1.bf16.msra.mxu0 %v2429
        %2953 = vmatprep.subr.bf16.mxu0 %v2426
        %2954 = vmatpush1.bf16.msra.mxu0 %v2425
        %2955 = vmatprep.subr.bf16.mxu0 %v2422
        %2956 = vmatpush1.bf16.msra.mxu0 %v2421
        %2957 = vmatprep.subr.bf16.mxu0 %v2418
        %2958 = vmatpush1.bf16.msra.mxu0 %v2417
        %2959 = vmatprep.subr.bf16.mxu0 %v2414
        %2960 = vmatpush1.bf16.msra.mxu0 %v2413
        %2961 = vmatprep.subr.bf16.mxu0 %v2474
        %2962 = vmatpush2.bf16.msra.mxu0 %v2473
        %2963 = vmatprep.subr.bf16.mxu0 %v2470
        %2964 = vmatpush2.bf16.msra.mxu0 %v2469
        %2965 = vmatprep.subr.bf16.mxu0 %v2466
        %2966 = vmatpush2.bf16.msra.mxu0 %v2465
        %2967 = vmatprep.subr.bf16.mxu0 %v2462
        %2968 = vmatpush2.bf16.msra.mxu0 %v2461
        %2969 = vmatprep.subr.bf16.mxu0 %v2458
        %2970 = vmatpush2.bf16.msra.mxu0 %v2457
        %2971 = vmatprep.subr.bf16.mxu0 %v2454
        %2972 = vmatpush2.bf16.msra.mxu0 %v2453
        %2973 = vmatprep.subr.bf16.mxu0 %v2450
        %2974 = vmatpush2.bf16.msra.mxu0 %v2449
        %2975 = vmatprep.subr.bf16.mxu0 %v2446
        %2976 = vmatpush2.bf16.msra.mxu0 %v2445
        %2977 = vmatprep.mubr.bf16.mxu0 %v1459
        %2978 = vmatmul.mubr.bf16.gmra.mxu0 %v1458
        %v2979 = vpop.f32.mrf.mxu0
        %v2980 = vadd.f32 %v2937, %v2979
        %v2981 = vpop.f32.mrf.mxu0
        %v2982 = vadd.f32 %v2939, %v2981
        %v2983 = vpop.f32.mrf.mxu0
        %v2984 = vadd.f32 %v2941, %v2983
        %v2985 = vpop.f32.mrf.mxu0
        %v2986 = vadd.f32 %v2943, %v2985
        %2987 = vdwg.mxu0
        %2988 = vmatprep.subr.bf16.mxu0 0
        %2989 = vmatpush1.bf16.msra.mxu0 0
        %2990 = vmatprep.subr.bf16.mxu0 0
        %2991 = vmatpush1.bf16.msra.mxu0 0
        %2992 = vmatprep.subr.bf16.mxu0 0
        %2993 = vmatpush1.bf16.msra.mxu0 0
        %2994 = vmatprep.subr.bf16.mxu0 0
        %2995 = vmatpush1.bf16.msra.mxu0 0
        %2996 = vmatprep.subr.bf16.mxu0 0
        %2997 = vmatpush1.bf16.msra.mxu0 0
        %2998 = vmatprep.subr.bf16.mxu0 0
        %2999 = vmatpush1.bf16.msra.mxu0 0
        %3000 = vmatprep.subr.bf16.mxu0 %v2482
        %3001 = vmatpush1.bf16.msra.mxu0 %v2481
        %3002 = vmatprep.subr.bf16.mxu0 %v2478
        %3003 = vmatpush1.bf16.msra.mxu0 %v2477
        %3004 = vmatprep.subr.bf16.mxu0 0
        %3005 = vmatpush2.bf16.msra.mxu0 0
        %3006 = vmatprep.subr.bf16.mxu0 0
        %3007 = vmatpush2.bf16.msra.mxu0 0
        %3008 = vmatprep.subr.bf16.mxu0 0
        %3009 = vmatpush2.bf16.msra.mxu0 0
        %3010 = vmatprep.subr.bf16.mxu0 0
        %3011 = vmatpush2.bf16.msra.mxu0 0
        %3012 = vmatprep.subr.bf16.mxu0 0
        %3013 = vmatpush2.bf16.msra.mxu0 0
        %3014 = vmatprep.subr.bf16.mxu0 0
        %3015 = vmatpush2.bf16.msra.mxu0 0
        %3016 = vmatprep.subr.bf16.mxu0 0
        %3017 = vmatpush2.bf16.msra.mxu0 0
        %3018 = vmatprep.subr.bf16.mxu0 0
        %3019 = vmatpush2.bf16.msra.mxu0 0
        %3020 = vmatprep.mubr.bf16.mxu0 0
        %3021 = vmatmul.mubr.bf16.gmra.mxu0 %v2685
        %v3022 = vpop.f32.mrf.mxu0
        %v3023 = vadd.f32 %v2980, %v3022
        %v3024 = vpop.f32.mrf.mxu0
        %v3025 = vadd.f32 %v2982, %v3024
        %v3026 = vpop.f32.mrf.mxu0
        %v3027 = vadd.f32 %v2984, %v3026
        %v3028 = vpop.f32.mrf.mxu0
        %v3029 = vadd.f32 %v2986, %v3028
        %3030 = vdwg.mxu0
        %v3031 = vmax.f32 %v2851, 0.0
        %v3032 = vmax.f32 %v2853, 0.0
        %v3033 = vmax.f32 %v3023, 0.0
        %v3034 = vmax.f32 %v3025, 0.0
        %v3035 = vmax.f32 %v2855, 0.0
        %v3036 = vmax.f32 %v2857, 0.0
        %v3037 = vmax.f32 %v3027, 0.0
        %v3038 = vmax.f32 %v3029, 0.0
        %v3039 = vpack.c.bf16 %v3035, %v3031
        %v3040 = vpack.c.bf16 %v3036, %v3032
        %v3041 = vpack.c.bf16 %v3037, %v3033
        %v3042 = vpack.c.bf16 %v3038, %v3034
        %v3043 = vld [vmem:[%s8] sm:$0xf]
        %v3044 = vld [vmem:[%s8 + $0x4] sm:$0xf]
        %v3045 = vld [vmem:[%s8 + $0x8] sm:$0xf]
        %v3046 = vld [vmem:[%s8 + $0xc] sm:$0xf]
        %v3047 = vld [vmem:[%s8 + $0x10] sm:$0xf]
        %v3048 = vld [vmem:[%s8 + $0x14] sm:$0xf]
        %v3049 = vld [vmem:[%s8 + $0x18] sm:$0xf]
        %v3050 = vld [vmem:[%s8 + $0x1c] sm:$0xf]
        %v3051 = vld [vmem:[%s8 + $0x20] sm:$0xf]
        %v3052 = vld [vmem:[%s8 + $0x24] sm:$0xf]
        %v3053 = vld [vmem:[%s8 + $0x28] sm:$0xf]
        %v3054 = vld [vmem:[%s8 + $0x2c] sm:$0xf]
        %v3055 = vld [vmem:[%s8 + $0x30] sm:$0xf]
        %v3056 = vld [vmem:[%s8 + $0x34] sm:$0xf]
        %v3057 = vld [vmem:[%s8 + $0x38] sm:$0xf]
        %v3058 = vld [vmem:[%s8 + $0x3c] sm:$0xf]
        %v3059 = vld [vmem:[%s8 + $0x40] sm:$0xf]
        %v3060 = vld [vmem:[%s8 + $0x44] sm:$0xf]
        %v3061 = vld [vmem:[%s8 + $0x48] sm:$0xf]
        %v3062 = vld [vmem:[%s8 + $0x4c] sm:$0xf]
        %v3063 = vld [vmem:[%s8 + $0x50] sm:$0xf]
        %v3064 = vld [vmem:[%s8 + $0x54] sm:$0xf]
        %v3065 = vld [vmem:[%s8 + $0x58] sm:$0xf]
        %v3066 = vld [vmem:[%s8 + $0x5c] sm:$0xf]
        %v3067 = vld [vmem:[%s8 + $0x60] sm:$0xf]
        %v3068 = vld [vmem:[%s8 + $0x64] sm:$0xf]
        %v3069 = vld [vmem:[%s8 + $0x68] sm:$0xf]
        %v3070 = vld [vmem:[%s8 + $0x6c] sm:$0xf]
        %v3071 = vld [vmem:[%s8 + $0x70] sm:$0xf]
        %v3072 = vld [vmem:[%s8 + $0x74] sm:$0xf]
        %v3073 = vld [vmem:[%s8 + $0x78] sm:$0xf]
        %v3074 = vld [vmem:[%s8 + $0x7c] sm:$0xf]
        %v3075 = vld [vmem:[%s8 + $0x80] sm:$0xf]
        %v3076 = vld [vmem:[%s8 + $0x84] sm:$0xf]
        %v3077 = vld [vmem:[%s8 + $0x88] sm:$0xf]
        %v3078 = vld [vmem:[%s8 + $0x8c] sm:$0xf]
        %v3079 = vld [vmem:[%s8 + $0x90] sm:$0xf]
        %v3080 = vld [vmem:[%s8 + $0x94] sm:$0xf]
        %v3081 = vld [vmem:[%s8 + $0x98] sm:$0xf]
        %v3082 = vld [vmem:[%s8 + $0x9c] sm:$0xf]
        %v3083 = vld [vmem:[%s8 + $0xa0] sm:$0xf]
        %v3084 = vld [vmem:[%s8 + $0xa4] sm:$0xf]
        %v3085 = vld [vmem:[%s8 + $0xa8] sm:$0xf]
        %v3086 = vld [vmem:[%s8 + $0xac] sm:$0xf]
        %v3087 = vld [vmem:[%s8 + $0xb0] sm:$0xf]
        %v3088 = vld [vmem:[%s8 + $0xb4] sm:$0xf]
        %v3089 = vld [vmem:[%s8 + $0xb8] sm:$0xf]
        %v3090 = vld [vmem:[%s8 + $0xbc] sm:$0xf]
        %v3091 = vld [vmem:[%s8 + $0xc0] sm:$0xf]
        %v3092 = vld [vmem:[%s8 + $0xc4] sm:$0xf]
        %v3093 = vld [vmem:[%s9] sm:$0x1]
        %v3095 = vlaneseq
        %v3096 = vshrl.u32 %v3095, 7
        %v3097 = vsub.s32 0, %v3096
        %v3098 = vrot.slane %v3093, %v3097
        %v3150 = vunpack.c.l.b16 %v3043
        %v3151 = vunpack.c.l.b16 %v3044
        %v3152 = vunpack.c.l.b16 %v3045
        %v3153 = vunpack.c.l.b16 %v3046
        %v3154 = vunpack.c.l.b16 %v3047
        %v3155 = vunpack.c.l.b16 %v3048
        %v3156 = vunpack.c.l.b16 %v3049
        %v3157 = vunpack.c.l.b16 %v3050
        %v3158 = vunpack.c.l.b16 %v3051
        %v3159 = vunpack.c.l.b16 %v3052
        %v3160 = vunpack.c.l.b16 %v3053
        %v3161 = vunpack.c.l.b16 %v3054
        %v3162 = vunpack.c.l.b16 %v3055
        %v3163 = vunpack.c.l.b16 %v3056
        %v3164 = vunpack.c.l.b16 %v3057
        %v3165 = vunpack.c.l.b16 %v3058
        %v3166 = vunpack.c.l.b16 %v3059
        %v3167 = vunpack.c.l.b16 %v3060
        %v3168 = vunpack.c.l.b16 %v3061
        %v3169 = vunpack.c.l.b16 %v3062
        %v3170 = vunpack.c.l.b16 %v3063
        %v3171 = vunpack.c.l.b16 %v3064
        %v3172 = vunpack.c.l.b16 %v3065
        %v3173 = vunpack.c.l.b16 %v3066
        %v3174 = vunpack.c.l.b16 %v3067
        %v3175 = vunpack.c.l.b16 %v3068
        %v3176 = vunpack.c.l.b16 %v3069
        %v3177 = vunpack.c.l.b16 %v3070
        %v3178 = vunpack.c.l.b16 %v3071
        %v3179 = vunpack.c.l.b16 %v3072
        %v3180 = vunpack.c.l.b16 %v3073
        %v3181 = vunpack.c.l.b16 %v3074
        %v3182 = vunpack.c.l.b16 %v3075
        %v3183 = vunpack.c.l.b16 %v3076
        %v3184 = vunpack.c.l.b16 %v3077
        %v3185 = vunpack.c.l.b16 %v3078
        %v3186 = vunpack.c.l.b16 %v3079
        %v3187 = vunpack.c.l.b16 %v3080
        %v3188 = vunpack.c.l.b16 %v3081
        %v3189 = vunpack.c.l.b16 %v3082
        %v3190 = vunpack.c.l.b16 %v3083
        %v3191 = vunpack.c.l.b16 %v3084
        %v3192 = vunpack.c.l.b16 %v3085
        %v3193 = vunpack.c.l.b16 %v3086
        %v3194 = vunpack.c.l.b16 %v3087
        %v3195 = vunpack.c.l.b16 %v3088
        %v3196 = vunpack.c.l.b16 %v3089
        %v3197 = vunpack.c.l.b16 %v3090
        %v3198 = vunpack.c.l.b16 %v3091
        %v3199 = vunpack.c.l.b16 %v3092
        %v3200 = vpack.c.b16 %v3151, %v3150
        %v3201 = vpack.c.b16 %v3153, %v3152
        %v3202 = vpack.c.b16 %v3155, %v3154
        %v3203 = vpack.c.b16 %v3157, %v3156
        %v3204 = vpack.c.b16 %v3159, %v3158
        %v3205 = vpack.c.b16 %v3161, %v3160
        %v3206 = vpack.c.b16 %v3163, %v3162
        %v3207 = vpack.c.b16 %v3165, %v3164
        %v3208 = vpack.c.b16 %v3167, %v3166
        %v3209 = vpack.c.b16 %v3169, %v3168
        %v3210 = vpack.c.b16 %v3171, %v3170
        %v3211 = vpack.c.b16 %v3173, %v3172
        %v3212 = vpack.c.b16 %v3175, %v3174
        %v3213 = vpack.c.b16 %v3177, %v3176
        %v3214 = vpack.c.b16 %v3179, %v3178
        %v3215 = vpack.c.b16 %v3181, %v3180
        %v3216 = vpack.c.b16 %v3183, %v3182
        %v3217 = vpack.c.b16 %v3185, %v3184
        %v3218 = vpack.c.b16 %v3187, %v3186
        %v3219 = vpack.c.b16 %v3189, %v3188
        %v3220 = vpack.c.b16 %v3191, %v3190
        %v3221 = vpack.c.b16 %v3193, %v3192
        %v3222 = vpack.c.b16 %v3195, %v3194
        %v3223 = vpack.c.b16 %v3197, %v3196
        %v3224 = vpack.c.b16 %v3199, %v3198
        %vm3250 = vcmask 130048
        %v3252 = vsel %vm3250, %v3042, 0
        %3254 = vmatprep.subr.bf16.mxu0 0
        %3255 = vmatpush1.bf16.msra.mxu0 %v3207
        %3256 = vmatprep.subr.bf16.mxu0 0
        %3257 = vmatpush1.bf16.msra.mxu0 %v3206
        %3258 = vmatprep.subr.bf16.mxu0 0
        %3259 = vmatpush1.bf16.msra.mxu0 %v3205
        %3260 = vmatprep.subr.bf16.mxu0 0
        %3261 = vmatpush1.bf16.msra.mxu0 %v3204
        %3262 = vmatprep.subr.bf16.mxu0 0
        %3263 = vmatpush1.bf16.msra.mxu0 %v3203
        %3264 = vmatprep.subr.bf16.mxu0 0
        %3265 = vmatpush1.bf16.msra.mxu0 %v3202
        %3266 = vmatprep.subr.bf16.mxu0 0
        %3267 = vmatpush1.bf16.msra.mxu0 %v3201
        %3268 = vmatprep.subr.bf16.mxu0 0
        %3269 = vmatpush1.bf16.msra.mxu0 %v3200
        %3270 = vmatprep.subr.bf16.mxu0 0
        %3271 = vmatpush2.bf16.msra.mxu0 %v3215
        %3272 = vmatprep.subr.bf16.mxu0 0
        %3273 = vmatpush2.bf16.msra.mxu0 %v3214
        %3274 = vmatprep.subr.bf16.mxu0 0
        %3275 = vmatpush2.bf16.msra.mxu0 %v3213
        %3276 = vmatprep.subr.bf16.mxu0 0
        %3277 = vmatpush2.bf16.msra.mxu0 %v3212
        %3278 = vmatprep.subr.bf16.mxu0 0
        %3279 = vmatpush2.bf16.msra.mxu0 %v3211
        %3280 = vmatprep.subr.bf16.mxu0 0
        %3281 = vmatpush2.bf16.msra.mxu0 %v3210
        %3282 = vmatprep.subr.bf16.mxu0 0
        %3283 = vmatpush2.bf16.msra.mxu0 %v3209
        %3284 = vmatprep.subr.bf16.mxu0 0
        %3285 = vmatpush2.bf16.msra.mxu0 %v3208
        %3286 = vmatprep.mubr.bf16.mxu0 %v3040
        %3287 = vmatmul.mubr.bf16.gmra.mxu0 %v3039
        %v3288 = vpop.f32.mrf.mxu0
        %v3289 = vadd.f32 %v3098, %v3288
        %v3290 = vpop.f32.mrf.mxu0
        %v3291 = vpop.f32.mrf.mxu0
        %v3292 = vadd.f32 %v3098, %v3291
        %v3293 = vpop.f32.mrf.mxu0
        %3294 = vdwg.mxu0
        %3295 = vmatprep.subr.bf16.mxu0 0
        %3296 = vmatpush1.bf16.msra.mxu0 %v3223
        %3297 = vmatprep.subr.bf16.mxu0 0
        %3298 = vmatpush1.bf16.msra.mxu0 %v3222
        %3299 = vmatprep.subr.bf16.mxu0 0
        %3300 = vmatpush1.bf16.msra.mxu0 %v3221
        %3301 = vmatprep.subr.bf16.mxu0 0
        %3302 = vmatpush1.bf16.msra.mxu0 %v3220
        %3303 = vmatprep.subr.bf16.mxu0 0
        %3304 = vmatpush1.bf16.msra.mxu0 %v3219
        %3305 = vmatprep.subr.bf16.mxu0 0
        %3306 = vmatpush1.bf16.msra.mxu0 %v3218
        %3307 = vmatprep.subr.bf16.mxu0 0
        %3308 = vmatpush1.bf16.msra.mxu0 %v3217
        %3309 = vmatprep.subr.bf16.mxu0 0
        %3310 = vmatpush1.bf16.msra.mxu0 %v3216
        %3311 = vmatprep.subr.bf16.mxu0 0
        %3312 = vmatpush2.bf16.msra.mxu0 0
        %3313 = vmatprep.subr.bf16.mxu0 0
        %3314 = vmatpush2.bf16.msra.mxu0 0
        %3315 = vmatprep.subr.bf16.mxu0 0
        %3316 = vmatpush2.bf16.msra.mxu0 0
        %3317 = vmatprep.subr.bf16.mxu0 0
        %3318 = vmatpush2.bf16.msra.mxu0 0
        %3319 = vmatprep.subr.bf16.mxu0 0
        %3320 = vmatpush2.bf16.msra.mxu0 0
        %3321 = vmatprep.subr.bf16.mxu0 0
        %3322 = vmatpush2.bf16.msra.mxu0 0
        %3323 = vmatprep.subr.bf16.mxu0 0
        %3324 = vmatpush2.bf16.msra.mxu0 0
        %3325 = vmatprep.subr.bf16.mxu0 0
        %3326 = vmatpush2.bf16.msra.mxu0 %v3224
        %3327 = vmatprep.mubr.bf16.mxu0 %v3252
        %3328 = vmatmul.mubr.bf16.gmra.mxu0 %v3041
        %v3329 = vpop.f32.mrf.mxu0
        %v3330 = vadd.f32 %v3289, %v3329
        %v3331 = vpop.f32.mrf.mxu0
        %v3332 = vpop.f32.mrf.mxu0
        %v3333 = vadd.f32 %v3292, %v3332
        %v3334 = vpop.f32.mrf.mxu0
        %3335 = vdwg.mxu0
        %v3336 = vld [vmem:[%s629] sm:$0xff]
        %v3337 = vld [vmem:[%s629 + $0x8] sm:$0xff]
        %v3338 = vmul.f32 %v3330, 0.5
        %v3339 = vmul.f32 %v3333, 0.5
        %v3340 = vmul.f32 %v3338, 1.442695
        %v3341 = vpow.pop %v3340
        %v3342 = vmul.f32 %v3339, 1.442695
        %v3343 = vpow.pop %v3342
        %3346 = vrot.lane.b32.xlu0 %v3341, 112
        %v3347 = vpop.permute.xlu0 %3346
        %3348 = vrot.lane.b32.xlu0 %v3343, 112
        %v3349 = vpop.permute.xlu0 %3348
        %v3352 = vmul.f32 %v3336, %v3347
        %v3353 = vmul.f32 %v3337, %v3349
        %v3354 = vadd.f32 %v3352, %v3330
        %v3355 = vadd.f32 %v3353, %v3333
        %v3356 = vpack.c.bf16 %v3355, %v3354
        %v3357 = vld [vmem:[%s10] sm:$0xff]
        %v3358 = vld [vmem:[%s10 + $0x8] sm:$0xff]
        %v3359 = vld [vmem:[%s10 + $0x10] sm:$0xff]
        %v3360 = vld [vmem:[%s10 + $0x18] sm:$0xff]
        %v3361 = vld [vmem:[%s11] sm:$0xff]
        %v3362 = vld [vmem:[%s11 + $0x8] sm:$0xff]
        %v3365 = vunpack.c.l.b16 %v3361
        %v3366 = vunpack.c.h.b16 %v3361
        %v3367 = vunpack.c.l.b16 %v3362
        %v3368 = vunpack.c.h.b16 %v3362
        %v3369 = vpack.c.b16 %v3365, %v3365
        %v3370 = vpack.c.b16 %v3366, %v3366
        %v3371 = vpack.c.b16 %v3367, %v3367
        %v3372 = vpack.c.b16 %v3368, %v3368
        %v3374 = vsel %vm733, %v3369, 0
        %v3377 = vsel %vm733, %v3370, 0
        %v3380 = vsel %vm733, %v3371, 0
        %v3383 = vsel %vm733, %v3372, 0
        %3385 = vmatprep.subr.bf16.mxu0 0
        %3386 = vmatpush1.bf16.msra.mxu0 0
        %3387 = vmatprep.subr.bf16.mxu0 0
        %3388 = vmatpush1.bf16.msra.mxu0 0
        %3389 = vmatprep.subr.bf16.mxu0 0
        %3390 = vmatpush1.bf16.msra.mxu0 0
        %3391 = vmatprep.subr.bf16.mxu0 0
        %3392 = vmatpush1.bf16.msra.mxu0 0
        %3393 = vmatprep.subr.bf16.mxu0 0
        %3394 = vmatpush1.bf16.msra.mxu0 0
        %3395 = vmatprep.subr.bf16.mxu0 0
        %3396 = vmatpush1.bf16.msra.mxu0 0
        %3397 = vmatprep.subr.bf16.mxu0 0
        %3398 = vmatpush1.bf16.msra.mxu0 0
        %3399 = vmatprep.subr.bf16.mxu0 %v3377
        %3400 = vmatpush1.bf16.msra.mxu0 %v3374
        %3401 = vmatprep.subr.bf16.mxu0 0
        %3402 = vmatpush2.bf16.msra.mxu0 0
        %3403 = vmatprep.subr.bf16.mxu0 0
        %3404 = vmatpush2.bf16.msra.mxu0 0
        %3405 = vmatprep.subr.bf16.mxu0 0
        %3406 = vmatpush2.bf16.msra.mxu0 0
        %3407 = vmatprep.subr.bf16.mxu0 0
        %3408 = vmatpush2.bf16.msra.mxu0 0
        %3409 = vmatprep.subr.bf16.mxu0 0
        %3410 = vmatpush2.bf16.msra.mxu0 0
        %3411 = vmatprep.subr.bf16.mxu0 0
        %3412 = vmatpush2.bf16.msra.mxu0 0
        %3413 = vmatprep.subr.bf16.mxu0 0
        %3414 = vmatpush2.bf16.msra.mxu0 0
        %3415 = vmatprep.subr.bf16.mxu0 0
        %3416 = vmatpush2.bf16.msra.mxu0 0
        %3417 = vmatprep.mubr.bf16.mxu0 0
        %3418 = vmatmul.mubr.bf16.gmra.mxu0 %v731
        %v3419 = vpop.f32.mrf.mxu0
        %v3420 = vadd.f32 0.0, %v3419
        %v3421 = vpop.f32.mrf.mxu0
        %v3422 = vadd.f32 0.0, %v3421
        %v3423 = vpop.f32.mrf.mxu0
        %v3424 = vadd.f32 0.0, %v3423
        %v3425 = vpop.f32.mrf.mxu0
        %v3426 = vadd.f32 0.0, %v3425
        %3427 = vdwg.mxu0
        %3428 = vmatprep.subr.bf16.mxu0 0
        %3429 = vmatpush1.bf16.msra.mxu0 0
        %3430 = vmatprep.subr.bf16.mxu0 0
        %3431 = vmatpush1.bf16.msra.mxu0 0
        %3432 = vmatprep.subr.bf16.mxu0 0
        %3433 = vmatpush1.bf16.msra.mxu0 0
        %3434 = vmatprep.subr.bf16.mxu0 0
        %3435 = vmatpush1.bf16.msra.mxu0 0
        %3436 = vmatprep.subr.bf16.mxu0 0
        %3437 = vmatpush1.bf16.msra.mxu0 0
        %3438 = vmatprep.subr.bf16.mxu0 0
        %3439 = vmatpush1.bf16.msra.mxu0 0
        %3440 = vmatprep.subr.bf16.mxu0 0
        %3441 = vmatpush1.bf16.msra.mxu0 0
        %3442 = vmatprep.subr.bf16.mxu0 %v3383
        %3443 = vmatpush1.bf16.msra.mxu0 %v3380
        %3444 = vmatprep.subr.bf16.mxu0 0
        %3445 = vmatpush2.bf16.msra.mxu0 0
        %3446 = vmatprep.subr.bf16.mxu0 0
        %3447 = vmatpush2.bf16.msra.mxu0 0
        %3448 = vmatprep.subr.bf16.mxu0 0
        %3449 = vmatpush2.bf16.msra.mxu0 0
        %3450 = vmatprep.subr.bf16.mxu0 0
        %3451 = vmatpush2.bf16.msra.mxu0 0
        %3452 = vmatprep.subr.bf16.mxu0 0
        %3453 = vmatpush2.bf16.msra.mxu0 0
        %3454 = vmatprep.subr.bf16.mxu0 0
        %3455 = vmatpush2.bf16.msra.mxu0 0
        %3456 = vmatprep.subr.bf16.mxu0 0
        %3457 = vmatpush2.bf16.msra.mxu0 0
        %3458 = vmatprep.subr.bf16.mxu0 0
        %3459 = vmatpush2.bf16.msra.mxu0 0
        %3460 = vmatprep.mubr.bf16.mxu0 0
        %3461 = vmatmul.mubr.bf16.gmra.mxu0 %v731
        %v3462 = vpop.f32.mrf.mxu0
        %v3463 = vadd.f32 0.0, %v3462
        %v3464 = vpop.f32.mrf.mxu0
        %v3465 = vadd.f32 0.0, %v3464
        %v3466 = vpop.f32.mrf.mxu0
        %v3467 = vadd.f32 0.0, %v3466
        %v3468 = vpop.f32.mrf.mxu0
        %v3469 = vadd.f32 0.0, %v3468
        %3470 = vdwg.mxu0
        %v3475 = vunpack.c.l.b16 %v3357
        %v3476 = vunpack.c.h.b16 %v3357
        %v3477 = vunpack.c.l.b16 %v3358
        %v3478 = vunpack.c.h.b16 %v3358
        %v3479 = vunpack.c.l.b16 %v3359
        %v3480 = vunpack.c.h.b16 %v3359
        %v3481 = vunpack.c.l.b16 %v3360
        %v3482 = vunpack.c.h.b16 %v3360
        %v3483 = vpack.c.b16 %v3479, %v3475
        %v3484 = vpack.c.b16 %v3480, %v3476
        %v3485 = vpack.c.b16 %v3481, %v3477
        %v3486 = vpack.c.b16 %v3482, %v3478
        %v3492 = vsel %vm3250, %v3356, 0
        %3494 = vmatprep.subr.bf16.mxu0 0
        %3495 = vmatpush1.bf16.msra.mxu0 0
        %3496 = vmatprep.subr.bf16.mxu0 0
        %3497 = vmatpush1.bf16.msra.mxu0 0
        %3498 = vmatprep.subr.bf16.mxu0 0
        %3499 = vmatpush1.bf16.msra.mxu0 0
        %3500 = vmatprep.subr.bf16.mxu0 0
        %3501 = vmatpush1.bf16.msra.mxu0 0
        %3502 = vmatprep.subr.bf16.mxu0 0
        %3503 = vmatpush1.bf16.msra.mxu0 0
        %3504 = vmatprep.subr.bf16.mxu0 0
        %3505 = vmatpush1.bf16.msra.mxu0 0
        %3506 = vmatprep.subr.bf16.mxu0 0
        %3507 = vmatpush1.bf16.msra.mxu0 0
        %3508 = vmatprep.subr.bf16.mxu0 %v3484
        %3509 = vmatpush1.bf16.msra.mxu0 %v3483
        %3510 = vmatprep.subr.bf16.mxu0 0
        %3511 = vmatpush2.bf16.msra.mxu0 0
        %3512 = vmatprep.subr.bf16.mxu0 0
        %3513 = vmatpush2.bf16.msra.mxu0 0
        %3514 = vmatprep.subr.bf16.mxu0 0
        %3515 = vmatpush2.bf16.msra.mxu0 0
        %3516 = vmatprep.subr.bf16.mxu0 0
        %3517 = vmatpush2.bf16.msra.mxu0 0
        %3518 = vmatprep.subr.bf16.mxu0 0
        %3519 = vmatpush2.bf16.msra.mxu0 0
        %3520 = vmatprep.subr.bf16.mxu0 0
        %3521 = vmatpush2.bf16.msra.mxu0 0
        %3522 = vmatprep.subr.bf16.mxu0 0
        %3523 = vmatpush2.bf16.msra.mxu0 0
        %3524 = vmatprep.subr.bf16.mxu0 0
        %3525 = vmatpush2.bf16.msra.mxu0 0
        %3526 = vmatprep.mubr.bf16.mxu0 0
        %3527 = vmatmul.mubr.bf16.gmra.mxu0 %v3492
        %v3528 = vpop.f32.mrf.mxu0
        %v3529 = vadd.f32 %v3420, %v3528
        %v3530 = vpop.f32.mrf.mxu0
        %v3531 = vadd.f32 %v3422, %v3530
        %v3532 = vpop.f32.mrf.mxu0
        %v3533 = vadd.f32 %v3424, %v3532
        %v3534 = vpop.f32.mrf.mxu0
        %v3535 = vadd.f32 %v3426, %v3534
        %3536 = vdwg.mxu0
        %3537 = vmatprep.subr.bf16.mxu0 0
        %3538 = vmatpush1.bf16.msra.mxu0 0
        %3539 = vmatprep.subr.bf16.mxu0 0
        %3540 = vmatpush1.bf16.msra.mxu0 0
        %3541 = vmatprep.subr.bf16.mxu0 0
        %3542 = vmatpush1.bf16.msra.mxu0 0
        %3543 = vmatprep.subr.bf16.mxu0 0
        %3544 = vmatpush1.bf16.msra.mxu0 0
        %3545 = vmatprep.subr.bf16.mxu0 0
        %3546 = vmatpush1.bf16.msra.mxu0 0
        %3547 = vmatprep.subr.bf16.mxu0 0
        %3548 = vmatpush1.bf16.msra.mxu0 0
        %3549 = vmatprep.subr.bf16.mxu0 0
        %3550 = vmatpush1.bf16.msra.mxu0 0
        %3551 = vmatprep.subr.bf16.mxu0 %v3486
        %3552 = vmatpush1.bf16.msra.mxu0 %v3485
        %3553 = vmatprep.subr.bf16.mxu0 0
        %3554 = vmatpush2.bf16.msra.mxu0 0
        %3555 = vmatprep.subr.bf16.mxu0 0
        %3556 = vmatpush2.bf16.msra.mxu0 0
        %3557 = vmatprep.subr.bf16.mxu0 0
        %3558 = vmatpush2.bf16.msra.mxu0 0
        %3559 = vmatprep.subr.bf16.mxu0 0
        %3560 = vmatpush2.bf16.msra.mxu0 0
        %3561 = vmatprep.subr.bf16.mxu0 0
        %3562 = vmatpush2.bf16.msra.mxu0 0
        %3563 = vmatprep.subr.bf16.mxu0 0
        %3564 = vmatpush2.bf16.msra.mxu0 0
        %3565 = vmatprep.subr.bf16.mxu0 0
        %3566 = vmatpush2.bf16.msra.mxu0 0
        %3567 = vmatprep.subr.bf16.mxu0 0
        %3568 = vmatpush2.bf16.msra.mxu0 0
        %3569 = vmatprep.mubr.bf16.mxu0 0
        %3570 = vmatmul.mubr.bf16.gmra.mxu0 %v3492
        %v3571 = vpop.f32.mrf.mxu0
        %v3572 = vadd.f32 %v3463, %v3571
        %v3573 = vpop.f32.mrf.mxu0
        %v3574 = vadd.f32 %v3465, %v3573
        %v3575 = vpop.f32.mrf.mxu0
        %v3576 = vadd.f32 %v3467, %v3575
        %v3577 = vpop.f32.mrf.mxu0
        %v3578 = vadd.f32 %v3469, %v3577
        %3579 = vdwg.mxu0
        %v3580 = vld [vmem:[%s12] sm:$0xf]
        %v3582 = vlaneseq
        %v3583 = vshrl.u32 %v3582, 7
        %v3584 = vsub.s32 0, %v3583
        %v3585 = vrot.slane %v3580, %v3584
        %v3586 = vlaneseq
        %v3587 = vshrl.u32 %v3586, 7
        %v3588 = vsub.s32 1, %v3587
        %v3589 = vrot.slane %v3580, %v3588
        %v3590 = vlaneseq
        %v3591 = vshrl.u32 %v3590, 7
        %v3592 = vsub.s32 2, %v3591
        %v3593 = vrot.slane %v3580, %v3592
        %v3594 = vlaneseq
        %v3595 = vshrl.u32 %v3594, 7
        %v3596 = vsub.s32 3, %v3595
        %v3597 = vrot.slane %v3580, %v3596
        %v3602 = vadd.f32 %v3529, %v3585
        %v3603 = vadd.f32 %v3531, %v3589
        %v3604 = vadd.f32 %v3572, %v3593
        %v3605 = vadd.f32 %v3574, %v3597
        %v3606 = vadd.f32 %v3533, %v3585
        %v3607 = vadd.f32 %v3535, %v3589
        %v3608 = vadd.f32 %v3576, %v3593
        %v3609 = vadd.f32 %v3578, %v3597
        %v3610 = vmax.f32 %v3602, 0.0
        %v3611 = vmax.f32 %v3603, 0.0
        %v3612 = vmax.f32 %v3604, 0.0
        %v3613 = vmax.f32 %v3605, 0.0
        %v3614 = vmax.f32 %v3606, 0.0
        %v3615 = vmax.f32 %v3607, 0.0
        %v3616 = vmax.f32 %v3608, 0.0
        %v3617 = vmax.f32 %v3609, 0.0
        %v3618 = vpack.c.bf16 %v3614, %v3610
        %v3619 = vpack.c.bf16 %v3615, %v3611
        %v3620 = vpack.c.bf16 %v3616, %v3612
        %v3621 = vpack.c.bf16 %v3617, %v3613
        %v3622 = vld [vmem:[%s13] sm:$0xff]
        %v3623 = vld [vmem:[%s13 + $0x8] sm:$0xff]
        %v3624 = vld [vmem:[%s13 + $0x10] sm:$0xff]
        %v3625 = vld [vmem:[%s13 + $0x18] sm:$0xf]
        %v3626 = vld [vmem:[%s13 + $0x1c] sm:$0xff]
        %v3627 = vld [vmem:[%s13 + $0x24] sm:$0xff]
        %v3628 = vld [vmem:[%s13 + $0x2c] sm:$0xff]
        %v3629 = vld [vmem:[%s13 + $0x34] sm:$0xf]
        %v3630 = vld [vmem:[%s13 + $0x38] sm:$0xff]
        %v3631 = vld [vmem:[%s13 + $0x40] sm:$0xff]
        %v3632 = vld [vmem:[%s13 + $0x48] sm:$0xff]
        %v3633 = vld [vmem:[%s13 + $0x50] sm:$0xf]
        %v3634 = vld [vmem:[%s13 + $0x54] sm:$0xff]
        %v3635 = vld [vmem:[%s13 + $0x5c] sm:$0xff]
        %v3636 = vld [vmem:[%s13 + $0x64] sm:$0xff]
        %v3637 = vld [vmem:[%s13 + $0x6c] sm:$0xf]
        %v3638 = vld [vmem:[%s13 + $0x70] sm:$0xff]
        %v3639 = vld [vmem:[%s13 + $0x78] sm:$0xff]
        %v3640 = vld [vmem:[%s13 + $0x80] sm:$0xff]
        %v3641 = vld [vmem:[%s13 + $0x88] sm:$0xf]
        %v3642 = vld [vmem:[%s13 + $0x8c] sm:$0xff]
        %v3643 = vld [vmem:[%s13 + $0x94] sm:$0xff]
        %v3644 = vld [vmem:[%s13 + $0x9c] sm:$0xff]
        %v3645 = vld [vmem:[%s13 + $0xa4] sm:$0xf]
        %v3646 = vld [vmem:[%s13 + $0xa8] sm:$0xff]
        %v3647 = vld [vmem:[%s13 + $0xb0] sm:$0xff]
        %v3648 = vld [vmem:[%s13 + $0xb8] sm:$0xff]
        %v3649 = vld [vmem:[%s13 + $0xc0] sm:$0xf]
        %v3650 = vld [vmem:[%s13 + $0xc4] sm:$0xff]
        %v3651 = vld [vmem:[%s13 + $0xcc] sm:$0xff]
        %v3652 = vld [vmem:[%s13 + $0xd4] sm:$0xff]
        %v3653 = vld [vmem:[%s13 + $0xdc] sm:$0xf]
        %v3654 = vld [vmem:[%s13 + $0xe0] sm:$0xff]
        %v3655 = vld [vmem:[%s13 + $0xe8] sm:$0xff]
        %v3656 = vld [vmem:[%s13 + $0xf0] sm:$0xff]
        %v3657 = vld [vmem:[%s13 + $0xf8] sm:$0xf]
        %v3658 = vld [vmem:[%s13 + $0xfc] sm:$0xff]
        %v3659 = vld [vmem:[%s13 + $0x104] sm:$0xff]
        %v3660 = vld [vmem:[%s13 + $0x10c] sm:$0xff]
        %v3661 = vld [vmem:[%s13 + $0x114] sm:$0xf]
        %v3662 = vld [vmem:[%s13 + $0x118] sm:$0xff]
        %v3663 = vld [vmem:[%s13 + $0x120] sm:$0xff]
        %v3664 = vld [vmem:[%s13 + $0x128] sm:$0xff]
        %v3665 = vld [vmem:[%s13 + $0x130] sm:$0xf]
        %v3666 = vld [vmem:[%s13 + $0x134] sm:$0xff]
        %v3667 = vld [vmem:[%s13 + $0x13c] sm:$0xff]
        %v3668 = vld [vmem:[%s13 + $0x144] sm:$0xff]
        %v3669 = vld [vmem:[%s13 + $0x14c] sm:$0xf]
        %v3670 = vld [vmem:[%s13 + $0x150] sm:$0xff]
        %v3671 = vld [vmem:[%s13 + $0x158] sm:$0xff]
        %v3672 = vld [vmem:[%s13 + $0x160] sm:$0xff]
        %v3673 = vld [vmem:[%s13 + $0x168] sm:$0xf]
        %v3674 = vld [vmem:[%s13 + $0x16c] sm:$0xff]
        %v3675 = vld [vmem:[%s13 + $0x174] sm:$0xff]
        %v3676 = vld [vmem:[%s13 + $0x17c] sm:$0xff]
        %v3677 = vld [vmem:[%s13 + $0x184] sm:$0xf]
        %v3678 = vld [vmem:[%s13 + $0x188] sm:$0xff]
        %v3679 = vld [vmem:[%s13 + $0x190] sm:$0xff]
        %v3680 = vld [vmem:[%s13 + $0x198] sm:$0xff]
        %v3681 = vld [vmem:[%s13 + $0x1a0] sm:$0xf]
        %v3682 = vld [vmem:[%s13 + $0x1a4] sm:$0xff]
        %v3683 = vld [vmem:[%s13 + $0x1ac] sm:$0xff]
        %v3684 = vld [vmem:[%s13 + $0x1b4] sm:$0xff]
        %v3685 = vld [vmem:[%s13 + $0x1bc] sm:$0xf]
        %v3686 = vld [vmem:[%s13 + $0x1c0] sm:$0xff]
        %v3687 = vld [vmem:[%s13 + $0x1c8] sm:$0xff]
        %v3688 = vld [vmem:[%s13 + $0x1d0] sm:$0xff]
        %v3689 = vld [vmem:[%s13 + $0x1d8] sm:$0xf]
        %v3690 = vld [vmem:[%s13 + $0x1dc] sm:$0xff]
        %v3691 = vld [vmem:[%s13 + $0x1e4] sm:$0xff]
        %v3692 = vld [vmem:[%s13 + $0x1ec] sm:$0xff]
        %v3693 = vld [vmem:[%s13 + $0x1f4] sm:$0xf]
        %v3694 = vld [vmem:[%s13 + $0x1f8] sm:$0xff]
        %v3695 = vld [vmem:[%s13 + $0x200] sm:$0xff]
        %v3696 = vld [vmem:[%s13 + $0x208] sm:$0xff]
        %v3697 = vld [vmem:[%s13 + $0x210] sm:$0xf]
        %v3698 = vld [vmem:[%s13 + $0x214] sm:$0xff]
        %v3699 = vld [vmem:[%s13 + $0x21c] sm:$0xff]
        %v3700 = vld [vmem:[%s13 + $0x224] sm:$0xff]
        %v3701 = vld [vmem:[%s13 + $0x22c] sm:$0xf]
        %v3702 = vld [vmem:[%s13 + $0x230] sm:$0xff]
        %v3703 = vld [vmem:[%s13 + $0x238] sm:$0xff]
        %v3704 = vld [vmem:[%s13 + $0x240] sm:$0xff]
        %v3705 = vld [vmem:[%s13 + $0x248] sm:$0xf]
        %v3706 = vld [vmem:[%s13 + $0x24c] sm:$0xff]
        %v3707 = vld [vmem:[%s13 + $0x254] sm:$0xff]
        %v3708 = vld [vmem:[%s13 + $0x25c] sm:$0xff]
        %v3709 = vld [vmem:[%s13 + $0x264] sm:$0xf]
        %v3710 = vld [vmem:[%s13 + $0x268] sm:$0xff]
        %v3711 = vld [vmem:[%s13 + $0x270] sm:$0xff]
        %v3712 = vld [vmem:[%s13 + $0x278] sm:$0xff]
        %v3713 = vld [vmem:[%s13 + $0x280] sm:$0xf]
        %v3714 = vld [vmem:[%s13 + $0x284] sm:$0xff]
        %v3715 = vld [vmem:[%s13 + $0x28c] sm:$0xff]
        %v3716 = vld [vmem:[%s13 + $0x294] sm:$0xff]
        %v3717 = vld [vmem:[%s13 + $0x29c] sm:$0xf]
        %v3718 = vld [vmem:[%s13 + $0x2a0] sm:$0xff]
        %v3719 = vld [vmem:[%s13 + $0x2a8] sm:$0xff]
        %v3720 = vld [vmem:[%s13 + $0x2b0] sm:$0xff]
        %v3721 = vld [vmem:[%s13 + $0x2b8] sm:$0xf]
        %v3722 = vld [vmem:[%s13 + $0x2bc] sm:$0xff]
        %v3723 = vld [vmem:[%s13 + $0x2c4] sm:$0xff]
        %v3724 = vld [vmem:[%s13 + $0x2cc] sm:$0xff]
        %v3725 = vld [vmem:[%s13 + $0x2d4] sm:$0xf]
        %v3726 = vld [vmem:[%s13 + $0x2d8] sm:$0xff]
        %v3727 = vld [vmem:[%s13 + $0x2e0] sm:$0xff]
        %v3728 = vld [vmem:[%s13 + $0x2e8] sm:$0xff]
        %v3729 = vld [vmem:[%s13 + $0x2f0] sm:$0xf]
        %v3730 = vld [vmem:[%s13 + $0x2f4] sm:$0xff]
        %v3731 = vld [vmem:[%s13 + $0x2fc] sm:$0xff]
        %v3732 = vld [vmem:[%s13 + $0x304] sm:$0xff]
        %v3733 = vld [vmem:[%s13 + $0x30c] sm:$0xf]
        %v3734 = vld [vmem:[%s13 + $0x310] sm:$0xff]
        %v3735 = vld [vmem:[%s13 + $0x318] sm:$0xff]
        %v3736 = vld [vmem:[%s13 + $0x320] sm:$0xff]
        %v3737 = vld [vmem:[%s13 + $0x328] sm:$0xf]
        %v3738 = vld [vmem:[%s13 + $0x32c] sm:$0xff]
        %v3739 = vld [vmem:[%s13 + $0x334] sm:$0xff]
        %v3740 = vld [vmem:[%s13 + $0x33c] sm:$0xff]
        %v3741 = vld [vmem:[%s13 + $0x344] sm:$0xf]
        %v3742 = vld [vmem:[%s13 + $0x348] sm:$0xff]
        %v3743 = vld [vmem:[%s13 + $0x350] sm:$0xff]
        %v3744 = vld [vmem:[%s13 + $0x358] sm:$0xff]
        %v3745 = vld [vmem:[%s13 + $0x360] sm:$0xf]
        %v3746 = vld [vmem:[%s13 + $0x364] sm:$0xff]
        %v3747 = vld [vmem:[%s13 + $0x36c] sm:$0xff]
        %v3748 = vld [vmem:[%s13 + $0x374] sm:$0xff]
        %v3749 = vld [vmem:[%s13 + $0x37c] sm:$0xf]
        %v3750 = vld [vmem:[%s13 + $0x380] sm:$0xff]
        %v3751 = vld [vmem:[%s13 + $0x388] sm:$0xff]
        %v3752 = vld [vmem:[%s13 + $0x390] sm:$0xff]
        %v3753 = vld [vmem:[%s13 + $0x398] sm:$0xf]
        %v3754 = vld [vmem:[%s13 + $0x39c] sm:$0xff]
        %v3755 = vld [vmem:[%s13 + $0x3a4] sm:$0xff]
        %v3756 = vld [vmem:[%s13 + $0x3ac] sm:$0xff]
        %v3757 = vld [vmem:[%s13 + $0x3b4] sm:$0xf]
        %v3758 = vld [vmem:[%s13 + $0x3b8] sm:$0xff]
        %v3759 = vld [vmem:[%s13 + $0x3c0] sm:$0xff]
        %v3760 = vld [vmem:[%s13 + $0x3c8] sm:$0xff]
        %v3761 = vld [vmem:[%s13 + $0x3d0] sm:$0xf]
        %v3762 = vld [vmem:[%s13 + $0x3d4] sm:$0xff]
        %v3763 = vld [vmem:[%s13 + $0x3dc] sm:$0xff]
        %v3764 = vld [vmem:[%s13 + $0x3e4] sm:$0xff]
        %v3765 = vld [vmem:[%s13 + $0x3ec] sm:$0xf]
        %v3766 = vld [vmem:[%s13 + $0x3f0] sm:$0xff]
        %v3767 = vld [vmem:[%s13 + $0x3f8] sm:$0xff]
        %v3768 = vld [vmem:[%s13 + $0x400] sm:$0xff]
        %v3769 = vld [vmem:[%s13 + $0x408] sm:$0xf]
        %v3770 = vld [vmem:[%s13 + $0x40c] sm:$0xff]
        %v3771 = vld [vmem:[%s13 + $0x414] sm:$0xff]
        %v3772 = vld [vmem:[%s13 + $0x41c] sm:$0xff]
        %v3773 = vld [vmem:[%s13 + $0x424] sm:$0xf]
        %v3774 = vld [vmem:[%s13 + $0x428] sm:$0xff]
        %v3775 = vld [vmem:[%s13 + $0x430] sm:$0xff]
        %v3776 = vld [vmem:[%s13 + $0x438] sm:$0xff]
        %v3777 = vld [vmem:[%s13 + $0x440] sm:$0xf]
        %v3778 = vld [vmem:[%s13 + $0x444] sm:$0xff]
        %v3779 = vld [vmem:[%s13 + $0x44c] sm:$0xff]
        %v3780 = vld [vmem:[%s13 + $0x454] sm:$0xff]
        %v3781 = vld [vmem:[%s13 + $0x45c] sm:$0xf]
        %v3782 = vld [vmem:[%s13 + $0x460] sm:$0xff]
        %v3783 = vld [vmem:[%s13 + $0x468] sm:$0xff]
        %v3784 = vld [vmem:[%s13 + $0x470] sm:$0xff]
        %v3785 = vld [vmem:[%s13 + $0x478] sm:$0xf]
        %v3786 = vld [vmem:[%s13 + $0x47c] sm:$0xff]
        %v3787 = vld [vmem:[%s13 + $0x484] sm:$0xff]
        %v3788 = vld [vmem:[%s13 + $0x48c] sm:$0xff]
        %v3789 = vld [vmem:[%s13 + $0x494] sm:$0xf]
        %v3790 = vld [vmem:[%s13 + $0x498] sm:$0xff]
        %v3791 = vld [vmem:[%s13 + $0x4a0] sm:$0xff]
        %v3792 = vld [vmem:[%s13 + $0x4a8] sm:$0xff]
        %v3793 = vld [vmem:[%s13 + $0x4b0] sm:$0xf]
        %v3794 = vld [vmem:[%s13 + $0x4b4] sm:$0xff]
        %v3795 = vld [vmem:[%s13 + $0x4bc] sm:$0xff]
        %v3796 = vld [vmem:[%s13 + $0x4c4] sm:$0xff]
        %v3797 = vld [vmem:[%s13 + $0x4cc] sm:$0xf]
        %v3798 = vld [vmem:[%s13 + $0x4d0] sm:$0xff]
        %v3799 = vld [vmem:[%s13 + $0x4d8] sm:$0xff]
        %v3800 = vld [vmem:[%s13 + $0x4e0] sm:$0xff]
        %v3801 = vld [vmem:[%s13 + $0x4e8] sm:$0xf]
        %v3802 = vld [vmem:[%s13 + $0x4ec] sm:$0xff]
        %v3803 = vld [vmem:[%s13 + $0x4f4] sm:$0xff]
        %v3804 = vld [vmem:[%s13 + $0x4fc] sm:$0xff]
        %v3805 = vld [vmem:[%s13 + $0x504] sm:$0xf]
        %v3806 = vld [vmem:[%s13 + $0x508] sm:$0xff]
        %v3807 = vld [vmem:[%s13 + $0x510] sm:$0xff]
        %v3808 = vld [vmem:[%s13 + $0x518] sm:$0xff]
        %v3809 = vld [vmem:[%s13 + $0x520] sm:$0xf]
        %v3810 = vld [vmem:[%s13 + $0x524] sm:$0xff]
        %v3811 = vld [vmem:[%s13 + $0x52c] sm:$0xff]
        %v3812 = vld [vmem:[%s13 + $0x534] sm:$0xff]
        %v3813 = vld [vmem:[%s13 + $0x53c] sm:$0xf]
        %v3814 = vld [vmem:[%s13 + $0x540] sm:$0xff]
        %v3815 = vld [vmem:[%s13 + $0x548] sm:$0xff]
        %v3816 = vld [vmem:[%s13 + $0x550] sm:$0xff]
        %v3817 = vld [vmem:[%s13 + $0x558] sm:$0xf]
        %v3818 = vld [vmem:[%s13 + $0x55c] sm:$0xff]
        %v3819 = vld [vmem:[%s13 + $0x564] sm:$0xff]
        %v3820 = vld [vmem:[%s13 + $0x56c] sm:$0xff]
        %v3821 = vld [vmem:[%s13 + $0x574] sm:$0xf]
        %v3822 = vld [vmem:[%s14] sm:$0x7f]
        %v3824 = vlaneseq
        %v3825 = vshrl.u32 %v3824, 7
        %v3826 = vsub.s32 0, %v3825
        %v3827 = vrot.slane %v3822, %v3826
        %v3828 = vlaneseq
        %v3829 = vshrl.u32 %v3828, 7
        %v3830 = vsub.s32 1, %v3829
        %v3831 = vrot.slane %v3822, %v3830
        %v3832 = vlaneseq
        %v3833 = vshrl.u32 %v3832, 7
        %v3834 = vsub.s32 2, %v3833
        %v3835 = vrot.slane %v3822, %v3834
        %v3836 = vlaneseq
        %v3837 = vshrl.u32 %v3836, 7
        %v3838 = vsub.s32 3, %v3837
        %v3839 = vrot.slane %v3822, %v3838
        %v3840 = vlaneseq
        %v3841 = vshrl.u32 %v3840, 7
        %v3842 = vsub.s32 4, %v3841
        %v3843 = vrot.slane %v3822, %v3842
        %v3844 = vlaneseq
        %v3845 = vshrl.u32 %v3844, 7
        %v3846 = vsub.s32 5, %v3845
        %v3847 = vrot.slane %v3822, %v3846
        %v3848 = vlaneseq
        %v3849 = vshrl.u32 %v3848, 7
        %v3850 = vsub.s32 6, %v3849
        %v3851 = vrot.slane %v3822, %v3850
        %v4059 = vunpack.c.l.b16 %v3622
        %v4060 = vunpack.c.h.b16 %v3622
        %v4061 = vunpack.c.l.b16 %v3623
        %v4062 = vunpack.c.h.b16 %v3623
        %v4063 = vunpack.c.l.b16 %v3624
        %v4064 = vunpack.c.h.b16 %v3624
        %v4065 = vunpack.c.l.b16 %v3625
        %v4066 = vunpack.c.l.b16 %v3626
        %v4067 = vunpack.c.h.b16 %v3626
        %v4068 = vunpack.c.l.b16 %v3627
        %v4069 = vunpack.c.h.b16 %v3627
        %v4070 = vunpack.c.l.b16 %v3628
        %v4071 = vunpack.c.h.b16 %v3628
        %v4072 = vunpack.c.l.b16 %v3629
        %v4073 = vunpack.c.l.b16 %v3630
        %v4074 = vunpack.c.h.b16 %v3630
        %v4075 = vunpack.c.l.b16 %v3631
        %v4076 = vunpack.c.h.b16 %v3631
        %v4077 = vunpack.c.l.b16 %v3632
        %v4078 = vunpack.c.h.b16 %v3632
        %v4079 = vunpack.c.l.b16 %v3633
        %v4080 = vunpack.c.l.b16 %v3634
        %v4081 = vunpack.c.h.b16 %v3634
        %v4082 = vunpack.c.l.b16 %v3635
        %v4083 = vunpack.c.h.b16 %v3635
        %v4084 = vunpack.c.l.b16 %v3636
        %v4085 = vunpack.c.h.b16 %v3636
        %v4086 = vunpack.c.l.b16 %v3637
        %v4087 = vunpack.c.l.b16 %v3638
        %v4088 = vunpack.c.h.b16 %v3638
        %v4089 = vunpack.c.l.b16 %v3639
        %v4090 = vunpack.c.h.b16 %v3639
        %v4091 = vunpack.c.l.b16 %v3640
        %v4092 = vunpack.c.h.b16 %v3640
        %v4093 = vunpack.c.l.b16 %v3641
        %v4094 = vunpack.c.l.b16 %v3642
        %v4095 = vunpack.c.h.b16 %v3642
        %v4096 = vunpack.c.l.b16 %v3643
        %v4097 = vunpack.c.h.b16 %v3643
        %v4098 = vunpack.c.l.b16 %v3644
        %v4099 = vunpack.c.h.b16 %v3644
        %v4100 = vunpack.c.l.b16 %v3645
        %v4101 = vunpack.c.l.b16 %v3646
        %v4102 = vunpack.c.h.b16 %v3646
        %v4103 = vunpack.c.l.b16 %v3647
        %v4104 = vunpack.c.h.b16 %v3647
        %v4105 = vunpack.c.l.b16 %v3648
        %v4106 = vunpack.c.h.b16 %v3648
        %v4107 = vunpack.c.l.b16 %v3649
        %v4108 = vunpack.c.l.b16 %v3650
        %v4109 = vunpack.c.h.b16 %v3650
        %v4110 = vunpack.c.l.b16 %v3651
        %v4111 = vunpack.c.h.b16 %v3651
        %v4112 = vunpack.c.l.b16 %v3652
        %v4113 = vunpack.c.h.b16 %v3652
        %v4114 = vunpack.c.l.b16 %v3653
        %v4115 = vunpack.c.l.b16 %v3654
        %v4116 = vunpack.c.h.b16 %v3654
        %v4117 = vunpack.c.l.b16 %v3655
        %v4118 = vunpack.c.h.b16 %v3655
        %v4119 = vunpack.c.l.b16 %v3656
        %v4120 = vunpack.c.h.b16 %v3656
        %v4121 = vunpack.c.l.b16 %v3657
        %v4122 = vunpack.c.l.b16 %v3658
        %v4123 = vunpack.c.h.b16 %v3658
        %v4124 = vunpack.c.l.b16 %v3659
        %v4125 = vunpack.c.h.b16 %v3659
        %v4126 = vunpack.c.l.b16 %v3660
        %v4127 = vunpack.c.h.b16 %v3660
        %v4128 = vunpack.c.l.b16 %v3661
        %v4129 = vunpack.c.l.b16 %v3662
        %v4130 = vunpack.c.h.b16 %v3662
        %v4131 = vunpack.c.l.b16 %v3663
        %v4132 = vunpack.c.h.b16 %v3663
        %v4133 = vunpack.c.l.b16 %v3664
        %v4134 = vunpack.c.h.b16 %v3664
        %v4135 = vunpack.c.l.b16 %v3665
        %v4136 = vunpack.c.l.b16 %v3666
        %v4137 = vunpack.c.h.b16 %v3666
        %v4138 = vunpack.c.l.b16 %v3667
        %v4139 = vunpack.c.h.b16 %v3667
        %v4140 = vunpack.c.l.b16 %v3668
        %v4141 = vunpack.c.h.b16 %v3668
        %v4142 = vunpack.c.l.b16 %v3669
        %v4143 = vunpack.c.l.b16 %v3670
        %v4144 = vunpack.c.h.b16 %v3670
        %v4145 = vunpack.c.l.b16 %v3671
        %v4146 = vunpack.c.h.b16 %v3671
        %v4147 = vunpack.c.l.b16 %v3672
        %v4148 = vunpack.c.h.b16 %v3672
        %v4149 = vunpack.c.l.b16 %v3673
        %v4150 = vunpack.c.l.b16 %v3674
        %v4151 = vunpack.c.h.b16 %v3674
        %v4152 = vunpack.c.l.b16 %v3675
        %v4153 = vunpack.c.h.b16 %v3675
        %v4154 = vunpack.c.l.b16 %v3676
        %v4155 = vunpack.c.h.b16 %v3676
        %v4156 = vunpack.c.l.b16 %v3677
        %v4157 = vunpack.c.l.b16 %v3678
        %v4158 = vunpack.c.h.b16 %v3678
        %v4159 = vunpack.c.l.b16 %v3679
        %v4160 = vunpack.c.h.b16 %v3679
        %v4161 = vunpack.c.l.b16 %v3680
        %v4162 = vunpack.c.h.b16 %v3680
        %v4163 = vunpack.c.l.b16 %v3681
        %v4164 = vunpack.c.l.b16 %v3682
        %v4165 = vunpack.c.h.b16 %v3682
        %v4166 = vunpack.c.l.b16 %v3683
        %v4167 = vunpack.c.h.b16 %v3683
        %v4168 = vunpack.c.l.b16 %v3684
        %v4169 = vunpack.c.h.b16 %v3684
        %v4170 = vunpack.c.l.b16 %v3685
        %v4171 = vunpack.c.l.b16 %v3686
        %v4172 = vunpack.c.h.b16 %v3686
        %v4173 = vunpack.c.l.b16 %v3687
        %v4174 = vunpack.c.h.b16 %v3687
        %v4175 = vunpack.c.l.b16 %v3688
        %v4176 = vunpack.c.h.b16 %v3688
        %v4177 = vunpack.c.l.b16 %v3689
        %v4178 = vunpack.c.l.b16 %v3690
        %v4179 = vunpack.c.h.b16 %v3690
        %v4180 = vunpack.c.l.b16 %v3691
        %v4181 = vunpack.c.h.b16 %v3691
        %v4182 = vunpack.c.l.b16 %v3692
        %v4183 = vunpack.c.h.b16 %v3692
        %v4184 = vunpack.c.l.b16 %v3693
        %v4185 = vunpack.c.l.b16 %v3694
        %v4186 = vunpack.c.h.b16 %v3694
        %v4187 = vunpack.c.l.b16 %v3695
        %v4188 = vunpack.c.h.b16 %v3695
        %v4189 = vunpack.c.l.b16 %v3696
        %v4190 = vunpack.c.h.b16 %v3696
        %v4191 = vunpack.c.l.b16 %v3697
        %v4192 = vunpack.c.l.b16 %v3698
        %v4193 = vunpack.c.h.b16 %v3698
        %v4194 = vunpack.c.l.b16 %v3699
        %v4195 = vunpack.c.h.b16 %v3699
        %v4196 = vunpack.c.l.b16 %v3700
        %v4197 = vunpack.c.h.b16 %v3700
        %v4198 = vunpack.c.l.b16 %v3701
        %v4199 = vunpack.c.l.b16 %v3702
        %v4200 = vunpack.c.h.b16 %v3702
        %v4201 = vunpack.c.l.b16 %v3703
        %v4202 = vunpack.c.h.b16 %v3703
        %v4203 = vunpack.c.l.b16 %v3704
        %v4204 = vunpack.c.h.b16 %v3704
        %v4205 = vunpack.c.l.b16 %v3705
        %v4206 = vunpack.c.l.b16 %v3706
        %v4207 = vunpack.c.h.b16 %v3706
        %v4208 = vunpack.c.l.b16 %v3707
        %v4209 = vunpack.c.h.b16 %v3707
        %v4210 = vunpack.c.l.b16 %v3708
        %v4211 = vunpack.c.h.b16 %v3708
        %v4212 = vunpack.c.l.b16 %v3709
        %v4213 = vunpack.c.l.b16 %v3710
        %v4214 = vunpack.c.h.b16 %v3710
        %v4215 = vunpack.c.l.b16 %v3711
        %v4216 = vunpack.c.h.b16 %v3711
        %v4217 = vunpack.c.l.b16 %v3712
        %v4218 = vunpack.c.h.b16 %v3712
        %v4219 = vunpack.c.l.b16 %v3713
        %v4220 = vunpack.c.l.b16 %v3714
        %v4221 = vunpack.c.h.b16 %v3714
        %v4222 = vunpack.c.l.b16 %v3715
        %v4223 = vunpack.c.h.b16 %v3715
        %v4224 = vunpack.c.l.b16 %v3716
        %v4225 = vunpack.c.h.b16 %v3716
        %v4226 = vunpack.c.l.b16 %v3717
        %v4227 = vunpack.c.l.b16 %v3718
        %v4228 = vunpack.c.h.b16 %v3718
        %v4229 = vunpack.c.l.b16 %v3719
        %v4230 = vunpack.c.h.b16 %v3719
        %v4231 = vunpack.c.l.b16 %v3720
        %v4232 = vunpack.c.h.b16 %v3720
        %v4233 = vunpack.c.l.b16 %v3721
        %v4234 = vunpack.c.l.b16 %v3722
        %v4235 = vunpack.c.h.b16 %v3722
        %v4236 = vunpack.c.l.b16 %v3723
        %v4237 = vunpack.c.h.b16 %v3723
        %v4238 = vunpack.c.l.b16 %v3724
        %v4239 = vunpack.c.h.b16 %v3724
        %v4240 = vunpack.c.l.b16 %v3725
        %v4241 = vunpack.c.l.b16 %v3726
        %v4242 = vunpack.c.h.b16 %v3726
        %v4243 = vunpack.c.l.b16 %v3727
        %v4244 = vunpack.c.h.b16 %v3727
        %v4245 = vunpack.c.l.b16 %v3728
        %v4246 = vunpack.c.h.b16 %v3728
        %v4247 = vunpack.c.l.b16 %v3729
        %v4248 = vunpack.c.l.b16 %v3730
        %v4249 = vunpack.c.h.b16 %v3730
        %v4250 = vunpack.c.l.b16 %v3731
        %v4251 = vunpack.c.h.b16 %v3731
        %v4252 = vunpack.c.l.b16 %v3732
        %v4253 = vunpack.c.h.b16 %v3732
        %v4254 = vunpack.c.l.b16 %v3733
        %v4255 = vunpack.c.l.b16 %v3734
        %v4256 = vunpack.c.h.b16 %v3734
        %v4257 = vunpack.c.l.b16 %v3735
        %v4258 = vunpack.c.h.b16 %v3735
        %v4259 = vunpack.c.l.b16 %v3736
        %v4260 = vunpack.c.h.b16 %v3736
        %v4261 = vunpack.c.l.b16 %v3737
        %v4262 = vunpack.c.l.b16 %v3738
        %v4263 = vunpack.c.h.b16 %v3738
        %v4264 = vunpack.c.l.b16 %v3739
        %v4265 = vunpack.c.h.b16 %v3739
        %v4266 = vunpack.c.l.b16 %v3740
        %v4267 = vunpack.c.h.b16 %v3740
        %v4268 = vunpack.c.l.b16 %v3741
        %v4269 = vunpack.c.l.b16 %v3742
        %v4270 = vunpack.c.h.b16 %v3742
        %v4271 = vunpack.c.l.b16 %v3743
        %v4272 = vunpack.c.h.b16 %v3743
        %v4273 = vunpack.c.l.b16 %v3744
        %v4274 = vunpack.c.h.b16 %v3744
        %v4275 = vunpack.c.l.b16 %v3745
        %v4276 = vunpack.c.l.b16 %v3746
        %v4277 = vunpack.c.h.b16 %v3746
        %v4278 = vunpack.c.l.b16 %v3747
        %v4279 = vunpack.c.h.b16 %v3747
        %v4280 = vunpack.c.l.b16 %v3748
        %v4281 = vunpack.c.h.b16 %v3748
        %v4282 = vunpack.c.l.b16 %v3749
        %v4283 = vunpack.c.l.b16 %v3750
        %v4284 = vunpack.c.h.b16 %v3750
        %v4285 = vunpack.c.l.b16 %v3751
        %v4286 = vunpack.c.h.b16 %v3751
        %v4287 = vunpack.c.l.b16 %v3752
        %v4288 = vunpack.c.h.b16 %v3752
        %v4289 = vunpack.c.l.b16 %v3753
        %v4290 = vunpack.c.l.b16 %v3754
        %v4291 = vunpack.c.h.b16 %v3754
        %v4292 = vunpack.c.l.b16 %v3755
        %v4293 = vunpack.c.h.b16 %v3755
        %v4294 = vunpack.c.l.b16 %v3756
        %v4295 = vunpack.c.h.b16 %v3756
        %v4296 = vunpack.c.l.b16 %v3757
        %v4297 = vunpack.c.l.b16 %v3758
        %v4298 = vunpack.c.h.b16 %v3758
        %v4299 = vunpack.c.l.b16 %v3759
        %v4300 = vunpack.c.h.b16 %v3759
        %v4301 = vunpack.c.l.b16 %v3760
        %v4302 = vunpack.c.h.b16 %v3760
        %v4303 = vunpack.c.l.b16 %v3761
        %v4304 = vunpack.c.l.b16 %v3762
        %v4305 = vunpack.c.h.b16 %v3762
        %v4306 = vunpack.c.l.b16 %v3763
        %v4307 = vunpack.c.h.b16 %v3763
        %v4308 = vunpack.c.l.b16 %v3764
        %v4309 = vunpack.c.h.b16 %v3764
        %v4310 = vunpack.c.l.b16 %v3765
        %v4311 = vunpack.c.l.b16 %v3766
        %v4312 = vunpack.c.h.b16 %v3766
        %v4313 = vunpack.c.l.b16 %v3767
        %v4314 = vunpack.c.h.b16 %v3767
        %v4315 = vunpack.c.l.b16 %v3768
        %v4316 = vunpack.c.h.b16 %v3768
        %v4317 = vunpack.c.l.b16 %v3769
        %v4318 = vunpack.c.l.b16 %v3770
        %v4319 = vunpack.c.h.b16 %v3770
        %v4320 = vunpack.c.l.b16 %v3771
        %v4321 = vunpack.c.h.b16 %v3771
        %v4322 = vunpack.c.l.b16 %v3772
        %v4323 = vunpack.c.h.b16 %v3772
        %v4324 = vunpack.c.l.b16 %v3773
        %v4325 = vunpack.c.l.b16 %v3774
        %v4326 = vunpack.c.h.b16 %v3774
        %v4327 = vunpack.c.l.b16 %v3775
        %v4328 = vunpack.c.h.b16 %v3775
        %v4329 = vunpack.c.l.b16 %v3776
        %v4330 = vunpack.c.h.b16 %v3776
        %v4331 = vunpack.c.l.b16 %v3777
        %v4332 = vunpack.c.l.b16 %v3778
        %v4333 = vunpack.c.h.b16 %v3778
        %v4334 = vunpack.c.l.b16 %v3779
        %v4335 = vunpack.c.h.b16 %v3779
        %v4336 = vunpack.c.l.b16 %v3780
        %v4337 = vunpack.c.h.b16 %v3780
        %v4338 = vunpack.c.l.b16 %v3781
        %v4339 = vunpack.c.l.b16 %v3782
        %v4340 = vunpack.c.h.b16 %v3782
        %v4341 = vunpack.c.l.b16 %v3783
        %v4342 = vunpack.c.h.b16 %v3783
        %v4343 = vunpack.c.l.b16 %v3784
        %v4344 = vunpack.c.h.b16 %v3784
        %v4345 = vunpack.c.l.b16 %v3785
        %v4346 = vunpack.c.l.b16 %v3786
        %v4347 = vunpack.c.h.b16 %v3786
        %v4348 = vunpack.c.l.b16 %v3787
        %v4349 = vunpack.c.h.b16 %v3787
        %v4350 = vunpack.c.l.b16 %v3788
        %v4351 = vunpack.c.h.b16 %v3788
        %v4352 = vunpack.c.l.b16 %v3789
        %v4353 = vunpack.c.l.b16 %v3790
        %v4354 = vunpack.c.h.b16 %v3790
        %v4355 = vunpack.c.l.b16 %v3791
        %v4356 = vunpack.c.h.b16 %v3791
        %v4357 = vunpack.c.l.b16 %v3792
        %v4358 = vunpack.c.h.b16 %v3792
        %v4359 = vunpack.c.l.b16 %v3793
        %v4360 = vunpack.c.l.b16 %v3794
        %v4361 = vunpack.c.h.b16 %v3794
        %v4362 = vunpack.c.l.b16 %v3795
        %v4363 = vunpack.c.h.b16 %v3795
        %v4364 = vunpack.c.l.b16 %v3796
        %v4365 = vunpack.c.h.b16 %v3796
        %v4366 = vunpack.c.l.b16 %v3797
        %v4367 = vunpack.c.l.b16 %v3798
        %v4368 = vunpack.c.h.b16 %v3798
        %v4369 = vunpack.c.l.b16 %v3799
        %v4370 = vunpack.c.h.b16 %v3799
        %v4371 = vunpack.c.l.b16 %v3800
        %v4372 = vunpack.c.h.b16 %v3800
        %v4373 = vunpack.c.l.b16 %v3801
        %v4374 = vunpack.c.l.b16 %v3802
        %v4375 = vunpack.c.h.b16 %v3802
        %v4376 = vunpack.c.l.b16 %v3803
        %v4377 = vunpack.c.h.b16 %v3803
        %v4378 = vunpack.c.l.b16 %v3804
        %v4379 = vunpack.c.h.b16 %v3804
        %v4380 = vunpack.c.l.b16 %v3805
        %v4381 = vunpack.c.l.b16 %v3806
        %v4382 = vunpack.c.h.b16 %v3806
        %v4383 = vunpack.c.l.b16 %v3807
        %v4384 = vunpack.c.h.b16 %v3807
        %v4385 = vunpack.c.l.b16 %v3808
        %v4386 = vunpack.c.h.b16 %v3808
        %v4387 = vunpack.c.l.b16 %v3809
        %v4388 = vunpack.c.l.b16 %v3810
        %v4389 = vunpack.c.h.b16 %v3810
        %v4390 = vunpack.c.l.b16 %v3811
        %v4391 = vunpack.c.h.b16 %v3811
        %v4392 = vunpack.c.l.b16 %v3812
        %v4393 = vunpack.c.h.b16 %v3812
        %v4394 = vunpack.c.l.b16 %v3813
        %v4395 = vunpack.c.l.b16 %v3814
        %v4396 = vunpack.c.h.b16 %v3814
        %v4397 = vunpack.c.l.b16 %v3815
        %v4398 = vunpack.c.h.b16 %v3815
        %v4399 = vunpack.c.l.b16 %v3816
        %v4400 = vunpack.c.h.b16 %v3816
        %v4401 = vunpack.c.l.b16 %v3817
        %v4402 = vunpack.c.l.b16 %v3818
        %v4403 = vunpack.c.h.b16 %v3818
        %v4404 = vunpack.c.l.b16 %v3819
        %v4405 = vunpack.c.h.b16 %v3819
        %v4406 = vunpack.c.l.b16 %v3820
        %v4407 = vunpack.c.h.b16 %v3820
        %v4408 = vunpack.c.l.b16 %v3821
        %v4409 = vpack.c.b16 %v4066, %v4059
        %v4410 = vpack.c.b16 %v4067, %v4060
        %v4411 = vpack.c.b16 %v4068, %v4061
        %v4412 = vpack.c.b16 %v4069, %v4062
        %v4413 = vpack.c.b16 %v4070, %v4063
        %v4414 = vpack.c.b16 %v4071, %v4064
        %v4415 = vpack.c.b16 %v4072, %v4065
        %v4416 = vpack.c.b16 %v4080, %v4073
        %v4417 = vpack.c.b16 %v4081, %v4074
        %v4418 = vpack.c.b16 %v4082, %v4075
        %v4419 = vpack.c.b16 %v4083, %v4076
        %v4420 = vpack.c.b16 %v4084, %v4077
        %v4421 = vpack.c.b16 %v4085, %v4078
        %v4422 = vpack.c.b16 %v4086, %v4079
        %v4423 = vpack.c.b16 %v4094, %v4087
        %v4424 = vpack.c.b16 %v4095, %v4088
        %v4425 = vpack.c.b16 %v4096, %v4089
        %v4426 = vpack.c.b16 %v4097, %v4090
        %v4427 = vpack.c.b16 %v4098, %v4091
        %v4428 = vpack.c.b16 %v4099, %v4092
        %v4429 = vpack.c.b16 %v4100, %v4093
        %v4430 = vpack.c.b16 %v4108, %v4101
        %v4431 = vpack.c.b16 %v4109, %v4102
        %v4432 = vpack.c.b16 %v4110, %v4103
        %v4433 = vpack.c.b16 %v4111, %v4104
        %v4434 = vpack.c.b16 %v4112, %v4105
        %v4435 = vpack.c.b16 %v4113, %v4106
        %v4436 = vpack.c.b16 %v4114, %v4107
        %v4437 = vpack.c.b16 %v4122, %v4115
        %v4438 = vpack.c.b16 %v4123, %v4116
        %v4439 = vpack.c.b16 %v4124, %v4117
        %v4440 = vpack.c.b16 %v4125, %v4118
        %v4441 = vpack.c.b16 %v4126, %v4119
        %v4442 = vpack.c.b16 %v4127, %v4120
        %v4443 = vpack.c.b16 %v4128, %v4121
        %v4444 = vpack.c.b16 %v4136, %v4129
        %v4445 = vpack.c.b16 %v4137, %v4130
        %v4446 = vpack.c.b16 %v4138, %v4131
        %v4447 = vpack.c.b16 %v4139, %v4132
        %v4448 = vpack.c.b16 %v4140, %v4133
        %v4449 = vpack.c.b16 %v4141, %v4134
        %v4450 = vpack.c.b16 %v4142, %v4135
        %v4451 = vpack.c.b16 %v4150, %v4143
        %v4452 = vpack.c.b16 %v4151, %v4144
        %v4453 = vpack.c.b16 %v4152, %v4145
        %v4454 = vpack.c.b16 %v4153, %v4146
        %v4455 = vpack.c.b16 %v4154, %v4147
        %v4456 = vpack.c.b16 %v4155, %v4148
        %v4457 = vpack.c.b16 %v4156, %v4149
        %v4458 = vpack.c.b16 %v4164, %v4157
        %v4459 = vpack.c.b16 %v4165, %v4158
        %v4460 = vpack.c.b16 %v4166, %v4159
        %v4461 = vpack.c.b16 %v4167, %v4160
        %v4462 = vpack.c.b16 %v4168, %v4161
        %v4463 = vpack.c.b16 %v4169, %v4162
        %v4464 = vpack.c.b16 %v4170, %v4163
        %v4465 = vpack.c.b16 %v4178, %v4171
        %v4466 = vpack.c.b16 %v4179, %v4172
        %v4467 = vpack.c.b16 %v4180, %v4173
        %v4468 = vpack.c.b16 %v4181, %v4174
        %v4469 = vpack.c.b16 %v4182, %v4175
        %v4470 = vpack.c.b16 %v4183, %v4176
        %v4471 = vpack.c.b16 %v4184, %v4177
        %v4472 = vpack.c.b16 %v4192, %v4185
        %v4473 = vpack.c.b16 %v4193, %v4186
        %v4474 = vpack.c.b16 %v4194, %v4187
        %v4475 = vpack.c.b16 %v4195, %v4188
        %v4476 = vpack.c.b16 %v4196, %v4189
        %v4477 = vpack.c.b16 %v4197, %v4190
        %v4478 = vpack.c.b16 %v4198, %v4191
        %v4479 = vpack.c.b16 %v4206, %v4199
        %v4480 = vpack.c.b16 %v4207, %v4200
        %v4481 = vpack.c.b16 %v4208, %v4201
        %v4482 = vpack.c.b16 %v4209, %v4202
        %v4483 = vpack.c.b16 %v4210, %v4203
        %v4484 = vpack.c.b16 %v4211, %v4204
        %v4485 = vpack.c.b16 %v4212, %v4205
        %v4486 = vpack.c.b16 %v4220, %v4213
        %v4487 = vpack.c.b16 %v4221, %v4214
        %v4488 = vpack.c.b16 %v4222, %v4215
        %v4489 = vpack.c.b16 %v4223, %v4216
        %v4490 = vpack.c.b16 %v4224, %v4217
        %v4491 = vpack.c.b16 %v4225, %v4218
        %v4492 = vpack.c.b16 %v4226, %v4219
        %v4493 = vpack.c.b16 %v4234, %v4227
        %v4494 = vpack.c.b16 %v4235, %v4228
        %v4495 = vpack.c.b16 %v4236, %v4229
        %v4496 = vpack.c.b16 %v4237, %v4230
        %v4497 = vpack.c.b16 %v4238, %v4231
        %v4498 = vpack.c.b16 %v4239, %v4232
        %v4499 = vpack.c.b16 %v4240, %v4233
        %v4500 = vpack.c.b16 %v4248, %v4241
        %v4501 = vpack.c.b16 %v4249, %v4242
        %v4502 = vpack.c.b16 %v4250, %v4243
        %v4503 = vpack.c.b16 %v4251, %v4244
        %v4504 = vpack.c.b16 %v4252, %v4245
        %v4505 = vpack.c.b16 %v4253, %v4246
        %v4506 = vpack.c.b16 %v4254, %v4247
        %v4507 = vpack.c.b16 %v4262, %v4255
        %v4508 = vpack.c.b16 %v4263, %v4256
        %v4509 = vpack.c.b16 %v4264, %v4257
        %v4510 = vpack.c.b16 %v4265, %v4258
        %v4511 = vpack.c.b16 %v4266, %v4259
        %v4512 = vpack.c.b16 %v4267, %v4260
        %v4513 = vpack.c.b16 %v4268, %v4261
        %v4514 = vpack.c.b16 %v4276, %v4269
        %v4515 = vpack.c.b16 %v4277, %v4270
        %v4516 = vpack.c.b16 %v4278, %v4271
        %v4517 = vpack.c.b16 %v4279, %v4272
        %v4518 = vpack.c.b16 %v4280, %v4273
        %v4519 = vpack.c.b16 %v4281, %v4274
        %v4520 = vpack.c.b16 %v4282, %v4275
        %v4521 = vpack.c.b16 %v4290, %v4283
        %v4522 = vpack.c.b16 %v4291, %v4284
        %v4523 = vpack.c.b16 %v4292, %v4285
        %v4524 = vpack.c.b16 %v4293, %v4286
        %v4525 = vpack.c.b16 %v4294, %v4287
        %v4526 = vpack.c.b16 %v4295, %v4288
        %v4527 = vpack.c.b16 %v4296, %v4289
        %v4528 = vpack.c.b16 %v4304, %v4297
        %v4529 = vpack.c.b16 %v4305, %v4298
        %v4530 = vpack.c.b16 %v4306, %v4299
        %v4531 = vpack.c.b16 %v4307, %v4300
        %v4532 = vpack.c.b16 %v4308, %v4301
        %v4533 = vpack.c.b16 %v4309, %v4302
        %v4534 = vpack.c.b16 %v4310, %v4303
        %v4535 = vpack.c.b16 %v4318, %v4311
        %v4536 = vpack.c.b16 %v4319, %v4312
        %v4537 = vpack.c.b16 %v4320, %v4313
        %v4538 = vpack.c.b16 %v4321, %v4314
        %v4539 = vpack.c.b16 %v4322, %v4315
        %v4540 = vpack.c.b16 %v4323, %v4316
        %v4541 = vpack.c.b16 %v4324, %v4317
        %v4542 = vpack.c.b16 %v4332, %v4325
        %v4543 = vpack.c.b16 %v4333, %v4326
        %v4544 = vpack.c.b16 %v4334, %v4327
        %v4545 = vpack.c.b16 %v4335, %v4328
        %v4546 = vpack.c.b16 %v4336, %v4329
        %v4547 = vpack.c.b16 %v4337, %v4330
        %v4548 = vpack.c.b16 %v4338, %v4331
        %v4549 = vpack.c.b16 %v4346, %v4339
        %v4550 = vpack.c.b16 %v4347, %v4340
        %v4551 = vpack.c.b16 %v4348, %v4341
        %v4552 = vpack.c.b16 %v4349, %v4342
        %v4553 = vpack.c.b16 %v4350, %v4343
        %v4554 = vpack.c.b16 %v4351, %v4344
        %v4555 = vpack.c.b16 %v4352, %v4345
        %v4556 = vpack.c.b16 %v4360, %v4353
        %v4557 = vpack.c.b16 %v4361, %v4354
        %v4558 = vpack.c.b16 %v4362, %v4355
        %v4559 = vpack.c.b16 %v4363, %v4356
        %v4560 = vpack.c.b16 %v4364, %v4357
        %v4561 = vpack.c.b16 %v4365, %v4358
        %v4562 = vpack.c.b16 %v4366, %v4359
        %v4563 = vpack.c.b16 %v4374, %v4367
        %v4564 = vpack.c.b16 %v4375, %v4368
        %v4565 = vpack.c.b16 %v4376, %v4369
        %v4566 = vpack.c.b16 %v4377, %v4370
        %v4567 = vpack.c.b16 %v4378, %v4371
        %v4568 = vpack.c.b16 %v4379, %v4372
        %v4569 = vpack.c.b16 %v4380, %v4373
        %v4570 = vpack.c.b16 %v4388, %v4381
        %v4571 = vpack.c.b16 %v4389, %v4382
        %v4572 = vpack.c.b16 %v4390, %v4383
        %v4573 = vpack.c.b16 %v4391, %v4384
        %v4574 = vpack.c.b16 %v4392, %v4385
        %v4575 = vpack.c.b16 %v4393, %v4386
        %v4576 = vpack.c.b16 %v4394, %v4387
        %v4577 = vpack.c.b16 %v4402, %v4395
        %v4578 = vpack.c.b16 %v4403, %v4396
        %v4579 = vpack.c.b16 %v4404, %v4397
        %v4580 = vpack.c.b16 %v4405, %v4398
        %v4581 = vpack.c.b16 %v4406, %v4399
        %v4582 = vpack.c.b16 %v4407, %v4400
        %v4583 = vpack.c.b16 %v4408, %v4401
        %v4760 = vsel %vm3250, %v3621, 0
        %4762 = vmatprep.subr.bf16.mxu0 %v4459
        %4763 = vmatpush1.bf16.msra.mxu0 %v4458
        %4764 = vmatprep.subr.bf16.mxu0 %v4452
        %4765 = vmatpush1.bf16.msra.mxu0 %v4451
        %4766 = vmatprep.subr.bf16.mxu0 %v4445
        %4767 = vmatpush1.bf16.msra.mxu0 %v4444
        %4768 = vmatprep.subr.bf16.mxu0 %v4438
        %4769 = vmatpush1.bf16.msra.mxu0 %v4437
        %4770 = vmatprep.subr.bf16.mxu0 %v4431
        %4771 = vmatpush1.bf16.msra.mxu0 %v4430
        %4772 = vmatprep.subr.bf16.mxu0 %v4424
        %4773 = vmatpush1.bf16.msra.mxu0 %v4423
        %4774 = vmatprep.subr.bf16.mxu0 %v4417
        %4775 = vmatpush1.bf16.msra.mxu0 %v4416
        %4776 = vmatprep.subr.bf16.mxu0 %v4410
        %4777 = vmatpush1.bf16.msra.mxu0 %v4409
        %4778 = vmatprep.subr.bf16.mxu0 %v4515
        %4779 = vmatpush2.bf16.msra.mxu0 %v4514
        %4780 = vmatprep.subr.bf16.mxu0 %v4508
        %4781 = vmatpush2.bf16.msra.mxu0 %v4507
        %4782 = vmatprep.subr.bf16.mxu0 %v4501
        %4783 = vmatpush2.bf16.msra.mxu0 %v4500
        %4784 = vmatprep.subr.bf16.mxu0 %v4494
        %4785 = vmatpush2.bf16.msra.mxu0 %v4493
        %4786 = vmatprep.subr.bf16.mxu0 %v4487
        %4787 = vmatpush2.bf16.msra.mxu0 %v4486
        %4788 = vmatprep.subr.bf16.mxu0 %v4480
        %4789 = vmatpush2.bf16.msra.mxu0 %v4479
        %4790 = vmatprep.subr.bf16.mxu0 %v4473
        %4791 = vmatpush2.bf16.msra.mxu0 %v4472
        %4792 = vmatprep.subr.bf16.mxu0 %v4466
        %4793 = vmatpush2.bf16.msra.mxu0 %v4465
        %4794 = vmatprep.mubr.bf16.mxu0 %v3619
        %4795 = vmatmul.mubr.bf16.gmra.mxu0 %v3618
        %v4796 = vpop.f32.mrf.mxu0
        %v4797 = vadd.f32 %v3827, %v4796
        %v4798 = vpop.f32.mrf.mxu0
        %v4799 = vadd.f32 %v3831, %v4798
        %v4800 = vpop.f32.mrf.mxu0
        %v4801 = vadd.f32 %v3827, %v4800
        %v4802 = vpop.f32.mrf.mxu0
        %v4803 = vadd.f32 %v3831, %v4802
        %4804 = vdwg.mxu0
        %4805 = vmatprep.subr.bf16.mxu0 %v4571
        %4806 = vmatpush1.bf16.msra.mxu0 %v4570
        %4807 = vmatprep.subr.bf16.mxu0 %v4564
        %4808 = vmatpush1.bf16.msra.mxu0 %v4563
        %4809 = vmatprep.subr.bf16.mxu0 %v4557
        %4810 = vmatpush1.bf16.msra.mxu0 %v4556
        %4811 = vmatprep.subr.bf16.mxu0 %v4550
        %4812 = vmatpush1.bf16.msra.mxu0 %v4549
        %4813 = vmatprep.subr.bf16.mxu0 %v4543
        %4814 = vmatpush1.bf16.msra.mxu0 %v4542
        %4815 = vmatprep.subr.bf16.mxu0 %v4536
        %4816 = vmatpush1.bf16.msra.mxu0 %v4535
        %4817 = vmatprep.subr.bf16.mxu0 %v4529
        %4818 = vmatpush1.bf16.msra.mxu0 %v4528
        %4819 = vmatprep.subr.bf16.mxu0 %v4522
        %4820 = vmatpush1.bf16.msra.mxu0 %v4521
        %4821 = vmatprep.subr.bf16.mxu0 0
        %4822 = vmatpush2.bf16.msra.mxu0 0
        %4823 = vmatprep.subr.bf16.mxu0 0
        %4824 = vmatpush2.bf16.msra.mxu0 0
        %4825 = vmatprep.subr.bf16.mxu0 0
        %4826 = vmatpush2.bf16.msra.mxu0 0
        %4827 = vmatprep.subr.bf16.mxu0 0
        %4828 = vmatpush2.bf16.msra.mxu0 0
        %4829 = vmatprep.subr.bf16.mxu0 0
        %4830 = vmatpush2.bf16.msra.mxu0 0
        %4831 = vmatprep.subr.bf16.mxu0 0
        %4832 = vmatpush2.bf16.msra.mxu0 0
        %4833 = vmatprep.subr.bf16.mxu0 0
        %4834 = vmatpush2.bf16.msra.mxu0 0
        %4835 = vmatprep.subr.bf16.mxu0 %v4578
        %4836 = vmatpush2.bf16.msra.mxu0 %v4577
        %4837 = vmatprep.mubr.bf16.mxu0 %v4760
        %4838 = vmatmul.mubr.bf16.gmra.mxu0 %v3620
        %v4839 = vpop.f32.mrf.mxu0
        %v4840 = vadd.f32 %v4797, %v4839
        %v4841 = vpop.f32.mrf.mxu0
        %v4842 = vadd.f32 %v4799, %v4841
        %v4843 = vpop.f32.mrf.mxu0
        %v4844 = vadd.f32 %v4801, %v4843
        %v4845 = vpop.f32.mrf.mxu0
        %v4846 = vadd.f32 %v4803, %v4845
        %4847 = vdwg.mxu0
        %4848 = vmatprep.subr.bf16.mxu0 %v4461
        %4849 = vmatpush1.bf16.msra.mxu0 %v4460
        %4850 = vmatprep.subr.bf16.mxu0 %v4454
        %4851 = vmatpush1.bf16.msra.mxu0 %v4453
        %4852 = vmatprep.subr.bf16.mxu0 %v4447
        %4853 = vmatpush1.bf16.msra.mxu0 %v4446
        %4854 = vmatprep.subr.bf16.mxu0 %v4440
        %4855 = vmatpush1.bf16.msra.mxu0 %v4439
        %4856 = vmatprep.subr.bf16.mxu0 %v4433
        %4857 = vmatpush1.bf16.msra.mxu0 %v4432
        %4858 = vmatprep.subr.bf16.mxu0 %v4426
        %4859 = vmatpush1.bf16.msra.mxu0 %v4425
        %4860 = vmatprep.subr.bf16.mxu0 %v4419
        %4861 = vmatpush1.bf16.msra.mxu0 %v4418
        %4862 = vmatprep.subr.bf16.mxu0 %v4412
        %4863 = vmatpush1.bf16.msra.mxu0 %v4411
        %4864 = vmatprep.subr.bf16.mxu0 %v4517
        %4865 = vmatpush2.bf16.msra.mxu0 %v4516
        %4866 = vmatprep.subr.bf16.mxu0 %v4510
        %4867 = vmatpush2.bf16.msra.mxu0 %v4509
        %4868 = vmatprep.subr.bf16.mxu0 %v4503
        %4869 = vmatpush2.bf16.msra.mxu0 %v4502
        %4870 = vmatprep.subr.bf16.mxu0 %v4496
        %4871 = vmatpush2.bf16.msra.mxu0 %v4495
        %4872 = vmatprep.subr.bf16.mxu0 %v4489
        %4873 = vmatpush2.bf16.msra.mxu0 %v4488
        %4874 = vmatprep.subr.bf16.mxu0 %v4482
        %4875 = vmatpush2.bf16.msra.mxu0 %v4481
        %4876 = vmatprep.subr.bf16.mxu0 %v4475
        %4877 = vmatpush2.bf16.msra.mxu0 %v4474
        %4878 = vmatprep.subr.bf16.mxu0 %v4468
        %4879 = vmatpush2.bf16.msra.mxu0 %v4467
        %4880 = vmatprep.mubr.bf16.mxu0 %v3619
        %4881 = vmatmul.mubr.bf16.gmra.mxu0 %v3618
        %v4882 = vpop.f32.mrf.mxu0
        %v4883 = vadd.f32 %v3835, %v4882
        %v4884 = vpop.f32.mrf.mxu0
        %v4885 = vadd.f32 %v3839, %v4884
        %v4886 = vpop.f32.mrf.mxu0
        %v4887 = vadd.f32 %v3835, %v4886
        %v4888 = vpop.f32.mrf.mxu0
        %v4889 = vadd.f32 %v3839, %v4888
        %4890 = vdwg.mxu0
        %4891 = vmatprep.subr.bf16.mxu0 %v4573
        %4892 = vmatpush1.bf16.msra.mxu0 %v4572
        %4893 = vmatprep.subr.bf16.mxu0 %v4566
        %4894 = vmatpush1.bf16.msra.mxu0 %v4565
        %4895 = vmatprep.subr.bf16.mxu0 %v4559
        %4896 = vmatpush1.bf16.msra.mxu0 %v4558
        %4897 = vmatprep.subr.bf16.mxu0 %v4552
        %4898 = vmatpush1.bf16.msra.mxu0 %v4551
        %4899 = vmatprep.subr.bf16.mxu0 %v4545
        %4900 = vmatpush1.bf16.msra.mxu0 %v4544
        %4901 = vmatprep.subr.bf16.mxu0 %v4538
        %4902 = vmatpush1.bf16.msra.mxu0 %v4537
        %4903 = vmatprep.subr.bf16.mxu0 %v4531
        %4904 = vmatpush1.bf16.msra.mxu0 %v4530
        %4905 = vmatprep.subr.bf16.mxu0 %v4524
        %4906 = vmatpush1.bf16.msra.mxu0 %v4523
        %4907 = vmatprep.subr.bf16.mxu0 0
        %4908 = vmatpush2.bf16.msra.mxu0 0
        %4909 = vmatprep.subr.bf16.mxu0 0
        %4910 = vmatpush2.bf16.msra.mxu0 0
        %4911 = vmatprep.subr.bf16.mxu0 0
        %4912 = vmatpush2.bf16.msra.mxu0 0
        %4913 = vmatprep.subr.bf16.mxu0 0
        %4914 = vmatpush2.bf16.msra.mxu0 0
        %4915 = vmatprep.subr.bf16.mxu0 0
        %4916 = vmatpush2.bf16.msra.mxu0 0
        %4917 = vmatprep.subr.bf16.mxu0 0
        %4918 = vmatpush2.bf16.msra.mxu0 0
        %4919 = vmatprep.subr.bf16.mxu0 0
        %4920 = vmatpush2.bf16.msra.mxu0 0
        %4921 = vmatprep.subr.bf16.mxu0 %v4580
        %4922 = vmatpush2.bf16.msra.mxu0 %v4579
        %4923 = vmatprep.mubr.bf16.mxu0 %v4760
        %4924 = vmatmul.mubr.bf16.gmra.mxu0 %v3620
        %v4925 = vpop.f32.mrf.mxu0
        %v4926 = vadd.f32 %v4883, %v4925
        %v4927 = vpop.f32.mrf.mxu0
        %v4928 = vadd.f32 %v4885, %v4927
        %v4929 = vpop.f32.mrf.mxu0
        %v4930 = vadd.f32 %v4887, %v4929
        %v4931 = vpop.f32.mrf.mxu0
        %v4932 = vadd.f32 %v4889, %v4931
        %4933 = vdwg.mxu0
        %4934 = vmatprep.subr.bf16.mxu0 %v4463
        %4935 = vmatpush1.bf16.msra.mxu0 %v4462
        %4936 = vmatprep.subr.bf16.mxu0 %v4456
        %4937 = vmatpush1.bf16.msra.mxu0 %v4455
        %4938 = vmatprep.subr.bf16.mxu0 %v4449
        %4939 = vmatpush1.bf16.msra.mxu0 %v4448
        %4940 = vmatprep.subr.bf16.mxu0 %v4442
        %4941 = vmatpush1.bf16.msra.mxu0 %v4441
        %4942 = vmatprep.subr.bf16.mxu0 %v4435
        %4943 = vmatpush1.bf16.msra.mxu0 %v4434
        %4944 = vmatprep.subr.bf16.mxu0 %v4428
        %4945 = vmatpush1.bf16.msra.mxu0 %v4427
        %4946 = vmatprep.subr.bf16.mxu0 %v4421
        %4947 = vmatpush1.bf16.msra.mxu0 %v4420
        %4948 = vmatprep.subr.bf16.mxu0 %v4414
        %4949 = vmatpush1.bf16.msra.mxu0 %v4413
        %4950 = vmatprep.subr.bf16.mxu0 %v4519
        %4951 = vmatpush2.bf16.msra.mxu0 %v4518
        %4952 = vmatprep.subr.bf16.mxu0 %v4512
        %4953 = vmatpush2.bf16.msra.mxu0 %v4511
        %4954 = vmatprep.subr.bf16.mxu0 %v4505
        %4955 = vmatpush2.bf16.msra.mxu0 %v4504
        %4956 = vmatprep.subr.bf16.mxu0 %v4498
        %4957 = vmatpush2.bf16.msra.mxu0 %v4497
        %4958 = vmatprep.subr.bf16.mxu0 %v4491
        %4959 = vmatpush2.bf16.msra.mxu0 %v4490
        %4960 = vmatprep.subr.bf16.mxu0 %v4484
        %4961 = vmatpush2.bf16.msra.mxu0 %v4483
        %4962 = vmatprep.subr.bf16.mxu0 %v4477
        %4963 = vmatpush2.bf16.msra.mxu0 %v4476
        %4964 = vmatprep.subr.bf16.mxu0 %v4470
        %4965 = vmatpush2.bf16.msra.mxu0 %v4469
        %4966 = vmatprep.mubr.bf16.mxu0 %v3619
        %4967 = vmatmul.mubr.bf16.gmra.mxu0 %v3618
        %v4968 = vpop.f32.mrf.mxu0
        %v4969 = vadd.f32 %v3843, %v4968
        %v4970 = vpop.f32.mrf.mxu0
        %v4971 = vadd.f32 %v3847, %v4970
        %v4972 = vpop.f32.mrf.mxu0
        %v4973 = vadd.f32 %v3843, %v4972
        %v4974 = vpop.f32.mrf.mxu0
        %v4975 = vadd.f32 %v3847, %v4974
        %4976 = vdwg.mxu0
        %4977 = vmatprep.subr.bf16.mxu0 %v4575
        %4978 = vmatpush1.bf16.msra.mxu0 %v4574
        %4979 = vmatprep.subr.bf16.mxu0 %v4568
        %4980 = vmatpush1.bf16.msra.mxu0 %v4567
        %4981 = vmatprep.subr.bf16.mxu0 %v4561
        %4982 = vmatpush1.bf16.msra.mxu0 %v4560
        %4983 = vmatprep.subr.bf16.mxu0 %v4554
        %4984 = vmatpush1.bf16.msra.mxu0 %v4553
        %4985 = vmatprep.subr.bf16.mxu0 %v4547
        %4986 = vmatpush1.bf16.msra.mxu0 %v4546
        %4987 = vmatprep.subr.bf16.mxu0 %v4540
        %4988 = vmatpush1.bf16.msra.mxu0 %v4539
        %4989 = vmatprep.subr.bf16.mxu0 %v4533
        %4990 = vmatpush1.bf16.msra.mxu0 %v4532
        %4991 = vmatprep.subr.bf16.mxu0 %v4526
        %4992 = vmatpush1.bf16.msra.mxu0 %v4525
        %4993 = vmatprep.subr.bf16.mxu0 0
        %4994 = vmatpush2.bf16.msra.mxu0 0
        %4995 = vmatprep.subr.bf16.mxu0 0
        %4996 = vmatpush2.bf16.msra.mxu0 0
        %4997 = vmatprep.subr.bf16.mxu0 0
        %4998 = vmatpush2.bf16.msra.mxu0 0
        %4999 = vmatprep.subr.bf16.mxu0 0
        %5000 = vmatpush2.bf16.msra.mxu0 0
        %5001 = vmatprep.subr.bf16.mxu0 0
        %5002 = vmatpush2.bf16.msra.mxu0 0
        %5003 = vmatprep.subr.bf16.mxu0 0
        %5004 = vmatpush2.bf16.msra.mxu0 0
        %5005 = vmatprep.subr.bf16.mxu0 0
        %5006 = vmatpush2.bf16.msra.mxu0 0
        %5007 = vmatprep.subr.bf16.mxu0 %v4582
        %5008 = vmatpush2.bf16.msra.mxu0 %v4581
        %5009 = vmatprep.mubr.bf16.mxu0 %v4760
        %5010 = vmatmul.mubr.bf16.gmra.mxu0 %v3620
        %v5011 = vpop.f32.mrf.mxu0
        %v5012 = vadd.f32 %v4969, %v5011
        %v5013 = vpop.f32.mrf.mxu0
        %v5014 = vadd.f32 %v4971, %v5013
        %v5015 = vpop.f32.mrf.mxu0
        %v5016 = vadd.f32 %v4973, %v5015
        %v5017 = vpop.f32.mrf.mxu0
        %v5018 = vadd.f32 %v4975, %v5017
        %5019 = vdwg.mxu0
        %5020 = vmatprep.subr.bf16.mxu0 0
        %5021 = vmatpush1.bf16.msra.mxu0 %v4464
        %5022 = vmatprep.subr.bf16.mxu0 0
        %5023 = vmatpush1.bf16.msra.mxu0 %v4457
        %5024 = vmatprep.subr.bf16.mxu0 0
        %5025 = vmatpush1.bf16.msra.mxu0 %v4450
        %5026 = vmatprep.subr.bf16.mxu0 0
        %5027 = vmatpush1.bf16.msra.mxu0 %v4443
        %5028 = vmatprep.subr.bf16.mxu0 0
        %5029 = vmatpush1.bf16.msra.mxu0 %v4436
        %5030 = vmatprep.subr.bf16.mxu0 0
        %5031 = vmatpush1.bf16.msra.mxu0 %v4429
        %5032 = vmatprep.subr.bf16.mxu0 0
        %5033 = vmatpush1.bf16.msra.mxu0 %v4422
        %5034 = vmatprep.subr.bf16.mxu0 0
        %5035 = vmatpush1.bf16.msra.mxu0 %v4415
        %5036 = vmatprep.subr.bf16.mxu0 0
        %5037 = vmatpush2.bf16.msra.mxu0 %v4520
        %5038 = vmatprep.subr.bf16.mxu0 0
        %5039 = vmatpush2.bf16.msra.mxu0 %v4513
        %5040 = vmatprep.subr.bf16.mxu0 0
        %5041 = vmatpush2.bf16.msra.mxu0 %v4506
        %5042 = vmatprep.subr.bf16.mxu0 0
        %5043 = vmatpush2.bf16.msra.mxu0 %v4499
        %5044 = vmatprep.subr.bf16.mxu0 0
        %5045 = vmatpush2.bf16.msra.mxu0 %v4492
        %5046 = vmatprep.subr.bf16.mxu0 0
        %5047 = vmatpush2.bf16.msra.mxu0 %v4485
        %5048 = vmatprep.subr.bf16.mxu0 0
        %5049 = vmatpush2.bf16.msra.mxu0 %v4478
        %5050 = vmatprep.subr.bf16.mxu0 0
        %5051 = vmatpush2.bf16.msra.mxu0 %v4471
        %5052 = vmatprep.mubr.bf16.mxu0 %v3619
        %5053 = vmatmul.mubr.bf16.gmra.mxu0 %v3618
        %v5054 = vpop.f32.mrf.mxu0
        %v5055 = vadd.f32 %v3851, %v5054
        %v5056 = vpop.f32.mrf.mxu0
        %v5057 = vpop.f32.mrf.mxu0
        %v5058 = vadd.f32 %v3851, %v5057
        %v5059 = vpop.f32.mrf.mxu0
        %5060 = vdwg.mxu0
        %5061 = vmatprep.subr.bf16.mxu0 0
        %5062 = vmatpush1.bf16.msra.mxu0 %v4576
        %5063 = vmatprep.subr.bf16.mxu0 0
        %5064 = vmatpush1.bf16.msra.mxu0 %v4569
        %5065 = vmatprep.subr.bf16.mxu0 0
        %5066 = vmatpush1.bf16.msra.mxu0 %v4562
        %5067 = vmatprep.subr.bf16.mxu0 0
        %5068 = vmatpush1.bf16.msra.mxu0 %v4555
        %5069 = vmatprep.subr.bf16.mxu0 0
        %5070 = vmatpush1.bf16.msra.mxu0 %v4548
        %5071 = vmatprep.subr.bf16.mxu0 0
        %5072 = vmatpush1.bf16.msra.mxu0 %v4541
        %5073 = vmatprep.subr.bf16.mxu0 0
        %5074 = vmatpush1.bf16.msra.mxu0 %v4534
        %5075 = vmatprep.subr.bf16.mxu0 0
        %5076 = vmatpush1.bf16.msra.mxu0 %v4527
        %5077 = vmatprep.subr.bf16.mxu0 0
        %5078 = vmatpush2.bf16.msra.mxu0 0
        %5079 = vmatprep.subr.bf16.mxu0 0
        %5080 = vmatpush2.bf16.msra.mxu0 0
        %5081 = vmatprep.subr.bf16.mxu0 0
        %5082 = vmatpush2.bf16.msra.mxu0 0
        %5083 = vmatprep.subr.bf16.mxu0 0
        %5084 = vmatpush2.bf16.msra.mxu0 0
        %5085 = vmatprep.subr.bf16.mxu0 0
        %5086 = vmatpush2.bf16.msra.mxu0 0
        %5087 = vmatprep.subr.bf16.mxu0 0
        %5088 = vmatpush2.bf16.msra.mxu0 0
        %5089 = vmatprep.subr.bf16.mxu0 0
        %5090 = vmatpush2.bf16.msra.mxu0 0
        %5091 = vmatprep.subr.bf16.mxu0 0
        %5092 = vmatpush2.bf16.msra.mxu0 %v4583
        %5093 = vmatprep.mubr.bf16.mxu0 %v4760
        %5094 = vmatmul.mubr.bf16.gmra.mxu0 %v3620
        %v5095 = vpop.f32.mrf.mxu0
        %v5096 = vadd.f32 %v5055, %v5095
        %v5097 = vpop.f32.mrf.mxu0
        %v5098 = vpop.f32.mrf.mxu0
        %v5099 = vadd.f32 %v5058, %v5098
        %v5100 = vpop.f32.mrf.mxu0
        %5101 = vdwg.mxu0
        %v5102 = vmax.f32 %v4840, 0.0
        %v5103 = vmax.f32 %v4842, 0.0
        %v5104 = vmax.f32 %v4926, 0.0
        %v5105 = vmax.f32 %v4928, 0.0
        %v5106 = vmax.f32 %v5012, 0.0
        %v5107 = vmax.f32 %v5014, 0.0
        %v5108 = vmax.f32 %v5096, 0.0
        %v5109 = vmax.f32 %v4844, 0.0
        %v5110 = vmax.f32 %v4846, 0.0
        %v5111 = vmax.f32 %v4930, 0.0
        %v5112 = vmax.f32 %v4932, 0.0
        %v5113 = vmax.f32 %v5016, 0.0
        %v5114 = vmax.f32 %v5018, 0.0
        %v5115 = vmax.f32 %v5099, 0.0
        %v5116 = vpack.c.bf16 %v5109, %v5102
        %v5117 = vpack.c.bf16 %v5110, %v5103
        %v5118 = vpack.c.bf16 %v5111, %v5104
        %v5119 = vpack.c.bf16 %v5112, %v5105
        %v5120 = vpack.c.bf16 %v5113, %v5106
        %v5121 = vpack.c.bf16 %v5114, %v5107
        %v5122 = vpack.c.bf16 %v5115, %v5108
        %v5123 = vld [vmem:[%s15] sm:$0xf]
        %v5124 = vld [vmem:[%s15 + $0x4] sm:$0xf]
        %v5125 = vld [vmem:[%s15 + $0x8] sm:$0xf]
        %v5126 = vld [vmem:[%s15 + $0xc] sm:$0xf]
        %v5127 = vld [vmem:[%s15 + $0x10] sm:$0xf]
        %v5128 = vld [vmem:[%s15 + $0x14] sm:$0xf]
        %v5129 = vld [vmem:[%s15 + $0x18] sm:$0xf]
        %v5130 = vld [vmem:[%s15 + $0x1c] sm:$0xf]
        %v5131 = vld [vmem:[%s15 + $0x20] sm:$0xf]
        %v5132 = vld [vmem:[%s15 + $0x24] sm:$0xf]
        %v5133 = vld [vmem:[%s15 + $0x28] sm:$0xf]
        %v5134 = vld [vmem:[%s15 + $0x2c] sm:$0xf]
        %v5135 = vld [vmem:[%s15 + $0x30] sm:$0xf]
        %v5136 = vld [vmem:[%s15 + $0x34] sm:$0xf]
        %v5137 = vld [vmem:[%s15 + $0x38] sm:$0xf]
        %v5138 = vld [vmem:[%s15 + $0x3c] sm:$0xf]
        %v5139 = vld [vmem:[%s15 + $0x40] sm:$0xf]
        %v5140 = vld [vmem:[%s15 + $0x44] sm:$0xf]
        %v5141 = vld [vmem:[%s15 + $0x48] sm:$0xf]
        %v5142 = vld [vmem:[%s15 + $0x4c] sm:$0xf]
        %v5143 = vld [vmem:[%s15 + $0x50] sm:$0xf]
        %v5144 = vld [vmem:[%s15 + $0x54] sm:$0xf]
        %v5145 = vld [vmem:[%s15 + $0x58] sm:$0xf]
        %v5146 = vld [vmem:[%s15 + $0x5c] sm:$0xf]
        %v5147 = vld [vmem:[%s15 + $0x60] sm:$0xf]
        %v5148 = vld [vmem:[%s15 + $0x64] sm:$0xf]
        %v5149 = vld [vmem:[%s15 + $0x68] sm:$0xf]
        %v5150 = vld [vmem:[%s15 + $0x6c] sm:$0xf]
        %v5151 = vld [vmem:[%s15 + $0x70] sm:$0xf]
        %v5152 = vld [vmem:[%s15 + $0x74] sm:$0xf]
        %v5153 = vld [vmem:[%s15 + $0x78] sm:$0xf]
        %v5154 = vld [vmem:[%s15 + $0x7c] sm:$0xf]
        %v5155 = vld [vmem:[%s15 + $0x80] sm:$0xf]
        %v5156 = vld [vmem:[%s15 + $0x84] sm:$0xf]
        %v5157 = vld [vmem:[%s15 + $0x88] sm:$0xf]
        %v5158 = vld [vmem:[%s15 + $0x8c] sm:$0xf]
        %v5159 = vld [vmem:[%s15 + $0x90] sm:$0xf]
        %v5160 = vld [vmem:[%s15 + $0x94] sm:$0xf]
        %v5161 = vld [vmem:[%s15 + $0x98] sm:$0xf]
        %v5162 = vld [vmem:[%s15 + $0x9c] sm:$0xf]
        %v5163 = vld [vmem:[%s15 + $0xa0] sm:$0xf]
        %v5164 = vld [vmem:[%s15 + $0xa4] sm:$0xf]
        %v5165 = vld [vmem:[%s15 + $0xa8] sm:$0xf]
        %v5166 = vld [vmem:[%s15 + $0xac] sm:$0xf]
        %v5167 = vld [vmem:[%s15 + $0xb0] sm:$0xf]
        %v5168 = vld [vmem:[%s15 + $0xb4] sm:$0xf]
        %v5169 = vld [vmem:[%s15 + $0xb8] sm:$0xf]
        %v5170 = vld [vmem:[%s15 + $0xbc] sm:$0xf]
        %v5171 = vld [vmem:[%s15 + $0xc0] sm:$0xf]
        %v5172 = vld [vmem:[%s15 + $0xc4] sm:$0xf]
        %v5173 = vld [vmem:[%s15 + $0xc8] sm:$0xf]
        %v5174 = vld [vmem:[%s15 + $0xcc] sm:$0xf]
        %v5175 = vld [vmem:[%s15 + $0xd0] sm:$0xf]
        %v5176 = vld [vmem:[%s15 + $0xd4] sm:$0xf]
        %v5177 = vld [vmem:[%s15 + $0xd8] sm:$0xf]
        %v5178 = vld [vmem:[%s15 + $0xdc] sm:$0xf]
        %v5179 = vld [vmem:[%s15 + $0xe0] sm:$0xf]
        %v5180 = vld [vmem:[%s15 + $0xe4] sm:$0xf]
        %v5181 = vld [vmem:[%s15 + $0xe8] sm:$0xf]
        %v5182 = vld [vmem:[%s15 + $0xec] sm:$0xf]
        %v5183 = vld [vmem:[%s15 + $0xf0] sm:$0xf]
        %v5184 = vld [vmem:[%s15 + $0xf4] sm:$0xf]
        %v5185 = vld [vmem:[%s15 + $0xf8] sm:$0xf]
        %v5186 = vld [vmem:[%s15 + $0xfc] sm:$0xf]
        %v5187 = vld [vmem:[%s15 + $0x100] sm:$0xf]
        %v5188 = vld [vmem:[%s15 + $0x104] sm:$0xf]
        %v5189 = vld [vmem:[%s15 + $0x108] sm:$0xf]
        %v5190 = vld [vmem:[%s15 + $0x10c] sm:$0xf]
        %v5191 = vld [vmem:[%s15 + $0x110] sm:$0xf]
        %v5192 = vld [vmem:[%s15 + $0x114] sm:$0xf]
        %v5193 = vld [vmem:[%s15 + $0x118] sm:$0xf]
        %v5194 = vld [vmem:[%s15 + $0x11c] sm:$0xf]
        %v5195 = vld [vmem:[%s15 + $0x120] sm:$0xf]
        %v5196 = vld [vmem:[%s15 + $0x124] sm:$0xf]
        %v5197 = vld [vmem:[%s15 + $0x128] sm:$0xf]
        %v5198 = vld [vmem:[%s15 + $0x12c] sm:$0xf]
        %v5199 = vld [vmem:[%s15 + $0x130] sm:$0xf]
        %v5200 = vld [vmem:[%s15 + $0x134] sm:$0xf]
        %v5201 = vld [vmem:[%s15 + $0x138] sm:$0xf]
        %v5202 = vld [vmem:[%s15 + $0x13c] sm:$0xf]
        %v5203 = vld [vmem:[%s15 + $0x140] sm:$0xf]
        %v5204 = vld [vmem:[%s15 + $0x144] sm:$0xf]
        %v5205 = vld [vmem:[%s15 + $0x148] sm:$0xf]
        %v5206 = vld [vmem:[%s15 + $0x14c] sm:$0xf]
        %v5207 = vld [vmem:[%s15 + $0x150] sm:$0xf]
        %v5208 = vld [vmem:[%s15 + $0x154] sm:$0xf]
        %v5209 = vld [vmem:[%s15 + $0x158] sm:$0xf]
        %v5210 = vld [vmem:[%s15 + $0x15c] sm:$0xf]
        %v5211 = vld [vmem:[%s15 + $0x160] sm:$0xf]
        %v5212 = vld [vmem:[%s15 + $0x164] sm:$0xf]
        %v5213 = vld [vmem:[%s15 + $0x168] sm:$0xf]
        %v5214 = vld [vmem:[%s15 + $0x16c] sm:$0xf]
        %v5215 = vld [vmem:[%s15 + $0x170] sm:$0xf]
        %v5216 = vld [vmem:[%s15 + $0x174] sm:$0xf]
        %v5217 = vld [vmem:[%s15 + $0x178] sm:$0xf]
        %v5218 = vld [vmem:[%s15 + $0x17c] sm:$0xf]
        %v5219 = vld [vmem:[%s15 + $0x180] sm:$0xf]
        %v5220 = vld [vmem:[%s15 + $0x184] sm:$0xf]
        %v5221 = vld [vmem:[%s15 + $0x188] sm:$0xf]
        %v5222 = vld [vmem:[%s15 + $0x18c] sm:$0xf]
        %v5223 = vld [vmem:[%s16] sm:$0x1]
        %v5225 = vlaneseq
        %v5226 = vshrl.u32 %v5225, 7
        %v5227 = vsub.s32 0, %v5226
        %v5228 = vrot.slane %v5223, %v5227
        %v5330 = vunpack.c.l.b16 %v5123
        %v5331 = vunpack.c.l.b16 %v5124
        %v5332 = vunpack.c.l.b16 %v5125
        %v5333 = vunpack.c.l.b16 %v5126
        %v5334 = vunpack.c.l.b16 %v5127
        %v5335 = vunpack.c.l.b16 %v5128
        %v5336 = vunpack.c.l.b16 %v5129
        %v5337 = vunpack.c.l.b16 %v5130
        %v5338 = vunpack.c.l.b16 %v5131
        %v5339 = vunpack.c.l.b16 %v5132
        %v5340 = vunpack.c.l.b16 %v5133
        %v5341 = vunpack.c.l.b16 %v5134
        %v5342 = vunpack.c.l.b16 %v5135
        %v5343 = vunpack.c.l.b16 %v5136
        %v5344 = vunpack.c.l.b16 %v5137
        %v5345 = vunpack.c.l.b16 %v5138
        %v5346 = vunpack.c.l.b16 %v5139
        %v5347 = vunpack.c.l.b16 %v5140
        %v5348 = vunpack.c.l.b16 %v5141
        %v5349 = vunpack.c.l.b16 %v5142
        %v5350 = vunpack.c.l.b16 %v5143
        %v5351 = vunpack.c.l.b16 %v5144
        %v5352 = vunpack.c.l.b16 %v5145
        %v5353 = vunpack.c.l.b16 %v5146
        %v5354 = vunpack.c.l.b16 %v5147
        %v5355 = vunpack.c.l.b16 %v5148
        %v5356 = vunpack.c.l.b16 %v5149
        %v5357 = vunpack.c.l.b16 %v5150
        %v5358 = vunpack.c.l.b16 %v5151
        %v5359 = vunpack.c.l.b16 %v5152
        %v5360 = vunpack.c.l.b16 %v5153
        %v5361 = vunpack.c.l.b16 %v5154
        %v5362 = vunpack.c.l.b16 %v5155
        %v5363 = vunpack.c.l.b16 %v5156
        %v5364 = vunpack.c.l.b16 %v5157
        %v5365 = vunpack.c.l.b16 %v5158
        %v5366 = vunpack.c.l.b16 %v5159
        %v5367 = vunpack.c.l.b16 %v5160
        %v5368 = vunpack.c.l.b16 %v5161
        %v5369 = vunpack.c.l.b16 %v5162
        %v5370 = vunpack.c.l.b16 %v5163
        %v5371 = vunpack.c.l.b16 %v5164
        %v5372 = vunpack.c.l.b16 %v5165
        %v5373 = vunpack.c.l.b16 %v5166
        %v5374 = vunpack.c.l.b16 %v5167
        %v5375 = vunpack.c.l.b16 %v5168
        %v5376 = vunpack.c.l.b16 %v5169
        %v5377 = vunpack.c.l.b16 %v5170
        %v5378 = vunpack.c.l.b16 %v5171
        %v5379 = vunpack.c.l.b16 %v5172
        %v5380 = vunpack.c.l.b16 %v5173
        %v5381 = vunpack.c.l.b16 %v5174
        %v5382 = vunpack.c.l.b16 %v5175
        %v5383 = vunpack.c.l.b16 %v5176
        %v5384 = vunpack.c.l.b16 %v5177
        %v5385 = vunpack.c.l.b16 %v5178
        %v5386 = vunpack.c.l.b16 %v5179
        %v5387 = vunpack.c.l.b16 %v5180
        %v5388 = vunpack.c.l.b16 %v5181
        %v5389 = vunpack.c.l.b16 %v5182
        %v5390 = vunpack.c.l.b16 %v5183
        %v5391 = vunpack.c.l.b16 %v5184
        %v5392 = vunpack.c.l.b16 %v5185
        %v5393 = vunpack.c.l.b16 %v5186
        %v5394 = vunpack.c.l.b16 %v5187
        %v5395 = vunpack.c.l.b16 %v5188
        %v5396 = vunpack.c.l.b16 %v5189
        %v5397 = vunpack.c.l.b16 %v5190
        %v5398 = vunpack.c.l.b16 %v5191
        %v5399 = vunpack.c.l.b16 %v5192
        %v5400 = vunpack.c.l.b16 %v5193
        %v5401 = vunpack.c.l.b16 %v5194
        %v5402 = vunpack.c.l.b16 %v5195
        %v5403 = vunpack.c.l.b16 %v5196
        %v5404 = vunpack.c.l.b16 %v5197
        %v5405 = vunpack.c.l.b16 %v5198
        %v5406 = vunpack.c.l.b16 %v5199
        %v5407 = vunpack.c.l.b16 %v5200
        %v5408 = vunpack.c.l.b16 %v5201
        %v5409 = vunpack.c.l.b16 %v5202
        %v5410 = vunpack.c.l.b16 %v5203
        %v5411 = vunpack.c.l.b16 %v5204
        %v5412 = vunpack.c.l.b16 %v5205
        %v5413 = vunpack.c.l.b16 %v5206
        %v5414 = vunpack.c.l.b16 %v5207
        %v5415 = vunpack.c.l.b16 %v5208
        %v5416 = vunpack.c.l.b16 %v5209
        %v5417 = vunpack.c.l.b16 %v5210
        %v5418 = vunpack.c.l.b16 %v5211
        %v5419 = vunpack.c.l.b16 %v5212
        %v5420 = vunpack.c.l.b16 %v5213
        %v5421 = vunpack.c.l.b16 %v5214
        %v5422 = vunpack.c.l.b16 %v5215
        %v5423 = vunpack.c.l.b16 %v5216
        %v5424 = vunpack.c.l.b16 %v5217
        %v5425 = vunpack.c.l.b16 %v5218
        %v5426 = vunpack.c.l.b16 %v5219
        %v5427 = vunpack.c.l.b16 %v5220
        %v5428 = vunpack.c.l.b16 %v5221
        %v5429 = vunpack.c.l.b16 %v5222
        %v5430 = vpack.c.b16 %v5331, %v5330
        %v5431 = vpack.c.b16 %v5333, %v5332
        %v5432 = vpack.c.b16 %v5335, %v5334
        %v5433 = vpack.c.b16 %v5337, %v5336
        %v5434 = vpack.c.b16 %v5339, %v5338
        %v5435 = vpack.c.b16 %v5341, %v5340
        %v5436 = vpack.c.b16 %v5343, %v5342
        %v5437 = vpack.c.b16 %v5345, %v5344
        %v5438 = vpack.c.b16 %v5347, %v5346
        %v5439 = vpack.c.b16 %v5349, %v5348
        %v5440 = vpack.c.b16 %v5351, %v5350
        %v5441 = vpack.c.b16 %v5353, %v5352
        %v5442 = vpack.c.b16 %v5355, %v5354
        %v5443 = vpack.c.b16 %v5357, %v5356
        %v5444 = vpack.c.b16 %v5359, %v5358
        %v5445 = vpack.c.b16 %v5361, %v5360
        %v5446 = vpack.c.b16 %v5363, %v5362
        %v5447 = vpack.c.b16 %v5365, %v5364
        %v5448 = vpack.c.b16 %v5367, %v5366
        %v5449 = vpack.c.b16 %v5369, %v5368
        %v5450 = vpack.c.b16 %v5371, %v5370
        %v5451 = vpack.c.b16 %v5373, %v5372
        %v5452 = vpack.c.b16 %v5375, %v5374
        %v5453 = vpack.c.b16 %v5377, %v5376
        %v5454 = vpack.c.b16 %v5379, %v5378
        %v5455 = vpack.c.b16 %v5381, %v5380
        %v5456 = vpack.c.b16 %v5383, %v5382
        %v5457 = vpack.c.b16 %v5385, %v5384
        %v5458 = vpack.c.b16 %v5387, %v5386
        %v5459 = vpack.c.b16 %v5389, %v5388
        %v5460 = vpack.c.b16 %v5391, %v5390
        %v5461 = vpack.c.b16 %v5393, %v5392
        %v5462 = vpack.c.b16 %v5395, %v5394
        %v5463 = vpack.c.b16 %v5397, %v5396
        %v5464 = vpack.c.b16 %v5399, %v5398
        %v5465 = vpack.c.b16 %v5401, %v5400
        %v5466 = vpack.c.b16 %v5403, %v5402
        %v5467 = vpack.c.b16 %v5405, %v5404
        %v5468 = vpack.c.b16 %v5407, %v5406
        %v5469 = vpack.c.b16 %v5409, %v5408
        %v5470 = vpack.c.b16 %v5411, %v5410
        %v5471 = vpack.c.b16 %v5413, %v5412
        %v5472 = vpack.c.b16 %v5415, %v5414
        %v5473 = vpack.c.b16 %v5417, %v5416
        %v5474 = vpack.c.b16 %v5419, %v5418
        %v5475 = vpack.c.b16 %v5421, %v5420
        %v5476 = vpack.c.b16 %v5423, %v5422
        %v5477 = vpack.c.b16 %v5425, %v5424
        %v5478 = vpack.c.b16 %v5427, %v5426
        %v5479 = vpack.c.b16 %v5429, %v5428
        %v5531 = vsel %vm2683, %v5122, 0
        %5533 = vmatprep.subr.bf16.mxu0 0
        %5534 = vmatpush1.bf16.msra.mxu0 %v5437
        %5535 = vmatprep.subr.bf16.mxu0 0
        %5536 = vmatpush1.bf16.msra.mxu0 %v5436
        %5537 = vmatprep.subr.bf16.mxu0 0
        %5538 = vmatpush1.bf16.msra.mxu0 %v5435
        %5539 = vmatprep.subr.bf16.mxu0 0
        %5540 = vmatpush1.bf16.msra.mxu0 %v5434
        %5541 = vmatprep.subr.bf16.mxu0 0
        %5542 = vmatpush1.bf16.msra.mxu0 %v5433
        %5543 = vmatprep.subr.bf16.mxu0 0
        %5544 = vmatpush1.bf16.msra.mxu0 %v5432
        %5545 = vmatprep.subr.bf16.mxu0 0
        %5546 = vmatpush1.bf16.msra.mxu0 %v5431
        %5547 = vmatprep.subr.bf16.mxu0 0
        %5548 = vmatpush1.bf16.msra.mxu0 %v5430
        %5549 = vmatprep.subr.bf16.mxu0 0
        %5550 = vmatpush2.bf16.msra.mxu0 %v5445
        %5551 = vmatprep.subr.bf16.mxu0 0
        %5552 = vmatpush2.bf16.msra.mxu0 %v5444
        %5553 = vmatprep.subr.bf16.mxu0 0
        %5554 = vmatpush2.bf16.msra.mxu0 %v5443
        %5555 = vmatprep.subr.bf16.mxu0 0
        %5556 = vmatpush2.bf16.msra.mxu0 %v5442
        %5557 = vmatprep.subr.bf16.mxu0 0
        %5558 = vmatpush2.bf16.msra.mxu0 %v5441
        %5559 = vmatprep.subr.bf16.mxu0 0
        %5560 = vmatpush2.bf16.msra.mxu0 %v5440
        %5561 = vmatprep.subr.bf16.mxu0 0
        %5562 = vmatpush2.bf16.msra.mxu0 %v5439
        %5563 = vmatprep.subr.bf16.mxu0 0
        %5564 = vmatpush2.bf16.msra.mxu0 %v5438
        %5565 = vmatprep.mubr.bf16.mxu0 %v5117
        %5566 = vmatmul.mubr.bf16.gmra.mxu0 %v5116
        %v5567 = vpop.f32.mrf.mxu0
        %v5568 = vadd.f32 %v5228, %v5567
        %v5569 = vpop.f32.mrf.mxu0
        %v5570 = vpop.f32.mrf.mxu0
        %v5571 = vadd.f32 %v5228, %v5570
        %v5572 = vpop.f32.mrf.mxu0
        %5573 = vdwg.mxu0
        %5574 = vmatprep.subr.bf16.mxu0 0
        %5575 = vmatpush1.bf16.msra.mxu0 %v5453
        %5576 = vmatprep.subr.bf16.mxu0 0
        %5577 = vmatpush1.bf16.msra.mxu0 %v5452
        %5578 = vmatprep.subr.bf16.mxu0 0
        %5579 = vmatpush1.bf16.msra.mxu0 %v5451
        %5580 = vmatprep.subr.bf16.mxu0 0
        %5581 = vmatpush1.bf16.msra.mxu0 %v5450
        %5582 = vmatprep.subr.bf16.mxu0 0
        %5583 = vmatpush1.bf16.msra.mxu0 %v5449
        %5584 = vmatprep.subr.bf16.mxu0 0
        %5585 = vmatpush1.bf16.msra.mxu0 %v5448
        %5586 = vmatprep.subr.bf16.mxu0 0
        %5587 = vmatpush1.bf16.msra.mxu0 %v5447
        %5588 = vmatprep.subr.bf16.mxu0 0
        %5589 = vmatpush1.bf16.msra.mxu0 %v5446
        %5590 = vmatprep.subr.bf16.mxu0 0
        %5591 = vmatpush2.bf16.msra.mxu0 %v5461
        %5592 = vmatprep.subr.bf16.mxu0 0
        %5593 = vmatpush2.bf16.msra.mxu0 %v5460
        %5594 = vmatprep.subr.bf16.mxu0 0
        %5595 = vmatpush2.bf16.msra.mxu0 %v5459
        %5596 = vmatprep.subr.bf16.mxu0 0
        %5597 = vmatpush2.bf16.msra.mxu0 %v5458
        %5598 = vmatprep.subr.bf16.mxu0 0
        %5599 = vmatpush2.bf16.msra.mxu0 %v5457
        %5600 = vmatprep.subr.bf16.mxu0 0
        %5601 = vmatpush2.bf16.msra.mxu0 %v5456
        %5602 = vmatprep.subr.bf16.mxu0 0
        %5603 = vmatpush2.bf16.msra.mxu0 %v5455
        %5604 = vmatprep.subr.bf16.mxu0 0
        %5605 = vmatpush2.bf16.msra.mxu0 %v5454
        %5606 = vmatprep.mubr.bf16.mxu0 %v5119
        %5607 = vmatmul.mubr.bf16.gmra.mxu0 %v5118
        %v5608 = vpop.f32.mrf.mxu0
        %v5609 = vadd.f32 %v5568, %v5608
        %v5610 = vpop.f32.mrf.mxu0
        %v5611 = vpop.f32.mrf.mxu0
        %v5612 = vadd.f32 %v5571, %v5611
        %v5613 = vpop.f32.mrf.mxu0
        %5614 = vdwg.mxu0
        %5615 = vmatprep.subr.bf16.mxu0 0
        %5616 = vmatpush1.bf16.msra.mxu0 %v5469
        %5617 = vmatprep.subr.bf16.mxu0 0
        %5618 = vmatpush1.bf16.msra.mxu0 %v5468
        %5619 = vmatprep.subr.bf16.mxu0 0
        %5620 = vmatpush1.bf16.msra.mxu0 %v5467
        %5621 = vmatprep.subr.bf16.mxu0 0
        %5622 = vmatpush1.bf16.msra.mxu0 %v5466
        %5623 = vmatprep.subr.bf16.mxu0 0
        %5624 = vmatpush1.bf16.msra.mxu0 %v5465
        %5625 = vmatprep.subr.bf16.mxu0 0
        %5626 = vmatpush1.bf16.msra.mxu0 %v5464
        %5627 = vmatprep.subr.bf16.mxu0 0
        %5628 = vmatpush1.bf16.msra.mxu0 %v5463
        %5629 = vmatprep.subr.bf16.mxu0 0
        %5630 = vmatpush1.bf16.msra.mxu0 %v5462
        %5631 = vmatprep.subr.bf16.mxu0 0
        %5632 = vmatpush2.bf16.msra.mxu0 %v5477
        %5633 = vmatprep.subr.bf16.mxu0 0
        %5634 = vmatpush2.bf16.msra.mxu0 %v5476
        %5635 = vmatprep.subr.bf16.mxu0 0
        %5636 = vmatpush2.bf16.msra.mxu0 %v5475
        %5637 = vmatprep.subr.bf16.mxu0 0
        %5638 = vmatpush2.bf16.msra.mxu0 %v5474
        %5639 = vmatprep.subr.bf16.mxu0 0
        %5640 = vmatpush2.bf16.msra.mxu0 %v5473
        %5641 = vmatprep.subr.bf16.mxu0 0
        %5642 = vmatpush2.bf16.msra.mxu0 %v5472
        %5643 = vmatprep.subr.bf16.mxu0 0
        %5644 = vmatpush2.bf16.msra.mxu0 %v5471
        %5645 = vmatprep.subr.bf16.mxu0 0
        %5646 = vmatpush2.bf16.msra.mxu0 %v5470
        %5647 = vmatprep.mubr.bf16.mxu0 %v5121
        %5648 = vmatmul.mubr.bf16.gmra.mxu0 %v5120
        %v5649 = vpop.f32.mrf.mxu0
        %v5650 = vadd.f32 %v5609, %v5649
        %v5651 = vpop.f32.mrf.mxu0
        %v5652 = vpop.f32.mrf.mxu0
        %v5653 = vadd.f32 %v5612, %v5652
        %v5654 = vpop.f32.mrf.mxu0
        %5655 = vdwg.mxu0
        %5656 = vmatprep.subr.bf16.mxu0 0
        %5657 = vmatpush1.bf16.msra.mxu0 0
        %5658 = vmatprep.subr.bf16.mxu0 0
        %5659 = vmatpush1.bf16.msra.mxu0 0
        %5660 = vmatprep.subr.bf16.mxu0 0
        %5661 = vmatpush1.bf16.msra.mxu0 0
        %5662 = vmatprep.subr.bf16.mxu0 0
        %5663 = vmatpush1.bf16.msra.mxu0 0
        %5664 = vmatprep.subr.bf16.mxu0 0
        %5665 = vmatpush1.bf16.msra.mxu0 0
        %5666 = vmatprep.subr.bf16.mxu0 0
        %5667 = vmatpush1.bf16.msra.mxu0 0
        %5668 = vmatprep.subr.bf16.mxu0 0
        %5669 = vmatpush1.bf16.msra.mxu0 %v5479
        %5670 = vmatprep.subr.bf16.mxu0 0
        %5671 = vmatpush1.bf16.msra.mxu0 %v5478
        %5672 = vmatprep.subr.bf16.mxu0 0
        %5673 = vmatpush2.bf16.msra.mxu0 0
        %5674 = vmatprep.subr.bf16.mxu0 0
        %5675 = vmatpush2.bf16.msra.mxu0 0
        %5676 = vmatprep.subr.bf16.mxu0 0
        %5677 = vmatpush2.bf16.msra.mxu0 0
        %5678 = vmatprep.subr.bf16.mxu0 0
        %5679 = vmatpush2.bf16.msra.mxu0 0
        %5680 = vmatprep.subr.bf16.mxu0 0
        %5681 = vmatpush2.bf16.msra.mxu0 0
        %5682 = vmatprep.subr.bf16.mxu0 0
        %5683 = vmatpush2.bf16.msra.mxu0 0
        %5684 = vmatprep.subr.bf16.mxu0 0
        %5685 = vmatpush2.bf16.msra.mxu0 0
        %5686 = vmatprep.subr.bf16.mxu0 0
        %5687 = vmatpush2.bf16.msra.mxu0 0
        %5688 = vmatprep.mubr.bf16.mxu0 0
        %5689 = vmatmul.mubr.bf16.gmra.mxu0 %v5531
        %v5690 = vpop.f32.mrf.mxu0
        %v5691 = vadd.f32 %v5650, %v5690
        %v5692 = vpop.f32.mrf.mxu0
        %v5693 = vpop.f32.mrf.mxu0
        %v5694 = vadd.f32 %v5653, %v5693
        %v5695 = vpop.f32.mrf.mxu0
        %5696 = vdwg.mxu0
        %5697 = vst [vmem:[%s605] sm:$0xff] %v5691
        %5698 = vst [vmem:[%s605 + $0x8] sm:$0xff] %v5694
        %5701 = vrot.lane.b32.xlu0 %v3354, 32
        %v5702 = vpop.permute.xlu0 %5701
        %5703 = vrot.lane.b32.xlu0 %v3355, 32
        %v5704 = vpop.permute.xlu0 %5703
        %v5707 = vsel %vm2683, %v3330, %v5702
        %v5708 = vsel %vm2683, %v3333, %v5704
        %vm5709 = vcmask 392192
        %v5710 = vsel %vm5709, %v5707, 0.0
        %v5711 = vsel %vm5709, %v5708, 0.0
        %5712 = vst [vmem:[%s612] sm:$0xff] %v5710
        %5713 = vst [vmem:[%s612 + $0x8] sm:$0xff] %v5711
        %s5714 = sand.u32 %s416, 1
        %s5715 = scalar_lea.sflag [#allocation3], %s5714
        %s5716 = sand.u32 %s416, 1
        %s5717 = smul.addr %s5716, 16
        %s5718 = scalar_lea.vmem [#allocation2], %s5717
        %s5719 = sand.u32 %s442, 1
        %s5720 = scalar_lea.sflag [#allocation5], %s5719
        %s5721 = sand.u32 %s442, 1
        %s5722 = smul.addr %s5721, 16
        %s5723 = scalar_lea.vmem [#allocation4], %s5722
        // Predicated region
        $region89: #{tpu_custom_call.1} parent=87 // pred_check
          %p5724 = pneg %p426
        $region90: #{tpu_custom_call.1} parent=87 // pred_check_branch
          %5726 = sbr.rel (%p5724) target = $region92
        $region91: #{tpu_custom_call.1} parent=87 // pred_region
          %s5727 = smul.u32 2, %s36
          %s5729 = ssub.s32 256, 256
          %5730 = vsyncadd %s5715, %s5729
          %s5731 = smul.addr %s5727, 128
          %s5732 = scalar_lea.hbm %s17, %s5731
          %s5733 = sshll.u32 %s5718, 4
          %s5734 = int_to_ptr.vmem [resolvable:$true] %s5733
          %5739 = dma.vmem_to_hbm [thread:$0]  %s5734, 256, %s5732, %s5715, 128, 128, 8
        $region92: #{tpu_custom_call.1} parent=87 // pred_fallthru
          _
        // Predicated region
        $region93: #{tpu_custom_call.1} parent=87 // pred_check
          %p5740 = pneg %p452
        $region94: #{tpu_custom_call.1} parent=87 // pred_check_branch
          %5742 = sbr.rel (%p5740) target = $region96
        $region95: #{tpu_custom_call.1} parent=87 // pred_region
          %s5743 = smul.u32 2, %s36
          %s5745 = ssub.s32 256, 256
          %5746 = vsyncadd %s5720, %s5745
          %s5747 = smul.addr %s5743, 128
          %s5748 = scalar_lea.hbm %s18, %s5747
          %s5749 = sshll.u32 %s5723, 4
          %s5750 = int_to_ptr.vmem [resolvable:$true] %s5749
          %5755 = dma.vmem_to_hbm [thread:$0]  %s5750, 256, %s5748, %s5720, 128, 128, 8
        $region96: #{tpu_custom_call.1} parent=87 // pred_fallthru
          _
      $region88: #{tpu_custom_call.1} parent=5 // pred_fallthru
        _
      %p5756 = scmp.le.s32.totalorder 2, %s31
      // Predicated region
      $region97: #{tpu_custom_call.1} parent=5 // pred_check
        %p5757 = pneg %p5756
      $region98: #{tpu_custom_call.1} parent=5 // pred_check_branch
        %5759 = sbr.rel (%p5757) target = $region100
      $region99: #{tpu_custom_call.1} parent=5 // pred_region
        %s5760 = ssub.s32 %s31, 2
        // Predicated region
        $region101: #{tpu_custom_call.1} parent=99 // pred_check
          %p5761 = pneg %p432
        $region102: #{tpu_custom_call.1} parent=99 // pred_check_branch
          %5763 = sbr.rel (%p5761) target = $region104
        $region103: #{tpu_custom_call.1} parent=99 // pred_region
          %s5764 = sand.u32 %s417, 1
          %s5765 = scalar_lea.sflag [#allocation3], %s5764
          %s5766 = sand.u32 %s417, 1
          %s5767 = smul.addr %s5766, 16
          %s5768 = scalar_lea.vmem [#allocation2], %s5767
          %5769 = dma.done %s5765, 256
        $region104: #{tpu_custom_call.1} parent=99 // pred_fallthru
          _
        // Predicated region
        $region105: #{tpu_custom_call.1} parent=99 // pred_check
          %p5770 = pneg %p458
        $region106: #{tpu_custom_call.1} parent=99 // pred_check_branch
          %5772 = sbr.rel (%p5770) target = $region108
        $region107: #{tpu_custom_call.1} parent=99 // pred_region
          %s5773 = sand.u32 %s443, 1
          %s5774 = scalar_lea.sflag [#allocation5], %s5773
          %s5775 = sand.u32 %s443, 1
          %s5776 = smul.addr %s5775, 16
          %s5777 = scalar_lea.vmem [#allocation4], %s5776
          %5778 = dma.done %s5774, 256
        $region108: #{tpu_custom_call.1} parent=99 // pred_fallthru
          _
      $region100: #{tpu_custom_call.1} parent=5 // pred_fallthru
        _
    $region6: #{tpu_custom_call.1} parent=1 // loop_footer
      %s35 = sadd.s32 1, %s31
    $region7: #{tpu_custom_call.1} parent=1 // loop_footer_branch
      %30 = sbr.rel target = $region3
    $region8: #{tpu_custom_call.1} parent=1 // loop_exit
      _
    %5779 = vsyncpa [#allocation3], 1
    %s5780 = scalar_lea.sflag [#allocation3], 1
    %5781 = vsyncpa %s5780, 1
    %5782 = vsyncpa [#allocation5], 1
    %s5783 = scalar_lea.sflag [#allocation5], 1
    %5784 = vsyncpa %s5783, 1

// kernel: tpu_custom_call.1
$region0: #{tpu_custom_call.1}
  #allocation0 [shape = 'u32[]', space=smem, size = 0x4, offset = 0x4, fixed_abs, tag = 'smem constant byte address 0x4 - core index']
  #allocation1 [shape = 'u32[144,128]{1,0:T(1,128)}', space=vmem, size = 0x12000, scoped, tag = 'internal scratch']
  %s0 = inlined_call_operand.vmem [shape: bf16[32,128], index: 0, kind: input, shape index: {}]
  %s1 = inlined_call_operand.vmem [shape: bf16[32,8], index: 1, kind: input, shape index: {}]
  %s2 = inlined_call_operand.vmem [shape: f32[32,16], index: 2, kind: input, shape index: {}]
  %s3 = inlined_call_operand.vmem [shape: bf16[128,800], index: 3, kind: input, shape index: {}]
  %s4 = inlined_call_operand.vmem [shape: bf16[8,800], index: 4, kind: input, shape index: {}]
  %s5 = inlined_call_operand.vmem [shape: f32[1,800], index: 5, kind: input, shape index: {}]
  %s6 = inlined_call_operand.vmem [shape: bf16[800,400], index: 6, kind: input, shape index: {}]
  %s7 = inlined_call_operand.vmem [shape: f32[1,400], index: 7, kind: input, shape index: {}]
  %s8 = inlined_call_operand.vmem [shape: bf16[400,32], index: 8, kind: input, shape index: {}]
  %s9 = inlined_call_operand.vmem [shape: f32[1,32], index: 9, kind: input, shape index: {}]
  %s10 = inlined_call_operand.vmem [shape: bf16[16,400], index: 10, kind: input, shape index: {}]
  %s11 = inlined_call_operand.vmem [shape: bf16[8,400], index: 11, kind: input, shape index: {}]
  %s12 = inlined_call_operand.vmem [shape: f32[1,400], index: 12, kind: input, shape index: {}]
  %s13 = inlined_call_operand.vmem [shape: bf16[400,800], index: 13, kind: input, shape index: {}]
  %s14 = inlined_call_operand.vmem [shape: f32[1,800], index: 14, kind: input, shape index: {}]
  %s15 = inlined_call_operand.vmem [shape: bf16[800,128], index: 15, kind: input, shape index: {}]
  %s16 = inlined_call_operand.vmem [shape: f32[1,128], index: 16, kind: input, shape index: {}]
  %s17 = inlined_call_operand.hbm [shape: f32[32,128], index: 17, kind: output, shape index: {0}]
  %s18 = inlined_call_operand.hbm [shape: f32[32,128], index: 18, kind: output, shape index: {1}]
  %19 = xla_tuple %s17, %s18
  %s20 = sld [smem:[#allocation0]]
  $region109: #{tpu_custom_call.1} parent=0
    _
  %s22 = ssub.s32 1, %s20
  %s23 = scalar_select 0, %s22, %s20
  $region1: #{tpu_custom_call.1} parent=0
    #allocation2 [shape = 'u8[16384]{0}', space=vmem, size = 0x4000, scoped, tag = 'output window, operand 0']
    #allocation3 [shape = 's32[2]{0}', space=sflag, size = 0x8, scoped, tag = 'scoped memory for tpu_custom_call.1']
    #allocation4 [shape = 'u8[16384]{0}', space=vmem, size = 0x4000, scoped, tag = 'output window, operand 1']
    #allocation5 [shape = 's32[2]{0}', space=sflag, size = 0x8, scoped, tag = 'scoped memory for tpu_custom_call.1']
    %24 = vsyncpa [#allocation3], 0
    %s25 = scalar_lea.sflag [#allocation3], 1
    %26 = vsyncpa %s25, 0
    %27 = vsyncpa [#allocation5], 0
    %s28 = scalar_lea.sflag [#allocation5], 1
    %29 = vsyncpa %s28, 0
    loop: start=0, step=1, limit=4
    $region2: #{tpu_custom_call.1} parent=1 // loop_pre_header
      _
    $region3: #{tpu_custom_call.1} parent=1 // loop_header
      %s31 = sphi 0, %s35
      %p32 = scmp.ge.s32.totalorder %s31, 4
      %s41 = sphi 0, %s43
      %s44 = sphi 0, %s41
      %s45 = sphi 0, %s44
      %s61 = sphi 0, %s45
      %s67 = sphi 0, %s69
      %s70 = sphi 0, %s67
      %s71 = sphi 0, %s70
      %s87 = sphi 0, %s71
      %s93 = sphi 0, %s95
      %s96 = sphi 0, %s93
      %s97 = sphi 0, %s96
      %s113 = sphi 0, %s97
      %s117 = sphi 0, %s117
      %s119 = sphi 0, %s117
      %s120 = sphi 0, %s119
      %s134 = sphi 0, %s120
      %s138 = sphi 0, %s138
      %s140 = sphi 0, %s138
      %s141 = sphi 0, %s140
      %s155 = sphi 0, %s141
      %s159 = sphi 0, %s159
      %s161 = sphi 0, %s159
      %s162 = sphi 0, %s161
      %s176 = sphi 0, %s162
      %s180 = sphi 0, %s180
      %s182 = sphi 0, %s180
      %s183 = sphi 0, %s182
      %s197 = sphi 0, %s183
      %s201 = sphi 0, %s201
      %s203 = sphi 0, %s201
      %s204 = sphi 0, %s203
      %s218 = sphi 0, %s204
      %s222 = sphi 0, %s222
      %s224 = sphi 0, %s222
      %s225 = sphi 0, %s224
      %s239 = sphi 0, %s225
      %s243 = sphi 0, %s243
      %s245 = sphi 0, %s243
      %s246 = sphi 0, %s245
      %s260 = sphi 0, %s246
      %s264 = sphi 0, %s264
      %s266 = sphi 0, %s264
      %s267 = sphi 0, %s266
      %s281 = sphi 0, %s267
      %s285 = sphi 0, %s285
      %s287 = sphi 0, %s285
      %s288 = sphi 0, %s287
      %s302 = sphi 0, %s288
      %s306 = sphi 0, %s306
      %s308 = sphi 0, %s306
      %s309 = sphi 0, %s308
      %s323 = sphi 0, %s309
      %s327 = sphi 0, %s327
      %s329 = sphi 0, %s327
      %s330 = sphi 0, %s329
      %s344 = sphi 0, %s330
      %s348 = sphi 0, %s348
      %s350 = sphi 0, %s348
      %s351 = sphi 0, %s350
      %s365 = sphi 0, %s351
      %s369 = sphi 0, %s369
      %s371 = sphi 0, %s369
      %s372 = sphi 0, %s371
      %s386 = sphi 0, %s372
      %s390 = sphi 0, %s390
      %s392 = sphi 0, %s390
      %s393 = sphi 0, %s392
      %s407 = sphi 0, %s393
      %s413 = sphi 0, %s415
      %s416 = sphi 0, %s413
      %s417 = sphi 0, %s416
      %s433 = sphi 0, %s417
      %s439 = sphi 0, %s441
      %s442 = sphi 0, %s439
      %s443 = sphi 0, %s442
      %s459 = sphi 0, %s443
    $region4: #{tpu_custom_call.1} parent=1 // loop_header_branch
      %34 = sbr.rel (%p32) target = $region8
    $region5: #{tpu_custom_call.1} parent=1 // loop_body
      %s36 = ssub.s32 %s31, 1
      %s37 = ssub.s32 %s31, 2
      %s38 = sadd.s32 %s31, 1
      %s39 = ssub.s32 %s31, %s38
      %p40 = scmp.eq.s32.totalorder %s39, 0
      %s42 = sadd.s32 %s41, 1
      %s43 = scalar_select %p40, %s41, %s42
      %p46 = pneg %p40
      %p47 = scmp.eq.s32.totalorder %s31, 1
      %p48 = por %p46, %p47
      %p49 = scmp.ne.s32.totalorder %s41, %s44
      %p50 = scmp.eq.s32.totalorder %s31, 0
      %p51 = por %p49, %p50
      %p52 = scmp.ne.s32.totalorder %s41, %s44
      %p53 = scmp.eq.s32.totalorder %s36, 1
      %p54 = por %p52, %p53
      %p55 = scmp.ne.s32.totalorder %s44, %s45
      %p56 = scmp.eq.s32.totalorder %s36, 0
      %p57 = por %p55, %p56
      %p58 = scmp.ne.s32.totalorder %s44, %s45
      %p59 = scmp.eq.s32.totalorder %s37, 1
      %p60 = por %p58, %p59
      %p62 = scmp.ne.s32.totalorder %s45, %s61
      %p63 = scmp.eq.s32.totalorder %s37, 0
      %p64 = por %p62, %p63
      %s65 = ssub.s32 %s31, %s38
      %p66 = scmp.eq.s32.totalorder %s65, 0
      %s68 = sadd.s32 %s67, 1
      %s69 = scalar_select %p66, %s67, %s68
      %p72 = pneg %p66
      %p73 = scmp.eq.s32.totalorder %s31, 1
      %p74 = por %p72, %p73
      %p75 = scmp.ne.s32.totalorder %s67, %s70
      %p76 = scmp.eq.s32.totalorder %s31, 0
      %p77 = por %p75, %p76
      %p78 = scmp.ne.s32.totalorder %s67, %s70
      %p79 = scmp.eq.s32.totalorder %s36, 1
      %p80 = por %p78, %p79
      %p81 = scmp.ne.s32.totalorder %s70, %s71
      %p82 = scmp.eq.s32.totalorder %s36, 0
      %p83 = por %p81, %p82
      %p84 = scmp.ne.s32.totalorder %s70, %s71
      %p85 = scmp.eq.s32.totalorder %s37, 1
      %p86 = por %p84, %p85
      %p88 = scmp.ne.s32.totalorder %s71, %s87
      %p89 = scmp.eq.s32.totalorder %s37, 0
      %p90 = por %p88, %p89
      %s91 = ssub.s32 %s31, %s38
      %p92 = scmp.eq.s32.totalorder %s91, 0
      %s94 = sadd.s32 %s93, 1
      %s95 = scalar_select %p92, %s93, %s94
      %p98 = pneg %p92
      %p99 = scmp.eq.s32.totalorder %s31, 1
      %p100 = por %p98, %p99
      %p101 = scmp.ne.s32.totalorder %s93, %s96
      %p102 = scmp.eq.s32.totalorder %s31, 0
      %p103 = por %p101, %p102
      %p104 = scmp.ne.s32.totalorder %s93, %s96
      %p105 = scmp.eq.s32.totalorder %s36, 1
      %p106 = por %p104, %p105
      %p107 = scmp.ne.s32.totalorder %s96, %s97
      %p108 = scmp.eq.s32.totalorder %s36, 0
      %p109 = por %p107, %p108
      %p110 = scmp.ne.s32.totalorder %s96, %s97
      %p111 = scmp.eq.s32.totalorder %s37, 1
      %p112 = por %p110, %p111
      %p114 = scmp.ne.s32.totalorder %s97, %s113
      %p115 = scmp.eq.s32.totalorder %s37, 0
      %p116 = por %p114, %p115
      %s118 = sadd.s32 %s117, 1
      %p121 = scmp.eq.s32.totalorder %s31, 1
      %p122 = scmp.ne.s32.totalorder %s117, %s119
      %p123 = scmp.eq.s32.totalorder %s31, 0
      %p124 = por %p122, %p123
      %p125 = scmp.ne.s32.totalorder %s117, %s119
      %p126 = scmp.eq.s32.totalorder %s36, 1
      %p127 = por %p125, %p126
      %p128 = scmp.ne.s32.totalorder %s119, %s120
      %p129 = scmp.eq.s32.totalorder %s36, 0
      %p130 = por %p128, %p129
      %p131 = scmp.ne.s32.totalorder %s119, %s120
      %p132 = scmp.eq.s32.totalorder %s37, 1
      %p133 = por %p131, %p132
      %p135 = scmp.ne.s32.totalorder %s120, %s134
      %p136 = scmp.eq.s32.totalorder %s37, 0
      %p137 = por %p135, %p136
      %s139 = sadd.s32 %s138, 1
      %p142 = scmp.eq.s32.totalorder %s31, 1
      %p143 = scmp.ne.s32.totalorder %s138, %s140
      %p144 = scmp.eq.s32.totalorder %s31, 0
      %p145 = por %p143, %p144
      %p146 = scmp.ne.s32.totalorder %s138, %s140
      %p147 = scmp.eq.s32.totalorder %s36, 1
      %p148 = por %p146, %p147
      %p149 = scmp.ne.s32.totalorder %s140, %s141
      %p150 = scmp.eq.s32.totalorder %s36, 0
      %p151 = por %p149, %p150
      %p152 = scmp.ne.s32.totalorder %s140, %s141
      %p153 = scmp.eq.s32.totalorder %s37, 1
      %p154 = por %p152, %p153
      %p156 = scmp.ne.s32.totalorder %s141, %s155
      %p157 = scmp.eq.s32.totalorder %s37, 0
      %p158 = por %p156, %p157
      %s160 = sadd.s32 %s159, 1
      %p163 = scmp.eq.s32.totalorder %s31, 1
      %p164 = scmp.ne.s32.totalorder %s159, %s161
      %p165 = scmp.eq.s32.totalorder %s31, 0
      %p166 = por %p164, %p165
      %p167 = scmp.ne.s32.totalorder %s159, %s161
      %p168 = scmp.eq.s32.totalorder %s36, 1
      %p169 = por %p167, %p168
      %p170 = scmp.ne.s32.totalorder %s161, %s162
      %p171 = scmp.eq.s32.totalorder %s36, 0
      %p172 = por %p170, %p171
      %p173 = scmp.ne.s32.totalorder %s161, %s162
      %p174 = scmp.eq.s32.totalorder %s37, 1
      %p175 = por %p173, %p174
      %p177 = scmp.ne.s32.totalorder %s162, %s176
      %p178 = scmp.eq.s32.totalorder %s37, 0
      %p179 = por %p177, %p178
      %s181 = sadd.s32 %s180, 1
      %p184 = scmp.eq.s32.totalorder %s31, 1
      %p185 = scmp.ne.s32.totalorder %s180, %s182
      %p186 = scmp.eq.s32.totalorder %s31, 0
      %p187 = por %p185, %p186
      %p188 = scmp.ne.s32.totalorder %s180, %s182
      %p189 = scmp.eq.s32.totalorder %s36, 1
      %p190 = por %p188, %p189
      %p191 = scmp.ne.s32.totalorder %s182, %s183
      %p192 = scmp.eq.s32.totalorder %s36, 0
      %p193 = por %p191, %p192
      %p194 = scmp.ne.s32.totalorder %s182, %s183
      %p195 = scmp.eq.s32.totalorder %s37, 1
      %p196 = por %p194, %p195
      %p198 = scmp.ne.s32.totalorder %s183, %s197
      %p199 = scmp.eq.s32.totalorder %s37, 0
      %p200 = por %p198, %p199
      %s202 = sadd.s32 %s201, 1
      %p205 = scmp.eq.s32.totalorder %s31, 1
      %p206 = scmp.ne.s32.totalorder %s201, %s203
      %p207 = scmp.eq.s32.totalorder %s31, 0
      %p208 = por %p206, %p207
      %p209 = scmp.ne.s32.totalorder %s201, %s203
      %p210 = scmp.eq.s32.totalorder %s36, 1
      %p211 = por %p209, %p210
      %p212 = scmp.ne.s32.totalorder %s203, %s204
      %p213 = scmp.eq.s32.totalorder %s36, 0
      %p214 = por %p212, %p213
      %p215 = scmp.ne.s32.totalorder %s203, %s204
      %p216 = scmp.eq.s32.totalorder %s37, 1
      %p217 = por %p215, %p216
      %p219 = scmp.ne.s32.totalorder %s204, %s218
      %p220 = scmp.eq.s32.totalorder %s37, 0
      %p221 = por %p219, %p220
      %s223 = sadd.s32 %s222, 1
      %p226 = scmp.eq.s32.totalorder %s31, 1
      %p227 = scmp.ne.s32.totalorder %s222, %s224
      %p228 = scmp.eq.s32.totalorder %s31, 0
      %p229 = por %p227, %p228
      %p230 = scmp.ne.s32.totalorder %s222, %s224
      %p231 = scmp.eq.s32.totalorder %s36, 1
      %p232 = por %p230, %p231
      %p233 = scmp.ne.s32.totalorder %s224, %s225
      %p234 = scmp.eq.s32.totalorder %s36, 0
      %p235 = por %p233, %p234
      %p236 = scmp.ne.s32.totalorder %s224, %s225
      %p237 = scmp.eq.s32.totalorder %s37, 1
      %p238 = por %p236, %p237
      %p240 = scmp.ne.s32.totalorder %s225, %s239
      %p241 = scmp.eq.s32.totalorder %s37, 0
      %p242 = por %p240, %p241
      %s244 = sadd.s32 %s243, 1
      %p247 = scmp.eq.s32.totalorder %s31, 1
      %p248 = scmp.ne.s32.totalorder %s243, %s245
      %p249 = scmp.eq.s32.totalorder %s31, 0
      %p250 = por %p248, %p249
      %p251 = scmp.ne.s32.totalorder %s243, %s245
      %p252 = scmp.eq.s32.totalorder %s36, 1
      %p253 = por %p251, %p252
      %p254 = scmp.ne.s32.totalorder %s245, %s246
      %p255 = scmp.eq.s32.totalorder %s36, 0
      %p256 = por %p254, %p255
      %p257 = scmp.ne.s32.totalorder %s245, %s246
      %p258 = scmp.eq.s32.totalorder %s37, 1
      %p259 = por %p257, %p258
      %p261 = scmp.ne.s32.totalorder %s246, %s260
      %p262 = scmp.eq.s32.totalorder %s37, 0
      %p263 = por %p261, %p262
      %s265 = sadd.s32 %s264, 1
      %p268 = scmp.eq.s32.totalorder %s31, 1
      %p269 = scmp.ne.s32.totalorder %s264, %s266
      %p270 = scmp.eq.s32.totalorder %s31, 0
      %p271 = por %p269, %p270
      %p272 = scmp.ne.s32.totalorder %s264, %s266
      %p273 = scmp.eq.s32.totalorder %s36, 1
      %p274 = por %p272, %p273
      %p275 = scmp.ne.s32.totalorder %s266, %s267
      %p276 = scmp.eq.s32.totalorder %s36, 0
      %p277 = por %p275, %p276
      %p278 = scmp.ne.s32.totalorder %s266, %s267
      %p279 = scmp.eq.s32.totalorder %s37, 1
      %p280 = por %p278, %p279
      %p282 = scmp.ne.s32.totalorder %s267, %s281
      %p283 = scmp.eq.s32.totalorder %s37, 0
      %p284 = por %p282, %p283
      %s286 = sadd.s32 %s285, 1
      %p289 = scmp.eq.s32.totalorder %s31, 1
      %p290 = scmp.ne.s32.totalorder %s285, %s287
      %p291 = scmp.eq.s32.totalorder %s31, 0
      %p292 = por %p290, %p291
      %p293 = scmp.ne.s32.totalorder %s285, %s287
      %p294 = scmp.eq.s32.totalorder %s36, 1
      %p295 = por %p293, %p294
      %p296 = scmp.ne.s32.totalorder %s287, %s288
      %p297 = scmp.eq.s32.totalorder %s36, 0
      %p298 = por %p296, %p297
      %p299 = scmp.ne.s32.totalorder %s287, %s288
      %p300 = scmp.eq.s32.totalorder %s37, 1
      %p301 = por %p299, %p300
      %p303 = scmp.ne.s32.totalorder %s288, %s302
      %p304 = scmp.eq.s32.totalorder %s37, 0
      %p305 = por %p303, %p304
      %s307 = sadd.s32 %s306, 1
      %p310 = scmp.eq.s32.totalorder %s31, 1
      %p311 = scmp.ne.s32.totalorder %s306, %s308
      %p312 = scmp.eq.s32.totalorder %s31, 0
      %p313 = por %p311, %p312
      %p314 = scmp.ne.s32.totalorder %s306, %s308
      %p315 = scmp.eq.s32.totalorder %s36, 1
      %p316 = por %p314, %p315
      %p317 = scmp.ne.s32.totalorder %s308, %s309
      %p318 = scmp.eq.s32.totalorder %s36, 0
      %p319 = por %p317, %p318
      %p320 = scmp.ne.s32.totalorder %s308, %s309
      %p321 = scmp.eq.s32.totalorder %s37, 1
      %p322 = por %p320, %p321
      %p324 = scmp.ne.s32.totalorder %s309, %s323
      %p325 = scmp.eq.s32.totalorder %s37, 0
      %p326 = por %p324, %p325
      %s328 = sadd.s32 %s327, 1
      %p331 = scmp.eq.s32.totalorder %s31, 1
      %p332 = scmp.ne.s32.totalorder %s327, %s329
      %p333 = scmp.eq.s32.totalorder %s31, 0
      %p334 = por %p332, %p333
      %p335 = scmp.ne.s32.totalorder %s327, %s329
      %p336 = scmp.eq.s32.totalorder %s36, 1
      %p337 = por %p335, %p336
      %p338 = scmp.ne.s32.totalorder %s329, %s330
      %p339 = scmp.eq.s32.totalorder %s36, 0
      %p340 = por %p338, %p339
      %p341 = scmp.ne.s32.totalorder %s329, %s330
      %p342 = scmp.eq.s32.totalorder %s37, 1
      %p343 = por %p341, %p342
      %p345 = scmp.ne.s32.totalorder %s330, %s344
      %p346 = scmp.eq.s32.totalorder %s37, 0
      %p347 = por %p345, %p346
      %s349 = sadd.s32 %s348, 1
      %p352 = scmp.eq.s32.totalorder %s31, 1
      %p353 = scmp.ne.s32.totalorder %s348, %s350
      %p354 = scmp.eq.s32.totalorder %s31, 0
      %p355 = por %p353, %p354
      %p356 = scmp.ne.s32.totalorder %s348, %s350
      %p357 = scmp.eq.s32.totalorder %s36, 1
      %p358 = por %p356, %p357
      %p359 = scmp.ne.s32.totalorder %s350, %s351
      %p360 = scmp.eq.s32.totalorder %s36, 0
      %p361 = por %p359, %p360
      %p362 = scmp.ne.s32.totalorder %s350, %s351
      %p363 = scmp.eq.s32.totalorder %s37, 1
      %p364 = por %p362, %p363
      %p366 = scmp.ne.s32.totalorder %s351, %s365
      %p367 = scmp.eq.s32.totalorder %s37, 0
      %p368 = por %p366, %p367
      %s370 = sadd.s32 %s369, 1
      %p373 = scmp.eq.s32.totalorder %s31, 1
      %p374 = scmp.ne.s32.totalorder %s369, %s371
      %p375 = scmp.eq.s32.totalorder %s31, 0
      %p376 = por %p374, %p375
      %p377 = scmp.ne.s32.totalorder %s369, %s371
      %p378 = scmp.eq.s32.totalorder %s36, 1
      %p379 = por %p377, %p378
      %p380 = scmp.ne.s32.totalorder %s371, %s372
      %p381 = scmp.eq.s32.totalorder %s36, 0
      %p382 = por %p380, %p381
      %p383 = scmp.ne.s32.totalorder %s371, %s372
      %p384 = scmp.eq.s32.totalorder %s37, 1
      %p385 = por %p383, %p384
      %p387 = scmp.ne.s32.totalorder %s372, %s386
      %p388 = scmp.eq.s32.totalorder %s37, 0
      %p389 = por %p387, %p388
      %s391 = sadd.s32 %s390, 1
      %p394 = scmp.eq.s32.totalorder %s31, 1
      %p395 = scmp.ne.s32.totalorder %s390, %s392
      %p396 = scmp.eq.s32.totalorder %s31, 0
      %p397 = por %p395, %p396
      %p398 = scmp.ne.s32.totalorder %s390, %s392
      %p399 = scmp.eq.s32.totalorder %s36, 1
      %p400 = por %p398, %p399
      %p401 = scmp.ne.s32.totalorder %s392, %s393
      %p402 = scmp.eq.s32.totalorder %s36, 0
      %p403 = por %p401, %p402
      %p404 = scmp.ne.s32.totalorder %s392, %s393
      %p405 = scmp.eq.s32.totalorder %s37, 1
      %p406 = por %p404, %p405
      %p408 = scmp.ne.s32.totalorder %s393, %s407
      %p409 = scmp.eq.s32.totalorder %s37, 0
      %p410 = por %p408, %p409
      %s411 = ssub.s32 %s31, %s38
      %p412 = scmp.eq.s32.totalorder %s411, 0
      %s414 = sadd.s32 %s413, 1
      %s415 = scalar_select %p412, %s413, %s414
      %p418 = pneg %p412
      %p419 = scmp.eq.s32.totalorder %s31, 1
      %p420 = por %p418, %p419
      %p421 = scmp.ne.s32.totalorder %s413, %s416
      %p422 = scmp.eq.s32.totalorder %s31, 0
      %p423 = por %p421, %p422
      %p424 = scmp.ne.s32.totalorder %s413, %s416
      %p425 = scmp.eq.s32.totalorder %s36, 1
      %p426 = por %p424, %p425
      %p427 = scmp.ne.s32.totalorder %s416, %s417
      %p428 = scmp.eq.s32.totalorder %s36, 0
      %p429 = por %p427, %p428
      %p430 = scmp.ne.s32.totalorder %s416, %s417
      %p431 = scmp.eq.s32.totalorder %s37, 1
      %p432 = por %p430, %p431
      %p434 = scmp.ne.s32.totalorder %s417, %s433
      %p435 = scmp.eq.s32.totalorder %s37, 0
      %p436 = por %p434, %p435
      %s437 = ssub.s32 %s31, %s38
      %p438 = scmp.eq.s32.totalorder %s437, 0
      %s440 = sadd.s32 %s439, 1
      %s441 = scalar_select %p438, %s439, %s440
      %p444 = pneg %p438
      %p445 = scmp.eq.s32.totalorder %s31, 1
      %p446 = por %p444, %p445
      %p447 = scmp.ne.s32.totalorder %s439, %s442
      %p448 = scmp.eq.s32.totalorder %s31, 0
      %p449 = por %p447, %p448
      %p450 = scmp.ne.s32.totalorder %s439, %s442
      %p451 = scmp.eq.s32.totalorder %s36, 1
      %p452 = por %p450, %p451
      %p453 = scmp.ne.s32.totalorder %s442, %s443
      %p454 = scmp.eq.s32.totalorder %s36, 0
      %p455 = por %p453, %p454
      %p456 = scmp.ne.s32.totalorder %s442, %s443
      %p457 = scmp.eq.s32.totalorder %s37, 1
      %p458 = por %p456, %p457
      %p460 = scmp.ne.s32.totalorder %s443, %s459
      %p461 = scmp.eq.s32.totalorder %s37, 0
      %p462 = por %p460, %p461
      %p463 = scmp.le.s32.totalorder 1, %s31
      %p464 = scmp.lt.s32.totalorder %s31, 3
      %p465 = pnand %p463, %p464
      %p466 = pneg %p465
      // Predicated region
      $region9: #{tpu_custom_call.1} parent=5 // pred_check
        _
      $region10: #{tpu_custom_call.1} parent=5 // pred_check_branch
        %468 = sbr.rel (%p465) target = $region12
      $region11: #{tpu_custom_call.1} parent=5 // pred_region
        %s469 = ssub.s32 %s31, 1
        // Predicated region
        $region13: #{tpu_custom_call.1} parent=11 // pred_check
          %p470 = pneg %p130
        $region14: #{tpu_custom_call.1} parent=11 // pred_check_branch
          %472 = sbr.rel (%p470) target = $region16
        $region15: #{tpu_custom_call.1} parent=11 // pred_region
          _
        $region16: #{tpu_custom_call.1} parent=11 // pred_fallthru
          _
        // Predicated region
        $region17: #{tpu_custom_call.1} parent=11 // pred_check
          %p473 = pneg %p151
        $region18: #{tpu_custom_call.1} parent=11 // pred_check_branch
          %475 = sbr.rel (%p473) target = $region20
        $region19: #{tpu_custom_call.1} parent=11 // pred_region
          _
        $region20: #{tpu_custom_call.1} parent=11 // pred_fallthru
          _
        // Predicated region
        $region21: #{tpu_custom_call.1} parent=11 // pred_check
          %p476 = pneg %p172
        $region22: #{tpu_custom_call.1} parent=11 // pred_check_branch
          %478 = sbr.rel (%p476) target = $region24
        $region23: #{tpu_custom_call.1} parent=11 // pred_region
          _
        $region24: #{tpu_custom_call.1} parent=11 // pred_fallthru
          _
        // Predicated region
        $region25: #{tpu_custom_call.1} parent=11 // pred_check
          %p479 = pneg %p193
        $region26: #{tpu_custom_call.1} parent=11 // pred_check_branch
          %481 = sbr.rel (%p479) target = $region28
        $region27: #{tpu_custom_call.1} parent=11 // pred_region
          _
        $region28: #{tpu_custom_call.1} parent=11 // pred_fallthru
          _
        // Predicated region
        $region29: #{tpu_custom_call.1} parent=11 // pred_check
          %p482 = pneg %p214
        $region30: #{tpu_custom_call.1} parent=11 // pred_check_branch
          %484 = sbr.rel (%p482) target = $region32
        $region31: #{tpu_custom_call.1} parent=11 // pred_region
          _
        $region32: #{tpu_custom_call.1} parent=11 // pred_fallthru
          _
        // Predicated region
        $region33: #{tpu_custom_call.1} parent=11 // pred_check
          %p485 = pneg %p235
        $region34: #{tpu_custom_call.1} parent=11 // pred_check_branch
          %487 = sbr.rel (%p485) target = $region36
        $region35: #{tpu_custom_call.1} parent=11 // pred_region
          _
        $region36: #{tpu_custom_call.1} parent=11 // pred_fallthru
          _
        // Predicated region
        $region37: #{tpu_custom_call.1} parent=11 // pred_check
          %p488 = pneg %p256
        $region38: #{tpu_custom_call.1} parent=11 // pred_check_branch
          %490 = sbr.rel (%p488) target = $region40
        $region39: #{tpu_custom_call.1} parent=11 // pred_region
          _
        $region40: #{tpu_custom_call.1} parent=11 // pred_fallthru
          _
        // Predicated region
        $region41: #{tpu_custom_call.1} parent=11 // pred_check
          %p491 = pneg %p277
        $region42: #{tpu_custom_call.1} parent=11 // pred_check_branch
          %493 = sbr.rel (%p491) target = $region44
        $region43: #{tpu_custom_call.1} parent=11 // pred_region
          _
        $region44: #{tpu_custom_call.1} parent=11 // pred_fallthru
          _
        // Predicated region
        $region45: #{tpu_custom_call.1} parent=11 // pred_check
          %p494 = pneg %p298
        $region46: #{tpu_custom_call.1} parent=11 // pred_check_branch
          %496 = sbr.rel (%p494) target = $region48
        $region47: #{tpu_custom_call.1} parent=11 // pred_region
          _
        $region48: #{tpu_custom_call.1} parent=11 // pred_fallthru
          _
        // Predicated region
        $region49: #{tpu_custom_call.1} parent=11 // pred_check
          %p497 = pneg %p319
        $region50: #{tpu_custom_call.1} parent=11 // pred_check_branch
          %499 = sbr.rel (%p497) target = $region52
        $region51: #{tpu_custom_call.1} parent=11 // pred_region
          _
        $region52: #{tpu_custom_call.1} parent=11 // pred_fallthru
          _
        // Predicated region
        $region53: #{tpu_custom_call.1} parent=11 // pred_check
          %p500 = pneg %p340
        $region54: #{tpu_custom_call.1} parent=11 // pred_check_branch
          %502 = sbr.rel (%p500) target = $region56
        $region55: #{tpu_custom_call.1} parent=11 // pred_region
          _
        $region56: #{tpu_custom_call.1} parent=11 // pred_fallthru
          _
        // Predicated region
        $region57: #{tpu_custom_call.1} parent=11 // pred_check
          %p503 = pneg %p361
        $region58: #{tpu_custom_call.1} parent=11 // pred_check_branch
          %505 = sbr.rel (%p503) target = $region60
        $region59: #{tpu_custom_call.1} parent=11 // pred_region
          _
        $region60: #{tpu_custom_call.1} parent=11 // pred_fallthru
          _
        // Predicated region
        $region61: #{tpu_custom_call.1} parent=11 // pred_check
          %p506 = pneg %p382
        $region62: #{tpu_custom_call.1} parent=11 // pred_check_branch
          %508 = sbr.rel (%p506) target = $region64
        $region63: #{tpu_custom_call.1} parent=11 // pred_region
          _
        $region64: #{tpu_custom_call.1} parent=11 // pred_fallthru
          _
        // Predicated region
        $region65: #{tpu_custom_call.1} parent=11 // pred_check
          %p509 = pneg %p403
        $region66: #{tpu_custom_call.1} parent=11 // pred_check_branch
          %511 = sbr.rel (%p509) target = $region68
        $region67: #{tpu_custom_call.1} parent=11 // pred_region
          _
        $region68: #{tpu_custom_call.1} parent=11 // pred_fallthru
          _
      $region12: #{tpu_custom_call.1} parent=5 // pred_fallthru
        _
      %p512 = scmp.lt.s32.totalorder %s31, 2
      // Predicated region
      $region69: #{tpu_custom_call.1} parent=5 // pred_check
        %p513 = pneg %p512
      $region70: #{tpu_custom_call.1} parent=5 // pred_check_branch
        %515 = sbr.rel (%p513) target = $region72
      $region71: #{tpu_custom_call.1} parent=5 // pred_region
        // Predicated region
        $region73: #{tpu_custom_call.1} parent=71 // pred_check
          %p516 = pneg %p51
        $region74: #{tpu_custom_call.1} parent=71 // pred_check_branch
          %518 = sbr.rel (%p516) target = $region76
        $region75: #{tpu_custom_call.1} parent=71 // pred_region
          %s519 = smul.u32 2, %s31
          %p520 = scmp.lt.s32.totalorder %s519, 3
          %s521 = scalar_select %p520, %s519, 3
          %s522 = smul.addr %s521, 4
          %s523 = scalar_lea.vmem %s0, %s522
          %s524 = smul.u32 2, %s31
        $region76: #{tpu_custom_call.1} parent=71 // pred_fallthru
          _
        // Predicated region
        $region77: #{tpu_custom_call.1} parent=71 // pred_check
          %p525 = pneg %p77
        $region78: #{tpu_custom_call.1} parent=71 // pred_check_branch
          %527 = sbr.rel (%p525) target = $region80
        $region79: #{tpu_custom_call.1} parent=71 // pred_region
          %s528 = smul.u32 2, %s31
          %p529 = scmp.lt.s32.totalorder %s528, 3
          %s530 = scalar_select %p529, %s528, 3
          %s531 = smul.addr %s530, 4
          %s532 = scalar_lea.vmem %s1, %s531
          %s533 = smul.u32 2, %s31
        $region80: #{tpu_custom_call.1} parent=71 // pred_fallthru
          _
        // Predicated region
        $region81: #{tpu_custom_call.1} parent=71 // pred_check
          %p534 = pneg %p103
        $region82: #{tpu_custom_call.1} parent=71 // pred_check_branch
          %536 = sbr.rel (%p534) target = $region84
        $region83: #{tpu_custom_call.1} parent=71 // pred_region
          %s537 = smul.u32 2, %s31
          %p538 = scmp.lt.s32.totalorder %s537, 3
          %s539 = scalar_select %p538, %s537, 3
          %s540 = smul.addr %s539, 8
          %s541 = scalar_lea.vmem %s2, %s540
          %s542 = smul.u32 2, %s31
        $region84: #{tpu_custom_call.1} parent=71 // pred_fallthru
          _
      $region72: #{tpu_custom_call.1} parent=5 // pred_fallthru
        _
      %p543 = scmp.le.s32.totalorder 1, %s31
      %p544 = scmp.lt.s32.totalorder %s31, 3
      %p545 = pnand %p543, %p544
      %p546 = pneg %p545
      // Predicated region
      $region85: #{tpu_custom_call.1} parent=5 // pred_check
        _
      $region86: #{tpu_custom_call.1} parent=5 // pred_check_branch
        %548 = sbr.rel (%p545) target = $region88
      $region87: #{tpu_custom_call.1} parent=5 // pred_region
        %s549 = ssub.s32 %s31, 1
        %s550 = smul.u32 2, %s36
        %p551 = scmp.lt.s32.totalorder %s550, 3
        %s552 = scalar_select %p551, %s550, 3
        %s553 = smul.addr %s552, 4
        %s554 = scalar_lea.vmem %s0, %s553
        %p555 = pneg %p57
        %p556 = pneg %p54
        %s557 = smul.u32 2, %s36
        %p558 = scmp.lt.s32.totalorder %s557, 3
        %s559 = scalar_select %p558, %s557, 3
        %s560 = smul.addr %s559, 4
        %s561 = scalar_lea.vmem %s1, %s560
        %p562 = pneg %p83
        %p563 = pneg %p80
        %s564 = smul.u32 2, %s36
        %p565 = scmp.lt.s32.totalorder %s564, 3
        %s566 = scalar_select %p565, %s564, 3
        %s567 = smul.addr %s566, 8
        %s568 = scalar_lea.vmem %s2, %s567
        %p569 = pneg %p109
        %p570 = pneg %p106
        %p571 = pneg %p130
        %p572 = pneg %p127
        %p573 = pneg %p151
        %p574 = pneg %p148
        %p575 = pneg %p172
        %p576 = pneg %p169
        %p577 = pneg %p193
        %p578 = pneg %p190
        %p579 = pneg %p214
        %p580 = pneg %p211
        %p581 = pneg %p235
        %p582 = pneg %p232
        %p583 = pneg %p256
        %p584 = pneg %p253
        %p585 = pneg %p277
        %p586 = pneg %p274
        %p587 = pneg %p298
        %p588 = pneg %p295
        %p589 = pneg %p319
        %p590 = pneg %p316
        %p591 = pneg %p340
        %p592 = pneg %p337
        %p593 = pneg %p361
        %p594 = pneg %p358
        %p595 = pneg %p382
        %p596 = pneg %p379
        %p597 = pneg %p403
        %p598 = pneg %p400
        %p599 = pneg %p429
        %p600 = pneg %p426
        %s601 = sand.u32 %s416, 1
        %s602 = scalar_lea.sflag [#allocation3], %s601
        %s603 = sand.u32 %s416, 1
        %s604 = smul.addr %s603, 16
        %s605 = scalar_lea.vmem [#allocation2], %s604
        %p606 = pneg %p455
        %p607 = pneg %p452
        %s608 = sand.u32 %s442, 1
        %s609 = scalar_lea.sflag [#allocation5], %s608
        %s610 = sand.u32 %s442, 1
        %s611 = smul.addr %s610, 16
        %s612 = scalar_lea.vmem [#allocation4], %s611
        %s613 = smul.u32 2, %s36
        %p614 = scmp.lt.s32.totalorder %s613, 3
        %s615 = scalar_select %p614, %s613, 3
        %s616 = smul.addr %s615, 4
        %s617 = scalar_lea.vmem %s0, %s616
        %s618 = smul.u32 2, %s36
        %s619 = smul.u32 2, %s36
        %p620 = scmp.lt.s32.totalorder %s619, 3
        %s621 = scalar_select %p620, %s619, 3
        %s622 = smul.addr %s621, 4
        %s623 = scalar_lea.vmem %s1, %s622
        %s624 = smul.u32 2, %s36
        %s625 = smul.u32 2, %s36
        %p626 = scmp.lt.s32.totalorder %s625, 3
        %s627 = scalar_select %p626, %s625, 3
        %s628 = smul.addr %s627, 8
        %s629 = scalar_lea.vmem %s2, %s628
        %s630 = smul.u32 2, %s36
        %s631 = smul.u32 2, %s36
        %s632 = smul.u32 2, %s36
        %v634 = vld [vmem:[%s623] sm:$0xf]
        %v635 = vld [vmem:[%s623 + $0x4] sm:$0xf]
        %v636 = vld [vmem:[%s617] sm:$0xf]
        %v637 = vld [vmem:[%s617 + $0x4] sm:$0xf]
        %v638 = vld [vmem:[%s3] sm:$0xff]
        %v639 = vld [vmem:[%s3 + $0x8] sm:$0xff]
        %v640 = vld [vmem:[%s3 + $0x10] sm:$0xff]
        %v641 = vld [vmem:[%s3 + $0x18] sm:$0xf]
        %v642 = vld [vmem:[%s3 + $0x1c] sm:$0xff]
        %v643 = vld [vmem:[%s3 + $0x24] sm:$0xff]
        %v644 = vld [vmem:[%s3 + $0x2c] sm:$0xff]
        %v645 = vld [vmem:[%s3 + $0x34] sm:$0xf]
        %v646 = vld [vmem:[%s3 + $0x38] sm:$0xff]
        %v647 = vld [vmem:[%s3 + $0x40] sm:$0xff]
        %v648 = vld [vmem:[%s3 + $0x48] sm:$0xff]
        %v649 = vld [vmem:[%s3 + $0x50] sm:$0xf]
        %v650 = vld [vmem:[%s3 + $0x54] sm:$0xff]
        %v651 = vld [vmem:[%s3 + $0x5c] sm:$0xff]
        %v652 = vld [vmem:[%s3 + $0x64] sm:$0xff]
        %v653 = vld [vmem:[%s3 + $0x6c] sm:$0xf]
        %v654 = vld [vmem:[%s3 + $0x70] sm:$0xff]
        %v655 = vld [vmem:[%s3 + $0x78] sm:$0xff]
        %v656 = vld [vmem:[%s3 + $0x80] sm:$0xff]
        %v657 = vld [vmem:[%s3 + $0x88] sm:$0xf]
        %v658 = vld [vmem:[%s3 + $0x8c] sm:$0xff]
        %v659 = vld [vmem:[%s3 + $0x94] sm:$0xff]
        %v660 = vld [vmem:[%s3 + $0x9c] sm:$0xff]
        %v661 = vld [vmem:[%s3 + $0xa4] sm:$0xf]
        %v662 = vld [vmem:[%s3 + $0xa8] sm:$0xff]
        %v663 = vld [vmem:[%s3 + $0xb0] sm:$0xff]
        %v664 = vld [vmem:[%s3 + $0xb8] sm:$0xff]
        %v665 = vld [vmem:[%s3 + $0xc0] sm:$0xf]
        %v666 = vld [vmem:[%s3 + $0xc4] sm:$0xff]
        %v667 = vld [vmem:[%s3 + $0xcc] sm:$0xff]
        %v668 = vld [vmem:[%s3 + $0xd4] sm:$0xff]
        %v669 = vld [vmem:[%s3 + $0xdc] sm:$0xf]
        %v670 = vld [vmem:[%s3 + $0xe0] sm:$0xff]
        %v671 = vld [vmem:[%s3 + $0xe8] sm:$0xff]
        %v672 = vld [vmem:[%s3 + $0xf0] sm:$0xff]
        %v673 = vld [vmem:[%s3 + $0xf8] sm:$0xf]
        %v674 = vld [vmem:[%s3 + $0xfc] sm:$0xff]
        %v675 = vld [vmem:[%s3 + $0x104] sm:$0xff]
        %v676 = vld [vmem:[%s3 + $0x10c] sm:$0xff]
        %v677 = vld [vmem:[%s3 + $0x114] sm:$0xf]
        %v678 = vld [vmem:[%s3 + $0x118] sm:$0xff]
        %v679 = vld [vmem:[%s3 + $0x120] sm:$0xff]
        %v680 = vld [vmem:[%s3 + $0x128] sm:$0xff]
        %v681 = vld [vmem:[%s3 + $0x130] sm:$0xf]
        %v682 = vld [vmem:[%s3 + $0x134] sm:$0xff]
        %v683 = vld [vmem:[%s3 + $0x13c] sm:$0xff]
        %v684 = vld [vmem:[%s3 + $0x144] sm:$0xff]
        %v685 = vld [vmem:[%s3 + $0x14c] sm:$0xf]
        %v686 = vld [vmem:[%s3 + $0x150] sm:$0xff]
        %v687 = vld [vmem:[%s3 + $0x158] sm:$0xff]
        %v688 = vld [vmem:[%s3 + $0x160] sm:$0xff]
        %v689 = vld [vmem:[%s3 + $0x168] sm:$0xf]
        %v690 = vld [vmem:[%s3 + $0x16c] sm:$0xff]
        %v691 = vld [vmem:[%s3 + $0x174] sm:$0xff]
        %v692 = vld [vmem:[%s3 + $0x17c] sm:$0xff]
        %v693 = vld [vmem:[%s3 + $0x184] sm:$0xf]
        %v694 = vld [vmem:[%s3 + $0x188] sm:$0xff]
        %v695 = vld [vmem:[%s3 + $0x190] sm:$0xff]
        %v696 = vld [vmem:[%s3 + $0x198] sm:$0xff]
        %v697 = vld [vmem:[%s3 + $0x1a0] sm:$0xf]
        %v698 = vld [vmem:[%s3 + $0x1a4] sm:$0xff]
        %v699 = vld [vmem:[%s3 + $0x1ac] sm:$0xff]
        %v700 = vld [vmem:[%s3 + $0x1b4] sm:$0xff]
        %v701 = vld [vmem:[%s3 + $0x1bc] sm:$0xf]
        %v702 = vld [vmem:[%s4] sm:$0xff]
        %v703 = vld [vmem:[%s4 + $0x8] sm:$0xff]
        %v704 = vld [vmem:[%s4 + $0x10] sm:$0xff]
        %v705 = vld [vmem:[%s4 + $0x18] sm:$0xf]
        %v708 = vunpack.c.l.b16 %v634
        %v709 = vunpack.c.l.b16 %v635
        %v710 = vpack.c.b16 %v709, %v708
        %v715 = vunpack.c.l.b16 %v702
        %v716 = vunpack.c.h.b16 %v702
        %v717 = vunpack.c.l.b16 %v703
        %v718 = vunpack.c.h.b16 %v703
        %v719 = vunpack.c.l.b16 %v704
        %v720 = vunpack.c.h.b16 %v704
        %v721 = vunpack.c.l.b16 %v705
        %v722 = vpack.c.b16 %v715, %v715
        %v723 = vpack.c.b16 %v716, %v716
        %v724 = vpack.c.b16 %v717, %v717
        %v725 = vpack.c.b16 %v718, %v718
        %v726 = vpack.c.b16 %v719, %v719
        %v727 = vpack.c.b16 %v720, %v720
        %v728 = vpack.c.b16 %v721, %v721
        %vm729 = vcmask 64512
        %v731 = vsel %vm729, %v710, 0
        %vm733 = vcmask 1043456
        %v735 = vsel %vm733, %v722, 0
        %v738 = vsel %vm733, %v723, 0
        %v741 = vsel %vm733, %v724, 0
        %v744 = vsel %vm733, %v725, 0
        %v747 = vsel %vm733, %v726, 0
        %v750 = vsel %vm733, %v727, 0
        %v753 = vsel %vm733, %v728, 0
        %755 = vmatprep.subr.bf16.mxu0 0
        %756 = vmatpush1.bf16.msra.mxu0 0
        %757 = vmatprep.subr.bf16.mxu0 0
        %758 = vmatpush1.bf16.msra.mxu0 0
        %759 = vmatprep.subr.bf16.mxu0 0
        %760 = vmatpush1.bf16.msra.mxu0 0
        %761 = vmatprep.subr.bf16.mxu0 0
        %762 = vmatpush1.bf16.msra.mxu0 0
        %763 = vmatprep.subr.bf16.mxu0 0
        %764 = vmatpush1.bf16.msra.mxu0 0
        %765 = vmatprep.subr.bf16.mxu0 0
        %766 = vmatpush1.bf16.msra.mxu0 0
        %767 = vmatprep.subr.bf16.mxu0 0
        %768 = vmatpush1.bf16.msra.mxu0 0
        %769 = vmatprep.subr.bf16.mxu0 %v738
        %770 = vmatpush1.bf16.msra.mxu0 %v735
        %771 = vmatprep.subr.bf16.mxu0 0
        %772 = vmatpush2.bf16.msra.mxu0 0
        %773 = vmatprep.subr.bf16.mxu0 0
        %774 = vmatpush2.bf16.msra.mxu0 0
        %775 = vmatprep.subr.bf16.mxu0 0
        %776 = vmatpush2.bf16.msra.mxu0 0
        %777 = vmatprep.subr.bf16.mxu0 0
        %778 = vmatpush2.bf16.msra.mxu0 0
        %779 = vmatprep.subr.bf16.mxu0 0
        %780 = vmatpush2.bf16.msra.mxu0 0
        %781 = vmatprep.subr.bf16.mxu0 0
        %782 = vmatpush2.bf16.msra.mxu0 0
        %783 = vmatprep.subr.bf16.mxu0 0
        %784 = vmatpush2.bf16.msra.mxu0 0
        %785 = vmatprep.subr.bf16.mxu0 0
        %786 = vmatpush2.bf16.msra.mxu0 0
        %787 = vmatprep.mubr.bf16.mxu0 0
        %788 = vmatmul.mubr.bf16.gmra.mxu0 %v731
        %v789 = vpop.f32.mrf.mxu0
        %v790 = vadd.f32 0.0, %v789
        %v791 = vpop.f32.mrf.mxu0
        %v792 = vadd.f32 0.0, %v791
        %v793 = vpop.f32.mrf.mxu0
        %v794 = vadd.f32 0.0, %v793
        %v795 = vpop.f32.mrf.mxu0
        %v796 = vadd.f32 0.0, %v795
        %797 = vdwg.mxu0
        %798 = vmatprep.subr.bf16.mxu0 0
        %799 = vmatpush1.bf16.msra.mxu0 0
        %800 = vmatprep.subr.bf16.mxu0 0
        %801 = vmatpush1.bf16.msra.mxu0 0
        %802 = vmatprep.subr.bf16.mxu0 0
        %803 = vmatpush1.bf16.msra.mxu0 0
        %804 = vmatprep.subr.bf16.mxu0 0
        %805 = vmatpush1.bf16.msra.mxu0 0
        %806 = vmatprep.subr.bf16.mxu0 0
        %807 = vmatpush1.bf16.msra.mxu0 0
        %808 = vmatprep.subr.bf16.mxu0 0
        %809 = vmatpush1.bf16.msra.mxu0 0
        %810 = vmatprep.subr.bf16.mxu0 0
        %811 = vmatpush1.bf16.msra.mxu0 0
        %812 = vmatprep.subr.bf16.mxu0 %v744
        %813 = vmatpush1.bf16.msra.mxu0 %v741
        %814 = vmatprep.subr.bf16.mxu0 0
        %815 = vmatpush2.bf16.msra.mxu0 0
        %816 = vmatprep.subr.bf16.mxu0 0
        %817 = vmatpush2.bf16.msra.mxu0 0
        %818 = vmatprep.subr.bf16.mxu0 0
        %819 = vmatpush2.bf16.msra.mxu0 0
        %820 = vmatprep.subr.bf16.mxu0 0
        %821 = vmatpush2.bf16.msra.mxu0 0
        %822 = vmatprep.subr.bf16.mxu0 0
        %823 = vmatpush2.bf16.msra.mxu0 0
        %824 = vmatprep.subr.bf16.mxu0 0
        %825 = vmatpush2.bf16.msra.mxu0 0
        %826 = vmatprep.subr.bf16.mxu0 0
        %827 = vmatpush2.bf16.msra.mxu0 0
        %828 = vmatprep.subr.bf16.mxu0 0
        %829 = vmatpush2.bf16.msra.mxu0 0
        %830 = vmatprep.mubr.bf16.mxu0 0
        %831 = vmatmul.mubr.bf16.gmra.mxu0 %v731
        %v832 = vpop.f32.mrf.mxu0
        %v833 = vadd.f32 0.0, %v832
        %v834 = vpop.f32.mrf.mxu0
        %v835 = vadd.f32 0.0, %v834
        %v836 = vpop.f32.mrf.mxu0
        %v837 = vadd.f32 0.0, %v836
        %v838 = vpop.f32.mrf.mxu0
        %v839 = vadd.f32 0.0, %v838
        %840 = vdwg.mxu0
        %841 = vmatprep.subr.bf16.mxu0 0
        %842 = vmatpush1.bf16.msra.mxu0 0
        %843 = vmatprep.subr.bf16.mxu0 0
        %844 = vmatpush1.bf16.msra.mxu0 0
        %845 = vmatprep.subr.bf16.mxu0 0
        %846 = vmatpush1.bf16.msra.mxu0 0
        %847 = vmatprep.subr.bf16.mxu0 0
        %848 = vmatpush1.bf16.msra.mxu0 0
        %849 = vmatprep.subr.bf16.mxu0 0
        %850 = vmatpush1.bf16.msra.mxu0 0
        %851 = vmatprep.subr.bf16.mxu0 0
        %852 = vmatpush1.bf16.msra.mxu0 0
        %853 = vmatprep.subr.bf16.mxu0 0
        %854 = vmatpush1.bf16.msra.mxu0 0
        %855 = vmatprep.subr.bf16.mxu0 %v750
        %856 = vmatpush1.bf16.msra.mxu0 %v747
        %857 = vmatprep.subr.bf16.mxu0 0
        %858 = vmatpush2.bf16.msra.mxu0 0
        %859 = vmatprep.subr.bf16.mxu0 0
        %860 = vmatpush2.bf16.msra.mxu0 0
        %861 = vmatprep.subr.bf16.mxu0 0
        %862 = vmatpush2.bf16.msra.mxu0 0
        %863 = vmatprep.subr.bf16.mxu0 0
        %864 = vmatpush2.bf16.msra.mxu0 0
        %865 = vmatprep.subr.bf16.mxu0 0
        %866 = vmatpush2.bf16.msra.mxu0 0
        %867 = vmatprep.subr.bf16.mxu0 0
        %868 = vmatpush2.bf16.msra.mxu0 0
        %869 = vmatprep.subr.bf16.mxu0 0
        %870 = vmatpush2.bf16.msra.mxu0 0
        %871 = vmatprep.subr.bf16.mxu0 0
        %872 = vmatpush2.bf16.msra.mxu0 0
        %873 = vmatprep.mubr.bf16.mxu0 0
        %874 = vmatmul.mubr.bf16.gmra.mxu0 %v731
        %v875 = vpop.f32.mrf.mxu0
        %v876 = vadd.f32 0.0, %v875
        %v877 = vpop.f32.mrf.mxu0
        %v878 = vadd.f32 0.0, %v877
        %v879 = vpop.f32.mrf.mxu0
        %v880 = vadd.f32 0.0, %v879
        %v881 = vpop.f32.mrf.mxu0
        %v882 = vadd.f32 0.0, %v881
        %883 = vdwg.mxu0
        %884 = vmatprep.subr.bf16.mxu0 0
        %885 = vmatpush1.bf16.msra.mxu0 0
        %886 = vmatprep.subr.bf16.mxu0 0
        %887 = vmatpush1.bf16.msra.mxu0 0
        %888 = vmatprep.subr.bf16.mxu0 0
        %889 = vmatpush1.bf16.msra.mxu0 0
        %890 = vmatprep.subr.bf16.mxu0 0
        %891 = vmatpush1.bf16.msra.mxu0 0
        %892 = vmatprep.subr.bf16.mxu0 0
        %893 = vmatpush1.bf16.msra.mxu0 0
        %894 = vmatprep.subr.bf16.mxu0 0
        %895 = vmatpush1.bf16.msra.mxu0 0
        %896 = vmatprep.subr.bf16.mxu0 0
        %897 = vmatpush1.bf16.msra.mxu0 0
        %898 = vmatprep.subr.bf16.mxu0 0
        %899 = vmatpush1.bf16.msra.mxu0 %v753
        %900 = vmatprep.subr.bf16.mxu0 0
        %901 = vmatpush2.bf16.msra.mxu0 0
        %902 = vmatprep.subr.bf16.mxu0 0
        %903 = vmatpush2.bf16.msra.mxu0 0
        %904 = vmatprep.subr.bf16.mxu0 0
        %905 = vmatpush2.bf16.msra.mxu0 0
        %906 = vmatprep.subr.bf16.mxu0 0
        %907 = vmatpush2.bf16.msra.mxu0 0
        %908 = vmatprep.subr.bf16.mxu0 0
        %909 = vmatpush2.bf16.msra.mxu0 0
        %910 = vmatprep.subr.bf16.mxu0 0
        %911 = vmatpush2.bf16.msra.mxu0 0
        %912 = vmatprep.subr.bf16.mxu0 0
        %913 = vmatpush2.bf16.msra.mxu0 0
        %914 = vmatprep.subr.bf16.mxu0 0
        %915 = vmatpush2.bf16.msra.mxu0 0
        %916 = vmatprep.mubr.bf16.mxu0 0
        %917 = vmatmul.mubr.bf16.gmra.mxu0 %v731
        %v918 = vpop.f32.mrf.mxu0
        %v919 = vadd.f32 0.0, %v918
        %v920 = vpop.f32.mrf.mxu0
        %v921 = vpop.f32.mrf.mxu0
        %v922 = vadd.f32 0.0, %v921
        %v923 = vpop.f32.mrf.mxu0
        %924 = vdwg.mxu0
        %v927 = vunpack.c.l.b16 %v636
        %v928 = vunpack.c.l.b16 %v637
        %v929 = vpack.c.b16 %v928, %v927
        %v995 = vunpack.c.l.b16 %v638
        %v996 = vunpack.c.h.b16 %v638
        %v997 = vunpack.c.l.b16 %v639
        %v998 = vunpack.c.h.b16 %v639
        %v999 = vunpack.c.l.b16 %v640
        %v1000 = vunpack.c.h.b16 %v640
        %v1001 = vunpack.c.l.b16 %v641
        %v1002 = vunpack.c.l.b16 %v642
        %v1003 = vunpack.c.h.b16 %v642
        %v1004 = vunpack.c.l.b16 %v643
        %v1005 = vunpack.c.h.b16 %v643
        %v1006 = vunpack.c.l.b16 %v644
        %v1007 = vunpack.c.h.b16 %v644
        %v1008 = vunpack.c.l.b16 %v645
        %v1009 = vunpack.c.l.b16 %v646
        %v1010 = vunpack.c.h.b16 %v646
        %v1011 = vunpack.c.l.b16 %v647
        %v1012 = vunpack.c.h.b16 %v647
        %v1013 = vunpack.c.l.b16 %v648
        %v1014 = vunpack.c.h.b16 %v648
        %v1015 = vunpack.c.l.b16 %v649
        %v1016 = vunpack.c.l.b16 %v650
        %v1017 = vunpack.c.h.b16 %v650
        %v1018 = vunpack.c.l.b16 %v651
        %v1019 = vunpack.c.h.b16 %v651
        %v1020 = vunpack.c.l.b16 %v652
        %v1021 = vunpack.c.h.b16 %v652
        %v1022 = vunpack.c.l.b16 %v653
        %v1023 = vunpack.c.l.b16 %v654
        %v1024 = vunpack.c.h.b16 %v654
        %v1025 = vunpack.c.l.b16 %v655
        %v1026 = vunpack.c.h.b16 %v655
        %v1027 = vunpack.c.l.b16 %v656
        %v1028 = vunpack.c.h.b16 %v656
        %v1029 = vunpack.c.l.b16 %v657
        %v1030 = vunpack.c.l.b16 %v658
        %v1031 = vunpack.c.h.b16 %v658
        %v1032 = vunpack.c.l.b16 %v659
        %v1033 = vunpack.c.h.b16 %v659
        %v1034 = vunpack.c.l.b16 %v660
        %v1035 = vunpack.c.h.b16 %v660
        %v1036 = vunpack.c.l.b16 %v661
        %v1037 = vunpack.c.l.b16 %v662
        %v1038 = vunpack.c.h.b16 %v662
        %v1039 = vunpack.c.l.b16 %v663
        %v1040 = vunpack.c.h.b16 %v663
        %v1041 = vunpack.c.l.b16 %v664
        %v1042 = vunpack.c.h.b16 %v664
        %v1043 = vunpack.c.l.b16 %v665
        %v1044 = vunpack.c.l.b16 %v666
        %v1045 = vunpack.c.h.b16 %v666
        %v1046 = vunpack.c.l.b16 %v667
        %v1047 = vunpack.c.h.b16 %v667
        %v1048 = vunpack.c.l.b16 %v668
        %v1049 = vunpack.c.h.b16 %v668
        %v1050 = vunpack.c.l.b16 %v669
        %v1051 = vunpack.c.l.b16 %v670
        %v1052 = vunpack.c.h.b16 %v670
        %v1053 = vunpack.c.l.b16 %v671
        %v1054 = vunpack.c.h.b16 %v671
        %v1055 = vunpack.c.l.b16 %v672
        %v1056 = vunpack.c.h.b16 %v672
        %v1057 = vunpack.c.l.b16 %v673
        %v1058 = vunpack.c.l.b16 %v674
        %v1059 = vunpack.c.h.b16 %v674
        %v1060 = vunpack.c.l.b16 %v675
        %v1061 = vunpack.c.h.b16 %v675
        %v1062 = vunpack.c.l.b16 %v676
        %v1063 = vunpack.c.h.b16 %v676
        %v1064 = vunpack.c.l.b16 %v677
        %v1065 = vunpack.c.l.b16 %v678
        %v1066 = vunpack.c.h.b16 %v678
        %v1067 = vunpack.c.l.b16 %v679
        %v1068 = vunpack.c.h.b16 %v679
        %v1069 = vunpack.c.l.b16 %v680
        %v1070 = vunpack.c.h.b16 %v680
        %v1071 = vunpack.c.l.b16 %v681
        %v1072 = vunpack.c.l.b16 %v682
        %v1073 = vunpack.c.h.b16 %v682
        %v1074 = vunpack.c.l.b16 %v683
        %v1075 = vunpack.c.h.b16 %v683
        %v1076 = vunpack.c.l.b16 %v684
        %v1077 = vunpack.c.h.b16 %v684
        %v1078 = vunpack.c.l.b16 %v685
        %v1079 = vunpack.c.l.b16 %v686
        %v1080 = vunpack.c.h.b16 %v686
        %v1081 = vunpack.c.l.b16 %v687
        %v1082 = vunpack.c.h.b16 %v687
        %v1083 = vunpack.c.l.b16 %v688
        %v1084 = vunpack.c.h.b16 %v688
        %v1085 = vunpack.c.l.b16 %v689
        %v1086 = vunpack.c.l.b16 %v690
        %v1087 = vunpack.c.h.b16 %v690
        %v1088 = vunpack.c.l.b16 %v691
        %v1089 = vunpack.c.h.b16 %v691
        %v1090 = vunpack.c.l.b16 %v692
        %v1091 = vunpack.c.h.b16 %v692
        %v1092 = vunpack.c.l.b16 %v693
        %v1093 = vunpack.c.l.b16 %v694
        %v1094 = vunpack.c.h.b16 %v694
        %v1095 = vunpack.c.l.b16 %v695
        %v1096 = vunpack.c.h.b16 %v695
        %v1097 = vunpack.c.l.b16 %v696
        %v1098 = vunpack.c.h.b16 %v696
        %v1099 = vunpack.c.l.b16 %v697
        %v1100 = vunpack.c.l.b16 %v698
        %v1101 = vunpack.c.h.b16 %v698
        %v1102 = vunpack.c.l.b16 %v699
        %v1103 = vunpack.c.h.b16 %v699
        %v1104 = vunpack.c.l.b16 %v700
        %v1105 = vunpack.c.h.b16 %v700
        %v1106 = vunpack.c.l.b16 %v701
        %v1107 = vpack.c.b16 %v1002, %v995
        %v1108 = vpack.c.b16 %v1003, %v996
        %v1109 = vpack.c.b16 %v1004, %v997
        %v1110 = vpack.c.b16 %v1005, %v998
        %v1111 = vpack.c.b16 %v1006, %v999
        %v1112 = vpack.c.b16 %v1007, %v1000
        %v1113 = vpack.c.b16 %v1008, %v1001
        %v1114 = vpack.c.b16 %v1016, %v1009
        %v1115 = vpack.c.b16 %v1017, %v1010
        %v1116 = vpack.c.b16 %v1018, %v1011
        %v1117 = vpack.c.b16 %v1019, %v1012
        %v1118 = vpack.c.b16 %v1020, %v1013
        %v1119 = vpack.c.b16 %v1021, %v1014
        %v1120 = vpack.c.b16 %v1022, %v1015
        %v1121 = vpack.c.b16 %v1030, %v1023
        %v1122 = vpack.c.b16 %v1031, %v1024
        %v1123 = vpack.c.b16 %v1032, %v1025
        %v1124 = vpack.c.b16 %v1033, %v1026
        %v1125 = vpack.c.b16 %v1034, %v1027
        %v1126 = vpack.c.b16 %v1035, %v1028
        %v1127 = vpack.c.b16 %v1036, %v1029
        %v1128 = vpack.c.b16 %v1044, %v1037
        %v1129 = vpack.c.b16 %v1045, %v1038
        %v1130 = vpack.c.b16 %v1046, %v1039
        %v1131 = vpack.c.b16 %v1047, %v1040
        %v1132 = vpack.c.b16 %v1048, %v1041
        %v1133 = vpack.c.b16 %v1049, %v1042
        %v1134 = vpack.c.b16 %v1050, %v1043
        %v1135 = vpack.c.b16 %v1058, %v1051
        %v1136 = vpack.c.b16 %v1059, %v1052
        %v1137 = vpack.c.b16 %v1060, %v1053
        %v1138 = vpack.c.b16 %v1061, %v1054
        %v1139 = vpack.c.b16 %v1062, %v1055
        %v1140 = vpack.c.b16 %v1063, %v1056
        %v1141 = vpack.c.b16 %v1064, %v1057
        %v1142 = vpack.c.b16 %v1072, %v1065
        %v1143 = vpack.c.b16 %v1073, %v1066
        %v1144 = vpack.c.b16 %v1074, %v1067
        %v1145 = vpack.c.b16 %v1075, %v1068
        %v1146 = vpack.c.b16 %v1076, %v1069
        %v1147 = vpack.c.b16 %v1077, %v1070
        %v1148 = vpack.c.b16 %v1078, %v1071
        %v1149 = vpack.c.b16 %v1086, %v1079
        %v1150 = vpack.c.b16 %v1087, %v1080
        %v1151 = vpack.c.b16 %v1088, %v1081
        %v1152 = vpack.c.b16 %v1089, %v1082
        %v1153 = vpack.c.b16 %v1090, %v1083
        %v1154 = vpack.c.b16 %v1091, %v1084
        %v1155 = vpack.c.b16 %v1092, %v1085
        %v1156 = vpack.c.b16 %v1100, %v1093
        %v1157 = vpack.c.b16 %v1101, %v1094
        %v1158 = vpack.c.b16 %v1102, %v1095
        %v1159 = vpack.c.b16 %v1103, %v1096
        %v1160 = vpack.c.b16 %v1104, %v1097
        %v1161 = vpack.c.b16 %v1105, %v1098
        %v1162 = vpack.c.b16 %v1106, %v1099
        %1219 = vmatprep.subr.bf16.mxu0 %v1157
        %1220 = vmatpush1.bf16.msra.mxu0 %v1156
        %1221 = vmatprep.subr.bf16.mxu0 %v1150
        %1222 = vmatpush1.bf16.msra.mxu0 %v1149
        %1223 = vmatprep.subr.bf16.mxu0 %v1143
        %1224 = vmatpush1.bf16.msra.mxu0 %v1142
        %1225 = vmatprep.subr.bf16.mxu0 %v1136
        %1226 = vmatpush1.bf16.msra.mxu0 %v1135
        %1227 = vmatprep.subr.bf16.mxu0 %v1129
        %1228 = vmatpush1.bf16.msra.mxu0 %v1128
        %1229 = vmatprep.subr.bf16.mxu0 %v1122
        %1230 = vmatpush1.bf16.msra.mxu0 %v1121
        %1231 = vmatprep.subr.bf16.mxu0 %v1115
        %1232 = vmatpush1.bf16.msra.mxu0 %v1114
        %1233 = vmatprep.subr.bf16.mxu0 %v1108
        %1234 = vmatpush1.bf16.msra.mxu0 %v1107
        %1235 = vmatprep.subr.bf16.mxu0 0
        %1236 = vmatpush2.bf16.msra.mxu0 0
        %1237 = vmatprep.subr.bf16.mxu0 0
        %1238 = vmatpush2.bf16.msra.mxu0 0
        %1239 = vmatprep.subr.bf16.mxu0 0
        %1240 = vmatpush2.bf16.msra.mxu0 0
        %1241 = vmatprep.subr.bf16.mxu0 0
        %1242 = vmatpush2.bf16.msra.mxu0 0
        %1243 = vmatprep.subr.bf16.mxu0 0
        %1244 = vmatpush2.bf16.msra.mxu0 0
        %1245 = vmatprep.subr.bf16.mxu0 0
        %1246 = vmatpush2.bf16.msra.mxu0 0
        %1247 = vmatprep.subr.bf16.mxu0 0
        %1248 = vmatpush2.bf16.msra.mxu0 0
        %1249 = vmatprep.subr.bf16.mxu0 0
        %1250 = vmatpush2.bf16.msra.mxu0 0
        %1251 = vmatprep.mubr.bf16.mxu0 0
        %1252 = vmatmul.mubr.bf16.gmra.mxu0 %v929
        %v1253 = vpop.f32.mrf.mxu0
        %v1254 = vadd.f32 %v790, %v1253
        %v1255 = vpop.f32.mrf.mxu0
        %v1256 = vadd.f32 %v792, %v1255
        %v1257 = vpop.f32.mrf.mxu0
        %v1258 = vadd.f32 %v794, %v1257
        %v1259 = vpop.f32.mrf.mxu0
        %v1260 = vadd.f32 %v796, %v1259
        %1261 = vdwg.mxu0
        %1262 = vmatprep.subr.bf16.mxu0 %v1159
        %1263 = vmatpush1.bf16.msra.mxu0 %v1158
        %1264 = vmatprep.subr.bf16.mxu0 %v1152
        %1265 = vmatpush1.bf16.msra.mxu0 %v1151
        %1266 = vmatprep.subr.bf16.mxu0 %v1145
        %1267 = vmatpush1.bf16.msra.mxu0 %v1144
        %1268 = vmatprep.subr.bf16.mxu0 %v1138
        %1269 = vmatpush1.bf16.msra.mxu0 %v1137
        %1270 = vmatprep.subr.bf16.mxu0 %v1131
        %1271 = vmatpush1.bf16.msra.mxu0 %v1130
        %1272 = vmatprep.subr.bf16.mxu0 %v1124
        %1273 = vmatpush1.bf16.msra.mxu0 %v1123
        %1274 = vmatprep.subr.bf16.mxu0 %v1117
        %1275 = vmatpush1.bf16.msra.mxu0 %v1116
        %1276 = vmatprep.subr.bf16.mxu0 %v1110
        %1277 = vmatpush1.bf16.msra.mxu0 %v1109
        %1278 = vmatprep.subr.bf16.mxu0 0
        %1279 = vmatpush2.bf16.msra.mxu0 0
        %1280 = vmatprep.subr.bf16.mxu0 0
        %1281 = vmatpush2.bf16.msra.mxu0 0
        %1282 = vmatprep.subr.bf16.mxu0 0
        %1283 = vmatpush2.bf16.msra.mxu0 0
        %1284 = vmatprep.subr.bf16.mxu0 0
        %1285 = vmatpush2.bf16.msra.mxu0 0
        %1286 = vmatprep.subr.bf16.mxu0 0
        %1287 = vmatpush2.bf16.msra.mxu0 0
        %1288 = vmatprep.subr.bf16.mxu0 0
        %1289 = vmatpush2.bf16.msra.mxu0 0
        %1290 = vmatprep.subr.bf16.mxu0 0
        %1291 = vmatpush2.bf16.msra.mxu0 0
        %1292 = vmatprep.subr.bf16.mxu0 0
        %1293 = vmatpush2.bf16.msra.mxu0 0
        %1294 = vmatprep.mubr.bf16.mxu0 0
        %1295 = vmatmul.mubr.bf16.gmra.mxu0 %v929
        %v1296 = vpop.f32.mrf.mxu0
        %v1297 = vadd.f32 %v833, %v1296
        %v1298 = vpop.f32.mrf.mxu0
        %v1299 = vadd.f32 %v835, %v1298
        %v1300 = vpop.f32.mrf.mxu0
        %v1301 = vadd.f32 %v837, %v1300
        %v1302 = vpop.f32.mrf.mxu0
        %v1303 = vadd.f32 %v839, %v1302
        %1304 = vdwg.mxu0
        %1305 = vmatprep.subr.bf16.mxu0 %v1161
        %1306 = vmatpush1.bf16.msra.mxu0 %v1160
        %1307 = vmatprep.subr.bf16.mxu0 %v1154
        %1308 = vmatpush1.bf16.msra.mxu0 %v1153
        %1309 = vmatprep.subr.bf16.mxu0 %v1147
        %1310 = vmatpush1.bf16.msra.mxu0 %v1146
        %1311 = vmatprep.subr.bf16.mxu0 %v1140
        %1312 = vmatpush1.bf16.msra.mxu0 %v1139
        %1313 = vmatprep.subr.bf16.mxu0 %v1133
        %1314 = vmatpush1.bf16.msra.mxu0 %v1132
        %1315 = vmatprep.subr.bf16.mxu0 %v1126
        %1316 = vmatpush1.bf16.msra.mxu0 %v1125
        %1317 = vmatprep.subr.bf16.mxu0 %v1119
        %1318 = vmatpush1.bf16.msra.mxu0 %v1118
        %1319 = vmatprep.subr.bf16.mxu0 %v1112
        %1320 = vmatpush1.bf16.msra.mxu0 %v1111
        %1321 = vmatprep.subr.bf16.mxu0 0
        %1322 = vmatpush2.bf16.msra.mxu0 0
        %1323 = vmatprep.subr.bf16.mxu0 0
        %1324 = vmatpush2.bf16.msra.mxu0 0
        %1325 = vmatprep.subr.bf16.mxu0 0
        %1326 = vmatpush2.bf16.msra.mxu0 0
        %1327 = vmatprep.subr.bf16.mxu0 0
        %1328 = vmatpush2.bf16.msra.mxu0 0
        %1329 = vmatprep.subr.bf16.mxu0 0
        %1330 = vmatpush2.bf16.msra.mxu0 0
        %1331 = vmatprep.subr.bf16.mxu0 0
        %1332 = vmatpush2.bf16.msra.mxu0 0
        %1333 = vmatprep.subr.bf16.mxu0 0
        %1334 = vmatpush2.bf16.msra.mxu0 0
        %1335 = vmatprep.subr.bf16.mxu0 0
        %1336 = vmatpush2.bf16.msra.mxu0 0
        %1337 = vmatprep.mubr.bf16.mxu0 0
        %1338 = vmatmul.mubr.bf16.gmra.mxu0 %v929
        %v1339 = vpop.f32.mrf.mxu0
        %v1340 = vadd.f32 %v876, %v1339
        %v1341 = vpop.f32.mrf.mxu0
        %v1342 = vadd.f32 %v878, %v1341
        %v1343 = vpop.f32.mrf.mxu0
        %v1344 = vadd.f32 %v880, %v1343
        %v1345 = vpop.f32.mrf.mxu0
        %v1346 = vadd.f32 %v882, %v1345
        %1347 = vdwg.mxu0
        %1348 = vmatprep.subr.bf16.mxu0 0
        %1349 = vmatpush1.bf16.msra.mxu0 %v1162
        %1350 = vmatprep.subr.bf16.mxu0 0
        %1351 = vmatpush1.bf16.msra.mxu0 %v1155
        %1352 = vmatprep.subr.bf16.mxu0 0
        %1353 = vmatpush1.bf16.msra.mxu0 %v1148
        %1354 = vmatprep.subr.bf16.mxu0 0
        %1355 = vmatpush1.bf16.msra.mxu0 %v1141
        %1356 = vmatprep.subr.bf16.mxu0 0
        %1357 = vmatpush1.bf16.msra.mxu0 %v1134
        %1358 = vmatprep.subr.bf16.mxu0 0
        %1359 = vmatpush1.bf16.msra.mxu0 %v1127
        %1360 = vmatprep.subr.bf16.mxu0 0
        %1361 = vmatpush1.bf16.msra.mxu0 %v1120
        %1362 = vmatprep.subr.bf16.mxu0 0
        %1363 = vmatpush1.bf16.msra.mxu0 %v1113
        %1364 = vmatprep.subr.bf16.mxu0 0
        %1365 = vmatpush2.bf16.msra.mxu0 0
        %1366 = vmatprep.subr.bf16.mxu0 0
        %1367 = vmatpush2.bf16.msra.mxu0 0
        %1368 = vmatprep.subr.bf16.mxu0 0
        %1369 = vmatpush2.bf16.msra.mxu0 0
        %1370 = vmatprep.subr.bf16.mxu0 0
        %1371 = vmatpush2.bf16.msra.mxu0 0
        %1372 = vmatprep.subr.bf16.mxu0 0
        %1373 = vmatpush2.bf16.msra.mxu0 0
        %1374 = vmatprep.subr.bf16.mxu0 0
        %1375 = vmatpush2.bf16.msra.mxu0 0
        %1376 = vmatprep.subr.bf16.mxu0 0
        %1377 = vmatpush2.bf16.msra.mxu0 0
        %1378 = vmatprep.subr.bf16.mxu0 0
        %1379 = vmatpush2.bf16.msra.mxu0 0
        %1380 = vmatprep.mubr.bf16.mxu0 0
        %1381 = vmatmul.mubr.bf16.gmra.mxu0 %v929
        %v1382 = vpop.f32.mrf.mxu0
        %v1383 = vadd.f32 %v919, %v1382
        %v1384 = vpop.f32.mrf.mxu0
        %v1385 = vpop.f32.mrf.mxu0
        %v1386 = vadd.f32 %v922, %v1385
        %v1387 = vpop.f32.mrf.mxu0
        %1388 = vdwg.mxu0
        %v1389 = vld [vmem:[%s5] sm:$0x7f]
        %v1391 = vlaneseq
        %v1392 = vshrl.u32 %v1391, 7
        %v1393 = vsub.s32 0, %v1392
        %v1394 = vrot.slane %v1389, %v1393
        %v1395 = vlaneseq
        %v1396 = vshrl.u32 %v1395, 7
        %v1397 = vsub.s32 1, %v1396
        %v1398 = vrot.slane %v1389, %v1397
        %v1399 = vlaneseq
        %v1400 = vshrl.u32 %v1399, 7
        %v1401 = vsub.s32 2, %v1400
        %v1402 = vrot.slane %v1389, %v1401
        %v1403 = vlaneseq
        %v1404 = vshrl.u32 %v1403, 7
        %v1405 = vsub.s32 3, %v1404
        %v1406 = vrot.slane %v1389, %v1405
        %v1407 = vlaneseq
        %v1408 = vshrl.u32 %v1407, 7
        %v1409 = vsub.s32 4, %v1408
        %v1410 = vrot.slane %v1389, %v1409
        %v1411 = vlaneseq
        %v1412 = vshrl.u32 %v1411, 7
        %v1413 = vsub.s32 5, %v1412
        %v1414 = vrot.slane %v1389, %v1413
        %v1415 = vlaneseq
        %v1416 = vshrl.u32 %v1415, 7
        %v1417 = vsub.s32 6, %v1416
        %v1418 = vrot.slane %v1389, %v1417
        %v1426 = vadd.f32 %v1254, %v1394
        %v1427 = vadd.f32 %v1256, %v1398
        %v1428 = vadd.f32 %v1297, %v1402
        %v1429 = vadd.f32 %v1299, %v1406
        %v1430 = vadd.f32 %v1340, %v1410
        %v1431 = vadd.f32 %v1342, %v1414
        %v1432 = vadd.f32 %v1383, %v1418
        %v1433 = vadd.f32 %v1258, %v1394
        %v1434 = vadd.f32 %v1260, %v1398
        %v1435 = vadd.f32 %v1301, %v1402
        %v1436 = vadd.f32 %v1303, %v1406
        %v1437 = vadd.f32 %v1344, %v1410
        %v1438 = vadd.f32 %v1346, %v1414
        %v1439 = vadd.f32 %v1386, %v1418
        %v1440 = vmax.f32 %v1426, 0.0
        %v1441 = vmax.f32 %v1427, 0.0
        %v1442 = vmax.f32 %v1428, 0.0
        %v1443 = vmax.f32 %v1429, 0.0
        %v1444 = vmax.f32 %v1430, 0.0
        %v1445 = vmax.f32 %v1431, 0.0
        %v1446 = vmax.f32 %v1432, 0.0
        %v1447 = vmax.f32 %v1433, 0.0
        %v1448 = vmax.f32 %v1434, 0.0
        %v1449 = vmax.f32 %v1435, 0.0
        %v1450 = vmax.f32 %v1436, 0.0
        %v1451 = vmax.f32 %v1437, 0.0
        %v1452 = vmax.f32 %v1438, 0.0
        %v1453 = vmax.f32 %v1439, 0.0
        %v1454 = vpack.c.bf16 %v1447, %v1440
        %v1455 = vpack.c.bf16 %v1448, %v1441
        %v1456 = vpack.c.bf16 %v1449, %v1442
        %v1457 = vpack.c.bf16 %v1450, %v1443
        %v1458 = vpack.c.bf16 %v1451, %v1444
        %v1459 = vpack.c.bf16 %v1452, %v1445
        %v1460 = vpack.c.bf16 %v1453, %v1446
        %v1461 = vld [vmem:[%s6] sm:$0xff]
        %v1462 = vld [vmem:[%s6 + $0x8] sm:$0xff]
        %v1463 = vld [vmem:[%s6 + $0x10] sm:$0xff]
        %v1464 = vld [vmem:[%s6 + $0x18] sm:$0xff]
        %v1465 = vld [vmem:[%s6 + $0x20] sm:$0xff]
        %v1466 = vld [vmem:[%s6 + $0x28] sm:$0xff]
        %v1467 = vld [vmem:[%s6 + $0x30] sm:$0xff]
        %v1468 = vld [vmem:[%s6 + $0x38] sm:$0xff]
        %v1469 = vld [vmem:[%s6 + $0x40] sm:$0xff]
        %v1470 = vld [vmem:[%s6 + $0x48] sm:$0xff]
        %v1471 = vld [vmem:[%s6 + $0x50] sm:$0xff]
        %v1472 = vld [vmem:[%s6 + $0x58] sm:$0xff]
        %v1473 = vld [vmem:[%s6 + $0x60] sm:$0xff]
        %v1474 = vld [vmem:[%s6 + $0x68] sm:$0xff]
        %v1475 = vld [vmem:[%s6 + $0x70] sm:$0xff]
        %v1476 = vld [vmem:[%s6 + $0x78] sm:$0xff]
        %v1477 = vld [vmem:[%s6 + $0x80] sm:$0xff]
        %v1478 = vld [vmem:[%s6 + $0x88] sm:$0xff]
        %v1479 = vld [vmem:[%s6 + $0x90] sm:$0xff]
        %v1480 = vld [vmem:[%s6 + $0x98] sm:$0xff]
        %v1481 = vld [vmem:[%s6 + $0xa0] sm:$0xff]
        %v1482 = vld [vmem:[%s6 + $0xa8] sm:$0xff]
        %v1483 = vld [vmem:[%s6 + $0xb0] sm:$0xff]
        %v1484 = vld [vmem:[%s6 + $0xb8] sm:$0xff]
        %v1485 = vld [vmem:[%s6 + $0xc0] sm:$0xff]
        %v1486 = vld [vmem:[%s6 + $0xc8] sm:$0xff]
        %v1487 = vld [vmem:[%s6 + $0xd0] sm:$0xff]
        %v1488 = vld [vmem:[%s6 + $0xd8] sm:$0xff]
        %v1489 = vld [vmem:[%s6 + $0xe0] sm:$0xff]
        %v1490 = vld [vmem:[%s6 + $0xe8] sm:$0xff]
        %v1491 = vld [vmem:[%s6 + $0xf0] sm:$0xff]
        %v1492 = vld [vmem:[%s6 + $0xf8] sm:$0xff]
        %v1493 = vld [vmem:[%s6 + $0x100] sm:$0xff]
        %v1494 = vld [vmem:[%s6 + $0x108] sm:$0xff]
        %v1495 = vld [vmem:[%s6 + $0x110] sm:$0xff]
        %v1496 = vld [vmem:[%s6 + $0x118] sm:$0xff]
        %v1497 = vld [vmem:[%s6 + $0x120] sm:$0xff]
        %v1498 = vld [vmem:[%s6 + $0x128] sm:$0xff]
        %v1499 = vld [vmem:[%s6 + $0x130] sm:$0xff]
        %v1500 = vld [vmem:[%s6 + $0x138] sm:$0xff]
        %v1501 = vld [vmem:[%s6 + $0x140] sm:$0xff]
        %v1502 = vld [vmem:[%s6 + $0x148] sm:$0xff]
        %v1503 = vld [vmem:[%s6 + $0x150] sm:$0xff]
        %v1504 = vld [vmem:[%s6 + $0x158] sm:$0xff]
        %v1505 = vld [vmem:[%s6 + $0x160] sm:$0xff]
        %v1506 = vld [vmem:[%s6 + $0x168] sm:$0xff]
        %v1507 = vld [vmem:[%s6 + $0x170] sm:$0xff]
        %v1508 = vld [vmem:[%s6 + $0x178] sm:$0xff]
        %v1509 = vld [vmem:[%s6 + $0x180] sm:$0xff]
        %v1510 = vld [vmem:[%s6 + $0x188] sm:$0xff]
        %v1511 = vld [vmem:[%s6 + $0x190] sm:$0xff]
        %v1512 = vld [vmem:[%s6 + $0x198] sm:$0xff]
        %v1513 = vld [vmem:[%s6 + $0x1a0] sm:$0xff]
        %v1514 = vld [vmem:[%s6 + $0x1a8] sm:$0xff]
        %v1515 = vld [vmem:[%s6 + $0x1b0] sm:$0xff]
        %v1516 = vld [vmem:[%s6 + $0x1b8] sm:$0xff]
        %v1517 = vld [vmem:[%s6 + $0x1c0] sm:$0xff]
        %v1518 = vld [vmem:[%s6 + $0x1c8] sm:$0xff]
        %v1519 = vld [vmem:[%s6 + $0x1d0] sm:$0xff]
        %v1520 = vld [vmem:[%s6 + $0x1d8] sm:$0xff]
        %v1521 = vld [vmem:[%s6 + $0x1e0] sm:$0xff]
        %v1522 = vld [vmem:[%s6 + $0x1e8] sm:$0xff]
        %v1523 = vld [vmem:[%s6 + $0x1f0] sm:$0xff]
        %v1524 = vld [vmem:[%s6 + $0x1f8] sm:$0xff]
        %v1525 = vld [vmem:[%s6 + $0x200] sm:$0xff]
        %v1526 = vld [vmem:[%s6 + $0x208] sm:$0xff]
        %v1527 = vld [vmem:[%s6 + $0x210] sm:$0xff]
        %v1528 = vld [vmem:[%s6 + $0x218] sm:$0xff]
        %v1529 = vld [vmem:[%s6 + $0x220] sm:$0xff]
        %v1530 = vld [vmem:[%s6 + $0x228] sm:$0xff]
        %v1531 = vld [vmem:[%s6 + $0x230] sm:$0xff]
        %v1532 = vld [vmem:[%s6 + $0x238] sm:$0xff]
        %v1533 = vld [vmem:[%s6 + $0x240] sm:$0xff]
        %v1534 = vld [vmem:[%s6 + $0x248] sm:$0xff]
        %v1535 = vld [vmem:[%s6 + $0x250] sm:$0xff]
        %v1536 = vld [vmem:[%s6 + $0x258] sm:$0xff]
        %v1537 = vld [vmem:[%s6 + $0x260] sm:$0xff]
        %v1538 = vld [vmem:[%s6 + $0x268] sm:$0xff]
        %v1539 = vld [vmem:[%s6 + $0x270] sm:$0xff]
        %v1540 = vld [vmem:[%s6 + $0x278] sm:$0xff]
        %v1541 = vld [vmem:[%s6 + $0x280] sm:$0xff]
        %v1542 = vld [vmem:[%s6 + $0x288] sm:$0xff]
        %v1543 = vld [vmem:[%s6 + $0x290] sm:$0xff]
        %v1544 = vld [vmem:[%s6 + $0x298] sm:$0xff]
        %v1545 = vld [vmem:[%s6 + $0x2a0] sm:$0xff]
        %v1546 = vld [vmem:[%s6 + $0x2a8] sm:$0xff]
        %v1547 = vld [vmem:[%s6 + $0x2b0] sm:$0xff]
        %v1548 = vld [vmem:[%s6 + $0x2b8] sm:$0xff]
        %v1549 = vld [vmem:[%s6 + $0x2c0] sm:$0xff]
        %v1550 = vld [vmem:[%s6 + $0x2c8] sm:$0xff]
        %v1551 = vld [vmem:[%s6 + $0x2d0] sm:$0xff]
        %v1552 = vld [vmem:[%s6 + $0x2d8] sm:$0xff]
        %v1553 = vld [vmem:[%s6 + $0x2e0] sm:$0xff]
        %v1554 = vld [vmem:[%s6 + $0x2e8] sm:$0xff]
        %v1555 = vld [vmem:[%s6 + $0x2f0] sm:$0xff]
        %v1556 = vld [vmem:[%s6 + $0x2f8] sm:$0xff]
        %v1557 = vld [vmem:[%s6 + $0x300] sm:$0xff]
        %v1558 = vld [vmem:[%s6 + $0x308] sm:$0xff]
        %v1559 = vld [vmem:[%s6 + $0x310] sm:$0xff]
        %v1560 = vld [vmem:[%s6 + $0x318] sm:$0xff]
        %v1561 = vld [vmem:[%s6 + $0x320] sm:$0xff]
        %v1562 = vld [vmem:[%s6 + $0x328] sm:$0xff]
        %v1563 = vld [vmem:[%s6 + $0x330] sm:$0xff]
        %v1564 = vld [vmem:[%s6 + $0x338] sm:$0xff]
        %v1565 = vld [vmem:[%s6 + $0x340] sm:$0xff]
        %v1566 = vld [vmem:[%s6 + $0x348] sm:$0xff]
        %v1567 = vld [vmem:[%s6 + $0x350] sm:$0xff]
        %v1568 = vld [vmem:[%s6 + $0x358] sm:$0xff]
        %v1569 = vld [vmem:[%s6 + $0x360] sm:$0xff]
        %v1570 = vld [vmem:[%s6 + $0x368] sm:$0xff]
        %v1571 = vld [vmem:[%s6 + $0x370] sm:$0xff]
        %v1572 = vld [vmem:[%s6 + $0x378] sm:$0xff]
        %v1573 = vld [vmem:[%s6 + $0x380] sm:$0xff]
        %v1574 = vld [vmem:[%s6 + $0x388] sm:$0xff]
        %v1575 = vld [vmem:[%s6 + $0x390] sm:$0xff]
        %v1576 = vld [vmem:[%s6 + $0x398] sm:$0xff]
        %v1577 = vld [vmem:[%s6 + $0x3a0] sm:$0xff]
        %v1578 = vld [vmem:[%s6 + $0x3a8] sm:$0xff]
        %v1579 = vld [vmem:[%s6 + $0x3b0] sm:$0xff]
        %v1580 = vld [vmem:[%s6 + $0x3b8] sm:$0xff]
        %v1581 = vld [vmem:[%s6 + $0x3c0] sm:$0xff]
        %v1582 = vld [vmem:[%s6 + $0x3c8] sm:$0xff]
        %v1583 = vld [vmem:[%s6 + $0x3d0] sm:$0xff]
        %v1584 = vld [vmem:[%s6 + $0x3d8] sm:$0xff]
        %v1585 = vld [vmem:[%s6 + $0x3e0] sm:$0xff]
        %v1586 = vld [vmem:[%s6 + $0x3e8] sm:$0xff]
        %v1587 = vld [vmem:[%s6 + $0x3f0] sm:$0xff]
        %v1588 = vld [vmem:[%s6 + $0x3f8] sm:$0xff]
        %v1589 = vld [vmem:[%s6 + $0x400] sm:$0xff]
        %v1590 = vld [vmem:[%s6 + $0x408] sm:$0xff]
        %v1591 = vld [vmem:[%s6 + $0x410] sm:$0xff]
        %v1592 = vld [vmem:[%s6 + $0x418] sm:$0xff]
        %v1593 = vld [vmem:[%s6 + $0x420] sm:$0xff]
        %v1594 = vld [vmem:[%s6 + $0x428] sm:$0xff]
        %v1595 = vld [vmem:[%s6 + $0x430] sm:$0xff]
        %v1596 = vld [vmem:[%s6 + $0x438] sm:$0xff]
        %v1597 = vld [vmem:[%s6 + $0x440] sm:$0xff]
        %v1598 = vld [vmem:[%s6 + $0x448] sm:$0xff]
        %v1599 = vld [vmem:[%s6 + $0x450] sm:$0xff]
        %v1600 = vld [vmem:[%s6 + $0x458] sm:$0xff]
        %v1601 = vld [vmem:[%s6 + $0x460] sm:$0xff]
        %v1602 = vld [vmem:[%s6 + $0x468] sm:$0xff]
        %v1603 = vld [vmem:[%s6 + $0x470] sm:$0xff]
        %v1604 = vld [vmem:[%s6 + $0x478] sm:$0xff]
        %v1605 = vld [vmem:[%s6 + $0x480] sm:$0xff]
        %v1606 = vld [vmem:[%s6 + $0x488] sm:$0xff]
        %v1607 = vld [vmem:[%s6 + $0x490] sm:$0xff]
        %v1608 = vld [vmem:[%s6 + $0x498] sm:$0xff]
        %v1609 = vld [vmem:[%s6 + $0x4a0] sm:$0xff]
        %v1610 = vld [vmem:[%s6 + $0x4a8] sm:$0xff]
        %v1611 = vld [vmem:[%s6 + $0x4b0] sm:$0xff]
        %v1612 = vld [vmem:[%s6 + $0x4b8] sm:$0xff]
        %v1613 = vld [vmem:[%s6 + $0x4c0] sm:$0xff]
        %v1614 = vld [vmem:[%s6 + $0x4c8] sm:$0xff]
        %v1615 = vld [vmem:[%s6 + $0x4d0] sm:$0xff]
        %v1616 = vld [vmem:[%s6 + $0x4d8] sm:$0xff]
        %v1617 = vld [vmem:[%s6 + $0x4e0] sm:$0xff]
        %v1618 = vld [vmem:[%s6 + $0x4e8] sm:$0xff]
        %v1619 = vld [vmem:[%s6 + $0x4f0] sm:$0xff]
        %v1620 = vld [vmem:[%s6 + $0x4f8] sm:$0xff]
        %v1621 = vld [vmem:[%s6 + $0x500] sm:$0xff]
        %v1622 = vld [vmem:[%s6 + $0x508] sm:$0xff]
        %v1623 = vld [vmem:[%s6 + $0x510] sm:$0xff]
        %v1624 = vld [vmem:[%s6 + $0x518] sm:$0xff]
        %v1625 = vld [vmem:[%s6 + $0x520] sm:$0xff]
        %v1626 = vld [vmem:[%s6 + $0x528] sm:$0xff]
        %v1627 = vld [vmem:[%s6 + $0x530] sm:$0xff]
        %v1628 = vld [vmem:[%s6 + $0x538] sm:$0xff]
        %v1629 = vld [vmem:[%s6 + $0x540] sm:$0xff]
        %v1630 = vld [vmem:[%s6 + $0x548] sm:$0xff]
        %v1631 = vld [vmem:[%s6 + $0x550] sm:$0xff]
        %v1632 = vld [vmem:[%s6 + $0x558] sm:$0xff]
        %v1633 = vld [vmem:[%s6 + $0x560] sm:$0xff]
        %v1634 = vld [vmem:[%s6 + $0x568] sm:$0xff]
        %v1635 = vld [vmem:[%s6 + $0x570] sm:$0xff]
        %v1636 = vld [vmem:[%s6 + $0x578] sm:$0xff]
        %v1637 = vld [vmem:[%s6 + $0x580] sm:$0xff]
        %v1638 = vld [vmem:[%s6 + $0x588] sm:$0xff]
        %v1639 = vld [vmem:[%s6 + $0x590] sm:$0xff]
        %v1640 = vld [vmem:[%s6 + $0x598] sm:$0xff]
        %v1641 = vld [vmem:[%s6 + $0x5a0] sm:$0xff]
        %v1642 = vld [vmem:[%s6 + $0x5a8] sm:$0xff]
        %v1643 = vld [vmem:[%s6 + $0x5b0] sm:$0xff]
        %v1644 = vld [vmem:[%s6 + $0x5b8] sm:$0xff]
        %v1645 = vld [vmem:[%s6 + $0x5c0] sm:$0xff]
        %v1646 = vld [vmem:[%s6 + $0x5c8] sm:$0xff]
        %v1647 = vld [vmem:[%s6 + $0x5d0] sm:$0xff]
        %v1648 = vld [vmem:[%s6 + $0x5d8] sm:$0xff]
        %v1649 = vld [vmem:[%s6 + $0x5e0] sm:$0xff]
        %v1650 = vld [vmem:[%s6 + $0x5e8] sm:$0xff]
        %v1651 = vld [vmem:[%s6 + $0x5f0] sm:$0xff]
        %v1652 = vld [vmem:[%s6 + $0x5f8] sm:$0xff]
        %v1653 = vld [vmem:[%s6 + $0x600] sm:$0xff]
        %v1654 = vld [vmem:[%s6 + $0x608] sm:$0xff]
        %v1655 = vld [vmem:[%s6 + $0x610] sm:$0xff]
        %v1656 = vld [vmem:[%s6 + $0x618] sm:$0xff]
        %v1657 = vld [vmem:[%s6 + $0x620] sm:$0xff]
        %v1658 = vld [vmem:[%s6 + $0x628] sm:$0xff]
        %v1659 = vld [vmem:[%s6 + $0x630] sm:$0xff]
        %v1660 = vld [vmem:[%s6 + $0x638] sm:$0xff]
        %v1661 = vld [vmem:[%s7] sm:$0xf]
        %v1663 = vlaneseq
        %v1664 = vshrl.u32 %v1663, 7
        %v1665 = vsub.s32 0, %v1664
        %v1666 = vrot.slane %v1661, %v1665
        %v1667 = vlaneseq
        %v1668 = vshrl.u32 %v1667, 7
        %v1669 = vsub.s32 1, %v1668
        %v1670 = vrot.slane %v1661, %v1669
        %v1671 = vlaneseq
        %v1672 = vshrl.u32 %v1671, 7
        %v1673 = vsub.s32 2, %v1672
        %v1674 = vrot.slane %v1661, %v1673
        %v1675 = vlaneseq
        %v1676 = vshrl.u32 %v1675, 7
        %v1677 = vsub.s32 3, %v1676
        %v1678 = vrot.slane %v1661, %v1677
        %v1883 = vunpack.c.l.b16 %v1461
        %v1884 = vunpack.c.h.b16 %v1461
        %v1885 = vunpack.c.l.b16 %v1462
        %v1886 = vunpack.c.h.b16 %v1462
        %v1887 = vunpack.c.l.b16 %v1463
        %v1888 = vunpack.c.h.b16 %v1463
        %v1889 = vunpack.c.l.b16 %v1464
        %v1890 = vunpack.c.h.b16 %v1464
        %v1891 = vunpack.c.l.b16 %v1465
        %v1892 = vunpack.c.h.b16 %v1465
        %v1893 = vunpack.c.l.b16 %v1466
        %v1894 = vunpack.c.h.b16 %v1466
        %v1895 = vunpack.c.l.b16 %v1467
        %v1896 = vunpack.c.h.b16 %v1467
        %v1897 = vunpack.c.l.b16 %v1468
        %v1898 = vunpack.c.h.b16 %v1468
        %v1899 = vunpack.c.l.b16 %v1469
        %v1900 = vunpack.c.h.b16 %v1469
        %v1901 = vunpack.c.l.b16 %v1470
        %v1902 = vunpack.c.h.b16 %v1470
        %v1903 = vunpack.c.l.b16 %v1471
        %v1904 = vunpack.c.h.b16 %v1471
        %v1905 = vunpack.c.l.b16 %v1472
        %v1906 = vunpack.c.h.b16 %v1472
        %v1907 = vunpack.c.l.b16 %v1473
        %v1908 = vunpack.c.h.b16 %v1473
        %v1909 = vunpack.c.l.b16 %v1474
        %v1910 = vunpack.c.h.b16 %v1474
        %v1911 = vunpack.c.l.b16 %v1475
        %v1912 = vunpack.c.h.b16 %v1475
        %v1913 = vunpack.c.l.b16 %v1476
        %v1914 = vunpack.c.h.b16 %v1476
        %v1915 = vunpack.c.l.b16 %v1477
        %v1916 = vunpack.c.h.b16 %v1477
        %v1917 = vunpack.c.l.b16 %v1478
        %v1918 = vunpack.c.h.b16 %v1478
        %v1919 = vunpack.c.l.b16 %v1479
        %v1920 = vunpack.c.h.b16 %v1479
        %v1921 = vunpack.c.l.b16 %v1480
        %v1922 = vunpack.c.h.b16 %v1480
        %v1923 = vunpack.c.l.b16 %v1481
        %v1924 = vunpack.c.h.b16 %v1481
        %v1925 = vunpack.c.l.b16 %v1482
        %v1926 = vunpack.c.h.b16 %v1482
        %v1927 = vunpack.c.l.b16 %v1483
        %v1928 = vunpack.c.h.b16 %v1483
        %v1929 = vunpack.c.l.b16 %v1484
        %v1930 = vunpack.c.h.b16 %v1484
        %v1931 = vunpack.c.l.b16 %v1485
        %v1932 = vunpack.c.h.b16 %v1485
        %v1933 = vunpack.c.l.b16 %v1486
        %v1934 = vunpack.c.h.b16 %v1486
        %v1935 = vunpack.c.l.b16 %v1487
        %v1936 = vunpack.c.h.b16 %v1487
        %v1937 = vunpack.c.l.b16 %v1488
        %v1938 = vunpack.c.h.b16 %v1488
        %v1939 = vunpack.c.l.b16 %v1489
        %v1940 = vunpack.c.h.b16 %v1489
        %v1941 = vunpack.c.l.b16 %v1490
        %v1942 = vunpack.c.h.b16 %v1490
        %v1943 = vunpack.c.l.b16 %v1491
        %v1944 = vunpack.c.h.b16 %v1491
        %v1945 = vunpack.c.l.b16 %v1492
        %v1946 = vunpack.c.h.b16 %v1492
        %v1947 = vunpack.c.l.b16 %v1493
        %v1948 = vunpack.c.h.b16 %v1493
        %v1949 = vunpack.c.l.b16 %v1494
        %v1950 = vunpack.c.h.b16 %v1494
        %v1951 = vunpack.c.l.b16 %v1495
        %v1952 = vunpack.c.h.b16 %v1495
        %v1953 = vunpack.c.l.b16 %v1496
        %v1954 = vunpack.c.h.b16 %v1496
        %v1955 = vunpack.c.l.b16 %v1497
        %v1956 = vunpack.c.h.b16 %v1497
        %v1957 = vunpack.c.l.b16 %v1498
        %v1958 = vunpack.c.h.b16 %v1498
        %v1959 = vunpack.c.l.b16 %v1499
        %v1960 = vunpack.c.h.b16 %v1499
        %v1961 = vunpack.c.l.b16 %v1500
        %v1962 = vunpack.c.h.b16 %v1500
        %v1963 = vunpack.c.l.b16 %v1501
        %v1964 = vunpack.c.h.b16 %v1501
        %v1965 = vunpack.c.l.b16 %v1502
        %v1966 = vunpack.c.h.b16 %v1502
        %v1967 = vunpack.c.l.b16 %v1503
        %v1968 = vunpack.c.h.b16 %v1503
        %v1969 = vunpack.c.l.b16 %v1504
        %v1970 = vunpack.c.h.b16 %v1504
        %v1971 = vunpack.c.l.b16 %v1505
        %v1972 = vunpack.c.h.b16 %v1505
        %v1973 = vunpack.c.l.b16 %v1506
        %v1974 = vunpack.c.h.b16 %v1506
        %v1975 = vunpack.c.l.b16 %v1507
        %v1976 = vunpack.c.h.b16 %v1507
        %v1977 = vunpack.c.l.b16 %v1508
        %v1978 = vunpack.c.h.b16 %v1508
        %v1979 = vunpack.c.l.b16 %v1509
        %v1980 = vunpack.c.h.b16 %v1509
        %v1981 = vunpack.c.l.b16 %v1510
        %v1982 = vunpack.c.h.b16 %v1510
        %v1983 = vunpack.c.l.b16 %v1511
        %v1984 = vunpack.c.h.b16 %v1511
        %v1985 = vunpack.c.l.b16 %v1512
        %v1986 = vunpack.c.h.b16 %v1512
        %v1987 = vunpack.c.l.b16 %v1513
        %v1988 = vunpack.c.h.b16 %v1513
        %v1989 = vunpack.c.l.b16 %v1514
        %v1990 = vunpack.c.h.b16 %v1514
        %v1991 = vunpack.c.l.b16 %v1515
        %v1992 = vunpack.c.h.b16 %v1515
        %v1993 = vunpack.c.l.b16 %v1516
        %v1994 = vunpack.c.h.b16 %v1516
        %v1995 = vunpack.c.l.b16 %v1517
        %v1996 = vunpack.c.h.b16 %v1517
        %v1997 = vunpack.c.l.b16 %v1518
        %v1998 = vunpack.c.h.b16 %v1518
        %v1999 = vunpack.c.l.b16 %v1519
        %v2000 = vunpack.c.h.b16 %v1519
        %v2001 = vunpack.c.l.b16 %v1520
        %v2002 = vunpack.c.h.b16 %v1520
        %v2003 = vunpack.c.l.b16 %v1521
        %v2004 = vunpack.c.h.b16 %v1521
        %v2005 = vunpack.c.l.b16 %v1522
        %v2006 = vunpack.c.h.b16 %v1522
        %v2007 = vunpack.c.l.b16 %v1523
        %v2008 = vunpack.c.h.b16 %v1523
        %v2009 = vunpack.c.l.b16 %v1524
        %v2010 = vunpack.c.h.b16 %v1524
        %v2011 = vunpack.c.l.b16 %v1525
        %v2012 = vunpack.c.h.b16 %v1525
        %v2013 = vunpack.c.l.b16 %v1526
        %v2014 = vunpack.c.h.b16 %v1526
        %v2015 = vunpack.c.l.b16 %v1527
        %v2016 = vunpack.c.h.b16 %v1527
        %v2017 = vunpack.c.l.b16 %v1528
        %v2018 = vunpack.c.h.b16 %v1528
        %v2019 = vunpack.c.l.b16 %v1529
        %v2020 = vunpack.c.h.b16 %v1529
        %v2021 = vunpack.c.l.b16 %v1530
        %v2022 = vunpack.c.h.b16 %v1530
        %v2023 = vunpack.c.l.b16 %v1531
        %v2024 = vunpack.c.h.b16 %v1531
        %v2025 = vunpack.c.l.b16 %v1532
        %v2026 = vunpack.c.h.b16 %v1532
        %v2027 = vunpack.c.l.b16 %v1533
        %v2028 = vunpack.c.h.b16 %v1533
        %v2029 = vunpack.c.l.b16 %v1534
        %v2030 = vunpack.c.h.b16 %v1534
        %v2031 = vunpack.c.l.b16 %v1535
        %v2032 = vunpack.c.h.b16 %v1535
        %v2033 = vunpack.c.l.b16 %v1536
        %v2034 = vunpack.c.h.b16 %v1536
        %v2035 = vunpack.c.l.b16 %v1537
        %v2036 = vunpack.c.h.b16 %v1537
        %v2037 = vunpack.c.l.b16 %v1538
        %v2038 = vunpack.c.h.b16 %v1538
        %v2039 = vunpack.c.l.b16 %v1539
        %v2040 = vunpack.c.h.b16 %v1539
        %v2041 = vunpack.c.l.b16 %v1540
        %v2042 = vunpack.c.h.b16 %v1540
        %v2043 = vunpack.c.l.b16 %v1541
        %v2044 = vunpack.c.h.b16 %v1541
        %v2045 = vunpack.c.l.b16 %v1542
        %v2046 = vunpack.c.h.b16 %v1542
        %v2047 = vunpack.c.l.b16 %v1543
        %v2048 = vunpack.c.h.b16 %v1543
        %v2049 = vunpack.c.l.b16 %v1544
        %v2050 = vunpack.c.h.b16 %v1544
        %v2051 = vunpack.c.l.b16 %v1545
        %v2052 = vunpack.c.h.b16 %v1545
        %v2053 = vunpack.c.l.b16 %v1546
        %v2054 = vunpack.c.h.b16 %v1546
        %v2055 = vunpack.c.l.b16 %v1547
        %v2056 = vunpack.c.h.b16 %v1547
        %v2057 = vunpack.c.l.b16 %v1548
        %v2058 = vunpack.c.h.b16 %v1548
        %v2059 = vunpack.c.l.b16 %v1549
        %v2060 = vunpack.c.h.b16 %v1549
        %v2061 = vunpack.c.l.b16 %v1550
        %v2062 = vunpack.c.h.b16 %v1550
        %v2063 = vunpack.c.l.b16 %v1551
        %v2064 = vunpack.c.h.b16 %v1551
        %v2065 = vunpack.c.l.b16 %v1552
        %v2066 = vunpack.c.h.b16 %v1552
        %v2067 = vunpack.c.l.b16 %v1553
        %v2068 = vunpack.c.h.b16 %v1553
        %v2069 = vunpack.c.l.b16 %v1554
        %v2070 = vunpack.c.h.b16 %v1554
        %v2071 = vunpack.c.l.b16 %v1555
        %v2072 = vunpack.c.h.b16 %v1555
        %v2073 = vunpack.c.l.b16 %v1556
        %v2074 = vunpack.c.h.b16 %v1556
        %v2075 = vunpack.c.l.b16 %v1557
        %v2076 = vunpack.c.h.b16 %v1557
        %v2077 = vunpack.c.l.b16 %v1558
        %v2078 = vunpack.c.h.b16 %v1558
        %v2079 = vunpack.c.l.b16 %v1559
        %v2080 = vunpack.c.h.b16 %v1559
        %v2081 = vunpack.c.l.b16 %v1560
        %v2082 = vunpack.c.h.b16 %v1560
        %v2083 = vunpack.c.l.b16 %v1561
        %v2084 = vunpack.c.h.b16 %v1561
        %v2085 = vunpack.c.l.b16 %v1562
        %v2086 = vunpack.c.h.b16 %v1562
        %v2087 = vunpack.c.l.b16 %v1563
        %v2088 = vunpack.c.h.b16 %v1563
        %v2089 = vunpack.c.l.b16 %v1564
        %v2090 = vunpack.c.h.b16 %v1564
        %v2091 = vunpack.c.l.b16 %v1565
        %v2092 = vunpack.c.h.b16 %v1565
        %v2093 = vunpack.c.l.b16 %v1566
        %v2094 = vunpack.c.h.b16 %v1566
        %v2095 = vunpack.c.l.b16 %v1567
        %v2096 = vunpack.c.h.b16 %v1567
        %v2097 = vunpack.c.l.b16 %v1568
        %v2098 = vunpack.c.h.b16 %v1568
        %v2099 = vunpack.c.l.b16 %v1569
        %v2100 = vunpack.c.h.b16 %v1569
        %v2101 = vunpack.c.l.b16 %v1570
        %v2102 = vunpack.c.h.b16 %v1570
        %v2103 = vunpack.c.l.b16 %v1571
        %v2104 = vunpack.c.h.b16 %v1571
        %v2105 = vunpack.c.l.b16 %v1572
        %v2106 = vunpack.c.h.b16 %v1572
        %v2107 = vunpack.c.l.b16 %v1573
        %v2108 = vunpack.c.h.b16 %v1573
        %v2109 = vunpack.c.l.b16 %v1574
        %v2110 = vunpack.c.h.b16 %v1574
        %v2111 = vunpack.c.l.b16 %v1575
        %v2112 = vunpack.c.h.b16 %v1575
        %v2113 = vunpack.c.l.b16 %v1576
        %v2114 = vunpack.c.h.b16 %v1576
        %v2115 = vunpack.c.l.b16 %v1577
        %v2116 = vunpack.c.h.b16 %v1577
        %v2117 = vunpack.c.l.b16 %v1578
        %v2118 = vunpack.c.h.b16 %v1578
        %v2119 = vunpack.c.l.b16 %v1579
        %v2120 = vunpack.c.h.b16 %v1579
        %v2121 = vunpack.c.l.b16 %v1580
        %v2122 = vunpack.c.h.b16 %v1580
        %v2123 = vunpack.c.l.b16 %v1581
        %v2124 = vunpack.c.h.b16 %v1581
        %v2125 = vunpack.c.l.b16 %v1582
        %v2126 = vunpack.c.h.b16 %v1582
        %v2127 = vunpack.c.l.b16 %v1583
        %v2128 = vunpack.c.h.b16 %v1583
        %v2129 = vunpack.c.l.b16 %v1584
        %v2130 = vunpack.c.h.b16 %v1584
        %v2131 = vunpack.c.l.b16 %v1585
        %v2132 = vunpack.c.h.b16 %v1585
        %v2133 = vunpack.c.l.b16 %v1586
        %v2134 = vunpack.c.h.b16 %v1586
        %v2135 = vunpack.c.l.b16 %v1587
        %v2136 = vunpack.c.h.b16 %v1587
        %v2137 = vunpack.c.l.b16 %v1588
        %v2138 = vunpack.c.h.b16 %v1588
        %v2139 = vunpack.c.l.b16 %v1589
        %v2140 = vunpack.c.h.b16 %v1589
        %v2141 = vunpack.c.l.b16 %v1590
        %v2142 = vunpack.c.h.b16 %v1590
        %v2143 = vunpack.c.l.b16 %v1591
        %v2144 = vunpack.c.h.b16 %v1591
        %v2145 = vunpack.c.l.b16 %v1592
        %v2146 = vunpack.c.h.b16 %v1592
        %v2147 = vunpack.c.l.b16 %v1593
        %v2148 = vunpack.c.h.b16 %v1593
        %v2149 = vunpack.c.l.b16 %v1594
        %v2150 = vunpack.c.h.b16 %v1594
        %v2151 = vunpack.c.l.b16 %v1595
        %v2152 = vunpack.c.h.b16 %v1595
        %v2153 = vunpack.c.l.b16 %v1596
        %v2154 = vunpack.c.h.b16 %v1596
        %v2155 = vunpack.c.l.b16 %v1597
        %v2156 = vunpack.c.h.b16 %v1597
        %v2157 = vunpack.c.l.b16 %v1598
        %v2158 = vunpack.c.h.b16 %v1598
        %v2159 = vunpack.c.l.b16 %v1599
        %v2160 = vunpack.c.h.b16 %v1599
        %v2161 = vunpack.c.l.b16 %v1600
        %v2162 = vunpack.c.h.b16 %v1600
        %v2163 = vunpack.c.l.b16 %v1601
        %v2164 = vunpack.c.h.b16 %v1601
        %v2165 = vunpack.c.l.b16 %v1602
        %v2166 = vunpack.c.h.b16 %v1602
        %v2167 = vunpack.c.l.b16 %v1603
        %v2168 = vunpack.c.h.b16 %v1603
        %v2169 = vunpack.c.l.b16 %v1604
        %v2170 = vunpack.c.h.b16 %v1604
        %v2171 = vunpack.c.l.b16 %v1605
        %v2172 = vunpack.c.h.b16 %v1605
        %v2173 = vunpack.c.l.b16 %v1606
        %v2174 = vunpack.c.h.b16 %v1606
        %v2175 = vunpack.c.l.b16 %v1607
        %v2176 = vunpack.c.h.b16 %v1607
        %v2177 = vunpack.c.l.b16 %v1608
        %v2178 = vunpack.c.h.b16 %v1608
        %v2179 = vunpack.c.l.b16 %v1609
        %v2180 = vunpack.c.h.b16 %v1609
        %v2181 = vunpack.c.l.b16 %v1610
        %v2182 = vunpack.c.h.b16 %v1610
        %v2183 = vunpack.c.l.b16 %v1611
        %v2184 = vunpack.c.h.b16 %v1611
        %v2185 = vunpack.c.l.b16 %v1612
        %v2186 = vunpack.c.h.b16 %v1612
        %v2187 = vunpack.c.l.b16 %v1613
        %v2188 = vunpack.c.h.b16 %v1613
        %v2189 = vunpack.c.l.b16 %v1614
        %v2190 = vunpack.c.h.b16 %v1614
        %v2191 = vunpack.c.l.b16 %v1615
        %v2192 = vunpack.c.h.b16 %v1615
        %v2193 = vunpack.c.l.b16 %v1616
        %v2194 = vunpack.c.h.b16 %v1616
        %v2195 = vunpack.c.l.b16 %v1617
        %v2196 = vunpack.c.h.b16 %v1617
        %v2197 = vunpack.c.l.b16 %v1618
        %v2198 = vunpack.c.h.b16 %v1618
        %v2199 = vunpack.c.l.b16 %v1619
        %v2200 = vunpack.c.h.b16 %v1619
        %v2201 = vunpack.c.l.b16 %v1620
        %v2202 = vunpack.c.h.b16 %v1620
        %v2203 = vunpack.c.l.b16 %v1621
        %v2204 = vunpack.c.h.b16 %v1621
        %v2205 = vunpack.c.l.b16 %v1622
        %v2206 = vunpack.c.h.b16 %v1622
        %v2207 = vunpack.c.l.b16 %v1623
        %v2208 = vunpack.c.h.b16 %v1623
        %v2209 = vunpack.c.l.b16 %v1624
        %v2210 = vunpack.c.h.b16 %v1624
        %v2211 = vunpack.c.l.b16 %v1625
        %v2212 = vunpack.c.h.b16 %v1625
        %v2213 = vunpack.c.l.b16 %v1626
        %v2214 = vunpack.c.h.b16 %v1626
        %v2215 = vunpack.c.l.b16 %v1627
        %v2216 = vunpack.c.h.b16 %v1627
        %v2217 = vunpack.c.l.b16 %v1628
        %v2218 = vunpack.c.h.b16 %v1628
        %v2219 = vunpack.c.l.b16 %v1629
        %v2220 = vunpack.c.h.b16 %v1629
        %v2221 = vunpack.c.l.b16 %v1630
        %v2222 = vunpack.c.h.b16 %v1630
        %v2223 = vunpack.c.l.b16 %v1631
        %v2224 = vunpack.c.h.b16 %v1631
        %v2225 = vunpack.c.l.b16 %v1632
        %v2226 = vunpack.c.h.b16 %v1632
        %v2227 = vunpack.c.l.b16 %v1633
        %v2228 = vunpack.c.h.b16 %v1633
        %v2229 = vunpack.c.l.b16 %v1634
        %v2230 = vunpack.c.h.b16 %v1634
        %v2231 = vunpack.c.l.b16 %v1635
        %v2232 = vunpack.c.h.b16 %v1635
        %v2233 = vunpack.c.l.b16 %v1636
        %v2234 = vunpack.c.h.b16 %v1636
        %v2235 = vunpack.c.l.b16 %v1637
        %v2236 = vunpack.c.h.b16 %v1637
        %v2237 = vunpack.c.l.b16 %v1638
        %v2238 = vunpack.c.h.b16 %v1638
        %v2239 = vunpack.c.l.b16 %v1639
        %v2240 = vunpack.c.h.b16 %v1639
        %v2241 = vunpack.c.l.b16 %v1640
        %v2242 = vunpack.c.h.b16 %v1640
        %v2243 = vunpack.c.l.b16 %v1641
        %v2244 = vunpack.c.h.b16 %v1641
        %v2245 = vunpack.c.l.b16 %v1642
        %v2246 = vunpack.c.h.b16 %v1642
        %v2247 = vunpack.c.l.b16 %v1643
        %v2248 = vunpack.c.h.b16 %v1643
        %v2249 = vunpack.c.l.b16 %v1644
        %v2250 = vunpack.c.h.b16 %v1644
        %v2251 = vunpack.c.l.b16 %v1645
        %v2252 = vunpack.c.h.b16 %v1645
        %v2253 = vunpack.c.l.b16 %v1646
        %v2254 = vunpack.c.h.b16 %v1646
        %v2255 = vunpack.c.l.b16 %v1647
        %v2256 = vunpack.c.h.b16 %v1647
        %v2257 = vunpack.c.l.b16 %v1648
        %v2258 = vunpack.c.h.b16 %v1648
        %v2259 = vunpack.c.l.b16 %v1649
        %v2260 = vunpack.c.h.b16 %v1649
        %v2261 = vunpack.c.l.b16 %v1650
        %v2262 = vunpack.c.h.b16 %v1650
        %v2263 = vunpack.c.l.b16 %v1651
        %v2264 = vunpack.c.h.b16 %v1651
        %v2265 = vunpack.c.l.b16 %v1652
        %v2266 = vunpack.c.h.b16 %v1652
        %v2267 = vunpack.c.l.b16 %v1653
        %v2268 = vunpack.c.h.b16 %v1653
        %v2269 = vunpack.c.l.b16 %v1654
        %v2270 = vunpack.c.h.b16 %v1654
        %v2271 = vunpack.c.l.b16 %v1655
        %v2272 = vunpack.c.h.b16 %v1655
        %v2273 = vunpack.c.l.b16 %v1656
        %v2274 = vunpack.c.h.b16 %v1656
        %v2275 = vunpack.c.l.b16 %v1657
        %v2276 = vunpack.c.h.b16 %v1657
        %v2277 = vunpack.c.l.b16 %v1658
        %v2278 = vunpack.c.h.b16 %v1658
        %v2279 = vunpack.c.l.b16 %v1659
        %v2280 = vunpack.c.h.b16 %v1659
        %v2281 = vunpack.c.l.b16 %v1660
        %v2282 = vunpack.c.h.b16 %v1660
        %v2283 = vpack.c.b16 %v1887, %v1883
        %v2284 = vpack.c.b16 %v1888, %v1884
        %v2285 = vpack.c.b16 %v1889, %v1885
        %v2286 = vpack.c.b16 %v1890, %v1886
        %v2287 = vpack.c.b16 %v1895, %v1891
        %v2288 = vpack.c.b16 %v1896, %v1892
        %v2289 = vpack.c.b16 %v1897, %v1893
        %v2290 = vpack.c.b16 %v1898, %v1894
        %v2291 = vpack.c.b16 %v1903, %v1899
        %v2292 = vpack.c.b16 %v1904, %v1900
        %v2293 = vpack.c.b16 %v1905, %v1901
        %v2294 = vpack.c.b16 %v1906, %v1902
        %v2295 = vpack.c.b16 %v1911, %v1907
        %v2296 = vpack.c.b16 %v1912, %v1908
        %v2297 = vpack.c.b16 %v1913, %v1909
        %v2298 = vpack.c.b16 %v1914, %v1910
        %v2299 = vpack.c.b16 %v1919, %v1915
        %v2300 = vpack.c.b16 %v1920, %v1916
        %v2301 = vpack.c.b16 %v1921, %v1917
        %v2302 = vpack.c.b16 %v1922, %v1918
        %v2303 = vpack.c.b16 %v1927, %v1923
        %v2304 = vpack.c.b16 %v1928, %v1924
        %v2305 = vpack.c.b16 %v1929, %v1925
        %v2306 = vpack.c.b16 %v1930, %v1926
        %v2307 = vpack.c.b16 %v1935, %v1931
        %v2308 = vpack.c.b16 %v1936, %v1932
        %v2309 = vpack.c.b16 %v1937, %v1933
        %v2310 = vpack.c.b16 %v1938, %v1934
        %v2311 = vpack.c.b16 %v1943, %v1939
        %v2312 = vpack.c.b16 %v1944, %v1940
        %v2313 = vpack.c.b16 %v1945, %v1941
        %v2314 = vpack.c.b16 %v1946, %v1942
        %v2315 = vpack.c.b16 %v1951, %v1947
        %v2316 = vpack.c.b16 %v1952, %v1948
        %v2317 = vpack.c.b16 %v1953, %v1949
        %v2318 = vpack.c.b16 %v1954, %v1950
        %v2319 = vpack.c.b16 %v1959, %v1955
        %v2320 = vpack.c.b16 %v1960, %v1956
        %v2321 = vpack.c.b16 %v1961, %v1957
        %v2322 = vpack.c.b16 %v1962, %v1958
        %v2323 = vpack.c.b16 %v1967, %v1963
        %v2324 = vpack.c.b16 %v1968, %v1964
        %v2325 = vpack.c.b16 %v1969, %v1965
        %v2326 = vpack.c.b16 %v1970, %v1966
        %v2327 = vpack.c.b16 %v1975, %v1971
        %v2328 = vpack.c.b16 %v1976, %v1972
        %v2329 = vpack.c.b16 %v1977, %v1973
        %v2330 = vpack.c.b16 %v1978, %v1974
        %v2331 = vpack.c.b16 %v1983, %v1979
        %v2332 = vpack.c.b16 %v1984, %v1980
        %v2333 = vpack.c.b16 %v1985, %v1981
        %v2334 = vpack.c.b16 %v1986, %v1982
        %v2335 = vpack.c.b16 %v1991, %v1987
        %v2336 = vpack.c.b16 %v1992, %v1988
        %v2337 = vpack.c.b16 %v1993, %v1989
        %v2338 = vpack.c.b16 %v1994, %v1990
        %v2339 = vpack.c.b16 %v1999, %v1995
        %v2340 = vpack.c.b16 %v2000, %v1996
        %v2341 = vpack.c.b16 %v2001, %v1997
        %v2342 = vpack.c.b16 %v2002, %v1998
        %v2343 = vpack.c.b16 %v2007, %v2003
        %v2344 = vpack.c.b16 %v2008, %v2004
        %v2345 = vpack.c.b16 %v2009, %v2005
        %v2346 = vpack.c.b16 %v2010, %v2006
        %v2347 = vpack.c.b16 %v2015, %v2011
        %v2348 = vpack.c.b16 %v2016, %v2012
        %v2349 = vpack.c.b16 %v2017, %v2013
        %v2350 = vpack.c.b16 %v2018, %v2014
        %v2351 = vpack.c.b16 %v2023, %v2019
        %v2352 = vpack.c.b16 %v2024, %v2020
        %v2353 = vpack.c.b16 %v2025, %v2021
        %v2354 = vpack.c.b16 %v2026, %v2022
        %v2355 = vpack.c.b16 %v2031, %v2027
        %v2356 = vpack.c.b16 %v2032, %v2028
        %v2357 = vpack.c.b16 %v2033, %v2029
        %v2358 = vpack.c.b16 %v2034, %v2030
        %v2359 = vpack.c.b16 %v2039, %v2035
        %v2360 = vpack.c.b16 %v2040, %v2036
        %v2361 = vpack.c.b16 %v2041, %v2037
        %v2362 = vpack.c.b16 %v2042, %v2038
        %v2363 = vpack.c.b16 %v2047, %v2043
        %v2364 = vpack.c.b16 %v2048, %v2044
        %v2365 = vpack.c.b16 %v2049, %v2045
        %v2366 = vpack.c.b16 %v2050, %v2046
        %v2367 = vpack.c.b16 %v2055, %v2051
        %v2368 = vpack.c.b16 %v2056, %v2052
        %v2369 = vpack.c.b16 %v2057, %v2053
        %v2370 = vpack.c.b16 %v2058, %v2054
        %v2371 = vpack.c.b16 %v2063, %v2059
        %v2372 = vpack.c.b16 %v2064, %v2060
        %v2373 = vpack.c.b16 %v2065, %v2061
        %v2374 = vpack.c.b16 %v2066, %v2062
        %v2375 = vpack.c.b16 %v2071, %v2067
        %v2376 = vpack.c.b16 %v2072, %v2068
        %v2377 = vpack.c.b16 %v2073, %v2069
        %v2378 = vpack.c.b16 %v2074, %v2070
        %v2379 = vpack.c.b16 %v2079, %v2075
        %v2380 = vpack.c.b16 %v2080, %v2076
        %v2381 = vpack.c.b16 %v2081, %v2077
        %v2382 = vpack.c.b16 %v2082, %v2078
        %v2383 = vpack.c.b16 %v2087, %v2083
        %v2384 = vpack.c.b16 %v2088, %v2084
        %v2385 = vpack.c.b16 %v2089, %v2085
        %v2386 = vpack.c.b16 %v2090, %v2086
        %v2387 = vpack.c.b16 %v2095, %v2091
        %v2388 = vpack.c.b16 %v2096, %v2092
        %v2389 = vpack.c.b16 %v2097, %v2093
        %v2390 = vpack.c.b16 %v2098, %v2094
        %v2391 = vpack.c.b16 %v2103, %v2099
        %v2392 = vpack.c.b16 %v2104, %v2100
        %v2393 = vpack.c.b16 %v2105, %v2101
        %v2394 = vpack.c.b16 %v2106, %v2102
        %v2395 = vpack.c.b16 %v2111, %v2107
        %v2396 = vpack.c.b16 %v2112, %v2108
        %v2397 = vpack.c.b16 %v2113, %v2109
        %v2398 = vpack.c.b16 %v2114, %v2110
        %v2399 = vpack.c.b16 %v2119, %v2115
        %v2400 = vpack.c.b16 %v2120, %v2116
        %v2401 = vpack.c.b16 %v2121, %v2117
        %v2402 = vpack.c.b16 %v2122, %v2118
        %v2403 = vpack.c.b16 %v2127, %v2123
        %v2404 = vpack.c.b16 %v2128, %v2124
        %v2405 = vpack.c.b16 %v2129, %v2125
        %v2406 = vpack.c.b16 %v2130, %v2126
        %v2407 = vpack.c.b16 %v2135, %v2131
        %v2408 = vpack.c.b16 %v2136, %v2132
        %v2409 = vpack.c.b16 %v2137, %v2133
        %v2410 = vpack.c.b16 %v2138, %v2134
        %v2411 = vpack.c.b16 %v2143, %v2139
        %v2412 = vpack.c.b16 %v2144, %v2140
        %v2413 = vpack.c.b16 %v2145, %v2141
        %v2414 = vpack.c.b16 %v2146, %v2142
        %v2415 = vpack.c.b16 %v2151, %v2147
        %v2416 = vpack.c.b16 %v2152, %v2148
        %v2417 = vpack.c.b16 %v2153, %v2149
        %v2418 = vpack.c.b16 %v2154, %v2150
        %v2419 = vpack.c.b16 %v2159, %v2155
        %v2420 = vpack.c.b16 %v2160, %v2156
        %v2421 = vpack.c.b16 %v2161, %v2157
        %v2422 = vpack.c.b16 %v2162, %v2158
        %v2423 = vpack.c.b16 %v2167, %v2163
        %v2424 = vpack.c.b16 %v2168, %v2164
        %v2425 = vpack.c.b16 %v2169, %v2165
        %v2426 = vpack.c.b16 %v2170, %v2166
        %v2427 = vpack.c.b16 %v2175, %v2171
        %v2428 = vpack.c.b16 %v2176, %v2172
        %v2429 = vpack.c.b16 %v2177, %v2173
        %v2430 = vpack.c.b16 %v2178, %v2174
        %v2431 = vpack.c.b16 %v2183, %v2179
        %v2432 = vpack.c.b16 %v2184, %v2180
        %v2433 = vpack.c.b16 %v2185, %v2181
        %v2434 = vpack.c.b16 %v2186, %v2182
        %v2435 = vpack.c.b16 %v2191, %v2187
        %v2436 = vpack.c.b16 %v2192, %v2188
        %v2437 = vpack.c.b16 %v2193, %v2189
        %v2438 = vpack.c.b16 %v2194, %v2190
        %v2439 = vpack.c.b16 %v2199, %v2195
        %v2440 = vpack.c.b16 %v2200, %v2196
        %v2441 = vpack.c.b16 %v2201, %v2197
        %v2442 = vpack.c.b16 %v2202, %v2198
        %v2443 = vpack.c.b16 %v2207, %v2203
        %v2444 = vpack.c.b16 %v2208, %v2204
        %v2445 = vpack.c.b16 %v2209, %v2205
        %v2446 = vpack.c.b16 %v2210, %v2206
        %v2447 = vpack.c.b16 %v2215, %v2211
        %v2448 = vpack.c.b16 %v2216, %v2212
        %v2449 = vpack.c.b16 %v2217, %v2213
        %v2450 = vpack.c.b16 %v2218, %v2214
        %v2451 = vpack.c.b16 %v2223, %v2219
        %v2452 = vpack.c.b16 %v2224, %v2220
        %v2453 = vpack.c.b16 %v2225, %v2221
        %v2454 = vpack.c.b16 %v2226, %v2222
        %v2455 = vpack.c.b16 %v2231, %v2227
        %v2456 = vpack.c.b16 %v2232, %v2228
        %v2457 = vpack.c.b16 %v2233, %v2229
        %v2458 = vpack.c.b16 %v2234, %v2230
        %v2459 = vpack.c.b16 %v2239, %v2235
        %v2460 = vpack.c.b16 %v2240, %v2236
        %v2461 = vpack.c.b16 %v2241, %v2237
        %v2462 = vpack.c.b16 %v2242, %v2238
        %v2463 = vpack.c.b16 %v2247, %v2243
        %v2464 = vpack.c.b16 %v2248, %v2244
        %v2465 = vpack.c.b16 %v2249, %v2245
        %v2466 = vpack.c.b16 %v2250, %v2246
        %v2467 = vpack.c.b16 %v2255, %v2251
        %v2468 = vpack.c.b16 %v2256, %v2252
        %v2469 = vpack.c.b16 %v2257, %v2253
        %v2470 = vpack.c.b16 %v2258, %v2254
        %v2471 = vpack.c.b16 %v2263, %v2259
        %v2472 = vpack.c.b16 %v2264, %v2260
        %v2473 = vpack.c.b16 %v2265, %v2261
        %v2474 = vpack.c.b16 %v2266, %v2262
        %v2475 = vpack.c.b16 %v2271, %v2267
        %v2476 = vpack.c.b16 %v2272, %v2268
        %v2477 = vpack.c.b16 %v2273, %v2269
        %v2478 = vpack.c.b16 %v2274, %v2270
        %v2479 = vpack.c.b16 %v2279, %v2275
        %v2480 = vpack.c.b16 %v2280, %v2276
        %v2481 = vpack.c.b16 %v2281, %v2277
        %v2482 = vpack.c.b16 %v2282, %v2278
        %vm2683 = vcmask 261120
        %v2685 = vsel %vm2683, %v1460, 0
        %2687 = vmatprep.subr.bf16.mxu0 %v2312
        %2688 = vmatpush1.bf16.msra.mxu0 %v2311
        %2689 = vmatprep.subr.bf16.mxu0 %v2308
        %2690 = vmatpush1.bf16.msra.mxu0 %v2307
        %2691 = vmatprep.subr.bf16.mxu0 %v2304
        %2692 = vmatpush1.bf16.msra.mxu0 %v2303
        %2693 = vmatprep.subr.bf16.mxu0 %v2300
        %2694 = vmatpush1.bf16.msra.mxu0 %v2299
        %2695 = vmatprep.subr.bf16.mxu0 %v2296
        %2696 = vmatpush1.bf16.msra.mxu0 %v2295
        %2697 = vmatprep.subr.bf16.mxu0 %v2292
        %2698 = vmatpush1.bf16.msra.mxu0 %v2291
        %2699 = vmatprep.subr.bf16.mxu0 %v2288
        %2700 = vmatpush1.bf16.msra.mxu0 %v2287
        %2701 = vmatprep.subr.bf16.mxu0 %v2284
        %2702 = vmatpush1.bf16.msra.mxu0 %v2283
        %2703 = vmatprep.subr.bf16.mxu0 %v2344
        %2704 = vmatpush2.bf16.msra.mxu0 %v2343
        %2705 = vmatprep.subr.bf16.mxu0 %v2340
        %2706 = vmatpush2.bf16.msra.mxu0 %v2339
        %2707 = vmatprep.subr.bf16.mxu0 %v2336
        %2708 = vmatpush2.bf16.msra.mxu0 %v2335
        %2709 = vmatprep.subr.bf16.mxu0 %v2332
        %2710 = vmatpush2.bf16.msra.mxu0 %v2331
        %2711 = vmatprep.subr.bf16.mxu0 %v2328
        %2712 = vmatpush2.bf16.msra.mxu0 %v2327
        %2713 = vmatprep.subr.bf16.mxu0 %v2324
        %2714 = vmatpush2.bf16.msra.mxu0 %v2323
        %2715 = vmatprep.subr.bf16.mxu0 %v2320
        %2716 = vmatpush2.bf16.msra.mxu0 %v2319
        %2717 = vmatprep.subr.bf16.mxu0 %v2316
        %2718 = vmatpush2.bf16.msra.mxu0 %v2315
        %2719 = vmatprep.mubr.bf16.mxu0 %v1455
        %2720 = vmatmul.mubr.bf16.gmra.mxu0 %v1454
        %v2721 = vpop.f32.mrf.mxu0
        %v2722 = vadd.f32 %v1666, %v2721
        %v2723 = vpop.f32.mrf.mxu0
        %v2724 = vadd.f32 %v1670, %v2723
        %v2725 = vpop.f32.mrf.mxu0
        %v2726 = vadd.f32 %v1666, %v2725
        %v2727 = vpop.f32.mrf.mxu0
        %v2728 = vadd.f32 %v1670, %v2727
        %2729 = vdwg.mxu0
        %2730 = vmatprep.subr.bf16.mxu0 %v2376
        %2731 = vmatpush1.bf16.msra.mxu0 %v2375
        %2732 = vmatprep.subr.bf16.mxu0 %v2372
        %2733 = vmatpush1.bf16.msra.mxu0 %v2371
        %2734 = vmatprep.subr.bf16.mxu0 %v2368
        %2735 = vmatpush1.bf16.msra.mxu0 %v2367
        %2736 = vmatprep.subr.bf16.mxu0 %v2364
        %2737 = vmatpush1.bf16.msra.mxu0 %v2363
        %2738 = vmatprep.subr.bf16.mxu0 %v2360
        %2739 = vmatpush1.bf16.msra.mxu0 %v2359
        %2740 = vmatprep.subr.bf16.mxu0 %v2356
        %2741 = vmatpush1.bf16.msra.mxu0 %v2355
        %2742 = vmatprep.subr.bf16.mxu0 %v2352
        %2743 = vmatpush1.bf16.msra.mxu0 %v2351
        %2744 = vmatprep.subr.bf16.mxu0 %v2348
        %2745 = vmatpush1.bf16.msra.mxu0 %v2347
        %2746 = vmatprep.subr.bf16.mxu0 %v2408
        %2747 = vmatpush2.bf16.msra.mxu0 %v2407
        %2748 = vmatprep.subr.bf16.mxu0 %v2404
        %2749 = vmatpush2.bf16.msra.mxu0 %v2403
        %2750 = vmatprep.subr.bf16.mxu0 %v2400
        %2751 = vmatpush2.bf16.msra.mxu0 %v2399
        %2752 = vmatprep.subr.bf16.mxu0 %v2396
        %2753 = vmatpush2.bf16.msra.mxu0 %v2395
        %2754 = vmatprep.subr.bf16.mxu0 %v2392
        %2755 = vmatpush2.bf16.msra.mxu0 %v2391
        %2756 = vmatprep.subr.bf16.mxu0 %v2388
        %2757 = vmatpush2.bf16.msra.mxu0 %v2387
        %2758 = vmatprep.subr.bf16.mxu0 %v2384
        %2759 = vmatpush2.bf16.msra.mxu0 %v2383
        %2760 = vmatprep.subr.bf16.mxu0 %v2380
        %2761 = vmatpush2.bf16.msra.mxu0 %v2379
        %2762 = vmatprep.mubr.bf16.mxu0 %v1457
        %2763 = vmatmul.mubr.bf16.gmra.mxu0 %v1456
        %v2764 = vpop.f32.mrf.mxu0
        %v2765 = vadd.f32 %v2722, %v2764
        %v2766 = vpop.f32.mrf.mxu0
        %v2767 = vadd.f32 %v2724, %v2766
        %v2768 = vpop.f32.mrf.mxu0
        %v2769 = vadd.f32 %v2726, %v2768
        %v2770 = vpop.f32.mrf.mxu0
        %v2771 = vadd.f32 %v2728, %v2770
        %2772 = vdwg.mxu0
        %2773 = vmatprep.subr.bf16.mxu0 %v2440
        %2774 = vmatpush1.bf16.msra.mxu0 %v2439
        %2775 = vmatprep.subr.bf16.mxu0 %v2436
        %2776 = vmatpush1.bf16.msra.mxu0 %v2435
        %2777 = vmatprep.subr.bf16.mxu0 %v2432
        %2778 = vmatpush1.bf16.msra.mxu0 %v2431
        %2779 = vmatprep.subr.bf16.mxu0 %v2428
        %2780 = vmatpush1.bf16.msra.mxu0 %v2427
        %2781 = vmatprep.subr.bf16.mxu0 %v2424
        %2782 = vmatpush1.bf16.msra.mxu0 %v2423
        %2783 = vmatprep.subr.bf16.mxu0 %v2420
        %2784 = vmatpush1.bf16.msra.mxu0 %v2419
        %2785 = vmatprep.subr.bf16.mxu0 %v2416
        %2786 = vmatpush1.bf16.msra.mxu0 %v2415
        %2787 = vmatprep.subr.bf16.mxu0 %v2412
        %2788 = vmatpush1.bf16.msra.mxu0 %v2411
        %2789 = vmatprep.subr.bf16.mxu0 %v2472
        %2790 = vmatpush2.bf16.msra.mxu0 %v2471
        %2791 = vmatprep.subr.bf16.mxu0 %v2468
        %2792 = vmatpush2.bf16.msra.mxu0 %v2467
        %2793 = vmatprep.subr.bf16.mxu0 %v2464
        %2794 = vmatpush2.bf16.msra.mxu0 %v2463
        %2795 = vmatprep.subr.bf16.mxu0 %v2460
        %2796 = vmatpush2.bf16.msra.mxu0 %v2459
        %2797 = vmatprep.subr.bf16.mxu0 %v2456
        %2798 = vmatpush2.bf16.msra.mxu0 %v2455
        %2799 = vmatprep.subr.bf16.mxu0 %v2452
        %2800 = vmatpush2.bf16.msra.mxu0 %v2451
        %2801 = vmatprep.subr.bf16.mxu0 %v2448
        %2802 = vmatpush2.bf16.msra.mxu0 %v2447
        %2803 = vmatprep.subr.bf16.mxu0 %v2444
        %2804 = vmatpush2.bf16.msra.mxu0 %v2443
        %2805 = vmatprep.mubr.bf16.mxu0 %v1459
        %2806 = vmatmul.mubr.bf16.gmra.mxu0 %v1458
        %v2807 = vpop.f32.mrf.mxu0
        %v2808 = vadd.f32 %v2765, %v2807
        %v2809 = vpop.f32.mrf.mxu0
        %v2810 = vadd.f32 %v2767, %v2809
        %v2811 = vpop.f32.mrf.mxu0
        %v2812 = vadd.f32 %v2769, %v2811
        %v2813 = vpop.f32.mrf.mxu0
        %v2814 = vadd.f32 %v2771, %v2813
        %2815 = vdwg.mxu0
        %2816 = vmatprep.subr.bf16.mxu0 0
        %2817 = vmatpush1.bf16.msra.mxu0 0
        %2818 = vmatprep.subr.bf16.mxu0 0
        %2819 = vmatpush1.bf16.msra.mxu0 0
        %2820 = vmatprep.subr.bf16.mxu0 0
        %2821 = vmatpush1.bf16.msra.mxu0 0
        %2822 = vmatprep.subr.bf16.mxu0 0
        %2823 = vmatpush1.bf16.msra.mxu0 0
        %2824 = vmatprep.subr.bf16.mxu0 0
        %2825 = vmatpush1.bf16.msra.mxu0 0
        %2826 = vmatprep.subr.bf16.mxu0 0
        %2827 = vmatpush1.bf16.msra.mxu0 0
        %2828 = vmatprep.subr.bf16.mxu0 %v2480
        %2829 = vmatpush1.bf16.msra.mxu0 %v2479
        %2830 = vmatprep.subr.bf16.mxu0 %v2476
        %2831 = vmatpush1.bf16.msra.mxu0 %v2475
        %2832 = vmatprep.subr.bf16.mxu0 0
        %2833 = vmatpush2.bf16.msra.mxu0 0
        %2834 = vmatprep.subr.bf16.mxu0 0
        %2835 = vmatpush2.bf16.msra.mxu0 0
        %2836 = vmatprep.subr.bf16.mxu0 0
        %2837 = vmatpush2.bf16.msra.mxu0 0
        %2838 = vmatprep.subr.bf16.mxu0 0
        %2839 = vmatpush2.bf16.msra.mxu0 0
        %2840 = vmatprep.subr.bf16.mxu0 0
        %2841 = vmatpush2.bf16.msra.mxu0 0
        %2842 = vmatprep.subr.bf16.mxu0 0
        %2843 = vmatpush2.bf16.msra.mxu0 0
        %2844 = vmatprep.subr.bf16.mxu0 0
        %2845 = vmatpush2.bf16.msra.mxu0 0
        %2846 = vmatprep.subr.bf16.mxu0 0
        %2847 = vmatpush2.bf16.msra.mxu0 0
        %2848 = vmatprep.mubr.bf16.mxu0 0
        %2849 = vmatmul.mubr.bf16.gmra.mxu0 %v2685
        %v2850 = vpop.f32.mrf.mxu0
        %v2851 = vadd.f32 %v2808, %v2850
        %v2852 = vpop.f32.mrf.mxu0
        %v2853 = vadd.f32 %v2810, %v2852
        %v2854 = vpop.f32.mrf.mxu0
        %v2855 = vadd.f32 %v2812, %v2854
        %v2856 = vpop.f32.mrf.mxu0
        %v2857 = vadd.f32 %v2814, %v2856
        %2858 = vdwg.mxu0
        %2859 = vmatprep.subr.bf16.mxu0 %v2314
        %2860 = vmatpush1.bf16.msra.mxu0 %v2313
        %2861 = vmatprep.subr.bf16.mxu0 %v2310
        %2862 = vmatpush1.bf16.msra.mxu0 %v2309
        %2863 = vmatprep.subr.bf16.mxu0 %v2306
        %2864 = vmatpush1.bf16.msra.mxu0 %v2305
        %2865 = vmatprep.subr.bf16.mxu0 %v2302
        %2866 = vmatpush1.bf16.msra.mxu0 %v2301
        %2867 = vmatprep.subr.bf16.mxu0 %v2298
        %2868 = vmatpush1.bf16.msra.mxu0 %v2297
        %2869 = vmatprep.subr.bf16.mxu0 %v2294
        %2870 = vmatpush1.bf16.msra.mxu0 %v2293
        %2871 = vmatprep.subr.bf16.mxu0 %v2290
        %2872 = vmatpush1.bf16.msra.mxu0 %v2289
        %2873 = vmatprep.subr.bf16.mxu0 %v2286
        %2874 = vmatpush1.bf16.msra.mxu0 %v2285
        %2875 = vmatprep.subr.bf16.mxu0 %v2346
        %2876 = vmatpush2.bf16.msra.mxu0 %v2345
        %2877 = vmatprep.subr.bf16.mxu0 %v2342
        %2878 = vmatpush2.bf16.msra.mxu0 %v2341
        %2879 = vmatprep.subr.bf16.mxu0 %v2338
        %2880 = vmatpush2.bf16.msra.mxu0 %v2337
        %2881 = vmatprep.subr.bf16.mxu0 %v2334
        %2882 = vmatpush2.bf16.msra.mxu0 %v2333
        %2883 = vmatprep.subr.bf16.mxu0 %v2330
        %2884 = vmatpush2.bf16.msra.mxu0 %v2329
        %2885 = vmatprep.subr.bf16.mxu0 %v2326
        %2886 = vmatpush2.bf16.msra.mxu0 %v2325
        %2887 = vmatprep.subr.bf16.mxu0 %v2322
        %2888 = vmatpush2.bf16.msra.mxu0 %v2321
        %2889 = vmatprep.subr.bf16.mxu0 %v2318
        %2890 = vmatpush2.bf16.msra.mxu0 %v2317
        %2891 = vmatprep.mubr.bf16.mxu0 %v1455
        %2892 = vmatmul.mubr.bf16.gmra.mxu0 %v1454
        %v2893 = vpop.f32.mrf.mxu0
        %v2894 = vadd.f32 %v1674, %v2893
        %v2895 = vpop.f32.mrf.mxu0
        %v2896 = vadd.f32 %v1678, %v2895
        %v2897 = vpop.f32.mrf.mxu0
        %v2898 = vadd.f32 %v1674, %v2897
        %v2899 = vpop.f32.mrf.mxu0
        %v2900 = vadd.f32 %v1678, %v2899
        %2901 = vdwg.mxu0
        %2902 = vmatprep.subr.bf16.mxu0 %v2378
        %2903 = vmatpush1.bf16.msra.mxu0 %v2377
        %2904 = vmatprep.subr.bf16.mxu0 %v2374
        %2905 = vmatpush1.bf16.msra.mxu0 %v2373
        %2906 = vmatprep.subr.bf16.mxu0 %v2370
        %2907 = vmatpush1.bf16.msra.mxu0 %v2369
        %2908 = vmatprep.subr.bf16.mxu0 %v2366
        %2909 = vmatpush1.bf16.msra.mxu0 %v2365
        %2910 = vmatprep.subr.bf16.mxu0 %v2362
        %2911 = vmatpush1.bf16.msra.mxu0 %v2361
        %2912 = vmatprep.subr.bf16.mxu0 %v2358
        %2913 = vmatpush1.bf16.msra.mxu0 %v2357
        %2914 = vmatprep.subr.bf16.mxu0 %v2354
        %2915 = vmatpush1.bf16.msra.mxu0 %v2353
        %2916 = vmatprep.subr.bf16.mxu0 %v2350
        %2917 = vmatpush1.bf16.msra.mxu0 %v2349
        %2918 = vmatprep.subr.bf16.mxu0 %v2410
        %2919 = vmatpush2.bf16.msra.mxu0 %v2409
        %2920 = vmatprep.subr.bf16.mxu0 %v2406
        %2921 = vmatpush2.bf16.msra.mxu0 %v2405
        %2922 = vmatprep.subr.bf16.mxu0 %v2402
        %2923 = vmatpush2.bf16.msra.mxu0 %v2401
        %2924 = vmatprep.subr.bf16.mxu0 %v2398
        %2925 = vmatpush2.bf16.msra.mxu0 %v2397
        %2926 = vmatprep.subr.bf16.mxu0 %v2394
        %2927 = vmatpush2.bf16.msra.mxu0 %v2393
        %2928 = vmatprep.subr.bf16.mxu0 %v2390
        %2929 = vmatpush2.bf16.msra.mxu0 %v2389
        %2930 = vmatprep.subr.bf16.mxu0 %v2386
        %2931 = vmatpush2.bf16.msra.mxu0 %v2385
        %2932 = vmatprep.subr.bf16.mxu0 %v2382
        %2933 = vmatpush2.bf16.msra.mxu0 %v2381
        %2934 = vmatprep.mubr.bf16.mxu0 %v1457
        %2935 = vmatmul.mubr.bf16.gmra.mxu0 %v1456
        %v2936 = vpop.f32.mrf.mxu0
        %v2937 = vadd.f32 %v2894, %v2936
        %v2938 = vpop.f32.mrf.mxu0
        %v2939 = vadd.f32 %v2896, %v2938
        %v2940 = vpop.f32.mrf.mxu0
        %v2941 = vadd.f32 %v2898, %v2940
        %v2942 = vpop.f32.mrf.mxu0
        %v2943 = vadd.f32 %v2900, %v2942
        %2944 = vdwg.mxu0
        %2945 = vmatprep.subr.bf16.mxu0 %v2442
        %2946 = vmatpush1.bf16.msra.mxu0 %v2441
        %2947 = vmatprep.subr.bf16.mxu0 %v2438
        %2948 = vmatpush1.bf16.msra.mxu0 %v2437
        %2949 = vmatprep.subr.bf16.mxu0 %v2434
        %2950 = vmatpush1.bf16.msra.mxu0 %v2433
        %2951 = vmatprep.subr.bf16.mxu0 %v2430
        %2952 = vmatpush1.bf16.msra.mxu0 %v2429
        %2953 = vmatprep.subr.bf16.mxu0 %v2426
        %2954 = vmatpush1.bf16.msra.mxu0 %v2425
        %2955 = vmatprep.subr.bf16.mxu0 %v2422
        %2956 = vmatpush1.bf16.msra.mxu0 %v2421
        %2957 = vmatprep.subr.bf16.mxu0 %v2418
        %2958 = vmatpush1.bf16.msra.mxu0 %v2417
        %2959 = vmatprep.subr.bf16.mxu0 %v2414
        %2960 = vmatpush1.bf16.msra.mxu0 %v2413
        %2961 = vmatprep.subr.bf16.mxu0 %v2474
        %2962 = vmatpush2.bf16.msra.mxu0 %v2473
        %2963 = vmatprep.subr.bf16.mxu0 %v2470
        %2964 = vmatpush2.bf16.msra.mxu0 %v2469
        %2965 = vmatprep.subr.bf16.mxu0 %v2466
        %2966 = vmatpush2.bf16.msra.mxu0 %v2465
        %2967 = vmatprep.subr.bf16.mxu0 %v2462
        %2968 = vmatpush2.bf16.msra.mxu0 %v2461
        %2969 = vmatprep.subr.bf16.mxu0 %v2458
        %2970 = vmatpush2.bf16.msra.mxu0 %v2457
        %2971 = vmatprep.subr.bf16.mxu0 %v2454
        %2972 = vmatpush2.bf16.msra.mxu0 %v2453
        %2973 = vmatprep.subr.bf16.mxu0 %v2450
        %2974 = vmatpush2.bf16.msra.mxu0 %v2449
        %2975 = vmatprep.subr.bf16.mxu0 %v2446
        %2976 = vmatpush2.bf16.msra.mxu0 %v2445
        %2977 = vmatprep.mubr.bf16.mxu0 %v1459
        %2978 = vmatmul.mubr.bf16.gmra.mxu0 %v1458
        %v2979 = vpop.f32.mrf.mxu0
        %v2980 = vadd.f32 %v2937, %v2979
        %v2981 = vpop.f32.mrf.mxu0
        %v2982 = vadd.f32 %v2939, %v2981
        %v2983 = vpop.f32.mrf.mxu0
        %v2984 = vadd.f32 %v2941, %v2983
        %v2985 = vpop.f32.mrf.mxu0
        %v2986 = vadd.f32 %v2943, %v2985
        %2987 = vdwg.mxu0
        %2988 = vmatprep.subr.bf16.mxu0 0
        %2989 = vmatpush1.bf16.msra.mxu0 0
        %2990 = vmatprep.subr.bf16.mxu0 0
        %2991 = vmatpush1.bf16.msra.mxu0 0
        %2992 = vmatprep.subr.bf16.mxu0 0
        %2993 = vmatpush1.bf16.msra.mxu0 0
        %2994 = vmatprep.subr.bf16.mxu0 0
        %2995 = vmatpush1.bf16.msra.mxu0 0
        %2996 = vmatprep.subr.bf16.mxu0 0
        %2997 = vmatpush1.bf16.msra.mxu0 0
        %2998 = vmatprep.subr.bf16.mxu0 0
        %2999 = vmatpush1.bf16.msra.mxu0 0
        %3000 = vmatprep.subr.bf16.mxu0 %v2482
        %3001 = vmatpush1.bf16.msra.mxu0 %v2481
        %3002 = vmatprep.subr.bf16.mxu0 %v2478
        %3003 = vmatpush1.bf16.msra.mxu0 %v2477
        %3004 = vmatprep.subr.bf16.mxu0 0
        %3005 = vmatpush2.bf16.msra.mxu0 0
        %3006 = vmatprep.subr.bf16.mxu0 0
        %3007 = vmatpush2.bf16.msra.mxu0 0
        %3008 = vmatprep.subr.bf16.mxu0 0
        %3009 = vmatpush2.bf16.msra.mxu0 0
        %3010 = vmatprep.subr.bf16.mxu0 0
        %3011 = vmatpush2.bf16.msra.mxu0 0
        %3012 = vmatprep.subr.bf16.mxu0 0
        %3013 = vmatpush2.bf16.msra.mxu0 0
        %3014 = vmatprep.subr.bf16.mxu0 0
        %3015 = vmatpush2.bf16.msra.mxu0 0
        %3016 = vmatprep.subr.bf16.mxu0 0
        %3017 = vmatpush2.bf16.msra.mxu0 0
        %3018 = vmatprep.subr.bf16.mxu0 0
        %3019 = vmatpush2.bf16.msra.mxu0 0
        %3020 = vmatprep.mubr.bf16.mxu0 0
        %3021 = vmatmul.mubr.bf16.gmra.mxu0 %v2685
        %v3022 = vpop.f32.mrf.mxu0
        %v3023 = vadd.f32 %v2980, %v3022
        %v3024 = vpop.f32.mrf.mxu0
        %v3025 = vadd.f32 %v2982, %v3024
        %v3026 = vpop.f32.mrf.mxu0
        %v3027 = vadd.f32 %v2984, %v3026
        %v3028 = vpop.f32.mrf.mxu0
        %v3029 = vadd.f32 %v2986, %v3028
        %3030 = vdwg.mxu0
        %v3031 = vmax.f32 %v2851, 0.0
        %v3032 = vmax.f32 %v2853, 0.0
        %v3033 = vmax.f32 %v3023, 0.0
        %v3034 = vmax.f32 %v3025, 0.0
        %v3035 = vmax.f32 %v2855, 0.0
        %v3036 = vmax.f32 %v2857, 0.0
        %v3037 = vmax.f32 %v3027, 0.0
        %v3038 = vmax.f32 %v3029, 0.0
        %v3039 = vpack.c.bf16 %v3035, %v3031
        %v3040 = vpack.c.bf16 %v3036, %v3032
        %v3041 = vpack.c.bf16 %v3037, %v3033
        %v3042 = vpack.c.bf16 %v3038, %v3034
        %v3043 = vld [vmem:[%s8] sm:$0xf]
        %v3044 = vld [vmem:[%s8 + $0x4] sm:$0xf]
        %v3045 = vld [vmem:[%s8 + $0x8] sm:$0xf]
        %v3046 = vld [vmem:[%s8 + $0xc] sm:$0xf]
        %v3047 = vld [vmem:[%s8 + $0x10] sm:$0xf]
        %v3048 = vld [vmem:[%s8 + $0x14] sm:$0xf]
        %v3049 = vld [vmem:[%s8 + $0x18] sm:$0xf]
        %v3050 = vld [vmem:[%s8 + $0x1c] sm:$0xf]
        %v3051 = vld [vmem:[%s8 + $0x20] sm:$0xf]
        %v3052 = vld [vmem:[%s8 + $0x24] sm:$0xf]
        %v3053 = vld [vmem:[%s8 + $0x28] sm:$0xf]
        %v3054 = vld [vmem:[%s8 + $0x2c] sm:$0xf]
        %v3055 = vld [vmem:[%s8 + $0x30] sm:$0xf]
        %v3056 = vld [vmem:[%s8 + $0x34] sm:$0xf]
        %v3057 = vld [vmem:[%s8 + $0x38] sm:$0xf]
        %v3058 = vld [vmem:[%s8 + $0x3c] sm:$0xf]
        %v3059 = vld [vmem:[%s8 + $0x40] sm:$0xf]
        %v3060 = vld [vmem:[%s8 + $0x44] sm:$0xf]
        %v3061 = vld [vmem:[%s8 + $0x48] sm:$0xf]
        %v3062 = vld [vmem:[%s8 + $0x4c] sm:$0xf]
        %v3063 = vld [vmem:[%s8 + $0x50] sm:$0xf]
        %v3064 = vld [vmem:[%s8 + $0x54] sm:$0xf]
        %v3065 = vld [vmem:[%s8 + $0x58] sm:$0xf]
        %v3066 = vld [vmem:[%s8 + $0x5c] sm:$0xf]
        %v3067 = vld [vmem:[%s8 + $0x60] sm:$0xf]
        %v3068 = vld [vmem:[%s8 + $0x64] sm:$0xf]
        %v3069 = vld [vmem:[%s8 + $0x68] sm:$0xf]
        %v3070 = vld [vmem:[%s8 + $0x6c] sm:$0xf]
        %v3071 = vld [vmem:[%s8 + $0x70] sm:$0xf]
        %v3072 = vld [vmem:[%s8 + $0x74] sm:$0xf]
        %v3073 = vld [vmem:[%s8 + $0x78] sm:$0xf]
        %v3074 = vld [vmem:[%s8 + $0x7c] sm:$0xf]
        %v3075 = vld [vmem:[%s8 + $0x80] sm:$0xf]
        %v3076 = vld [vmem:[%s8 + $0x84] sm:$0xf]
        %v3077 = vld [vmem:[%s8 + $0x88] sm:$0xf]
        %v3078 = vld [vmem:[%s8 + $0x8c] sm:$0xf]
        %v3079 = vld [vmem:[%s8 + $0x90] sm:$0xf]
        %v3080 = vld [vmem:[%s8 + $0x94] sm:$0xf]
        %v3081 = vld [vmem:[%s8 + $0x98] sm:$0xf]
        %v3082 = vld [vmem:[%s8 + $0x9c] sm:$0xf]
        %v3083 = vld [vmem:[%s8 + $0xa0] sm:$0xf]
        %v3084 = vld [vmem:[%s8 + $0xa4] sm:$0xf]
        %v3085 = vld [vmem:[%s8 + $0xa8] sm:$0xf]
        %v3086 = vld [vmem:[%s8 + $0xac] sm:$0xf]
        %v3087 = vld [vmem:[%s8 + $0xb0] sm:$0xf]
        %v3088 = vld [vmem:[%s8 + $0xb4] sm:$0xf]
        %v3089 = vld [vmem:[%s8 + $0xb8] sm:$0xf]
        %v3090 = vld [vmem:[%s8 + $0xbc] sm:$0xf]
        %v3091 = vld [vmem:[%s8 + $0xc0] sm:$0xf]
        %v3092 = vld [vmem:[%s8 + $0xc4] sm:$0xf]
        %v3093 = vld [vmem:[%s9] sm:$0x1]
        %v3095 = vlaneseq
        %v3096 = vshrl.u32 %v3095, 7
        %v3097 = vsub.s32 0, %v3096
        %v3098 = vrot.slane %v3093, %v3097
        %v3150 = vunpack.c.l.b16 %v3043
        %v3151 = vunpack.c.l.b16 %v3044
        %v3152 = vunpack.c.l.b16 %v3045
        %v3153 = vunpack.c.l.b16 %v3046
        %v3154 = vunpack.c.l.b16 %v3047
        %v3155 = vunpack.c.l.b16 %v3048
        %v3156 = vunpack.c.l.b16 %v3049
        %v3157 = vunpack.c.l.b16 %v3050
        %v3158 = vunpack.c.l.b16 %v3051
        %v3159 = vunpack.c.l.b16 %v3052
        %v3160 = vunpack.c.l.b16 %v3053
        %v3161 = vunpack.c.l.b16 %v3054
        %v3162 = vunpack.c.l.b16 %v3055
        %v3163 = vunpack.c.l.b16 %v3056
        %v3164 = vunpack.c.l.b16 %v3057
        %v3165 = vunpack.c.l.b16 %v3058
        %v3166 = vunpack.c.l.b16 %v3059
        %v3167 = vunpack.c.l.b16 %v3060
        %v3168 = vunpack.c.l.b16 %v3061
        %v3169 = vunpack.c.l.b16 %v3062
        %v3170 = vunpack.c.l.b16 %v3063
        %v3171 = vunpack.c.l.b16 %v3064
        %v3172 = vunpack.c.l.b16 %v3065
        %v3173 = vunpack.c.l.b16 %v3066
        %v3174 = vunpack.c.l.b16 %v3067
        %v3175 = vunpack.c.l.b16 %v3068
        %v3176 = vunpack.c.l.b16 %v3069
        %v3177 = vunpack.c.l.b16 %v3070
        %v3178 = vunpack.c.l.b16 %v3071
        %v3179 = vunpack.c.l.b16 %v3072
        %v3180 = vunpack.c.l.b16 %v3073
        %v3181 = vunpack.c.l.b16 %v3074
        %v3182 = vunpack.c.l.b16 %v3075
        %v3183 = vunpack.c.l.b16 %v3076
        %v3184 = vunpack.c.l.b16 %v3077
        %v3185 = vunpack.c.l.b16 %v3078
        %v3186 = vunpack.c.l.b16 %v3079
        %v3187 = vunpack.c.l.b16 %v3080
        %v3188 = vunpack.c.l.b16 %v3081
        %v3189 = vunpack.c.l.b16 %v3082
        %v3190 = vunpack.c.l.b16 %v3083
        %v3191 = vunpack.c.l.b16 %v3084
        %v3192 = vunpack.c.l.b16 %v3085
        %v3193 = vunpack.c.l.b16 %v3086
        %v3194 = vunpack.c.l.b16 %v3087
        %v3195 = vunpack.c.l.b16 %v3088
        %v3196 = vunpack.c.l.b16 %v3089
        %v3197 = vunpack.c.l.b16 %v3090
        %v3198 = vunpack.c.l.b16 %v3091
        %v3199 = vunpack.c.l.b16 %v3092
        %v3200 = vpack.c.b16 %v3151, %v3150
        %v3201 = vpack.c.b16 %v3153, %v3152
        %v3202 = vpack.c.b16 %v3155, %v3154
        %v3203 = vpack.c.b16 %v3157, %v3156
        %v3204 = vpack.c.b16 %v3159, %v3158
        %v3205 = vpack.c.b16 %v3161, %v3160
        %v3206 = vpack.c.b16 %v3163, %v3162
        %v3207 = vpack.c.b16 %v3165, %v3164
        %v3208 = vpack.c.b16 %v3167, %v3166
        %v3209 = vpack.c.b16 %v3169, %v3168
        %v3210 = vpack.c.b16 %v3171, %v3170
        %v3211 = vpack.c.b16 %v3173, %v3172
        %v3212 = vpack.c.b16 %v3175, %v3174
        %v3213 = vpack.c.b16 %v3177, %v3176
        %v3214 = vpack.c.b16 %v3179, %v3178
        %v3215 = vpack.c.b16 %v3181, %v3180
        %v3216 = vpack.c.b16 %v3183, %v3182
        %v3217 = vpack.c.b16 %v3185, %v3184
        %v3218 = vpack.c.b16 %v3187, %v3186
        %v3219 = vpack.c.b16 %v3189, %v3188
        %v3220 = vpack.c.b16 %v3191, %v3190
        %v3221 = vpack.c.b16 %v3193, %v3192
        %v3222 = vpack.c.b16 %v3195, %v3194
        %v3223 = vpack.c.b16 %v3197, %v3196
        %v3224 = vpack.c.b16 %v3199, %v3198
        %vm3250 = vcmask 130048
        %v3252 = vsel %vm3250, %v3042, 0
        %3254 = vmatprep.subr.bf16.mxu0 0
        %3255 = vmatpush1.bf16.msra.mxu0 %v3207
        %3256 = vmatprep.subr.bf16.mxu0 0
        %3257 = vmatpush1.bf16.msra.mxu0 %v3206
        %3258 = vmatprep.subr.bf16.mxu0 0
        %3259 = vmatpush1.bf16.msra.mxu0 %v3205
        %3260 = vmatprep.subr.bf16.mxu0 0
        %3261 = vmatpush1.bf16.msra.mxu0 %v3204
        %3262 = vmatprep.subr.bf16.mxu0 0
        %3263 = vmatpush1.bf16.msra.mxu0 %v3203
        %3264 = vmatprep.subr.bf16.mxu0 0
        %3265 = vmatpush1.bf16.msra.mxu0 %v3202
        %3266 = vmatprep.subr.bf16.mxu0 0
        %3267 = vmatpush1.bf16.msra.mxu0 %v3201
        %3268 = vmatprep.subr.bf16.mxu0 0
        %3269 = vmatpush1.bf16.msra.mxu0 %v3200
        %3270 = vmatprep.subr.bf16.mxu0 0
        %3271 = vmatpush2.bf16.msra.mxu0 %v3215
        %3272 = vmatprep.subr.bf16.mxu0 0
        %3273 = vmatpush2.bf16.msra.mxu0 %v3214
        %3274 = vmatprep.subr.bf16.mxu0 0
        %3275 = vmatpush2.bf16.msra.mxu0 %v3213
        %3276 = vmatprep.subr.bf16.mxu0 0
        %3277 = vmatpush2.bf16.msra.mxu0 %v3212
        %3278 = vmatprep.subr.bf16.mxu0 0
        %3279 = vmatpush2.bf16.msra.mxu0 %v3211
        %3280 = vmatprep.subr.bf16.mxu0 0
        %3281 = vmatpush2.bf16.msra.mxu0 %v3210
        %3282 = vmatprep.subr.bf16.mxu0 0
        %3283 = vmatpush2.bf16.msra.mxu0 %v3209
        %3284 = vmatprep.subr.bf16.mxu0 0
        %3285 = vmatpush2.bf16.msra.mxu0 %v3208
        %3286 = vmatprep.mubr.bf16.mxu0 %v3040
        %3287 = vmatmul.mubr.bf16.gmra.mxu0 %v3039
        %v3288 = vpop.f32.mrf.mxu0
        %v3289 = vadd.f32 %v3098, %v3288
        %v3290 = vpop.f32.mrf.mxu0
        %v3291 = vpop.f32.mrf.mxu0
        %v3292 = vadd.f32 %v3098, %v3291
        %v3293 = vpop.f32.mrf.mxu0
        %3294 = vdwg.mxu0
        %3295 = vmatprep.subr.bf16.mxu0 0
        %3296 = vmatpush1.bf16.msra.mxu0 %v3223
        %3297 = vmatprep.subr.bf16.mxu0 0
        %3298 = vmatpush1.bf16.msra.mxu0 %v3222
        %3299 = vmatprep.subr.bf16.mxu0 0
        %3300 = vmatpush1.bf16.msra.mxu0 %v3221
        %3301 = vmatprep.subr.bf16.mxu0 0
        %3302 = vmatpush1.bf16.msra.mxu0 %v3220
        %3303 = vmatprep.subr.bf16.mxu0 0
        %3304 = vmatpush1.bf16.msra.mxu0 %v3219
        %3305 = vmatprep.subr.bf16.mxu0 0
        %3306 = vmatpush1.bf16.msra.mxu0 %v3218
        %3307 = vmatprep.subr.bf16.mxu0 0
        %3308 = vmatpush1.bf16.msra.mxu0 %v3217
        %3309 = vmatprep.subr.bf16.mxu0 0
        %3310 = vmatpush1.bf16.msra.mxu0 %v3216
        %3311 = vmatprep.subr.bf16.mxu0 0
        %3312 = vmatpush2.bf16.msra.mxu0 0
        %3313 = vmatprep.subr.bf16.mxu0 0
        %3314 = vmatpush2.bf16.msra.mxu0 0
        %3315 = vmatprep.subr.bf16.mxu0 0
        %3316 = vmatpush2.bf16.msra.mxu0 0
        %3317 = vmatprep.subr.bf16.mxu0 0
        %3318 = vmatpush2.bf16.msra.mxu0 0
        %3319 = vmatprep.subr.bf16.mxu0 0
        %3320 = vmatpush2.bf16.msra.mxu0 0
        %3321 = vmatprep.subr.bf16.mxu0 0
        %3322 = vmatpush2.bf16.msra.mxu0 0
        %3323 = vmatprep.subr.bf16.mxu0 0
        %3324 = vmatpush2.bf16.msra.mxu0 0
        %3325 = vmatprep.subr.bf16.mxu0 0
        %3326 = vmatpush2.bf16.msra.mxu0 %v3224
        %3327 = vmatprep.mubr.bf16.mxu0 %v3252
        %3328 = vmatmul.mubr.bf16.gmra.mxu0 %v3041
        %v3329 = vpop.f32.mrf.mxu0
        %v3330 = vadd.f32 %v3289, %v3329
        %v3331 = vpop.f32.mrf.mxu0
        %v3332 = vpop.f32.mrf.mxu0
        %v3333 = vadd.f32 %v3292, %v3332
        %v3334 = vpop.f32.mrf.mxu0
        %3335 = vdwg.mxu0
        %v3336 = vld [vmem:[%s629] sm:$0xff]
        %v3337 = vld [vmem:[%s629 + $0x8] sm:$0xff]
        %v3338 = vmul.f32 %v3330, 0.5
        %v3339 = vmul.f32 %v3333, 0.5
        %v3340 = vmul.f32 %v3338, 1.442695
        %v3341 = vpow.pop %v3340
        %v3342 = vmul.f32 %v3339, 1.442695
        %v3343 = vpow.pop %v3342
        %3346 = vrot.lane.b32.xlu0 %v3341, 112
        %v3347 = vpop.permute.xlu0 %3346
        %3348 = vrot.lane.b32.xlu0 %v3343, 112
        %v3349 = vpop.permute.xlu0 %3348
        %v3352 = vmul.f32 %v3336, %v3347
        %v3353 = vmul.f32 %v3337, %v3349
        %v3354 = vadd.f32 %v3352, %v3330
        %v3355 = vadd.f32 %v3353, %v3333
        %v3356 = vpack.c.bf16 %v3355, %v3354
        %v3357 = vld [vmem:[%s10] sm:$0xff]
        %v3358 = vld [vmem:[%s10 + $0x8] sm:$0xff]
        %v3359 = vld [vmem:[%s10 + $0x10] sm:$0xff]
        %v3360 = vld [vmem:[%s10 + $0x18] sm:$0xff]
        %v3361 = vld [vmem:[%s11] sm:$0xff]
        %v3362 = vld [vmem:[%s11 + $0x8] sm:$0xff]
        %v3365 = vunpack.c.l.b16 %v3361
        %v3366 = vunpack.c.h.b16 %v3361
        %v3367 = vunpack.c.l.b16 %v3362
        %v3368 = vunpack.c.h.b16 %v3362
        %v3369 = vpack.c.b16 %v3365, %v3365
        %v3370 = vpack.c.b16 %v3366, %v3366
        %v3371 = vpack.c.b16 %v3367, %v3367
        %v3372 = vpack.c.b16 %v3368, %v3368
        %v3374 = vsel %vm733, %v3369, 0
        %v3377 = vsel %vm733, %v3370, 0
        %v3380 = vsel %vm733, %v3371, 0
        %v3383 = vsel %vm733, %v3372, 0
        %3385 = vmatprep.subr.bf16.mxu0 0
        %3386 = vmatpush1.bf16.msra.mxu0 0
        %3387 = vmatprep.subr.bf16.mxu0 0
        %3388 = vmatpush1.bf16.msra.mxu0 0
        %3389 = vmatprep.subr.bf16.mxu0 0
        %3390 = vmatpush1.bf16.msra.mxu0 0
        %3391 = vmatprep.subr.bf16.mxu0 0
        %3392 = vmatpush1.bf16.msra.mxu0 0
        %3393 = vmatprep.subr.bf16.mxu0 0
        %3394 = vmatpush1.bf16.msra.mxu0 0
        %3395 = vmatprep.subr.bf16.mxu0 0
        %3396 = vmatpush1.bf16.msra.mxu0 0
        %3397 = vmatprep.subr.bf16.mxu0 0
        %3398 = vmatpush1.bf16.msra.mxu0 0
        %3399 = vmatprep.subr.bf16.mxu0 %v3377
        %3400 = vmatpush1.bf16.msra.mxu0 %v3374
        %3401 = vmatprep.subr.bf16.mxu0 0
        %3402 = vmatpush2.bf16.msra.mxu0 0
        %3403 = vmatprep.subr.bf16.mxu0 0
        %3404 = vmatpush2.bf16.msra.mxu0 0
        %3405 = vmatprep.subr.bf16.mxu0 0
        %3406 = vmatpush2.bf16.msra.mxu0 0
        %3407 = vmatprep.subr.bf16.mxu0 0
        %3408 = vmatpush2.bf16.msra.mxu0 0
        %3409 = vmatprep.subr.bf16.mxu0 0
        %3410 = vmatpush2.bf16.msra.mxu0 0
        %3411 = vmatprep.subr.bf16.mxu0 0
        %3412 = vmatpush2.bf16.msra.mxu0 0
        %3413 = vmatprep.subr.bf16.mxu0 0
        %3414 = vmatpush2.bf16.msra.mxu0 0
        %3415 = vmatprep.subr.bf16.mxu0 0
        %3416 = vmatpush2.bf16.msra.mxu0 0
        %3417 = vmatprep.mubr.bf16.mxu0 0
        %3418 = vmatmul.mubr.bf16.gmra.mxu0 %v731
        %v3419 = vpop.f32.mrf.mxu0
        %v3420 = vadd.f32 0.0, %v3419
        %v3421 = vpop.f32.mrf.mxu0
        %v3422 = vadd.f32 0.0, %v3421
        %v3423 = vpop.f32.mrf.mxu0
        %v3424 = vadd.f32 0.0, %v3423
        %v3425 = vpop.f32.mrf.mxu0
        %v3426 = vadd.f32 0.0, %v3425
        %3427 = vdwg.mxu0
        %3428 = vmatprep.subr.bf16.mxu0 0
        %3429 = vmatpush1.bf16.msra.mxu0 0
        %3430 = vmatprep.subr.bf16.mxu0 0
        %3431 = vmatpush1.bf16.msra.mxu0 0
        %3432 = vmatprep.subr.bf16.mxu0 0
        %3433 = vmatpush1.bf16.msra.mxu0 0
        %3434 = vmatprep.subr.bf16.mxu0 0
        %3435 = vmatpush1.bf16.msra.mxu0 0
        %3436 = vmatprep.subr.bf16.mxu0 0
        %3437 = vmatpush1.bf16.msra.mxu0 0
        %3438 = vmatprep.subr.bf16.mxu0 0
        %3439 = vmatpush1.bf16.msra.mxu0 0
        %3440 = vmatprep.subr.bf16.mxu0 0
        %3441 = vmatpush1.bf16.msra.mxu0 0
        %3442 = vmatprep.subr.bf16.mxu0 %v3383
        %3443 = vmatpush1.bf16.msra.mxu0 %v3380
        %3444 = vmatprep.subr.bf16.mxu0 0
        %3445 = vmatpush2.bf16.msra.mxu0 0
        %3446 = vmatprep.subr.bf16.mxu0 0
        %3447 = vmatpush2.bf16.msra.mxu0 0
        %3448 = vmatprep.subr.bf16.mxu0 0
        %3449 = vmatpush2.bf16.msra.mxu0 0
        %3450 = vmatprep.subr.bf16.mxu0 0
        %3451 = vmatpush2.bf16.msra.mxu0 0
        %3452 = vmatprep.subr.bf16.mxu0 0
        %3453 = vmatpush2.bf16.msra.mxu0 0
        %3454 = vmatprep.subr.bf16.mxu0 0
        %3455 = vmatpush2.bf16.msra.mxu0 0
        %3456 = vmatprep.subr.bf16.mxu0 0
        %3457 = vmatpush2.bf16.msra.mxu0 0
        %3458 = vmatprep.subr.bf16.mxu0 0
        %3459 = vmatpush2.bf16.msra.mxu0 0
        %3460 = vmatprep.mubr.bf16.mxu0 0
        %3461 = vmatmul.mubr.bf16.gmra.mxu0 %v731
        %v3462 = vpop.f32.mrf.mxu0
        %v3463 = vadd.f32 0.0, %v3462
        %v3464 = vpop.f32.mrf.mxu0
        %v3465 = vadd.f32 0.0, %v3464
        %v3466 = vpop.f32.mrf.mxu0
        %v3467 = vadd.f32 0.0, %v3466
        %v3468 = vpop.f32.mrf.mxu0
        %v3469 = vadd.f32 0.0, %v3468
        %3470 = vdwg.mxu0
        %v3475 = vunpack.c.l.b16 %v3357
        %v3476 = vunpack.c.h.b16 %v3357
        %v3477 = vunpack.c.l.b16 %v3358
        %v3478 = vunpack.c.h.b16 %v3358
        %v3479 = vunpack.c.l.b16 %v3359
        %v3480 = vunpack.c.h.b16 %v3359
        %v3481 = vunpack.c.l.b16 %v3360
        %v3482 = vunpack.c.h.b16 %v3360
        %v3483 = vpack.c.b16 %v3479, %v3475
        %v3484 = vpack.c.b16 %v3480, %v3476
        %v3485 = vpack.c.b16 %v3481, %v3477
        %v3486 = vpack.c.b16 %v3482, %v3478
        %v3492 = vsel %vm3250, %v3356, 0
        %3494 = vmatprep.subr.bf16.mxu0 0
        %3495 = vmatpush1.bf16.msra.mxu0 0
        %3496 = vmatprep.subr.bf16.mxu0 0
        %3497 = vmatpush1.bf16.msra.mxu0 0
        %3498 = vmatprep.subr.bf16.mxu0 0
        %3499 = vmatpush1.bf16.msra.mxu0 0
        %3500 = vmatprep.subr.bf16.mxu0 0
        %3501 = vmatpush1.bf16.msra.mxu0 0
        %3502 = vmatprep.subr.bf16.mxu0 0
        %3503 = vmatpush1.bf16.msra.mxu0 0
        %3504 = vmatprep.subr.bf16.mxu0 0
        %3505 = vmatpush1.bf16.msra.mxu0 0
        %3506 = vmatprep.subr.bf16.mxu0 0
        %3507 = vmatpush1.bf16.msra.mxu0 0
        %3508 = vmatprep.subr.bf16.mxu0 %v3484
        %3509 = vmatpush1.bf16.msra.mxu0 %v3483
        %3510 = vmatprep.subr.bf16.mxu0 0
        %3511 = vmatpush2.bf16.msra.mxu0 0
        %3512 = vmatprep.subr.bf16.mxu0 0
        %3513 = vmatpush2.bf16.msra.mxu0 0
        %3514 = vmatprep.subr.bf16.mxu0 0
        %3515 = vmatpush2.bf16.msra.mxu0 0
        %3516 = vmatprep.subr.bf16.mxu0 0
        %3517 = vmatpush2.bf16.msra.mxu0 0
        %3518 = vmatprep.subr.bf16.mxu0 0
        %3519 = vmatpush2.bf16.msra.mxu0 0
        %3520 = vmatprep.subr.bf16.mxu0 0
        %3521 = vmatpush2.bf16.msra.mxu0 0
        %3522 = vmatprep.subr.bf16.mxu0 0
        %3523 = vmatpush2.bf16.msra.mxu0 0
        %3524 = vmatprep.subr.bf16.mxu0 0
        %3525 = vmatpush2.bf16.msra.mxu0 0
        %3526 = vmatprep.mubr.bf16.mxu0 0
        %3527 = vmatmul.mubr.bf16.gmra.mxu0 %v3492
        %v3528 = vpop.f32.mrf.mxu0
        %v3529 = vadd.f32 %v3420, %v3528
        %v3530 = vpop.f32.mrf.mxu0
        %v3531 = vadd.f32 %v3422, %v3530
        %v3532 = vpop.f32.mrf.mxu0
        %v3533 = vadd.f32 %v3424, %v3532
        %v3534 = vpop.f32.mrf.mxu0
        %v3535 = vadd.f32 %v3426, %v3534
        %3536 = vdwg.mxu0
        %3537 = vmatprep.subr.bf16.mxu0 0
        %3538 = vmatpush1.bf16.msra.mxu0 0
        %3539 = vmatprep.subr.bf16.mxu0 0
        %3540 = vmatpush1.bf16.msra.mxu0 0
        %3541 = vmatprep.subr.bf16.mxu0 0
        %3542 = vmatpush1.bf16.msra.mxu0 0
        %3543 = vmatprep.subr.bf16.mxu0 0
        %3544 = vmatpush1.bf16.msra.mxu0 0
        %3545 = vmatprep.subr.bf16.mxu0 0
        %3546 = vmatpush1.bf16.msra.mxu0 0
        %3547 = vmatprep.subr.bf16.mxu0 0
        %3548 = vmatpush1.bf16.msra.mxu0 0
        %3549 = vmatprep.subr.bf16.mxu0 0
        %3550 = vmatpush1.bf16.msra.mxu0 0
        %3551 = vmatprep.subr.bf16.mxu0 %v3486
        %3552 = vmatpush1.bf16.msra.mxu0 %v3485
        %3553 = vmatprep.subr.bf16.mxu0 0
        %3554 = vmatpush2.bf16.msra.mxu0 0
        %3555 = vmatprep.subr.bf16.mxu0 0
        %3556 = vmatpush2.bf16.msra.mxu0 0
        %3557 = vmatprep.subr.bf16.mxu0 0
        %3558 = vmatpush2.bf16.msra.mxu0 0
        %3559 = vmatprep.subr.bf16.mxu0 0
        %3560 = vmatpush2.bf16.msra.mxu0 0
        %3561 = vmatprep.subr.bf16.mxu0 0
        %3562 = vmatpush2.bf16.msra.mxu0 0
        %3563 = vmatprep.subr.bf16.mxu0 0
        %3564 = vmatpush2.bf16.msra.mxu0 0
        %3565 = vmatprep.subr.bf16.mxu0 0
        %3566 = vmatpush2.bf16.msra.mxu0 0
        %3567 = vmatprep.subr.bf16.mxu0 0
        %3568 = vmatpush2.bf16.msra.mxu0 0
        %3569 = vmatprep.mubr.bf16.mxu0 0
        %3570 = vmatmul.mubr.bf16.gmra.mxu0 %v3492
        %v3571 = vpop.f32.mrf.mxu0
        %v3572 = vadd.f32 %v3463, %v3571
        %v3573 = vpop.f32.mrf.mxu0
        %v3574 = vadd.f32 %v3465, %v3573
        %v3575 = vpop.f32.mrf.mxu0
        %v3576 = vadd.f32 %v3467, %v3575
        %v3577 = vpop.f32.mrf.mxu0
        %v3578 = vadd.f32 %v3469, %v3577
        %3579 = vdwg.mxu0
        %v3580 = vld [vmem:[%s12] sm:$0xf]
        %v3582 = vlaneseq
        %v3583 = vshrl.u32 %v3582, 7
        %v3584 = vsub.s32 0, %v3583
        %v3585 = vrot.slane %v3580, %v3584
        %v3586 = vlaneseq
        %v3587 = vshrl.u32 %v3586, 7
        %v3588 = vsub.s32 1, %v3587
        %v3589 = vrot.slane %v3580, %v3588
        %v3590 = vlaneseq
        %v3591 = vshrl.u32 %v3590, 7
        %v3592 = vsub.s32 2, %v3591
        %v3593 = vrot.slane %v3580, %v3592
        %v3594 = vlaneseq
        %v3595 = vshrl.u32 %v3594, 7
        %v3596 = vsub.s32 3, %v3595
        %v3597 = vrot.slane %v3580, %v3596
        %v3602 = vadd.f32 %v3529, %v3585
        %v3603 = vadd.f32 %v3531, %v3589
        %v3604 = vadd.f32 %v3572, %v3593
        %v3605 = vadd.f32 %v3574, %v3597
        %v3606 = vadd.f32 %v3533, %v3585
        %v3607 = vadd.f32 %v3535, %v3589
        %v3608 = vadd.f32 %v3576, %v3593
        %v3609 = vadd.f32 %v3578, %v3597
        %v3610 = vmax.f32 %v3602, 0.0
        %v3611 = vmax.f32 %v3603, 0.0
        %v3612 = vmax.f32 %v3604, 0.0
        %v3613 = vmax.f32 %v3605, 0.0
        %v3614 = vmax.f32 %v3606, 0.0
        %v3615 = vmax.f32 %v3607, 0.0
        %v3616 = vmax.f32 %v3608, 0.0
        %v3617 = vmax.f32 %v3609, 0.0
        %v3618 = vpack.c.bf16 %v3614, %v3610
        %v3619 = vpack.c.bf16 %v3615, %v3611
        %v3620 = vpack.c.bf16 %v3616, %v3612
        %v3621 = vpack.c.bf16 %v3617, %v3613
        %v3622 = vld [vmem:[%s13] sm:$0xff]
        %v3623 = vld [vmem:[%s13 + $0x8] sm:$0xff]
        %v3624 = vld [vmem:[%s13 + $0x10] sm:$0xff]
        %v3625 = vld [vmem:[%s13 + $0x18] sm:$0xf]
        %v3626 = vld [vmem:[%s13 + $0x1c] sm:$0xff]
        %v3627 = vld [vmem:[%s13 + $0x24] sm:$0xff]
        %v3628 = vld [vmem:[%s13 + $0x2c] sm:$0xff]
        %v3629 = vld [vmem:[%s13 + $0x34] sm:$0xf]
        %v3630 = vld [vmem:[%s13 + $0x38] sm:$0xff]
        %v3631 = vld [vmem:[%s13 + $0x40] sm:$0xff]
        %v3632 = vld [vmem:[%s13 + $0x48] sm:$0xff]
        %v3633 = vld [vmem:[%s13 + $0x50] sm:$0xf]
        %v3634 = vld [vmem:[%s13 + $0x54] sm:$0xff]
        %v3635 = vld [vmem:[%s13 + $0x5c] sm:$0xff]
        %v3636 = vld [vmem:[%s13 + $0x64] sm:$0xff]
        %v3637 = vld [vmem:[%s13 + $0x6c] sm:$0xf]
        %v3638 = vld [vmem:[%s13 + $0x70] sm:$0xff]
        %v3639 = vld [vmem:[%s13 + $0x78] sm:$0xff]
        %v3640 = vld [vmem:[%s13 + $0x80] sm:$0xff]
        %v3641 = vld [vmem:[%s13 + $0x88] sm:$0xf]
        %v3642 = vld [vmem:[%s13 + $0x8c] sm:$0xff]
        %v3643 = vld [vmem:[%s13 + $0x94] sm:$0xff]
        %v3644 = vld [vmem:[%s13 + $0x9c] sm:$0xff]
        %v3645 = vld [vmem:[%s13 + $0xa4] sm:$0xf]
        %v3646 = vld [vmem:[%s13 + $0xa8] sm:$0xff]
        %v3647 = vld [vmem:[%s13 + $0xb0] sm:$0xff]
        %v3648 = vld [vmem:[%s13 + $0xb8] sm:$0xff]
        %v3649 = vld [vmem:[%s13 + $0xc0] sm:$0xf]
        %v3650 = vld [vmem:[%s13 + $0xc4] sm:$0xff]
        %v3651 = vld [vmem:[%s13 + $0xcc] sm:$0xff]
        %v3652 = vld [vmem:[%s13 + $0xd4] sm:$0xff]
        %v3653 = vld [vmem:[%s13 + $0xdc] sm:$0xf]
        %v3654 = vld [vmem:[%s13 + $0xe0] sm:$0xff]
        %v3655 = vld [vmem:[%s13 + $0xe8] sm:$0xff]
        %v3656 = vld [vmem:[%s13 + $0xf0] sm:$0xff]
        %v3657 = vld [vmem:[%s13 + $0xf8] sm:$0xf]
        %v3658 = vld [vmem:[%s13 + $0xfc] sm:$0xff]
        %v3659 = vld [vmem:[%s13 + $0x104] sm:$0xff]
        %v3660 = vld [vmem:[%s13 + $0x10c] sm:$0xff]
        %v3661 = vld [vmem:[%s13 + $0x114] sm:$0xf]
        %v3662 = vld [vmem:[%s13 + $0x118] sm:$0xff]
        %v3663 = vld [vmem:[%s13 + $0x120] sm:$0xff]
        %v3664 = vld [vmem:[%s13 + $0x128] sm:$0xff]
        %v3665 = vld [vmem:[%s13 + $0x130] sm:$0xf]
        %v3666 = vld [vmem:[%s13 + $0x134] sm:$0xff]
        %v3667 = vld [vmem:[%s13 + $0x13c] sm:$0xff]
        %v3668 = vld [vmem:[%s13 + $0x144] sm:$0xff]
        %v3669 = vld [vmem:[%s13 + $0x14c] sm:$0xf]
        %v3670 = vld [vmem:[%s13 + $0x150] sm:$0xff]
        %v3671 = vld [vmem:[%s13 + $0x158] sm:$0xff]
        %v3672 = vld [vmem:[%s13 + $0x160] sm:$0xff]
        %v3673 = vld [vmem:[%s13 + $0x168] sm:$0xf]
        %v3674 = vld [vmem:[%s13 + $0x16c] sm:$0xff]
        %v3675 = vld [vmem:[%s13 + $0x174] sm:$0xff]
        %v3676 = vld [vmem:[%s13 + $0x17c] sm:$0xff]
        %v3677 = vld [vmem:[%s13 + $0x184] sm:$0xf]
        %v3678 = vld [vmem:[%s13 + $0x188] sm:$0xff]
        %v3679 = vld [vmem:[%s13 + $0x190] sm:$0xff]
        %v3680 = vld [vmem:[%s13 + $0x198] sm:$0xff]
        %v3681 = vld [vmem:[%s13 + $0x1a0] sm:$0xf]
        %v3682 = vld [vmem:[%s13 + $0x1a4] sm:$0xff]
        %v3683 = vld [vmem:[%s13 + $0x1ac] sm:$0xff]
        %v3684 = vld [vmem:[%s13 + $0x1b4] sm:$0xff]
        %v3685 = vld [vmem:[%s13 + $0x1bc] sm:$0xf]
        %v3686 = vld [vmem:[%s13 + $0x1c0] sm:$0xff]
        %v3687 = vld [vmem:[%s13 + $0x1c8] sm:$0xff]
        %v3688 = vld [vmem:[%s13 + $0x1d0] sm:$0xff]
        %v3689 = vld [vmem:[%s13 + $0x1d8] sm:$0xf]
        %v3690 = vld [vmem:[%s13 + $0x1dc] sm:$0xff]
        %v3691 = vld [vmem:[%s13 + $0x1e4] sm:$0xff]
        %v3692 = vld [vmem:[%s13 + $0x1ec] sm:$0xff]
        %v3693 = vld [vmem:[%s13 + $0x1f4] sm:$0xf]
        %v3694 = vld [vmem:[%s13 + $0x1f8] sm:$0xff]
        %v3695 = vld [vmem:[%s13 + $0x200] sm:$0xff]
        %v3696 = vld [vmem:[%s13 + $0x208] sm:$0xff]
        %v3697 = vld [vmem:[%s13 + $0x210] sm:$0xf]
        %v3698 = vld [vmem:[%s13 + $0x214] sm:$0xff]
        %v3699 = vld [vmem:[%s13 + $0x21c] sm:$0xff]
        %v3700 = vld [vmem:[%s13 + $0x224] sm:$0xff]
        %v3701 = vld [vmem:[%s13 + $0x22c] sm:$0xf]
        %v3702 = vld [vmem:[%s13 + $0x230] sm:$0xff]
        %v3703 = vld [vmem:[%s13 + $0x238] sm:$0xff]
        %v3704 = vld [vmem:[%s13 + $0x240] sm:$0xff]
        %v3705 = vld [vmem:[%s13 + $0x248] sm:$0xf]
        %v3706 = vld [vmem:[%s13 + $0x24c] sm:$0xff]
        %v3707 = vld [vmem:[%s13 + $0x254] sm:$0xff]
        %v3708 = vld [vmem:[%s13 + $0x25c] sm:$0xff]
        %v3709 = vld [vmem:[%s13 + $0x264] sm:$0xf]
        %v3710 = vld [vmem:[%s13 + $0x268] sm:$0xff]
        %v3711 = vld [vmem:[%s13 + $0x270] sm:$0xff]
        %v3712 = vld [vmem:[%s13 + $0x278] sm:$0xff]
        %v3713 = vld [vmem:[%s13 + $0x280] sm:$0xf]
        %v3714 = vld [vmem:[%s13 + $0x284] sm:$0xff]
        %v3715 = vld [vmem:[%s13 + $0x28c] sm:$0xff]
        %v3716 = vld [vmem:[%s13 + $0x294] sm:$0xff]
        %v3717 = vld [vmem:[%s13 + $0x29c] sm:$0xf]
        %v3718 = vld [vmem:[%s13 + $0x2a0] sm:$0xff]
        %v3719 = vld [vmem:[%s13 + $0x2a8] sm:$0xff]
        %v3720 = vld [vmem:[%s13 + $0x2b0] sm:$0xff]
        %v3721 = vld [vmem:[%s13 + $0x2b8] sm:$0xf]
        %v3722 = vld [vmem:[%s13 + $0x2bc] sm:$0xff]
        %v3723 = vld [vmem:[%s13 + $0x2c4] sm:$0xff]
        %v3724 = vld [vmem:[%s13 + $0x2cc] sm:$0xff]
        %v3725 = vld [vmem:[%s13 + $0x2d4] sm:$0xf]
        %v3726 = vld [vmem:[%s13 + $0x2d8] sm:$0xff]
        %v3727 = vld [vmem:[%s13 + $0x2e0] sm:$0xff]
        %v3728 = vld [vmem:[%s13 + $0x2e8] sm:$0xff]
        %v3729 = vld [vmem:[%s13 + $0x2f0] sm:$0xf]
        %v3730 = vld [vmem:[%s13 + $0x2f4] sm:$0xff]
        %v3731 = vld [vmem:[%s13 + $0x2fc] sm:$0xff]
        %v3732 = vld [vmem:[%s13 + $0x304] sm:$0xff]
        %v3733 = vld [vmem:[%s13 + $0x30c] sm:$0xf]
        %v3734 = vld [vmem:[%s13 + $0x310] sm:$0xff]
        %v3735 = vld [vmem:[%s13 + $0x318] sm:$0xff]
        %v3736 = vld [vmem:[%s13 + $0x320] sm:$0xff]
        %v3737 = vld [vmem:[%s13 + $0x328] sm:$0xf]
        %v3738 = vld [vmem:[%s13 + $0x32c] sm:$0xff]
        %v3739 = vld [vmem:[%s13 + $0x334] sm:$0xff]
        %v3740 = vld [vmem:[%s13 + $0x33c] sm:$0xff]
        %v3741 = vld [vmem:[%s13 + $0x344] sm:$0xf]
        %v3742 = vld [vmem:[%s13 + $0x348] sm:$0xff]
        %v3743 = vld [vmem:[%s13 + $0x350] sm:$0xff]
        %v3744 = vld [vmem:[%s13 + $0x358] sm:$0xff]
        %v3745 = vld [vmem:[%s13 + $0x360] sm:$0xf]
        %v3746 = vld [vmem:[%s13 + $0x364] sm:$0xff]
        %v3747 = vld [vmem:[%s13 + $0x36c] sm:$0xff]
        %v3748 = vld [vmem:[%s13 + $0x374] sm:$0xff]
        %v3749 = vld [vmem:[%s13 + $0x37c] sm:$0xf]
        %v3750 = vld [vmem:[%s13 + $0x380] sm:$0xff]
        %v3751 = vld [vmem:[%s13 + $0x388] sm:$0xff]
        %v3752 = vld [vmem:[%s13 + $0x390] sm:$0xff]
        %v3753 = vld [vmem:[%s13 + $0x398] sm:$0xf]
        %v3754 = vld [vmem:[%s13 + $0x39c] sm:$0xff]
        %v3755 = vld [vmem:[%s13 + $0x3a4] sm:$0xff]
        %v3756 = vld [vmem:[%s13 + $0x3ac] sm:$0xff]
        %v3757 = vld [vmem:[%s13 + $0x3b4] sm:$0xf]
        %v3758 = vld [vmem:[%s13 + $0x3b8] sm:$0xff]
        %v3759 = vld [vmem:[%s13 + $0x3c0] sm:$0xff]
        %v3760 = vld [vmem:[%s13 + $0x3c8] sm:$0xff]
        %v3761 = vld [vmem:[%s13 + $0x3d0] sm:$0xf]
        %v3762 = vld [vmem:[%s13 + $0x3d4] sm:$0xff]
        %v3763 = vld [vmem:[%s13 + $0x3dc] sm:$0xff]
        %v3764 = vld [vmem:[%s13 + $0x3e4] sm:$0xff]
        %v3765 = vld [vmem:[%s13 + $0x3ec] sm:$0xf]
        %v3766 = vld [vmem:[%s13 + $0x3f0] sm:$0xff]
        %v3767 = vld [vmem:[%s13 + $0x3f8] sm:$0xff]
        %v3768 = vld [vmem:[%s13 + $0x400] sm:$0xff]
        %v3769 = vld [vmem:[%s13 + $0x408] sm:$0xf]
        %v3770 = vld [vmem:[%s13 + $0x40c] sm:$0xff]
        %v3771 = vld [vmem:[%s13 + $0x414] sm:$0xff]
        %v3772 = vld [vmem:[%s13 + $0x41c] sm:$0xff]
        %v3773 = vld [vmem:[%s13 + $0x424] sm:$0xf]
        %v3774 = vld [vmem:[%s13 + $0x428] sm:$0xff]
        %v3775 = vld [vmem:[%s13 + $0x430] sm:$0xff]
        %v3776 = vld [vmem:[%s13 + $0x438] sm:$0xff]
        %v3777 = vld [vmem:[%s13 + $0x440] sm:$0xf]
        %v3778 = vld [vmem:[%s13 + $0x444] sm:$0xff]
        %v3779 = vld [vmem:[%s13 + $0x44c] sm:$0xff]
        %v3780 = vld [vmem:[%s13 + $0x454] sm:$0xff]
        %v3781 = vld [vmem:[%s13 + $0x45c] sm:$0xf]
        %v3782 = vld [vmem:[%s13 + $0x460] sm:$0xff]
        %v3783 = vld [vmem:[%s13 + $0x468] sm:$0xff]
        %v3784 = vld [vmem:[%s13 + $0x470] sm:$0xff]
        %v3785 = vld [vmem:[%s13 + $0x478] sm:$0xf]
        %v3786 = vld [vmem:[%s13 + $0x47c] sm:$0xff]
        %v3787 = vld [vmem:[%s13 + $0x484] sm:$0xff]
        %v3788 = vld [vmem:[%s13 + $0x48c] sm:$0xff]
        %v3789 = vld [vmem:[%s13 + $0x494] sm:$0xf]
        %v3790 = vld [vmem:[%s13 + $0x498] sm:$0xff]
        %v3791 = vld [vmem:[%s13 + $0x4a0] sm:$0xff]
        %v3792 = vld [vmem:[%s13 + $0x4a8] sm:$0xff]
        %v3793 = vld [vmem:[%s13 + $0x4b0] sm:$0xf]
        %v3794 = vld [vmem:[%s13 + $0x4b4] sm:$0xff]
        %v3795 = vld [vmem:[%s13 + $0x4bc] sm:$0xff]
        %v3796 = vld [vmem:[%s13 + $0x4c4] sm:$0xff]
        %v3797 = vld [vmem:[%s13 + $0x4cc] sm:$0xf]
        %v3798 = vld [vmem:[%s13 + $0x4d0] sm:$0xff]
        %v3799 = vld [vmem:[%s13 + $0x4d8] sm:$0xff]
        %v3800 = vld [vmem:[%s13 + $0x4e0] sm:$0xff]
        %v3801 = vld [vmem:[%s13 + $0x4e8] sm:$0xf]
        %v3802 = vld [vmem:[%s13 + $0x4ec] sm:$0xff]
        %v3803 = vld [vmem:[%s13 + $0x4f4] sm:$0xff]
        %v3804 = vld [vmem:[%s13 + $0x4fc] sm:$0xff]
        %v3805 = vld [vmem:[%s13 + $0x504] sm:$0xf]
        %v3806 = vld [vmem:[%s13 + $0x508] sm:$0xff]
        %v3807 = vld [vmem:[%s13 + $0x510] sm:$0xff]
        %v3808 = vld [vmem:[%s13 + $0x518] sm:$0xff]
        %v3809 = vld [vmem:[%s13 + $0x520] sm:$0xf]
        %v3810 = vld [vmem:[%s13 + $0x524] sm:$0xff]
        %v3811 = vld [vmem:[%s13 + $0x52c] sm:$0xff]
        %v3812 = vld [vmem:[%s13 + $0x534] sm:$0xff]
        %v3813 = vld [vmem:[%s13 + $0x53c] sm:$0xf]
        %v3814 = vld [vmem:[%s13 + $0x540] sm:$0xff]
        %v3815 = vld [vmem:[%s13 + $0x548] sm:$0xff]
        %v3816 = vld [vmem:[%s13 + $0x550] sm:$0xff]
        %v3817 = vld [vmem:[%s13 + $0x558] sm:$0xf]
        %v3818 = vld [vmem:[%s13 + $0x55c] sm:$0xff]
        %v3819 = vld [vmem:[%s13 + $0x564] sm:$0xff]
        %v3820 = vld [vmem:[%s13 + $0x56c] sm:$0xff]
        %v3821 = vld [vmem:[%s13 + $0x574] sm:$0xf]
        %v3822 = vld [vmem:[%s14] sm:$0x7f]
        %v3824 = vlaneseq
        %v3825 = vshrl.u32 %v3824, 7
        %v3826 = vsub.s32 0, %v3825
        %v3827 = vrot.slane %v3822, %v3826
        %v3828 = vlaneseq
        %v3829 = vshrl.u32 %v3828, 7
        %v3830 = vsub.s32 1, %v3829
        %v3831 = vrot.slane %v3822, %v3830
        %v3832 = vlaneseq
        %v3833 = vshrl.u32 %v3832, 7
        %v3834 = vsub.s32 2, %v3833
        %v3835 = vrot.slane %v3822, %v3834
        %v3836 = vlaneseq
        %v3837 = vshrl.u32 %v3836, 7
        %v3838 = vsub.s32 3, %v3837
        %v3839 = vrot.slane %v3822, %v3838
        %v3840 = vlaneseq
        %v3841 = vshrl.u32 %v3840, 7
        %v3842 = vsub.s32 4, %v3841
        %v3843 = vrot.slane %v3822, %v3842
        %v3844 = vlaneseq
        %v3845 = vshrl.u32 %v3844, 7
        %v3846 = vsub.s32 5, %v3845
        %v3847 = vrot.slane %v3822, %v3846
        %v3848 = vlaneseq
        %v3849 = vshrl.u32 %v3848, 7
        %v3850 = vsub.s32 6, %v3849
        %v3851 = vrot.slane %v3822, %v3850
        %v4059 = vunpack.c.l.b16 %v3622
        %v4060 = vunpack.c.h.b16 %v3622
        %v4061 = vunpack.c.l.b16 %v3623
        %v4062 = vunpack.c.h.b16 %v3623
        %v4063 = vunpack.c.l.b16 %v3624
        %v4064 = vunpack.c.h.b16 %v3624
        %v4065 = vunpack.c.l.b16 %v3625
        %v4066 = vunpack.c.l.b16 %v3626
        %v4067 = vunpack.c.h.b16 %v3626
        %v4068 = vunpack.c.l.b16 %v3627
        %v4069 = vunpack.c.h.b16 %v3627
        %v4070 = vunpack.c.l.b16 %v3628
        %v4071 = vunpack.c.h.b16 %v3628
        %v4072 = vunpack.c.l.b16 %v3629
        %v4073 = vunpack.c.l.b16 %v3630
        %v4074 = vunpack.c.h.b16 %v3630
        %v4075 = vunpack.c.l.b16 %v3631
        %v4076 = vunpack.c.h.b16 %v3631
        %v4077 = vunpack.c.l.b16 %v3632
        %v4078 = vunpack.c.h.b16 %v3632
        %v4079 = vunpack.c.l.b16 %v3633
        %v4080 = vunpack.c.l.b16 %v3634
        %v4081 = vunpack.c.h.b16 %v3634
        %v4082 = vunpack.c.l.b16 %v3635
        %v4083 = vunpack.c.h.b16 %v3635
        %v4084 = vunpack.c.l.b16 %v3636
        %v4085 = vunpack.c.h.b16 %v3636
        %v4086 = vunpack.c.l.b16 %v3637
        %v4087 = vunpack.c.l.b16 %v3638
        %v4088 = vunpack.c.h.b16 %v3638
        %v4089 = vunpack.c.l.b16 %v3639
        %v4090 = vunpack.c.h.b16 %v3639
        %v4091 = vunpack.c.l.b16 %v3640
        %v4092 = vunpack.c.h.b16 %v3640
        %v4093 = vunpack.c.l.b16 %v3641
        %v4094 = vunpack.c.l.b16 %v3642
        %v4095 = vunpack.c.h.b16 %v3642
        %v4096 = vunpack.c.l.b16 %v3643
        %v4097 = vunpack.c.h.b16 %v3643
        %v4098 = vunpack.c.l.b16 %v3644
        %v4099 = vunpack.c.h.b16 %v3644
        %v4100 = vunpack.c.l.b16 %v3645
        %v4101 = vunpack.c.l.b16 %v3646
        %v4102 = vunpack.c.h.b16 %v3646
        %v4103 = vunpack.c.l.b16 %v3647
        %v4104 = vunpack.c.h.b16 %v3647
        %v4105 = vunpack.c.l.b16 %v3648
        %v4106 = vunpack.c.h.b16 %v3648
        %v4107 = vunpack.c.l.b16 %v3649
        %v4108 = vunpack.c.l.b16 %v3650
        %v4109 = vunpack.c.h.b16 %v3650
        %v4110 = vunpack.c.l.b16 %v3651
        %v4111 = vunpack.c.h.b16 %v3651
        %v4112 = vunpack.c.l.b16 %v3652
        %v4113 = vunpack.c.h.b16 %v3652
        %v4114 = vunpack.c.l.b16 %v3653
        %v4115 = vunpack.c.l.b16 %v3654
        %v4116 = vunpack.c.h.b16 %v3654
        %v4117 = vunpack.c.l.b16 %v3655
        %v4118 = vunpack.c.h.b16 %v3655
        %v4119 = vunpack.c.l.b16 %v3656
        %v4120 = vunpack.c.h.b16 %v3656
        %v4121 = vunpack.c.l.b16 %v3657
        %v4122 = vunpack.c.l.b16 %v3658
        %v4123 = vunpack.c.h.b16 %v3658
        %v4124 = vunpack.c.l.b16 %v3659
        %v4125 = vunpack.c.h.b16 %v3659
        %v4126 = vunpack.c.l.b16 %v3660
        %v4127 = vunpack.c.h.b16 %v3660
        %v4128 = vunpack.c.l.b16 %v3661
        %v4129 = vunpack.c.l.b16 %v3662
        %v4130 = vunpack.c.h.b16 %v3662
        %v4131 = vunpack.c.l.b16 %v3663
        %v4132 = vunpack.c.h.b16 %v3663
        %v4133 = vunpack.c.l.b16 %v3664
        %v4134 = vunpack.c.h.b16 %v3664
        %v4135 = vunpack.c.l.b16 %v3665
        %v4136 = vunpack.c.l.b16 %v3666
        %v4137 = vunpack.c.h.b16 %v3666
        %v4138 = vunpack.c.l.b16 %v3667
        %v4139 = vunpack.c.h.b16 %v3667
        %v4140 = vunpack.c.l.b16 %v3668
        %v4141 = vunpack.c.h.b16 %v3668
        %v4142 = vunpack.c.l.b16 %v3669
        %v4143 = vunpack.c.l.b16 %v3670
        %v4144 = vunpack.c.h.b16 %v3670
        %v4145 = vunpack.c.l.b16 %v3671
        %v4146 = vunpack.c.h.b16 %v3671
        %v4147 = vunpack.c.l.b16 %v3672
        %v4148 = vunpack.c.h.b16 %v3672
        %v4149 = vunpack.c.l.b16 %v3673
        %v4150 = vunpack.c.l.b16 %v3674
        %v4151 = vunpack.c.h.b16 %v3674
        %v4152 = vunpack.c.l.b16 %v3675
        %v4153 = vunpack.c.h.b16 %v3675
        %v4154 = vunpack.c.l.b16 %v3676
        %v4155 = vunpack.c.h.b16 %v3676
        %v4156 = vunpack.c.l.b16 %v3677
        %v4157 = vunpack.c.l.b16 %v3678
        %v4158 = vunpack.c.h.b16 %v3678
        %v4159 = vunpack.c.l.b16 %v3679
        %v4160 = vunpack.c.h.b16 %v3679
        %v4161 = vunpack.c.l.b16 %v3680
        %v4162 = vunpack.c.h.b16 %v3680
        %v4163 = vunpack.c.l.b16 %v3681
        %v4164 = vunpack.c.l.b16 %v3682
        %v4165 = vunpack.c.h.b16 %v3682
        %v4166 = vunpack.c.l.b16 %v3683
        %v4167 = vunpack.c.h.b16 %v3683
        %v4168 = vunpack.c.l.b16 %v3684
        %v4169 = vunpack.c.h.b16 %v3684
        %v4170 = vunpack.c.l.b16 %v3685
        %v4171 = vunpack.c.l.b16 %v3686
        %v4172 = vunpack.c.h.b16 %v3686
        %v4173 = vunpack.c.l.b16 %v3687
        %v4174 = vunpack.c.h.b16 %v3687
        %v4175 = vunpack.c.l.b16 %v3688
        %v4176 = vunpack.c.h.b16 %v3688
        %v4177 = vunpack.c.l.b16 %v3689
        %v4178 = vunpack.c.l.b16 %v3690
        %v4179 = vunpack.c.h.b16 %v3690
        %v4180 = vunpack.c.l.b16 %v3691
        %v4181 = vunpack.c.h.b16 %v3691
        %v4182 = vunpack.c.l.b16 %v3692
        %v4183 = vunpack.c.h.b16 %v3692
        %v4184 = vunpack.c.l.b16 %v3693
        %v4185 = vunpack.c.l.b16 %v3694
        %v4186 = vunpack.c.h.b16 %v3694
        %v4187 = vunpack.c.l.b16 %v3695
        %v4188 = vunpack.c.h.b16 %v3695
        %v4189 = vunpack.c.l.b16 %v3696
        %v4190 = vunpack.c.h.b16 %v3696
        %v4191 = vunpack.c.l.b16 %v3697
        %v4192 = vunpack.c.l.b16 %v3698
        %v4193 = vunpack.c.h.b16 %v3698
        %v4194 = vunpack.c.l.b16 %v3699
        %v4195 = vunpack.c.h.b16 %v3699
        %v4196 = vunpack.c.l.b16 %v3700
        %v4197 = vunpack.c.h.b16 %v3700
        %v4198 = vunpack.c.l.b16 %v3701
        %v4199 = vunpack.c.l.b16 %v3702
        %v4200 = vunpack.c.h.b16 %v3702
        %v4201 = vunpack.c.l.b16 %v3703
        %v4202 = vunpack.c.h.b16 %v3703
        %v4203 = vunpack.c.l.b16 %v3704
        %v4204 = vunpack.c.h.b16 %v3704
        %v4205 = vunpack.c.l.b16 %v3705
        %v4206 = vunpack.c.l.b16 %v3706
        %v4207 = vunpack.c.h.b16 %v3706
        %v4208 = vunpack.c.l.b16 %v3707
        %v4209 = vunpack.c.h.b16 %v3707
        %v4210 = vunpack.c.l.b16 %v3708
        %v4211 = vunpack.c.h.b16 %v3708
        %v4212 = vunpack.c.l.b16 %v3709
        %v4213 = vunpack.c.l.b16 %v3710
        %v4214 = vunpack.c.h.b16 %v3710
        %v4215 = vunpack.c.l.b16 %v3711
        %v4216 = vunpack.c.h.b16 %v3711
        %v4217 = vunpack.c.l.b16 %v3712
        %v4218 = vunpack.c.h.b16 %v3712
        %v4219 = vunpack.c.l.b16 %v3713
        %v4220 = vunpack.c.l.b16 %v3714
        %v4221 = vunpack.c.h.b16 %v3714
        %v4222 = vunpack.c.l.b16 %v3715
        %v4223 = vunpack.c.h.b16 %v3715
        %v4224 = vunpack.c.l.b16 %v3716
        %v4225 = vunpack.c.h.b16 %v3716
        %v4226 = vunpack.c.l.b16 %v3717
        %v4227 = vunpack.c.l.b16 %v3718
        %v4228 = vunpack.c.h.b16 %v3718
        %v4229 = vunpack.c.l.b16 %v3719
        %v4230 = vunpack.c.h.b16 %v3719
        %v4231 = vunpack.c.l.b16 %v3720
        %v4232 = vunpack.c.h.b16 %v3720
        %v4233 = vunpack.c.l.b16 %v3721
        %v4234 = vunpack.c.l.b16 %v3722
        %v4235 = vunpack.c.h.b16 %v3722
        %v4236 = vunpack.c.l.b16 %v3723
        %v4237 = vunpack.c.h.b16 %v3723
        %v4238 = vunpack.c.l.b16 %v3724
        %v4239 = vunpack.c.h.b16 %v3724
        %v4240 = vunpack.c.l.b16 %v3725
        %v4241 = vunpack.c.l.b16 %v3726
        %v4242 = vunpack.c.h.b16 %v3726
        %v4243 = vunpack.c.l.b16 %v3727
        %v4244 = vunpack.c.h.b16 %v3727
        %v4245 = vunpack.c.l.b16 %v3728
        %v4246 = vunpack.c.h.b16 %v3728
        %v4247 = vunpack.c.l.b16 %v3729
        %v4248 = vunpack.c.l.b16 %v3730
        %v4249 = vunpack.c.h.b16 %v3730
        %v4250 = vunpack.c.l.b16 %v3731
        %v4251 = vunpack.c.h.b16 %v3731
        %v4252 = vunpack.c.l.b16 %v3732
        %v4253 = vunpack.c.h.b16 %v3732
        %v4254 = vunpack.c.l.b16 %v3733
        %v4255 = vunpack.c.l.b16 %v3734
        %v4256 = vunpack.c.h.b16 %v3734
        %v4257 = vunpack.c.l.b16 %v3735
        %v4258 = vunpack.c.h.b16 %v3735
        %v4259 = vunpack.c.l.b16 %v3736
        %v4260 = vunpack.c.h.b16 %v3736
        %v4261 = vunpack.c.l.b16 %v3737
        %v4262 = vunpack.c.l.b16 %v3738
        %v4263 = vunpack.c.h.b16 %v3738
        %v4264 = vunpack.c.l.b16 %v3739
        %v4265 = vunpack.c.h.b16 %v3739
        %v4266 = vunpack.c.l.b16 %v3740
        %v4267 = vunpack.c.h.b16 %v3740
        %v4268 = vunpack.c.l.b16 %v3741
        %v4269 = vunpack.c.l.b16 %v3742
        %v4270 = vunpack.c.h.b16 %v3742
        %v4271 = vunpack.c.l.b16 %v3743
        %v4272 = vunpack.c.h.b16 %v3743
        %v4273 = vunpack.c.l.b16 %v3744
        %v4274 = vunpack.c.h.b16 %v3744
        %v4275 = vunpack.c.l.b16 %v3745
        %v4276 = vunpack.c.l.b16 %v3746
        %v4277 = vunpack.c.h.b16 %v3746
        %v4278 = vunpack.c.l.b16 %v3747
        %v4279 = vunpack.c.h.b16 %v3747
        %v4280 = vunpack.c.l.b16 %v3748
        %v4281 = vunpack.c.h.b16 %v3748
        %v4282 = vunpack.c.l.b16 %v3749
        %v4283 = vunpack.c.l.b16 %v3750
        %v4284 = vunpack.c.h.b16 %v3750
        %v4285 = vunpack.c.l.b16 %v3751
        %v4286 = vunpack.c.h.b16 %v3751
        %v4287 = vunpack.c.l.b16 %v3752
        %v4288 = vunpack.c.h.b16 %v3752
        %v4289 = vunpack.c.l.b16 %v3753
        %v4290 = vunpack.c.l.b16 %v3754
        %v4291 = vunpack.c.h.b16 %v3754
        %v4292 = vunpack.c.l.b16 %v3755
        %v4293 = vunpack.c.h.b16 %v3755
        %v4294 = vunpack.c.l.b16 %v3756
        %v4295 = vunpack.c.h.b16 %v3756
        %v4296 = vunpack.c.l.b16 %v3757
        %v4297 = vunpack.c.l.b16 %v3758
        %v4298 = vunpack.c.h.b16 %v3758
        %v4299 = vunpack.c.l.b16 %v3759
        %v4300 = vunpack.c.h.b16 %v3759
        %v4301 = vunpack.c.l.b16 %v3760
        %v4302 = vunpack.c.h.b16 %v3760
        %v4303 = vunpack.c.l.b16 %v3761
        %v4304 = vunpack.c.l.b16 %v3762
        %v4305 = vunpack.c.h.b16 %v3762
        %v4306 = vunpack.c.l.b16 %v3763
        %v4307 = vunpack.c.h.b16 %v3763
        %v4308 = vunpack.c.l.b16 %v3764
        %v4309 = vunpack.c.h.b16 %v3764
        %v4310 = vunpack.c.l.b16 %v3765
        %v4311 = vunpack.c.l.b16 %v3766
        %v4312 = vunpack.c.h.b16 %v3766
        %v4313 = vunpack.c.l.b16 %v3767
        %v4314 = vunpack.c.h.b16 %v3767
        %v4315 = vunpack.c.l.b16 %v3768
        %v4316 = vunpack.c.h.b16 %v3768
        %v4317 = vunpack.c.l.b16 %v3769
        %v4318 = vunpack.c.l.b16 %v3770
        %v4319 = vunpack.c.h.b16 %v3770
        %v4320 = vunpack.c.l.b16 %v3771
        %v4321 = vunpack.c.h.b16 %v3771
        %v4322 = vunpack.c.l.b16 %v3772
        %v4323 = vunpack.c.h.b16 %v3772
        %v4324 = vunpack.c.l.b16 %v3773
        %v4325 = vunpack.c.l.b16 %v3774
        %v4326 = vunpack.c.h.b16 %v3774
        %v4327 = vunpack.c.l.b16 %v3775
        %v4328 = vunpack.c.h.b16 %v3775
        %v4329 = vunpack.c.l.b16 %v3776
        %v4330 = vunpack.c.h.b16 %v3776
        %v4331 = vunpack.c.l.b16 %v3777
        %v4332 = vunpack.c.l.b16 %v3778
        %v4333 = vunpack.c.h.b16 %v3778
        %v4334 = vunpack.c.l.b16 %v3779
        %v4335 = vunpack.c.h.b16 %v3779
        %v4336 = vunpack.c.l.b16 %v3780
        %v4337 = vunpack.c.h.b16 %v3780
        %v4338 = vunpack.c.l.b16 %v3781
        %v4339 = vunpack.c.l.b16 %v3782
        %v4340 = vunpack.c.h.b16 %v3782
        %v4341 = vunpack.c.l.b16 %v3783
        %v4342 = vunpack.c.h.b16 %v3783
        %v4343 = vunpack.c.l.b16 %v3784
        %v4344 = vunpack.c.h.b16 %v3784
        %v4345 = vunpack.c.l.b16 %v3785
        %v4346 = vunpack.c.l.b16 %v3786
        %v4347 = vunpack.c.h.b16 %v3786
        %v4348 = vunpack.c.l.b16 %v3787
        %v4349 = vunpack.c.h.b16 %v3787
        %v4350 = vunpack.c.l.b16 %v3788
        %v4351 = vunpack.c.h.b16 %v3788
        %v4352 = vunpack.c.l.b16 %v3789
        %v4353 = vunpack.c.l.b16 %v3790
        %v4354 = vunpack.c.h.b16 %v3790
        %v4355 = vunpack.c.l.b16 %v3791
        %v4356 = vunpack.c.h.b16 %v3791
        %v4357 = vunpack.c.l.b16 %v3792
        %v4358 = vunpack.c.h.b16 %v3792
        %v4359 = vunpack.c.l.b16 %v3793
        %v4360 = vunpack.c.l.b16 %v3794
        %v4361 = vunpack.c.h.b16 %v3794
        %v4362 = vunpack.c.l.b16 %v3795
        %v4363 = vunpack.c.h.b16 %v3795
        %v4364 = vunpack.c.l.b16 %v3796
        %v4365 = vunpack.c.h.b16 %v3796
        %v4366 = vunpack.c.l.b16 %v3797
        %v4367 = vunpack.c.l.b16 %v3798
        %v4368 = vunpack.c.h.b16 %v3798
        %v4369 = vunpack.c.l.b16 %v3799
        %v4370 = vunpack.c.h.b16 %v3799
        %v4371 = vunpack.c.l.b16 %v3800
        %v4372 = vunpack.c.h.b16 %v3800
        %v4373 = vunpack.c.l.b16 %v3801
        %v4374 = vunpack.c.l.b16 %v3802
        %v4375 = vunpack.c.h.b16 %v3802
        %v4376 = vunpack.c.l.b16 %v3803
        %v4377 = vunpack.c.h.b16 %v3803
        %v4378 = vunpack.c.l.b16 %v3804
        %v4379 = vunpack.c.h.b16 %v3804
        %v4380 = vunpack.c.l.b16 %v3805
        %v4381 = vunpack.c.l.b16 %v3806
        %v4382 = vunpack.c.h.b16 %v3806
        %v4383 = vunpack.c.l.b16 %v3807
        %v4384 = vunpack.c.h.b16 %v3807
        %v4385 = vunpack.c.l.b16 %v3808
        %v4386 = vunpack.c.h.b16 %v3808
        %v4387 = vunpack.c.l.b16 %v3809
        %v4388 = vunpack.c.l.b16 %v3810
        %v4389 = vunpack.c.h.b16 %v3810
        %v4390 = vunpack.c.l.b16 %v3811
        %v4391 = vunpack.c.h.b16 %v3811
        %v4392 = vunpack.c.l.b16 %v3812
        %v4393 = vunpack.c.h.b16 %v3812
        %v4394 = vunpack.c.l.b16 %v3813
        %v4395 = vunpack.c.l.b16 %v3814
        %v4396 = vunpack.c.h.b16 %v3814
        %v4397 = vunpack.c.l.b16 %v3815
        %v4398 = vunpack.c.h.b16 %v3815
        %v4399 = vunpack.c.l.b16 %v3816
        %v4400 = vunpack.c.h.b16 %v3816
        %v4401 = vunpack.c.l.b16 %v3817
        %v4402 = vunpack.c.l.b16 %v3818
        %v4403 = vunpack.c.h.b16 %v3818
        %v4404 = vunpack.c.l.b16 %v3819
        %v4405 = vunpack.c.h.b16 %v3819
        %v4406 = vunpack.c.l.b16 %v3820
        %v4407 = vunpack.c.h.b16 %v3820
        %v4408 = vunpack.c.l.b16 %v3821
        %v4409 = vpack.c.b16 %v4066, %v4059
        %v4410 = vpack.c.b16 %v4067, %v4060
        %v4411 = vpack.c.b16 %v4068, %v4061
        %v4412 = vpack.c.b16 %v4069, %v4062
        %v4413 = vpack.c.b16 %v4070, %v4063
        %v4414 = vpack.c.b16 %v4071, %v4064
        %v4415 = vpack.c.b16 %v4072, %v4065
        %v4416 = vpack.c.b16 %v4080, %v4073
        %v4417 = vpack.c.b16 %v4081, %v4074
        %v4418 = vpack.c.b16 %v4082, %v4075
        %v4419 = vpack.c.b16 %v4083, %v4076
        %v4420 = vpack.c.b16 %v4084, %v4077
        %v4421 = vpack.c.b16 %v4085, %v4078
        %v4422 = vpack.c.b16 %v4086, %v4079
        %v4423 = vpack.c.b16 %v4094, %v4087
        %v4424 = vpack.c.b16 %v4095, %v4088
        %v4425 = vpack.c.b16 %v4096, %v4089
        %v4426 = vpack.c.b16 %v4097, %v4090
        %v4427 = vpack.c.b16 %v4098, %v4091
        %v4428 = vpack.c.b16 %v4099, %v4092
        %v4429 = vpack.c.b16 %v4100, %v4093
        %v4430 = vpack.c.b16 %v4108, %v4101
        %v4431 = vpack.c.b16 %v4109, %v4102
        %v4432 = vpack.c.b16 %v4110, %v4103
        %v4433 = vpack.c.b16 %v4111, %v4104
        %v4434 = vpack.c.b16 %v4112, %v4105
        %v4435 = vpack.c.b16 %v4113, %v4106
        %v4436 = vpack.c.b16 %v4114, %v4107
        %v4437 = vpack.c.b16 %v4122, %v4115
        %v4438 = vpack.c.b16 %v4123, %v4116
        %v4439 = vpack.c.b16 %v4124, %v4117
        %v4440 = vpack.c.b16 %v4125, %v4118
        %v4441 = vpack.c.b16 %v4126, %v4119
        %v4442 = vpack.c.b16 %v4127, %v4120
        %v4443 = vpack.c.b16 %v4128, %v4121
        %v4444 = vpack.c.b16 %v4136, %v4129
        %v4445 = vpack.c.b16 %v4137, %v4130
        %v4446 = vpack.c.b16 %v4138, %v4131
        %v4447 = vpack.c.b16 %v4139, %v4132
        %v4448 = vpack.c.b16 %v4140, %v4133
        %v4449 = vpack.c.b16 %v4141, %v4134
        %v4450 = vpack.c.b16 %v4142, %v4135
        %v4451 = vpack.c.b16 %v4150, %v4143
        %v4452 = vpack.c.b16 %v4151, %v4144
        %v4453 = vpack.c.b16 %v4152, %v4145
        %v4454 = vpack.c.b16 %v4153, %v4146
        %v4455 = vpack.c.b16 %v4154, %v4147
        %v4456 = vpack.c.b16 %v4155, %v4148
        %v4457 = vpack.c.b16 %v4156, %v4149
        %v4458 = vpack.c.b16 %v4164, %v4157
        %v4459 = vpack.c.b16 %v4165, %v4158
        %v4460 = vpack.c.b16 %v4166, %v4159
        %v4461 = vpack.c.b16 %v4167, %v4160
        %v4462 = vpack.c.b16 %v4168, %v4161
        %v4463 = vpack.c.b16 %v4169, %v4162
        %v4464 = vpack.c.b16 %v4170, %v4163
        %v4465 = vpack.c.b16 %v4178, %v4171
        %v4466 = vpack.c.b16 %v4179, %v4172
        %v4467 = vpack.c.b16 %v4180, %v4173
        %v4468 = vpack.c.b16 %v4181, %v4174
        %v4469 = vpack.c.b16 %v4182, %v4175
        %v4470 = vpack.c.b16 %v4183, %v4176
        %v4471 = vpack.c.b16 %v4184, %v4177
        %v4472 = vpack.c.b16 %v4192, %v4185
        %v4473 = vpack.c.b16 %v4193, %v4186
        %v4474 = vpack.c.b16 %v4194, %v4187
        %v4475 = vpack.c.b16 %v4195, %v4188
        %v4476 = vpack.c.b16 %v4196, %v4189
        %v4477 = vpack.c.b16 %v4197, %v4190
        %v4478 = vpack.c.b16 %v4198, %v4191
        %v4479 = vpack.c.b16 %v4206, %v4199
        %v4480 = vpack.c.b16 %v4207, %v4200
        %v4481 = vpack.c.b16 %v4208, %v4201
        %v4482 = vpack.c.b16 %v4209, %v4202
        %v4483 = vpack.c.b16 %v4210, %v4203
        %v4484 = vpack.c.b16 %v4211, %v4204
        %v4485 = vpack.c.b16 %v4212, %v4205
        %v4486 = vpack.c.b16 %v4220, %v4213
        %v4487 = vpack.c.b16 %v4221, %v4214
        %v4488 = vpack.c.b16 %v4222, %v4215
        %v4489 = vpack.c.b16 %v4223, %v4216
        %v4490 = vpack.c.b16 %v4224, %v4217
        %v4491 = vpack.c.b16 %v4225, %v4218
        %v4492 = vpack.c.b16 %v4226, %v4219
        %v4493 = vpack.c.b16 %v4234, %v4227
        %v4494 = vpack.c.b16 %v4235, %v4228
        %v4495 = vpack.c.b16 %v4236, %v4229
        %v4496 = vpack.c.b16 %v4237, %v4230
        %v4497 = vpack.c.b16 %v4238, %v4231
        %v4498 = vpack.c.b16 %v4239, %v4232
        %v4499 = vpack.c.b16 %v4240, %v4233
        %v4500 = vpack.c.b16 %v4248, %v4241
        %v4501 = vpack.c.b16 %v4249, %v4242
        %v4502 = vpack.c.b16 %v4250, %v4243
        %v4503 = vpack.c.b16 %v4251, %v4244
        %v4504 = vpack.c.b16 %v4252, %v4245
        %v4505 = vpack.c.b16 %v4253, %v4246
        %v4506 = vpack.c.b16 %v4254, %v4247
        %v4507 = vpack.c.b16 %v4262, %v4255
        %v4508 = vpack.c.b16 %v4263, %v4256
        %v4509 = vpack.c.b16 %v4264, %v4257
        %v4510 = vpack.c.b16 %v4265, %v4258
        %v4511 = vpack.c.b16 %v4266, %v4259
        %v4512 = vpack.c.b16 %v4267, %v4260
        %v4513 = vpack.c.b16 %v4268, %v4261
        %v4514 = vpack.c.b16 %v4276, %v4269
        %v4515 = vpack.c.b16 %v4277, %v4270
        %v4516 = vpack.c.b16 %v4278, %v4271
        %v4517 = vpack.c.b16 %v4279, %v4272
        %v4518 = vpack.c.b16 %v4280, %v4273
        %v4519 = vpack.c.b16 %v4281, %v4274
        %v4520 = vpack.c.b16 %v4282, %v4275
        %v4521 = vpack.c.b16 %v4290, %v4283
        %v4522 = vpack.c.b16 %v4291, %v4284
        %v4523 = vpack.c.b16 %v4292, %v4285
        %v4524 = vpack.c.b16 %v4293, %v4286
        %v4525 = vpack.c.b16 %v4294, %v4287
        %v4526 = vpack.c.b16 %v4295, %v4288
        %v4527 = vpack.c.b16 %v4296, %v4289
        %v4528 = vpack.c.b16 %v4304, %v4297
        %v4529 = vpack.c.b16 %v4305, %v4298
        %v4530 = vpack.c.b16 %v4306, %v4299
        %v4531 = vpack.c.b16 %v4307, %v4300
        %v4532 = vpack.c.b16 %v4308, %v4301
        %v4533 = vpack.c.b16 %v4309, %v4302
        %v4534 = vpack.c.b16 %v4310, %v4303
        %v4535 = vpack.c.b16 %v4318, %v4311
        %v4536 = vpack.c.b16 %v4319, %v4312
        %v4537 = vpack.c.b16 %v4320, %v4313
        %v4538 = vpack.c.b16 %v4321, %v4314
        %v4539 = vpack.c.b16 %v4322, %v4315
        %v4540 = vpack.c.b16 %v4323, %v4316
        %v4541 = vpack.c.b16 %v4324, %v4317
        %v4542 = vpack.c.b16 %v4332, %v4325
        %v4543 = vpack.c.b16 %v4333, %v4326
        %v4544 = vpack.c.b16 %v4334, %v4327
        %v4545 = vpack.c.b16 %v4335, %v4328
        %v4546 = vpack.c.b16 %v4336, %v4329
        %v4547 = vpack.c.b16 %v4337, %v4330
        %v4548 = vpack.c.b16 %v4338, %v4331
        %v4549 = vpack.c.b16 %v4346, %v4339
        %v4550 = vpack.c.b16 %v4347, %v4340
        %v4551 = vpack.c.b16 %v4348, %v4341
        %v4552 = vpack.c.b16 %v4349, %v4342
        %v4553 = vpack.c.b16 %v4350, %v4343
        %v4554 = vpack.c.b16 %v4351, %v4344
        %v4555 = vpack.c.b16 %v4352, %v4345
        %v4556 = vpack.c.b16 %v4360, %v4353
        %v4557 = vpack.c.b16 %v4361, %v4354
        %v4558 = vpack.c.b16 %v4362, %v4355
        %v4559 = vpack.c.b16 %v4363, %v4356
        %v4560 = vpack.c.b16 %v4364, %v4357
        %v4561 = vpack.c.b16 %v4365, %v4358
        %v4562 = vpack.c.b16 %v4366, %v4359
        %v4563 = vpack.c.b16 %v4374, %v4367
        %v4564 = vpack.c.b16 %v4375, %v4368
        %v4565 = vpack.c.b16 %v4376, %v4369
        %v4566 = vpack.c.b16 %v4377, %v4370
        %v4567 = vpack.c.b16 %v4378, %v4371
        %v4568 = vpack.c.b16 %v4379, %v4372
        %v4569 = vpack.c.b16 %v4380, %v4373
        %v4570 = vpack.c.b16 %v4388, %v4381
        %v4571 = vpack.c.b16 %v4389, %v4382
        %v4572 = vpack.c.b16 %v4390, %v4383
        %v4573 = vpack.c.b16 %v4391, %v4384
        %v4574 = vpack.c.b16 %v4392, %v4385
        %v4575 = vpack.c.b16 %v4393, %v4386
        %v4576 = vpack.c.b16 %v4394, %v4387
        %v4577 = vpack.c.b16 %v4402, %v4395
        %v4578 = vpack.c.b16 %v4403, %v4396
        %v4579 = vpack.c.b16 %v4404, %v4397
        %v4580 = vpack.c.b16 %v4405, %v4398
        %v4581 = vpack.c.b16 %v4406, %v4399
        %v4582 = vpack.c.b16 %v4407, %v4400
        %v4583 = vpack.c.b16 %v4408, %v4401
        %v4760 = vsel %vm3250, %v3621, 0
        %4762 = vmatprep.subr.bf16.mxu0 %v4459
        %4763 = vmatpush1.bf16.msra.mxu0 %v4458
        %4764 = vmatprep.subr.bf16.mxu0 %v4452
        %4765 = vmatpush1.bf16.msra.mxu0 %v4451
        %4766 = vmatprep.subr.bf16.mxu0 %v4445
        %4767 = vmatpush1.bf16.msra.mxu0 %v4444
        %4768 = vmatprep.subr.bf16.mxu0 %v4438
        %4769 = vmatpush1.bf16.msra.mxu0 %v4437
        %4770 = vmatprep.subr.bf16.mxu0 %v4431
        %4771 = vmatpush1.bf16.msra.mxu0 %v4430
        %4772 = vmatprep.subr.bf16.mxu0 %v4424
        %4773 = vmatpush1.bf16.msra.mxu0 %v4423
        %4774 = vmatprep.subr.bf16.mxu0 %v4417
        %4775 = vmatpush1.bf16.msra.mxu0 %v4416
        %4776 = vmatprep.subr.bf16.mxu0 %v4410
        %4777 = vmatpush1.bf16.msra.mxu0 %v4409
        %4778 = vmatprep.subr.bf16.mxu0 %v4515
        %4779 = vmatpush2.bf16.msra.mxu0 %v4514
        %4780 = vmatprep.subr.bf16.mxu0 %v4508
        %4781 = vmatpush2.bf16.msra.mxu0 %v4507
        %4782 = vmatprep.subr.bf16.mxu0 %v4501
        %4783 = vmatpush2.bf16.msra.mxu0 %v4500
        %4784 = vmatprep.subr.bf16.mxu0 %v4494
        %4785 = vmatpush2.bf16.msra.mxu0 %v4493
        %4786 = vmatprep.subr.bf16.mxu0 %v4487
        %4787 = vmatpush2.bf16.msra.mxu0 %v4486
        %4788 = vmatprep.subr.bf16.mxu0 %v4480
        %4789 = vmatpush2.bf16.msra.mxu0 %v4479
        %4790 = vmatprep.subr.bf16.mxu0 %v4473
        %4791 = vmatpush2.bf16.msra.mxu0 %v4472
        %4792 = vmatprep.subr.bf16.mxu0 %v4466
        %4793 = vmatpush2.bf16.msra.mxu0 %v4465
        %4794 = vmatprep.mubr.bf16.mxu0 %v3619
        %4795 = vmatmul.mubr.bf16.gmra.mxu0 %v3618
        %v4796 = vpop.f32.mrf.mxu0
        %v4797 = vadd.f32 %v3827, %v4796
        %v4798 = vpop.f32.mrf.mxu0
        %v4799 = vadd.f32 %v3831, %v4798
        %v4800 = vpop.f32.mrf.mxu0
        %v4801 = vadd.f32 %v3827, %v4800
        %v4802 = vpop.f32.mrf.mxu0
        %v4803 = vadd.f32 %v3831, %v4802
        %4804 = vdwg.mxu0
        %4805 = vmatprep.subr.bf16.mxu0 %v4571
        %4806 = vmatpush1.bf16.msra.mxu0 %v4570
        %4807 = vmatprep.subr.bf16.mxu0 %v4564
        %4808 = vmatpush1.bf16.msra.mxu0 %v4563
        %4809 = vmatprep.subr.bf16.mxu0 %v4557
        %4810 = vmatpush1.bf16.msra.mxu0 %v4556
        %4811 = vmatprep.subr.bf16.mxu0 %v4550
        %4812 = vmatpush1.bf16.msra.mxu0 %v4549
        %4813 = vmatprep.subr.bf16.mxu0 %v4543
        %4814 = vmatpush1.bf16.msra.mxu0 %v4542
        %4815 = vmatprep.subr.bf16.mxu0 %v4536
        %4816 = vmatpush1.bf16.msra.mxu0 %v4535
        %4817 = vmatprep.subr.bf16.mxu0 %v4529
        %4818 = vmatpush1.bf16.msra.mxu0 %v4528
        %4819 = vmatprep.subr.bf16.mxu0 %v4522
        %4820 = vmatpush1.bf16.msra.mxu0 %v4521
        %4821 = vmatprep.subr.bf16.mxu0 0
        %4822 = vmatpush2.bf16.msra.mxu0 0
        %4823 = vmatprep.subr.bf16.mxu0 0
        %4824 = vmatpush2.bf16.msra.mxu0 0
        %4825 = vmatprep.subr.bf16.mxu0 0
        %4826 = vmatpush2.bf16.msra.mxu0 0
        %4827 = vmatprep.subr.bf16.mxu0 0
        %4828 = vmatpush2.bf16.msra.mxu0 0
        %4829 = vmatprep.subr.bf16.mxu0 0
        %4830 = vmatpush2.bf16.msra.mxu0 0
        %4831 = vmatprep.subr.bf16.mxu0 0
        %4832 = vmatpush2.bf16.msra.mxu0 0
        %4833 = vmatprep.subr.bf16.mxu0 0
        %4834 = vmatpush2.bf16.msra.mxu0 0
        %4835 = vmatprep.subr.bf16.mxu0 %v4578
        %4836 = vmatpush2.bf16.msra.mxu0 %v4577
        %4837 = vmatprep.mubr.bf16.mxu0 %v4760
        %4838 = vmatmul.mubr.bf16.gmra.mxu0 %v3620
        %v4839 = vpop.f32.mrf.mxu0
        %v4840 = vadd.f32 %v4797, %v4839
        %v4841 = vpop.f32.mrf.mxu0
        %v4842 = vadd.f32 %v4799, %v4841
        %v4843 = vpop.f32.mrf.mxu0
        %v4844 = vadd.f32 %v4801, %v4843
        %v4845 = vpop.f32.mrf.mxu0
        %v4846 = vadd.f32 %v4803, %v4845
        %4847 = vdwg.mxu0
        %4848 = vmatprep.subr.bf16.mxu0 %v4461
        %4849 = vmatpush1.bf16.msra.mxu0 %v4460
        %4850 = vmatprep.subr.bf16.mxu0 %v4454
        %4851 = vmatpush1.bf16.msra.mxu0 %v4453
        %4852 = vmatprep.subr.bf16.mxu0 %v4447
        %4853 = vmatpush1.bf16.msra.mxu0 %v4446
        %4854 = vmatprep.subr.bf16.mxu0 %v4440
        %4855 = vmatpush1.bf16.msra.mxu0 %v4439
        %4856 = vmatprep.subr.bf16.mxu0 %v4433
        %4857 = vmatpush1.bf16.msra.mxu0 %v4432
        %4858 = vmatprep.subr.bf16.mxu0 %v4426
        %4859 = vmatpush1.bf16.msra.mxu0 %v4425
        %4860 = vmatprep.subr.bf16.mxu0 %v4419
        %4861 = vmatpush1.bf16.msra.mxu0 %v4418
        %4862 = vmatprep.subr.bf16.mxu0 %v4412
        %4863 = vmatpush1.bf16.msra.mxu0 %v4411
        %4864 = vmatprep.subr.bf16.mxu0 %v4517
        %4865 = vmatpush2.bf16.msra.mxu0 %v4516
        %4866 = vmatprep.subr.bf16.mxu0 %v4510
        %4867 = vmatpush2.bf16.msra.mxu0 %v4509
        %4868 = vmatprep.subr.bf16.mxu0 %v4503
        %4869 = vmatpush2.bf16.msra.mxu0 %v4502
        %4870 = vmatprep.subr.bf16.mxu0 %v4496
        %4871 = vmatpush2.bf16.msra.mxu0 %v4495
        %4872 = vmatprep.subr.bf16.mxu0 %v4489
        %4873 = vmatpush2.bf16.msra.mxu0 %v4488
        %4874 = vmatprep.subr.bf16.mxu0 %v4482
        %4875 = vmatpush2.bf16.msra.mxu0 %v4481
        %4876 = vmatprep.subr.bf16.mxu0 %v4475
        %4877 = vmatpush2.bf16.msra.mxu0 %v4474
        %4878 = vmatprep.subr.bf16.mxu0 %v4468
        %4879 = vmatpush2.bf16.msra.mxu0 %v4467
        %4880 = vmatprep.mubr.bf16.mxu0 %v3619
        %4881 = vmatmul.mubr.bf16.gmra.mxu0 %v3618
        %v4882 = vpop.f32.mrf.mxu0
        %v4883 = vadd.f32 %v3835, %v4882
        %v4884 = vpop.f32.mrf.mxu0
        %v4885 = vadd.f32 %v3839, %v4884
        %v4886 = vpop.f32.mrf.mxu0
        %v4887 = vadd.f32 %v3835, %v4886
        %v4888 = vpop.f32.mrf.mxu0
        %v4889 = vadd.f32 %v3839, %v4888
        %4890 = vdwg.mxu0
        %4891 = vmatprep.subr.bf16.mxu0 %v4573
        %4892 = vmatpush1.bf16.msra.mxu0 %v4572
        %4893 = vmatprep.subr.bf16.mxu0 %v4566
        %4894 = vmatpush1.bf16.msra.mxu0 %v4565
        %4895 = vmatprep.subr.bf16.mxu0 %v4559
        %4896 = vmatpush1.bf16.msra.mxu0 %v4558
        %4897 = vmatprep.subr.bf16.mxu0 %v4552
        %4898 = vmatpush1.bf16.msra.mxu0 %v4551
        %4899 = vmatprep.subr.bf16.mxu0 %v4545
        %4900 = vmatpush1.bf16.msra.mxu0 %v4544
        %4901 = vmatprep.subr.bf16.mxu0 %v4538
        %4902 = vmatpush1.bf16.msra.mxu0 %v4537
        %4903 = vmatprep.subr.bf16.mxu0 %v4531
        %4904 = vmatpush1.bf16.msra.mxu0 %v4530
        %4905 = vmatprep.subr.bf16.mxu0 %v4524
        %4906 = vmatpush1.bf16.msra.mxu0 %v4523
        %4907 = vmatprep.subr.bf16.mxu0 0
        %4908 = vmatpush2.bf16.msra.mxu0 0
        %4909 = vmatprep.subr.bf16.mxu0 0
        %4910 = vmatpush2.bf16.msra.mxu0 0
        %4911 = vmatprep.subr.bf16.mxu0 0
        %4912 = vmatpush2.bf16.msra.mxu0 0
        %4913 = vmatprep.subr.bf16.mxu0 0
        %4914 = vmatpush2.bf16.msra.mxu0 0
        %4915 = vmatprep.subr.bf16.mxu0 0
        %4916 = vmatpush2.bf16.msra.mxu0 0
        %4917 = vmatprep.subr.bf16.mxu0 0
        %4918 = vmatpush2.bf16.msra.mxu0 0
        %4919 = vmatprep.subr.bf16.mxu0 0
        %4920 = vmatpush2.bf16.msra.mxu0 0
        %4921 = vmatprep.subr.bf16.mxu0 %v4580
        %4922 = vmatpush2.bf16.msra.mxu0 %v4579
        %4923 = vmatprep.mubr.bf16.mxu0 %v4760
        %4924 = vmatmul.mubr.bf16.gmra.mxu0 %v3620
        %v4925 = vpop.f32.mrf.mxu0
        %v4926 = vadd.f32 %v4883, %v4925
        %v4927 = vpop.f32.mrf.mxu0
        %v4928 = vadd.f32 %v4885, %v4927
        %v4929 = vpop.f32.mrf.mxu0
        %v4930 = vadd.f32 %v4887, %v4929
        %v4931 = vpop.f32.mrf.mxu0
        %v4932 = vadd.f32 %v4889, %v4931
        %4933 = vdwg.mxu0
        %4934 = vmatprep.subr.bf16.mxu0 %v4463
        %4935 = vmatpush1.bf16.msra.mxu0 %v4462
        %4936 = vmatprep.subr.bf16.mxu0 %v4456
        %4937 = vmatpush1.bf16.msra.mxu0 %v4455
        %4938 = vmatprep.subr.bf16.mxu0 %v4449
        %4939 = vmatpush1.bf16.msra.mxu0 %v4448
        %4940 = vmatprep.subr.bf16.mxu0 %v4442
        %4941 = vmatpush1.bf16.msra.mxu0 %v4441
        %4942 = vmatprep.subr.bf16.mxu0 %v4435
        %4943 = vmatpush1.bf16.msra.mxu0 %v4434
        %4944 = vmatprep.subr.bf16.mxu0 %v4428
        %4945 = vmatpush1.bf16.msra.mxu0 %v4427
        %4946 = vmatprep.subr.bf16.mxu0 %v4421
        %4947 = vmatpush1.bf16.msra.mxu0 %v4420
        %4948 = vmatprep.subr.bf16.mxu0 %v4414
        %4949 = vmatpush1.bf16.msra.mxu0 %v4413
        %4950 = vmatprep.subr.bf16.mxu0 %v4519
        %4951 = vmatpush2.bf16.msra.mxu0 %v4518
        %4952 = vmatprep.subr.bf16.mxu0 %v4512
        %4953 = vmatpush2.bf16.msra.mxu0 %v4511
        %4954 = vmatprep.subr.bf16.mxu0 %v4505
        %4955 = vmatpush2.bf16.msra.mxu0 %v4504
        %4956 = vmatprep.subr.bf16.mxu0 %v4498
        %4957 = vmatpush2.bf16.msra.mxu0 %v4497
        %4958 = vmatprep.subr.bf16.mxu0 %v4491
        %4959 = vmatpush2.bf16.msra.mxu0 %v4490
        %4960 = vmatprep.subr.bf16.mxu0 %v4484
        %4961 = vmatpush2.bf16.msra.mxu0 %v4483
        %4962 = vmatprep.subr.bf16.mxu0 %v4477
        %4963 = vmatpush2.bf16.msra.mxu0 %v4476
        %4964 = vmatprep.subr.bf16.mxu0 %v4470
        %4965 = vmatpush2.bf16.msra.mxu0 %v4469
        %4966 = vmatprep.mubr.bf16.mxu0 %v3619
        %4967 = vmatmul.mubr.bf16.gmra.mxu0 %v3618
        %v4968 = vpop.f32.mrf.mxu0
        %v4969 = vadd.f32 %v3843, %v4968
        %v4970 = vpop.f32.mrf.mxu0
        %v4971 = vadd.f32 %v3847, %v4970
        %v4972 = vpop.f32.mrf.mxu0
        %v4973 = vadd.f32 %v3843, %v4972
        %v4974 = vpop.f32.mrf.mxu0
        %v4975 = vadd.f32 %v3847, %v4974
        %4976 = vdwg.mxu0
        %4977 = vmatprep.subr.bf16.mxu0 %v4575
        %4978 = vmatpush1.bf16.msra.mxu0 %v4574
        %4979 = vmatprep.subr.bf16.mxu0 %v4568
        %4980 = vmatpush1.bf16.msra.mxu0 %v4567
        %4981 = vmatprep.subr.bf16.mxu0 %v4561
        %4982 = vmatpush1.bf16.msra.mxu0 %v4560
        %4983 = vmatprep.subr.bf16.mxu0 %v4554
        %4984 = vmatpush1.bf16.msra.mxu0 %v4553
        %4985 = vmatprep.subr.bf16.mxu0 %v4547
        %4986 = vmatpush1.bf16.msra.mxu0 %v4546
        %4987 = vmatprep.subr.bf16.mxu0 %v4540
        %4988 = vmatpush1.bf16.msra.mxu0 %v4539
        %4989 = vmatprep.subr.bf16.mxu0 %v4533
        %4990 = vmatpush1.bf16.msra.mxu0 %v4532
        %4991 = vmatprep.subr.bf16.mxu0 %v4526
        %4992 = vmatpush1.bf16.msra.mxu0 %v4525
        %4993 = vmatprep.subr.bf16.mxu0 0
        %4994 = vmatpush2.bf16.msra.mxu0 0
        %4995 = vmatprep.subr.bf16.mxu0 0
        %4996 = vmatpush2.bf16.msra.mxu0 0
        %4997 = vmatprep.subr.bf16.mxu0 0
        %4998 = vmatpush2.bf16.msra.mxu0 0
        %4999 = vmatprep.subr.bf16.mxu0 0
        %5000 = vmatpush2.bf16.msra.mxu0 0
        %5001 = vmatprep.subr.bf16.mxu0 0
        %5002 = vmatpush2.bf16.msra.mxu0 0
        %5003 = vmatprep.subr.bf16.mxu0 0
        %5004 = vmatpush2.bf16.msra.mxu0 0
        %5005 = vmatprep.subr.bf16.mxu0 0
        %5006 = vmatpush2.bf16.msra.mxu0 0
        %5007 = vmatprep.subr.bf16.mxu0 %v4582
        %5008 = vmatpush2.bf16.msra.mxu0 %v4581
        %5009 = vmatprep.mubr.bf16.mxu0 %v4760
        %5010 = vmatmul.mubr.bf16.gmra.mxu0 %v3620
        %v5011 = vpop.f32.mrf.mxu0
        %v5012 = vadd.f32 %v4969, %v5011
        %v5013 = vpop.f32.mrf.mxu0
        %v5014 = vadd.f32 %v4971, %v5013
        %v5015 = vpop.f32.mrf.mxu0
        %v5016 = vadd.f32 %v4973, %v5015
        %v5017 = vpop.f32.mrf.mxu0
        %v5018 = vadd.f32 %v4975, %v5017
        %5019 = vdwg.mxu0
        %5020 = vmatprep.subr.bf16.mxu0 0
        %5021 = vmatpush1.bf16.msra.mxu0 %v4464
        %5022 = vmatprep.subr.bf16.mxu0 0
        %5023 = vmatpush1.bf16.msra.mxu0 %v4457
        %5024 = vmatprep.subr.bf16.mxu0 0
        %5025 = vmatpush1.bf16.msra.mxu0 %v4450
        %5026 = vmatprep.subr.bf16.mxu0 0
        %5027 = vmatpush1.bf16.msra.mxu0 %v4443
        %5028 = vmatprep.subr.bf16.mxu0 0
        %5029 = vmatpush1.bf16.msra.mxu0 %v4436
        %5030 = vmatprep.subr.bf16.mxu0 0
        %5031 = vmatpush1.bf16.msra.mxu0 %v4429
        %5032 = vmatprep.subr.bf16.mxu0 0
        %5033 = vmatpush1.bf16.msra.mxu0 %v4422
        %5034 = vmatprep.subr.bf16.mxu0 0
        %5035 = vmatpush1.bf16.msra.mxu0 %v4415
        %5036 = vmatprep.subr.bf16.mxu0 0
        %5037 = vmatpush2.bf16.msra.mxu0 %v4520
        %5038 = vmatprep.subr.bf16.mxu0 0
        %5039 = vmatpush2.bf16.msra.mxu0 %v4513
        %5040 = vmatprep.subr.bf16.mxu0 0
        %5041 = vmatpush2.bf16.msra.mxu0 %v4506
        %5042 = vmatprep.subr.bf16.mxu0 0
        %5043 = vmatpush2.bf16.msra.mxu0 %v4499
        %5044 = vmatprep.subr.bf16.mxu0 0
        %5045 = vmatpush2.bf16.msra.mxu0 %v4492
        %5046 = vmatprep.subr.bf16.mxu0 0
        %5047 = vmatpush2.bf16.msra.mxu0 %v4485
        %5048 = vmatprep.subr.bf16.mxu0 0
        %5049 = vmatpush2.bf16.msra.mxu0 %v4478
        %5050 = vmatprep.subr.bf16.mxu0 0
        %5051 = vmatpush2.bf16.msra.mxu0 %v4471
        %5052 = vmatprep.mubr.bf16.mxu0 %v3619
        %5053 = vmatmul.mubr.bf16.gmra.mxu0 %v3618
        %v5054 = vpop.f32.mrf.mxu0
        %v5055 = vadd.f32 %v3851, %v5054
        %v5056 = vpop.f32.mrf.mxu0
        %v5057 = vpop.f32.mrf.mxu0
        %v5058 = vadd.f32 %v3851, %v5057
        %v5059 = vpop.f32.mrf.mxu0
        %5060 = vdwg.mxu0
        %5061 = vmatprep.subr.bf16.mxu0 0
        %5062 = vmatpush1.bf16.msra.mxu0 %v4576
        %5063 = vmatprep.subr.bf16.mxu0 0
        %5064 = vmatpush1.bf16.msra.mxu0 %v4569
        %5065 = vmatprep.subr.bf16.mxu0 0
        %5066 = vmatpush1.bf16.msra.mxu0 %v4562
        %5067 = vmatprep.subr.bf16.mxu0 0
        %5068 = vmatpush1.bf16.msra.mxu0 %v4555
        %5069 = vmatprep.subr.bf16.mxu0 0
        %5070 = vmatpush1.bf16.msra.mxu0 %v4548
        %5071 = vmatprep.subr.bf16.mxu0 0
        %5072 = vmatpush1.bf16.msra.mxu0 %v4541
        %5073 = vmatprep.subr.bf16.mxu0 0
        %5074 = vmatpush1.bf16.msra.mxu0 %v4534
        %5075 = vmatprep.subr.bf16.mxu0 0
        %5076 = vmatpush1.bf16.msra.mxu0 %v4527
        %5077 = vmatprep.subr.bf16.mxu0 0
        %5078 = vmatpush2.bf16.msra.mxu0 0
        %5079 = vmatprep.subr.bf16.mxu0 0
        %5080 = vmatpush2.bf16.msra.mxu0 0
        %5081 = vmatprep.subr.bf16.mxu0 0
        %5082 = vmatpush2.bf16.msra.mxu0 0
        %5083 = vmatprep.subr.bf16.mxu0 0
        %5084 = vmatpush2.bf16.msra.mxu0 0
        %5085 = vmatprep.subr.bf16.mxu0 0
        %5086 = vmatpush2.bf16.msra.mxu0 0
        %5087 = vmatprep.subr.bf16.mxu0 0
        %5088 = vmatpush2.bf16.msra.mxu0 0
        %5089 = vmatprep.subr.bf16.mxu0 0
        %5090 = vmatpush2.bf16.msra.mxu0 0
        %5091 = vmatprep.subr.bf16.mxu0 0
        %5092 = vmatpush2.bf16.msra.mxu0 %v4583
        %5093 = vmatprep.mubr.bf16.mxu0 %v4760
        %5094 = vmatmul.mubr.bf16.gmra.mxu0 %v3620
        %v5095 = vpop.f32.mrf.mxu0
        %v5096 = vadd.f32 %v5055, %v5095
        %v5097 = vpop.f32.mrf.mxu0
        %v5098 = vpop.f32.mrf.mxu0
        %v5099 = vadd.f32 %v5058, %v5098
        %v5100 = vpop.f32.mrf.mxu0
        %5101 = vdwg.mxu0
        %v5102 = vmax.f32 %v4840, 0.0
        %v5103 = vmax.f32 %v4842, 0.0
        %v5104 = vmax.f32 %v4926, 0.0
        %v5105 = vmax.f32 %v4928, 0.0
        %v5106 = vmax.f32 %v5012, 0.0
        %v5107 = vmax.f32 %v5014, 0.0
        %v5108 = vmax.f32 %v5096, 0.0
        %v5109 = vmax.f32 %v4844, 0.0
        %v5110 = vmax.f32 %v4846, 0.0
        %v5111 = vmax.f32 %v4930, 0.0
        %v5112 = vmax.f32 %v4932, 0.0
        %v5113 = vmax.f32 %v5016, 0.0
        %v5114 = vmax.f32 %v5018, 0.0
        %v5115 = vmax.f32 %v5099, 0.0
        %v5116 = vpack.c.bf16 %v5109, %v5102
        %v5117 = vpack.c.bf16 %v5110, %v5103
        %v5118 = vpack.c.bf16 %v5111, %v5104
        %v5119 = vpack.c.bf16 %v5112, %v5105
        %v5120 = vpack.c.bf16 %v5113, %v5106
        %v5121 = vpack.c.bf16 %v5114, %v5107
        %v5122 = vpack.c.bf16 %v5115, %v5108
        %v5123 = vld [vmem:[%s15] sm:$0xf]
        %v5124 = vld [vmem:[%s15 + $0x4] sm:$0xf]
        %v5125 = vld [vmem:[%s15 + $0x8] sm:$0xf]
        %v5126 = vld [vmem:[%s15 + $0xc] sm:$0xf]
        %v5127 = vld [vmem:[%s15 + $0x10] sm:$0xf]
        %v5128 = vld [vmem:[%s15 + $0x14] sm:$0xf]
        %v5129 = vld [vmem:[%s15 + $0x18] sm:$0xf]
        %v5130 = vld [vmem:[%s15 + $0x1c] sm:$0xf]
        %v5131 = vld [vmem:[%s15 + $0x20] sm:$0xf]
        %v5132 = vld [vmem:[%s15 + $0x24] sm:$0xf]
        %v5133 = vld [vmem:[%s15 + $0x28] sm:$0xf]
        %v5134 = vld [vmem:[%s15 + $0x2c] sm:$0xf]
        %v5135 = vld [vmem:[%s15 + $0x30] sm:$0xf]
        %v5136 = vld [vmem:[%s15 + $0x34] sm:$0xf]
        %v5137 = vld [vmem:[%s15 + $0x38] sm:$0xf]
        %v5138 = vld [vmem:[%s15 + $0x3c] sm:$0xf]
        %v5139 = vld [vmem:[%s15 + $0x40] sm:$0xf]
        %v5140 = vld [vmem:[%s15 + $0x44] sm:$0xf]
        %v5141 = vld [vmem:[%s15 + $0x48] sm:$0xf]
        %v5142 = vld [vmem:[%s15 + $0x4c] sm:$0xf]
        %v5143 = vld [vmem:[%s15 + $0x50] sm:$0xf]
        %v5144 = vld [vmem:[%s15 + $0x54] sm:$0xf]
        %v5145 = vld [vmem:[%s15 + $0x58] sm:$0xf]
        %v5146 = vld [vmem:[%s15 + $0x5c] sm:$0xf]
        %v5147 = vld [vmem:[%s15 + $0x60] sm:$0xf]
        %v5148 = vld [vmem:[%s15 + $0x64] sm:$0xf]
        %v5149 = vld [vmem:[%s15 + $0x68] sm:$0xf]
        %v5150 = vld [vmem:[%s15 + $0x6c] sm:$0xf]
        %v5151 = vld [vmem:[%s15 + $0x70] sm:$0xf]
        %v5152 = vld [vmem:[%s15 + $0x74] sm:$0xf]
        %v5153 = vld [vmem:[%s15 + $0x78] sm:$0xf]
        %v5154 = vld [vmem:[%s15 + $0x7c] sm:$0xf]
        %v5155 = vld [vmem:[%s15 + $0x80] sm:$0xf]
        %v5156 = vld [vmem:[%s15 + $0x84] sm:$0xf]
        %v5157 = vld [vmem:[%s15 + $0x88] sm:$0xf]
        %v5158 = vld [vmem:[%s15 + $0x8c] sm:$0xf]
        %v5159 = vld [vmem:[%s15 + $0x90] sm:$0xf]
        %v5160 = vld [vmem:[%s15 + $0x94] sm:$0xf]
        %v5161 = vld [vmem:[%s15 + $0x98] sm:$0xf]
        %v5162 = vld [vmem:[%s15 + $0x9c] sm:$0xf]
        %v5163 = vld [vmem:[%s15 + $0xa0] sm:$0xf]
        %v5164 = vld [vmem:[%s15 + $0xa4] sm:$0xf]
        %v5165 = vld [vmem:[%s15 + $0xa8] sm:$0xf]
        %v5166 = vld [vmem:[%s15 + $0xac] sm:$0xf]
        %v5167 = vld [vmem:[%s15 + $0xb0] sm:$0xf]
        %v5168 = vld [vmem:[%s15 + $0xb4] sm:$0xf]
        %v5169 = vld [vmem:[%s15 + $0xb8] sm:$0xf]
        %v5170 = vld [vmem:[%s15 + $0xbc] sm:$0xf]
        %v5171 = vld [vmem:[%s15 + $0xc0] sm:$0xf]
        %v5172 = vld [vmem:[%s15 + $0xc4] sm:$0xf]
        %v5173 = vld [vmem:[%s15 + $0xc8] sm:$0xf]
        %v5174 = vld [vmem:[%s15 + $0xcc] sm:$0xf]
        %v5175 = vld [vmem:[%s15 + $0xd0] sm:$0xf]
        %v5176 = vld [vmem:[%s15 + $0xd4] sm:$0xf]
        %v5177 = vld [vmem:[%s15 + $0xd8] sm:$0xf]
        %v5178 = vld [vmem:[%s15 + $0xdc] sm:$0xf]
        %v5179 = vld [vmem:[%s15 + $0xe0] sm:$0xf]
        %v5180 = vld [vmem:[%s15 + $0xe4] sm:$0xf]
        %v5181 = vld [vmem:[%s15 + $0xe8] sm:$0xf]
        %v5182 = vld [vmem:[%s15 + $0xec] sm:$0xf]
        %v5183 = vld [vmem:[%s15 + $0xf0] sm:$0xf]
        %v5184 = vld [vmem:[%s15 + $0xf4] sm:$0xf]
        %v5185 = vld [vmem:[%s15 + $0xf8] sm:$0xf]
        %v5186 = vld [vmem:[%s15 + $0xfc] sm:$0xf]
        %v5187 = vld [vmem:[%s15 + $0x100] sm:$0xf]
        %v5188 = vld [vmem:[%s15 + $0x104] sm:$0xf]
        %v5189 = vld [vmem:[%s15 + $0x108] sm:$0xf]
        %v5190 = vld [vmem:[%s15 + $0x10c] sm:$0xf]
        %v5191 = vld [vmem:[%s15 + $0x110] sm:$0xf]
        %v5192 = vld [vmem:[%s15 + $0x114] sm:$0xf]
        %v5193 = vld [vmem:[%s15 + $0x118] sm:$0xf]
        %v5194 = vld [vmem:[%s15 + $0x11c] sm:$0xf]
        %v5195 = vld [vmem:[%s15 + $0x120] sm:$0xf]
        %v5196 = vld [vmem:[%s15 + $0x124] sm:$0xf]
        %v5197 = vld [vmem:[%s15 + $0x128] sm:$0xf]
        %v5198 = vld [vmem:[%s15 + $0x12c] sm:$0xf]
        %v5199 = vld [vmem:[%s15 + $0x130] sm:$0xf]
        %v5200 = vld [vmem:[%s15 + $0x134] sm:$0xf]
        %v5201 = vld [vmem:[%s15 + $0x138] sm:$0xf]
        %v5202 = vld [vmem:[%s15 + $0x13c] sm:$0xf]
        %v5203 = vld [vmem:[%s15 + $0x140] sm:$0xf]
        %v5204 = vld [vmem:[%s15 + $0x144] sm:$0xf]
        %v5205 = vld [vmem:[%s15 + $0x148] sm:$0xf]
        %v5206 = vld [vmem:[%s15 + $0x14c] sm:$0xf]
        %v5207 = vld [vmem:[%s15 + $0x150] sm:$0xf]
        %v5208 = vld [vmem:[%s15 + $0x154] sm:$0xf]
        %v5209 = vld [vmem:[%s15 + $0x158] sm:$0xf]
        %v5210 = vld [vmem:[%s15 + $0x15c] sm:$0xf]
        %v5211 = vld [vmem:[%s15 + $0x160] sm:$0xf]
        %v5212 = vld [vmem:[%s15 + $0x164] sm:$0xf]
        %v5213 = vld [vmem:[%s15 + $0x168] sm:$0xf]
        %v5214 = vld [vmem:[%s15 + $0x16c] sm:$0xf]
        %v5215 = vld [vmem:[%s15 + $0x170] sm:$0xf]
        %v5216 = vld [vmem:[%s15 + $0x174] sm:$0xf]
        %v5217 = vld [vmem:[%s15 + $0x178] sm:$0xf]
        %v5218 = vld [vmem:[%s15 + $0x17c] sm:$0xf]
        %v5219 = vld [vmem:[%s15 + $0x180] sm:$0xf]
        %v5220 = vld [vmem:[%s15 + $0x184] sm:$0xf]
        %v5221 = vld [vmem:[%s15 + $0x188] sm:$0xf]
        %v5222 = vld [vmem:[%s15 + $0x18c] sm:$0xf]
        %v5223 = vld [vmem:[%s16] sm:$0x1]
        %v5225 = vlaneseq
        %v5226 = vshrl.u32 %v5225, 7
        %v5227 = vsub.s32 0, %v5226
        %v5228 = vrot.slane %v5223, %v5227
        %v5330 = vunpack.c.l.b16 %v5123
        %v5331 = vunpack.c.l.b16 %v5124
        %v5332 = vunpack.c.l.b16 %v5125
        %v5333 = vunpack.c.l.b16 %v5126
        %v5334 = vunpack.c.l.b16 %v5127
        %v5335 = vunpack.c.l.b16 %v5128
        %v5336 = vunpack.c.l.b16 %v5129
        %v5337 = vunpack.c.l.b16 %v5130
        %v5338 = vunpack.c.l.b16 %v5131
        %v5339 = vunpack.c.l.b16 %v5132
        %v5340 = vunpack.c.l.b16 %v5133
        %v5341 = vunpack.c.l.b16 %v5134
        %v5342 = vunpack.c.l.b16 %v5135
        %v5343 = vunpack.c.l.b16 %v5136
        %v5344 = vunpack.c.l.b16 %v5137
        %v5345 = vunpack.c.l.b16 %v5138
        %v5346 = vunpack.c.l.b16 %v5139
        %v5347 = vunpack.c.l.b16 %v5140
        %v5348 = vunpack.c.l.b16 %v5141
        %v5349 = vunpack.c.l.b16 %v5142
        %v5350 = vunpack.c.l.b16 %v5143
        %v5351 = vunpack.c.l.b16 %v5144
        %v5352 = vunpack.c.l.b16 %v5145
        %v5353 = vunpack.c.l.b16 %v5146
        %v5354 = vunpack.c.l.b16 %v5147
        %v5355 = vunpack.c.l.b16 %v5148
        %v5356 = vunpack.c.l.b16 %v5149
        %v5357 = vunpack.c.l.b16 %v5150
        %v5358 = vunpack.c.l.b16 %v5151
        %v5359 = vunpack.c.l.b16 %v5152
        %v5360 = vunpack.c.l.b16 %v5153
        %v5361 = vunpack.c.l.b16 %v5154
        %v5362 = vunpack.c.l.b16 %v5155
        %v5363 = vunpack.c.l.b16 %v5156
        %v5364 = vunpack.c.l.b16 %v5157
        %v5365 = vunpack.c.l.b16 %v5158
        %v5366 = vunpack.c.l.b16 %v5159
        %v5367 = vunpack.c.l.b16 %v5160
        %v5368 = vunpack.c.l.b16 %v5161
        %v5369 = vunpack.c.l.b16 %v5162
        %v5370 = vunpack.c.l.b16 %v5163
        %v5371 = vunpack.c.l.b16 %v5164
        %v5372 = vunpack.c.l.b16 %v5165
        %v5373 = vunpack.c.l.b16 %v5166
        %v5374 = vunpack.c.l.b16 %v5167
        %v5375 = vunpack.c.l.b16 %v5168
        %v5376 = vunpack.c.l.b16 %v5169
        %v5377 = vunpack.c.l.b16 %v5170
        %v5378 = vunpack.c.l.b16 %v5171
        %v5379 = vunpack.c.l.b16 %v5172
        %v5380 = vunpack.c.l.b16 %v5173
        %v5381 = vunpack.c.l.b16 %v5174
        %v5382 = vunpack.c.l.b16 %v5175
        %v5383 = vunpack.c.l.b16 %v5176
        %v5384 = vunpack.c.l.b16 %v5177
        %v5385 = vunpack.c.l.b16 %v5178
        %v5386 = vunpack.c.l.b16 %v5179
        %v5387 = vunpack.c.l.b16 %v5180
        %v5388 = vunpack.c.l.b16 %v5181
        %v5389 = vunpack.c.l.b16 %v5182
        %v5390 = vunpack.c.l.b16 %v5183
        %v5391 = vunpack.c.l.b16 %v5184
        %v5392 = vunpack.c.l.b16 %v5185
        %v5393 = vunpack.c.l.b16 %v5186
        %v5394 = vunpack.c.l.b16 %v5187
        %v5395 = vunpack.c.l.b16 %v5188
        %v5396 = vunpack.c.l.b16 %v5189
        %v5397 = vunpack.c.l.b16 %v5190
        %v5398 = vunpack.c.l.b16 %v5191
        %v5399 = vunpack.c.l.b16 %v5192
        %v5400 = vunpack.c.l.b16 %v5193
        %v5401 = vunpack.c.l.b16 %v5194
        %v5402 = vunpack.c.l.b16 %v5195
        %v5403 = vunpack.c.l.b16 %v5196
        %v5404 = vunpack.c.l.b16 %v5197
        %v5405 = vunpack.c.l.b16 %v5198
        %v5406 = vunpack.c.l.b16 %v5199
        %v5407 = vunpack.c.l.b16 %v5200
        %v5408 = vunpack.c.l.b16 %v5201
        %v5409 = vunpack.c.l.b16 %v5202
        %v5410 = vunpack.c.l.b16 %v5203
        %v5411 = vunpack.c.l.b16 %v5204
        %v5412 = vunpack.c.l.b16 %v5205
        %v5413 = vunpack.c.l.b16 %v5206
        %v5414 = vunpack.c.l.b16 %v5207
        %v5415 = vunpack.c.l.b16 %v5208
        %v5416 = vunpack.c.l.b16 %v5209
        %v5417 = vunpack.c.l.b16 %v5210
        %v5418 = vunpack.c.l.b16 %v5211
        %v5419 = vunpack.c.l.b16 %v5212
        %v5420 = vunpack.c.l.b16 %v5213
        %v5421 = vunpack.c.l.b16 %v5214
        %v5422 = vunpack.c.l.b16 %v5215
        %v5423 = vunpack.c.l.b16 %v5216
        %v5424 = vunpack.c.l.b16 %v5217
        %v5425 = vunpack.c.l.b16 %v5218
        %v5426 = vunpack.c.l.b16 %v5219
        %v5427 = vunpack.c.l.b16 %v5220
        %v5428 = vunpack.c.l.b16 %v5221
        %v5429 = vunpack.c.l.b16 %v5222
        %v5430 = vpack.c.b16 %v5331, %v5330
        %v5431 = vpack.c.b16 %v5333, %v5332
        %v5432 = vpack.c.b16 %v5335, %v5334
        %v5433 = vpack.c.b16 %v5337, %v5336
        %v5434 = vpack.c.b16 %v5339, %v5338
        %v5435 = vpack.c.b16 %v5341, %v5340
        %v5436 = vpack.c.b16 %v5343, %v5342
        %v5437 = vpack.c.b16 %v5345, %v5344
        %v5438 = vpack.c.b16 %v5347, %v5346
        %v5439 = vpack.c.b16 %v5349, %v5348
        %v5440 = vpack.c.b16 %v5351, %v5350
        %v5441 = vpack.c.b16 %v5353, %v5352
        %v5442 = vpack.c.b16 %v5355, %v5354
        %v5443 = vpack.c.b16 %v5357, %v5356
        %v5444 = vpack.c.b16 %v5359, %v5358
        %v5445 = vpack.c.b16 %v5361, %v5360
        %v5446 = vpack.c.b16 %v5363, %v5362
        %v5447 = vpack.c.b16 %v5365, %v5364
        %v5448 = vpack.c.b16 %v5367, %v5366
        %v5449 = vpack.c.b16 %v5369, %v5368
        %v5450 = vpack.c.b16 %v5371, %v5370
        %v5451 = vpack.c.b16 %v5373, %v5372
        %v5452 = vpack.c.b16 %v5375, %v5374
        %v5453 = vpack.c.b16 %v5377, %v5376
        %v5454 = vpack.c.b16 %v5379, %v5378
        %v5455 = vpack.c.b16 %v5381, %v5380
        %v5456 = vpack.c.b16 %v5383, %v5382
        %v5457 = vpack.c.b16 %v5385, %v5384
        %v5458 = vpack.c.b16 %v5387, %v5386
        %v5459 = vpack.c.b16 %v5389, %v5388
        %v5460 = vpack.c.b16 %v5391, %v5390
        %v5461 = vpack.c.b16 %v5393, %v5392
        %v5462 = vpack.c.b16 %v5395, %v5394
        %v5463 = vpack.c.b16 %v5397, %v5396
        %v5464 = vpack.c.b16 %v5399, %v5398
        %v5465 = vpack.c.b16 %v5401, %v5400
        %v5466 = vpack.c.b16 %v5403, %v5402
        %v5467 = vpack.c.b16 %v5405, %v5404
        %v5468 = vpack.c.b16 %v5407, %v5406
        %v5469 = vpack.c.b16 %v5409, %v5408
        %v5470 = vpack.c.b16 %v5411, %v5410
        %v5471 = vpack.c.b16 %v5413, %v5412
        %v5472 = vpack.c.b16 %v5415, %v5414
        %v5473 = vpack.c.b16 %v5417, %v5416
        %v5474 = vpack.c.b16 %v5419, %v5418
        %v5475 = vpack.c.b16 %v5421, %v5420
        %v5476 = vpack.c.b16 %v5423, %v5422
        %v5477 = vpack.c.b16 %v5425, %v5424
        %v5478 = vpack.c.b16 %v5427, %v5426
        %v5479 = vpack.c.b16 %v5429, %v5428
        %v5531 = vsel %vm2683, %v5122, 0
        %5533 = vmatprep.subr.bf16.mxu0 0
        %5534 = vmatpush1.bf16.msra.mxu0 %v5437
        %5535 = vmatprep.subr.bf16.mxu0 0
        %5536 = vmatpush1.bf16.msra.mxu0 %v5436
        %5537 = vmatprep.subr.bf16.mxu0 0
        %5538 = vmatpush1.bf16.msra.mxu0 %v5435
        %5539 = vmatprep.subr.bf16.mxu0 0
        %5540 = vmatpush1.bf16.msra.mxu0 %v5434
        %5541 = vmatprep.subr.bf16.mxu0 0
        %5542 = vmatpush1.bf16.msra.mxu0 %v5433
        %5543 = vmatprep.subr.bf16.mxu0 0
        %5544 = vmatpush1.bf16.msra.mxu0 %v5432
        %5545 = vmatprep.subr.bf16.mxu0 0
        %5546 = vmatpush1.bf16.msra.mxu0 %v5431
        %5547 = vmatprep.subr.bf16.mxu0 0
        %5548 = vmatpush1.bf16.msra.mxu0 %v5430
        %5549 = vmatprep.subr.bf16.mxu0 0
        %5550 = vmatpush2.bf16.msra.mxu0 %v5445
        %5551 = vmatprep.subr.bf16.mxu0 0
        %5552 = vmatpush2.bf16.msra.mxu0 %v5444
        %5553 = vmatprep.subr.bf16.mxu0 0
        %5554 = vmatpush2.bf16.msra.mxu0 %v5443
        %5555 = vmatprep.subr.bf16.mxu0 0
        %5556 = vmatpush2.bf16.msra.mxu0 %v5442
        %5557 = vmatprep.subr.bf16.mxu0 0
        %5558 = vmatpush2.bf16.msra.mxu0 %v5441
        %5559 = vmatprep.subr.bf16.mxu0 0
        %5560 = vmatpush2.bf16.msra.mxu0 %v5440
        %5561 = vmatprep.subr.bf16.mxu0 0
        %5562 = vmatpush2.bf16.msra.mxu0 %v5439
        %5563 = vmatprep.subr.bf16.mxu0 0
        %5564 = vmatpush2.bf16.msra.mxu0 %v5438
        %5565 = vmatprep.mubr.bf16.mxu0 %v5117
        %5566 = vmatmul.mubr.bf16.gmra.mxu0 %v5116
        %v5567 = vpop.f32.mrf.mxu0
        %v5568 = vadd.f32 %v5228, %v5567
        %v5569 = vpop.f32.mrf.mxu0
        %v5570 = vpop.f32.mrf.mxu0
        %v5571 = vadd.f32 %v5228, %v5570
        %v5572 = vpop.f32.mrf.mxu0
        %5573 = vdwg.mxu0
        %5574 = vmatprep.subr.bf16.mxu0 0
        %5575 = vmatpush1.bf16.msra.mxu0 %v5453
        %5576 = vmatprep.subr.bf16.mxu0 0
        %5577 = vmatpush1.bf16.msra.mxu0 %v5452
        %5578 = vmatprep.subr.bf16.mxu0 0
        %5579 = vmatpush1.bf16.msra.mxu0 %v5451
        %5580 = vmatprep.subr.bf16.mxu0 0
        %5581 = vmatpush1.bf16.msra.mxu0 %v5450
        %5582 = vmatprep.subr.bf16.mxu0 0
        %5583 = vmatpush1.bf16.msra.mxu0 %v5449
        %5584 = vmatprep.subr.bf16.mxu0 0
        %5585 = vmatpush1.bf16.msra.mxu0 %v5448
        %5586 = vmatprep.subr.bf16.mxu0 0
        %5587 = vmatpush1.bf16.msra.mxu0 %v5447
        %5588 = vmatprep.subr.bf16.mxu0 0
        %5589 = vmatpush1.bf16.msra.mxu0 %v5446
        %5590 = vmatprep.subr.bf16.mxu0 0
        %5591 = vmatpush2.bf16.msra.mxu0 %v5461
        %5592 = vmatprep.subr.bf16.mxu0 0
        %5593 = vmatpush2.bf16.msra.mxu0 %v5460
        %5594 = vmatprep.subr.bf16.mxu0 0
        %5595 = vmatpush2.bf16.msra.mxu0 %v5459
        %5596 = vmatprep.subr.bf16.mxu0 0
        %5597 = vmatpush2.bf16.msra.mxu0 %v5458
        %5598 = vmatprep.subr.bf16.mxu0 0
        %5599 = vmatpush2.bf16.msra.mxu0 %v5457
        %5600 = vmatprep.subr.bf16.mxu0 0
        %5601 = vmatpush2.bf16.msra.mxu0 %v5456
        %5602 = vmatprep.subr.bf16.mxu0 0
        %5603 = vmatpush2.bf16.msra.mxu0 %v5455
        %5604 = vmatprep.subr.bf16.mxu0 0
        %5605 = vmatpush2.bf16.msra.mxu0 %v5454
        %5606 = vmatprep.mubr.bf16.mxu0 %v5119
        %5607 = vmatmul.mubr.bf16.gmra.mxu0 %v5118
        %v5608 = vpop.f32.mrf.mxu0
        %v5609 = vadd.f32 %v5568, %v5608
        %v5610 = vpop.f32.mrf.mxu0
        %v5611 = vpop.f32.mrf.mxu0
        %v5612 = vadd.f32 %v5571, %v5611
        %v5613 = vpop.f32.mrf.mxu0
        %5614 = vdwg.mxu0
        %5615 = vmatprep.subr.bf16.mxu0 0
        %5616 = vmatpush1.bf16.msra.mxu0 %v5469
        %5617 = vmatprep.subr.bf16.mxu0 0
        %5618 = vmatpush1.bf16.msra.mxu0 %v5468
        %5619 = vmatprep.subr.bf16.mxu0 0
        %5620 = vmatpush1.bf16.msra.mxu0 %v5467
        %5621 = vmatprep.subr.bf16.mxu0 0
        %5622 = vmatpush1.bf16.msra.mxu0 %v5466
        %5623 = vmatprep.subr.bf16.mxu0 0
        %5624 = vmatpush1.bf16.msra.mxu0 %v5465
        %5625 = vmatprep.subr.bf16.mxu0 0
        %5626 = vmatpush1.bf16.msra.mxu0 %v5464
        %5627 = vmatprep.subr.bf16.mxu0 0
        %5628 = vmatpush1.bf16.msra.mxu0 %v5463
        %5629 = vmatprep.subr.bf16.mxu0 0
        %5630 = vmatpush1.bf16.msra.mxu0 %v5462
        %5631 = vmatprep.subr.bf16.mxu0 0
        %5632 = vmatpush2.bf16.msra.mxu0 %v5477
        %5633 = vmatprep.subr.bf16.mxu0 0
        %5634 = vmatpush2.bf16.msra.mxu0 %v5476
        %5635 = vmatprep.subr.bf16.mxu0 0
        %5636 = vmatpush2.bf16.msra.mxu0 %v5475
        %5637 = vmatprep.subr.bf16.mxu0 0
        %5638 = vmatpush2.bf16.msra.mxu0 %v5474
        %5639 = vmatprep.subr.bf16.mxu0 0
        %5640 = vmatpush2.bf16.msra.mxu0 %v5473
        %5641 = vmatprep.subr.bf16.mxu0 0
        %5642 = vmatpush2.bf16.msra.mxu0 %v5472
        %5643 = vmatprep.subr.bf16.mxu0 0
        %5644 = vmatpush2.bf16.msra.mxu0 %v5471
        %5645 = vmatprep.subr.bf16.mxu0 0
        %5646 = vmatpush2.bf16.msra.mxu0 %v5470
        %5647 = vmatprep.mubr.bf16.mxu0 %v5121
        %5648 = vmatmul.mubr.bf16.gmra.mxu0 %v5120
        %v5649 = vpop.f32.mrf.mxu0
        %v5650 = vadd.f32 %v5609, %v5649
        %v5651 = vpop.f32.mrf.mxu0
        %v5652 = vpop.f32.mrf.mxu0
        %v5653 = vadd.f32 %v5612, %v5652
        %v5654 = vpop.f32.mrf.mxu0
        %5655 = vdwg.mxu0
        %5656 = vmatprep.subr.bf16.mxu0 0
        %5657 = vmatpush1.bf16.msra.mxu0 0
        %5658 = vmatprep.subr.bf16.mxu0 0
        %5659 = vmatpush1.bf16.msra.mxu0 0
        %5660 = vmatprep.subr.bf16.mxu0 0
        %5661 = vmatpush1.bf16.msra.mxu0 0
        %5662 = vmatprep.subr.bf16.mxu0 0
        %5663 = vmatpush1.bf16.msra.mxu0 0
        %5664 = vmatprep.subr.bf16.mxu0 0
        %5665 = vmatpush1.bf16.msra.mxu0 0
        %5666 = vmatprep.subr.bf16.mxu0 0
        %5667 = vmatpush1.bf16.msra.mxu0 0
        %5668 = vmatprep.subr.bf16.mxu0 0
        %5669 = vmatpush1.bf16.msra.mxu0 %v5479
        %5670 = vmatprep.subr.bf16.mxu0 0
        %5671 = vmatpush1.bf16.msra.mxu0 %v5478
        %5672 = vmatprep.subr.bf16.mxu0 0
        %5673 = vmatpush2.bf16.msra.mxu0 0
        %5674 = vmatprep.subr.bf16.mxu0 0
        %5675 = vmatpush2.bf16.msra.mxu0 0
        %5676 = vmatprep.subr.bf16.mxu0 0
        %5677 = vmatpush2.bf16.msra.mxu0 0
        %5678 = vmatprep.subr.bf16.mxu0 0
        %5679 = vmatpush2.bf16.msra.mxu0 0
        %5680 = vmatprep.subr.bf16.mxu0 0
        %5681 = vmatpush2.bf16.msra.mxu0 0
        %5682 = vmatprep.subr.bf16.mxu0 0
        %5683 = vmatpush2.bf16.msra.mxu0 0
        %5684 = vmatprep.subr.bf16.mxu0 0
        %5685 = vmatpush2.bf16.msra.mxu0 0
        %5686 = vmatprep.subr.bf16.mxu0 0
        %5687 = vmatpush2.bf16.msra.mxu0 0
        %5688 = vmatprep.mubr.bf16.mxu0 0
        %5689 = vmatmul.mubr.bf16.gmra.mxu0 %v5531
        %v5690 = vpop.f32.mrf.mxu0
        %v5691 = vadd.f32 %v5650, %v5690
        %v5692 = vpop.f32.mrf.mxu0
        %v5693 = vpop.f32.mrf.mxu0
        %v5694 = vadd.f32 %v5653, %v5693
        %v5695 = vpop.f32.mrf.mxu0
        %5696 = vdwg.mxu0
        %5697 = vst [vmem:[%s605] sm:$0xff] %v5691
        %5698 = vst [vmem:[%s605 + $0x8] sm:$0xff] %v5694
        %5701 = vrot.lane.b32.xlu0 %v3354, 32
        %v5702 = vpop.permute.xlu0 %5701
        %5703 = vrot.lane.b32.xlu0 %v3355, 32
        %v5704 = vpop.permute.xlu0 %5703
        %v5707 = vsel %vm2683, %v3330, %v5702
        %v5708 = vsel %vm2683, %v3333, %v5704
        %vm5709 = vcmask 392192
        %v5710 = vsel %vm5709, %v5707, 0.0
        %v5711 = vsel %vm5709, %v5708, 0.0
        %5712 = vst [vmem:[%s612] sm:$0xff] %v5710
        %5713 = vst [vmem:[%s612 + $0x8] sm:$0xff] %v5711
        %s5714 = sand.u32 %s416, 1
        %s5715 = scalar_lea.sflag [#allocation3], %s5714
        %s5716 = sand.u32 %s416, 1
        %s5717 = smul.addr %s5716, 16
        %s5718 = scalar_lea.vmem [#allocation2], %s5717
        %s5719 = sand.u32 %s442, 1
        %s5720 = scalar_lea.sflag [#allocation5], %s5719
        %s5721 = sand.u32 %s442, 1
        %s5722 = smul.addr %s5721, 16
        %s5723 = scalar_lea.vmem [#allocation4], %s5722
        // Predicated region
        $region89: #{tpu_custom_call.1} parent=87 // pred_check
          %p5724 = pneg %p426
        $region90: #{tpu_custom_call.1} parent=87 // pred_check_branch
          %5726 = sbr.rel (%p5724) target = $region92
        $region91: #{tpu_custom_call.1} parent=87 // pred_region
          %s5727 = smul.u32 2, %s36
          %s5729 = ssub.s32 256, 256
          %5730 = vsyncadd %s5715, %s5729
          %s5731 = smul.addr %s5727, 128
          %s5732 = scalar_lea.hbm %s17, %s5731
          %s5733 = sshll.u32 %s5718, 4
          %s5734 = int_to_ptr.vmem [resolvable:$true] %s5733
          %5739 = dma.vmem_to_hbm [thread:$0]  %s5734, 256, %s5732, %s5715, 128, 128, 8
        $region92: #{tpu_custom_call.1} parent=87 // pred_fallthru
          _
        // Predicated region
        $region93: #{tpu_custom_call.1} parent=87 // pred_check
          %p5740 = pneg %p452
        $region94: #{tpu_custom_call.1} parent=87 // pred_check_branch
          %5742 = sbr.rel (%p5740) target = $region96
        $region95: #{tpu_custom_call.1} parent=87 // pred_region
          %s5743 = smul.u32 2, %s36
          %s5745 = ssub.s32 256, 256
          %5746 = vsyncadd %s5720, %s5745
          %s5747 = smul.addr %s5743, 128
          %s5748 = scalar_lea.hbm %s18, %s5747
          %s5749 = sshll.u32 %s5723, 4
          %s5750 = int_to_ptr.vmem [resolvable:$true] %s5749
          %5755 = dma.vmem_to_hbm [thread:$0]  %s5750, 256, %s5748, %s5720, 128, 128, 8
        $region96: #{tpu_custom_call.1} parent=87 // pred_fallthru
          _
      $region88: #{tpu_custom_call.1} parent=5 // pred_fallthru
        _
      %p5756 = scmp.le.s32.totalorder 2, %s31
      // Predicated region
      $region97: #{tpu_custom_call.1} parent=5 // pred_check
        %p5757 = pneg %p5756
      $region98: #{tpu_custom_call.1} parent=5 // pred_check_branch
        %5759 = sbr.rel (%p5757) target = $region100
      $region99: #{tpu_custom_call.1} parent=5 // pred_region
        %s5760 = ssub.s32 %s31, 2
        // Predicated region
        $region101: #{tpu_custom_call.1} parent=99 // pred_check
          %p5761 = pneg %p432
        $region102: #{tpu_custom_call.1} parent=99 // pred_check_branch
          %5763 = sbr.rel (%p5761) target = $region104
        $region103: #{tpu_custom_call.1} parent=99 // pred_region
          %s5764 = sand.u32 %s417, 1
          %s5765 = scalar_lea.sflag [#allocation3], %s5764
          %s5766 = sand.u32 %s417, 1
          %s5767 = smul.addr %s5766, 16
          %s5768 = scalar_lea.vmem [#allocation2], %s5767
          %5769 = dma.done %s5765, 256
        $region104: #{tpu_custom_call.1} parent=99 // pred_fallthru
          _
        // Predicated region
        $region105: #{tpu_custom_call.1} parent=99 // pred_check
          %p5770 = pneg %p458
        $region106: #{tpu_custom_call.1} parent=99 // pred_check_branch
          %5772 = sbr.rel (%p5770) target = $region108
        $region107: #{tpu_custom_call.1} parent=99 // pred_region
          %s5773 = sand.u32 %s443, 1
          %s5774 = scalar_lea.sflag [#allocation5], %s5773
          %s5775 = sand.u32 %s443, 1
          %s5776 = smul.addr %s5775, 16
          %s5777 = scalar_lea.vmem [#allocation4], %s5776
          %5778 = dma.done %s5774, 256
        $region108: #{tpu_custom_call.1} parent=99 // pred_fallthru
          _
      $region100: #{tpu_custom_call.1} parent=5 // pred_fallthru
        _
    $region6: #{tpu_custom_call.1} parent=1 // loop_footer
      %s35 = sadd.s32 1, %s31
    $region7: #{tpu_custom_call.1} parent=1 // loop_footer_branch
      %30 = sbr.rel target = $region3
    $region8: #{tpu_custom_call.1} parent=1 // loop_exit
      _
    %5779 = vsyncpa [#allocation3], 1
    %s5780 = scalar_lea.sflag [#allocation3], 1
    %5781 = vsyncpa %s5780, 1
    %5782 = vsyncpa [#allocation5], 1
    %s5783 = scalar_lea.sflag [#allocation5], 1
    %5784 = vsyncpa %s5783, 1

</llo_original>
